<compile_context>
chip_gen: v7x
topology: tpu7x:2x2x1
jax: 0.10.0
libtpu: 0.0.40
codegen_flags: <defaults>
</compile_context>

<pallas_src>
import functools

import jax
import jax.numpy as jnp
from jax.experimental import pallas as pl
from jax.experimental.pallas import tpu as pltpu

LEAK = 0.01      # nn.LeakyReLU default negative_slope
GN_EPS = 1e-5    # nn.GroupNorm default eps
CPAD = 128       # lane-dense padding of the fused kernel's HBM output


def _round_up(x, m):
    return (x + m - 1) // m * m


# --------------------------------------------------------------------------- #
# Fused DoubleConv kernel (one grid step = one batch element).
# --------------------------------------------------------------------------- #
def _double_conv_kernel(mask_ref, x_ref, w1_ref, g_ref, beta_ref, w2_ref,
                        o_ref, hbuf_ref, *, H, W):
    Wp = W + 2                       # padded row length
    q0 = Wp + 1                      # flattened index of interior position (1, 1)
    Mout = H * Wp                    # rows computed per sample (incl. masked columns)
    Cmid = w1_ref.shape[2]
    taps = [(dy, dx) for dy in (-1, 0, 1) for dx in (-1, 0, 1)]

    mask = mask_ref[...]             # (Mout, 1) f32; 1.0 on valid output columns

    # ---- conv1: nine shifted-tap matmuls (bf16 MXU, f32 accumulation) -------
    xall = x_ref[0].astype(jnp.float32)            # one aligned load of the bf16 block
    acc = jnp.zeros((Mout, Cmid), jnp.float32)
    for t, (dy, dx) in enumerate(taps):
        s = q0 + dy * Wp + dx
        xs = xall[s:s + Mout, :].astype(jnp.bfloat16)            # (Mout, Cin)
        acc = acc + jnp.dot(xs, w1_ref[t], preferred_element_type=jnp.float32)

    # ---- GroupNorm(num_groups=1): single-pass masked sum / sum-of-squares ---
    ym = acc * mask
    n = float(H * W * Cmid)
    s1 = jnp.sum(ym)
    s2 = jnp.sum(ym * ym)
    mean = s1 / n
    var = jnp.maximum(s2 / n - mean * mean, 0.0)
    inv = jax.lax.rsqrt(var + GN_EPS)
    h = (acc - mean) * inv * g_ref[...] + beta_ref[...]
    h = jnp.where(h >= 0, h, LEAK * h)             # LeakyReLU
    h = h * mask                                   # re-zero the padding columns

    # stash the zero-padded intermediate entirely in VMEM (never hits HBM)
    hbuf_ref[...] = jnp.zeros_like(hbuf_ref)
    hbuf_ref[pl.ds(q0, Mout), :] = h

    # ---- conv2 + LeakyReLU (output lanes padded to CPAD -> dense stores) ----
    hall = hbuf_ref[...]                           # (Npad, Cmid) f32
    acc2 = jnp.zeros((Mout, o_ref.shape[2]), jnp.float32)
    for t, (dy, dx) in enumerate(taps):
        s = q0 + dy * Wp + dx
        hs = hall[s:s + Mout, :].astype(jnp.bfloat16)
        acc2 = acc2 + jnp.dot(hs, w2_ref[t], preferred_element_type=jnp.float32)
    o_ref[0] = jnp.where(acc2 >= 0, acc2, LEAK * acc2)


def double_conv_fused(x, p):
    """x: (B, H, W, Cin) NHWC.  Returns (B, H, W, Cout) f32."""
    # TODO(synk): residual=True (1x1 res_conv) path of DoubleConv not implemented.
    B, H, W, Cin = x.shape
    Cmid = p["w1"].shape[-1]
    Cout = p["w2"].shape[-1]
    Wp = W + 2
    Npad = (H + 3) * Wp              # (H+2) padded rows + 1 spare zero row for the taps
    Mout = H * Wp

    # zero-pad (top=1, bottom=2, left=1, right=1) and flatten the spatial grid (bf16)
    xpad = jnp.pad(x.astype(jnp.bfloat16),
                   ((0, 0), (1, 2), (1, 1), (0, 0))).reshape(B, Npad, Cin)

    # validity mask over the Mout computed rows (zero on the wrap-around columns)
    m_idx = jnp.arange(Mout, dtype=jnp.int32)
    mask = (m_idx % Wp < W).astype(jnp.float32).reshape(Mout, 1)

    w1 = p["w1"].reshape(9, Cin, Cmid).astype(jnp.bfloat16)
    w2 = jnp.zeros((9, Cmid, CPAD), jnp.bfloat16)
    w2 = w2.at[:, :, :Cout].set(p["w2"].reshape(9, Cmid, Cout).astype(jnp.bfloat16))
    gamma = p["g1"].reshape(1, Cmid).astype(jnp.float32)
    beta = p["b1"].reshape(1, Cmid).astype(jnp.float32)

    flops = 2 * B * Mout * 9 * (Cin * Cmid + Cmid * CPAD)
    bytes_accessed = (xpad.size * 2 + w1.size * 2 + w2.size * 2
                      + (gamma.size + beta.size + mask.size) * 4
                      + B * Mout * CPAD * 4)

    out = pl.pallas_call(
        functools.partial(_double_conv_kernel, H=H, W=W),
        out_shape=jax.ShapeDtypeStruct((B, Mout, CPAD), jnp.float32),
        grid=(B,),
        in_specs=[pl.BlockSpec((Mout, 1), lambda b: (0, 0)),
                  pl.BlockSpec((1, Npad, Cin), lambda b: (b, 0, 0)),
                  pl.BlockSpec((9, Cin, Cmid), lambda b: (0, 0, 0)),
                  pl.BlockSpec((1, Cmid), lambda b: (0, 0)),
                  pl.BlockSpec((1, Cmid), lambda b: (0, 0)),
                  pl.BlockSpec((9, Cmid, CPAD), lambda b: (0, 0, 0))],
        out_specs=pl.BlockSpec((1, Mout, CPAD), lambda b: (b, 0, 0)),
        scratch_shapes=[pltpu.VMEM((Npad, Cmid), jnp.float32)],
        compiler_params=pltpu.CompilerParams(dimension_semantics=("parallel",)),
        cost_estimate=pl.CostEstimate(flops=flops, transcendentals=B,
                                      bytes_accessed=bytes_accessed),
    )(mask, xpad, w1, gamma, beta, w2)

    # (B, Mout, CPAD) -> drop wrap-around columns and lane padding -> NHWC
    return out.reshape(B, H, Wp, CPAD)[:, :, :W, :Cout]


# --------------------------------------------------------------------------- #
# ConvTranspose2d(k=2, s=2) as a packed matmul + bias (bf16 in / bf16 out).
# --------------------------------------------------------------------------- #
def _matmul_bias_kernel(x_ref, w_ref, b_ref, o_ref):
    y = jnp.dot(x_ref[0], w_ref[...], preferred_element_type=jnp.float32)
    o_ref[0] = (y + b_ref[...]).astype(o_ref.dtype)


def conv_transpose2x2(x, wt, bt):
    """x: (B, H, W, Cin) NHWC, wt: (Cin, Cup, 2, 2), bt: (Cup,) -> (B, 2H, 2W, Cup) bf16."""
    B, H, W, Cin = x.shape
    Cup = wt.shape[1]
    npack = 4 * Cup
    npad = _round_up(npack, 128)

    # pack the four kernel taps as output-column groups (dy, dx, c); pad lanes to 128
    wp = jnp.concatenate([wt[:, :, dy, dx] for dy in (0, 1) for dx in (0, 1)], axis=1)
    wp = jnp.zeros((Cin, npad), jnp.bfloat16).at[:, :npack].set(wp.astype(jnp.bfloat16))
    bp = jnp.zeros((1, npad), jnp.float32).at[0, :npack].set(jnp.tile(bt, 4))

    xf = x.reshape(B, H * W, Cin).astype(jnp.bfloat16)
    y = pl.pallas_call(
        _matmul_bias_kernel,
        out_shape=jax.ShapeDtypeStruct((B, H * W, npad), jnp.bfloat16),
        grid=(B,),
        in_specs=[pl.BlockSpec((1, H * W, Cin), lambda b: (b, 0, 0)),
                  pl.BlockSpec((Cin, npad), lambda b: (0, 0)),
                  pl.BlockSpec((1, npad), lambda b: (0, 0))],
        out_specs=pl.BlockSpec((1, H * W, npad), lambda b: (b, 0, 0)),
        compiler_params=pltpu.CompilerParams(dimension_semantics=("parallel",)),
    )(xf, wp, bp)

    # pixel shuffle: y[b, h*W+w, (dy*2+dx)*Cup + c] -> out[b, 2h+dy, 2w+dx, c]
    y = y[:, :, :npack].reshape(B, H, W, 2, 2, Cup)
    y = jnp.transpose(y, (0, 1, 3, 2, 4, 5)).reshape(B, 2 * H, 2 * W, Cup)
    return y


# --------------------------------------------------------------------------- #
# Bilinear 2x upsample (align_corners=True).
# TODO(synk): implemented with XLA einsums over small interpolation matrices (glue),
#             not a dedicated Pallas kernel.
# --------------------------------------------------------------------------- #
def _interp_matrix_2x(n):
    out = 2 * n
    pos = jnp.arange(out, dtype=jnp.float32) * (n - 1) / max(out - 1, 1)
    lo = jnp.floor(pos).astype(jnp.int32)
    hi = jnp.minimum(lo + 1, n - 1)
    frac = pos - lo.astype(jnp.float32)
    rows = jnp.arange(out)
    m = jnp.zeros((out, n), jnp.float32)
    m = m.at[rows, lo].add(1.0 - frac)
    m = m.at[rows, hi].add(frac)
    return m


def upsample_bilinear_2x(x):
    B, H, W, C = x.shape
    y = jnp.einsum("oh,bhwc->bowc", _interp_matrix_2x(H), x)
    y = jnp.einsum("pw,bowc->bopc", _interp_matrix_2x(W), y)
    return y


# ------------------------------- Up.forward -------------------------------- #
def up_forward(params, x1_nchw, x2_nchw, bilinear=False):
    x1 = jnp.transpose(x1_nchw, (0, 2, 3, 1)).astype(jnp.float32)   # NCHW -> NHWC
    x2 = jnp.transpose(x2_nchw, (0, 2, 3, 1)).astype(jnp.float32)
    if bilinear:
        x1u = upsample_bilinear_2x(x1)
    else:
        x1u = conv_transpose2x2(x1, params["wt"], params["bt"])
    dY = x2.shape[1] - x1u.shape[1]
    dX = x2.shape[2] - x1u.shape[2]
    x1u = jnp.pad(x1u, ((0, 0), (dY // 2, dY - dY // 2),
                        (dX // 2, dX - dX // 2), (0, 0)))
    x = jnp.concatenate([x2.astype(x1u.dtype), x1u], axis=-1)   # cat([x2, x1], dim=1)
    y = double_conv_fused(x, params["conv"])                    # (B, H, W, Cout) f32
    return jnp.transpose(y, (0, 3, 1, 2))                       # NHWC -> NCHW


# --------------------------- deterministic params --------------------------- #
def init_up_params(key, in_channels, out_channels, bilinear=False):
    keys = jax.random.split(key, 8)
    cin, cmid, cout = in_channels, out_channels, out_channels
    p = {"conv": dict(
        w1=jax.random.normal(keys[0], (3, 3, cin, cmid), jnp.float32) / jnp.sqrt(9.0 * cin),
        g1=1.0 + 0.1 * jax.random.normal(keys[1], (cmid,), jnp.float32),
        b1=0.1 * jax.random.normal(keys[2], (cmid,), jnp.float32),
        w2=jax.random.normal(keys[3], (3, 3, cmid, cout), jnp.float32) / jnp.sqrt(9.0 * cmid),
    )}
    if not bilinear:
        cup = in_channels // 2
        p["wt"] = (jax.random.normal(keys[4], (in_channels, cup, 2, 2), jnp.float32)
                   / jnp.sqrt(4.0 * in_channels))
        p["bt"] = 0.1 * jax.random.normal(keys[5], (cup,), jnp.float32)
    return p


# ----------------------------------- main ----------------------------------- #
if __name__ == "__main__":
    key = jax.random.PRNGKey(0)
    k_p1, k_p2, k_x1, k_x2, k_x1b = jax.random.split(key, 5)

    B, Cin, Cout = 2, 32, 16
    H1 = W1 = 8                      # x1 spatial; x2 is 2x that

    # --- bilinear=False (ConvTranspose2d) path: Up(32, 16, bilinear=False) ----
    params = init_up_params(k_p1, Cin, Cout, bilinear=False)
    x1 = jax.random.normal(k_x1, (B, Cin, H1, W1), jnp.float32)
    x2 = jax.random.normal(k_x2, (B, Cin // 2, 2 * H1, 2 * W1), jnp.float32)
    fwd = jax.jit(functools.partial(up_forward, params, bilinear=False))
    out = jax.block_until_ready(fwd(x1, x2))
    assert out.shape == (B, Cout, 2 * H1, 2 * W1), out.shape
    assert bool(jnp.all(jnp.isfinite(out)))

    # --- bilinear=True path (same fused DoubleConv Pallas kernel) -------------
    params_b = init_up_params(k_p2, Cin, Cout, bilinear=True)
    x1b = jax.random.normal(k_x1b, (B, Cin // 2, H1, W1), jnp.float32)
    fwd_b = jax.jit(functools.partial(up_forward, params_b, bilinear=True))
    out_b = jax.block_until_ready(fwd_b(x1b, x2))
    assert out_b.shape == (B, Cout, 2 * H1, 2 * W1), out_b.shape
    assert bool(jnp.all(jnp.isfinite(out_b)))

    print("KERNEL_OK")
</pallas_src>

<mosaic_0001>
module attributes {stable_mosaic.version = 11 : i64} {
  func.func @_matmul_bias_kernel(%arg0: i32, %arg1: memref<1x64x32xbf16, #tpu.memory_space<vmem>>, %arg2: memref<32x128xbf16, #tpu.memory_space<vmem>>, %arg3: memref<1x128xf32, #tpu.memory_space<vmem>>, %arg4: memref<1x64x128xbf16, #tpu.memory_space<vmem>>) attributes {dimension_semantics = [#tpu.dimension_semantics<parallel>], iteration_bounds = array<i64: 2>, scalar_prefetch = 0 : i64, scratch_operands = 0 : i64, tpu.core_type = #tpu.core_type<tc>, window_params = [{transform_indices = @transform_0, window_bounds = array<i64: 1, 64, 32>}, {pipeline_mode = #tpu.pipeline_mode<synchronous>, transform_indices = @transform_1, window_bounds = array<i64: 32, 128>}, {pipeline_mode = #tpu.pipeline_mode<synchronous>, transform_indices = @transform_2, window_bounds = array<i64: 1, 128>}, {transform_indices = @transform_3, window_bounds = array<i64: 1, 64, 128>}]} {
    %c0 = arith.constant 0 : index
    %c0_0 = arith.constant 0 : index
    %c0_1 = arith.constant 0 : index
    %0 = vector.load %arg1[%c0, %c0_0, %c0_1] : memref<1x64x32xbf16, #tpu.memory_space<vmem>>, vector<1x64x32xbf16>
    %1 = vector.shape_cast %0 : vector<1x64x32xbf16> to vector<64x32xbf16>
    %c0_2 = arith.constant 0 : index
    %c0_3 = arith.constant 0 : index
    %2 = vector.load %arg2[%c0_2, %c0_3] : memref<32x128xbf16, #tpu.memory_space<vmem>>, vector<32x128xbf16>
    %cst = arith.constant dense<0.000000e+00> : vector<64x128xf32>
    %3 = tpu.matmul %1, %2, %cst {dimension_numbers = #tpu.dot_dimension_numbers<[1], [0], [0], [1], [0, 0, 1, 1], [], []>} : vector<64x32xbf16>, vector<32x128xbf16>, vector<64x128xf32> -> vector<64x128xf32>
    %c0_4 = arith.constant 0 : index
    %c0_5 = arith.constant 0 : index
    %4 = vector.load %arg3[%c0_4, %c0_5] : memref<1x128xf32, #tpu.memory_space<vmem>>, vector<1x128xf32>
    %5 = vector.broadcast %4 : vector<1x128xf32> to vector<64x128xf32>
    %6 = arith.addf %3, %5 : vector<64x128xf32>
    %7 = arith.truncf %6 : vector<64x128xf32> to vector<64x128xbf16>
    %c0_6 = arith.constant 0 : index
    %c0_7 = arith.constant 0 : index
    %c0_8 = arith.constant 0 : index
    %8 = vector.load %arg4[%c0_6, %c0_7, %c0_8] : memref<1x64x128xbf16, #tpu.memory_space<vmem>>, vector<1x64x128xbf16>
    %9 = vector.shape_cast %8 : vector<1x64x128xbf16> to vector<64x128xbf16>
    %10 = vector.shape_cast %7 : vector<64x128xbf16> to vector<1x64x128xbf16>
    tpu.vector_store %arg4[%c0_6, %c0_7, %c0_8], %10 {strides = array<i32>} : memref<1x64x128xbf16, #tpu.memory_space<vmem>>, vector<1x64x128xbf16>,
    return
  }
  func.func @transform_0(%arg0: i32) -> (i32, i32, i32) {
    %c0_i32 = arith.constant 0 : i32
    %c0_i32_0 = arith.constant 0 : i32
    %c0_i32_1 = arith.constant 0 : i32
    return %arg0, %c0_i32, %c0_i32_0 : i32, i32, i32
  }
  func.func @transform_1(%arg0: i32) -> (i32, i32) {
    %c0_i32 = arith.constant 0 : i32
    %c0_i32_0 = arith.constant 0 : i32
    %c0_i32_1 = arith.constant 0 : i32
    return %c0_i32, %c0_i32_0 : i32, i32
  }
  func.func @transform_2(%arg0: i32) -> (i32, i32) {
    %c0_i32 = arith.constant 0 : i32
    %c0_i32_0 = arith.constant 0 : i32
    %c0_i32_1 = arith.constant 0 : i32
    return %c0_i32, %c0_i32_0 : i32, i32
  }
  func.func @transform_3(%arg0: i32) -> (i32, i32, i32) {
    %c0_i32 = arith.constant 0 : i32
    %c0_i32_0 = arith.constant 0 : i32
    %c0_i32_1 = arith.constant 0 : i32
    return %arg0, %c0_i32, %c0_i32_0 : i32, i32, i32
  }
}

module attributes {stable_mosaic.version = 11 : i64} {
  func.func @_double_conv_kernel(%arg0: i32, %arg1: memref<288x1xf32, #tpu.memory_space<vmem>>, %arg2: memref<1x342x32xbf16, #tpu.memory_space<vmem>>, %arg3: memref<9x32x16xbf16, #tpu.memory_space<vmem>>, %arg4: memref<1x16xf32, #tpu.memory_space<vmem>>, %arg5: memref<1x16xf32, #tpu.memory_space<vmem>>, %arg6: memref<9x16x128xbf16, #tpu.memory_space<vmem>>, %arg7: memref<1x288x128xf32, #tpu.memory_space<vmem>>, %arg8: memref<342x16xf32, #tpu.memory_space<vmem>>) attributes {dimension_semantics = [#tpu.dimension_semantics<parallel>], iteration_bounds = array<i64: 2>, scalar_prefetch = 0 : i64, scratch_operands = 1 : i64, tpu.core_type = #tpu.core_type<tc>, window_params = [{pipeline_mode = #tpu.pipeline_mode<synchronous>, transform_indices = @transform_0, window_bounds = array<i64: 288, 1>}, {transform_indices = @transform_1, window_bounds = array<i64: 1, 342, 32>}, {pipeline_mode = #tpu.pipeline_mode<synchronous>, transform_indices = @transform_2, window_bounds = array<i64: 9, 32, 16>}, {pipeline_mode = #tpu.pipeline_mode<synchronous>, transform_indices = @transform_3, window_bounds = array<i64: 1, 16>}, {pipeline_mode = #tpu.pipeline_mode<synchronous>, transform_indices = @transform_4, window_bounds = array<i64: 1, 16>}, {pipeline_mode = #tpu.pipeline_mode<synchronous>, transform_indices = @transform_5, window_bounds = array<i64: 9, 16, 128>}, {transform_indices = @transform_6, window_bounds = array<i64: 1, 288, 128>}]} {
    %c0 = arith.constant 0 : index
    %c0_0 = arith.constant 0 : index
    %0 = vector.load %arg1[%c0, %c0_0] : memref<288x1xf32, #tpu.memory_space<vmem>>, vector<288x1xf32>
    %c0_1 = arith.constant 0 : index
    %c0_2 = arith.constant 0 : index
    %c0_3 = arith.constant 0 : index
    %1 = vector.load %arg2[%c0_1, %c0_2, %c0_3] : memref<1x342x32xbf16, #tpu.memory_space<vmem>>, vector<1x342x32xbf16>
    %2 = vector.shape_cast %1 : vector<1x342x32xbf16> to vector<342x32xbf16>
    %3 = arith.extf %2 : vector<342x32xbf16> to vector<342x32xf32>
    %cst = arith.constant 0.000000e+00 : f32
    %4 = vector.broadcast %cst : f32 to vector<288x16xf32>
    %5 = vector.extract_strided_slice %3 {offsets = [0, 0], sizes = [288, 32], strides = [1, 1]} : vector<342x32xf32> to vector<288x32xf32>
    %6 = arith.truncf %5 : vector<288x32xf32> to vector<288x32xbf16>
    %c0_4 = arith.constant 0 : index
    %c0_5 = arith.constant 0 : index
    %c0_6 = arith.constant 0 : index
    %7 = vector.load %arg3[%c0_4, %c0_5, %c0_6] : memref<9x32x16xbf16, #tpu.memory_space<vmem>>, vector<1x32x16xbf16>
    %8 = vector.shape_cast %7 : vector<1x32x16xbf16> to vector<32x16xbf16>
    %cst_7 = arith.constant dense<0.000000e+00> : vector<288x16xf32>
    %9 = tpu.matmul %6, %8, %cst_7 {dimension_numbers = #tpu.dot_dimension_numbers<[1], [0], [0], [1], [0, 0, 1, 1], [], []>} : vector<288x32xbf16>, vector<32x16xbf16>, vector<288x16xf32> -> vector<288x16xf32>
    %10 = arith.addf %4, %9 : vector<288x16xf32>
    %11 = vector.extract_strided_slice %3 {offsets = [1, 0], sizes = [288, 32], strides = [1, 1]} : vector<342x32xf32> to vector<288x32xf32>
    %12 = arith.truncf %11 : vector<288x32xf32> to vector<288x32xbf16>
    %c1 = arith.constant 1 : index
    %c0_8 = arith.constant 0 : index
    %c0_9 = arith.constant 0 : index
    %13 = vector.load %arg3[%c1, %c0_8, %c0_9] : memref<9x32x16xbf16, #tpu.memory_space<vmem>>, vector<1x32x16xbf16>
    %14 = vector.shape_cast %13 : vector<1x32x16xbf16> to vector<32x16xbf16>
    %cst_10 = arith.constant dense<0.000000e+00> : vector<288x16xf32>
    %15 = tpu.matmul %12, %14, %cst_10 {dimension_numbers = #tpu.dot_dimension_numbers<[1], [0], [0], [1], [0, 0, 1, 1], [], []>} : vector<288x32xbf16>, vector<32x16xbf16>, vector<288x16xf32> -> vector<288x16xf32>
    %16 = arith.addf %10, %15 : vector<288x16xf32>
    %17 = vector.extract_strided_slice %3 {offsets = [2, 0], sizes = [288, 32], strides = [1, 1]} : vector<342x32xf32> to vector<288x32xf32>
    %18 = arith.truncf %17 : vector<288x32xf32> to vector<288x32xbf16>
    %c2 = arith.constant 2 : index
    %c0_11 = arith.constant 0 : index
    %c0_12 = arith.constant 0 : index
    %19 = vector.load %arg3[%c2, %c0_11, %c0_12] : memref<9x32x16xbf16, #tpu.memory_space<vmem>>, vector<1x32x16xbf16>
    %20 = vector.shape_cast %19 : vector<1x32x16xbf16> to vector<32x16xbf16>
    %cst_13 = arith.constant dense<0.000000e+00> : vector<288x16xf32>
    %21 = tpu.matmul %18, %20, %cst_13 {dimension_numbers = #tpu.dot_dimension_numbers<[1], [0], [0], [1], [0, 0, 1, 1], [], []>} : vector<288x32xbf16>, vector<32x16xbf16>, vector<288x16xf32> -> vector<288x16xf32>
    %22 = arith.addf %16, %21 : vector<288x16xf32>
    %23 = vector.extract_strided_slice %3 {offsets = [18, 0], sizes = [288, 32], strides = [1, 1]} : vector<342x32xf32> to vector<288x32xf32>
    %24 = arith.truncf %23 : vector<288x32xf32> to vector<288x32xbf16>
    %c3 = arith.constant 3 : index
    %c0_14 = arith.constant 0 : index
    %c0_15 = arith.constant 0 : index
    %25 = vector.load %arg3[%c3, %c0_14, %c0_15] : memref<9x32x16xbf16, #tpu.memory_space<vmem>>, vector<1x32x16xbf16>
    %26 = vector.shape_cast %25 : vector<1x32x16xbf16> to vector<32x16xbf16>
    %cst_16 = arith.constant dense<0.000000e+00> : vector<288x16xf32>
    %27 = tpu.matmul %24, %26, %cst_16 {dimension_numbers = #tpu.dot_dimension_numbers<[1], [0], [0], [1], [0, 0, 1, 1], [], []>} : vector<288x32xbf16>, vector<32x16xbf16>, vector<288x16xf32> -> vector<288x16xf32>
    %28 = arith.addf %22, %27 : vector<288x16xf32>
    %29 = vector.extract_strided_slice %3 {offsets = [19, 0], sizes = [288, 32], strides = [1, 1]} : vector<342x32xf32> to vector<288x32xf32>
    %30 = arith.truncf %29 : vector<288x32xf32> to vector<288x32xbf16>
    %c4 = arith.constant 4 : index
    %c0_17 = arith.constant 0 : index
    %c0_18 = arith.constant 0 : index
    %31 = vector.load %arg3[%c4, %c0_17, %c0_18] : memref<9x32x16xbf16, #tpu.memory_space<vmem>>, vector<1x32x16xbf16>
    %32 = vector.shape_cast %31 : vector<1x32x16xbf16> to vector<32x16xbf16>
    %cst_19 = arith.constant dense<0.000000e+00> : vector<288x16xf32>
    %33 = tpu.matmul %30, %32, %cst_19 {dimension_numbers = #tpu.dot_dimension_numbers<[1], [0], [0], [1], [0, 0, 1, 1], [], []>} : vector<288x32xbf16>, vector<32x16xbf16>, vector<288x16xf32> -> vector<288x16xf32>
    %34 = arith.addf %28, %33 : vector<288x16xf32>
    %35 = vector.extract_strided_slice %3 {offsets = [20, 0], sizes = [288, 32], strides = [1, 1]} : vector<342x32xf32> to vector<288x32xf32>
    %36 = arith.truncf %35 : vector<288x32xf32> to vector<288x32xbf16>
    %c5 = arith.constant 5 : index
    %c0_20 = arith.constant 0 : index
    %c0_21 = arith.constant 0 : index
    %37 = vector.load %arg3[%c5, %c0_20, %c0_21] : memref<9x32x16xbf16, #tpu.memory_space<vmem>>, vector<1x32x16xbf16>
    %38 = vector.shape_cast %37 : vector<1x32x16xbf16> to vector<32x16xbf16>
    %cst_22 = arith.constant dense<0.000000e+00> : vector<288x16xf32>
    %39 = tpu.matmul %36, %38, %cst_22 {dimension_numbers = #tpu.dot_dimension_numbers<[1], [0], [0], [1], [0, 0, 1, 1], [], []>} : vector<288x32xbf16>, vector<32x16xbf16>, vector<288x16xf32> -> vector<288x16xf32>
    %40 = arith.addf %34, %39 : vector<288x16xf32>
    %41 = vector.extract_strided_slice %3 {offsets = [36, 0], sizes = [288, 32], strides = [1, 1]} : vector<342x32xf32> to vector<288x32xf32>
    %42 = arith.truncf %41 : vector<288x32xf32> to vector<288x32xbf16>
    %c6 = arith.constant 6 : index
    %c0_23 = arith.constant 0 : index
    %c0_24 = arith.constant 0 : index
    %43 = vector.load %arg3[%c6, %c0_23, %c0_24] : memref<9x32x16xbf16, #tpu.memory_space<vmem>>, vector<1x32x16xbf16>
    %44 = vector.shape_cast %43 : vector<1x32x16xbf16> to vector<32x16xbf16>
    %cst_25 = arith.constant dense<0.000000e+00> : vector<288x16xf32>
    %45 = tpu.matmul %42, %44, %cst_25 {dimension_numbers = #tpu.dot_dimension_numbers<[1], [0], [0], [1], [0, 0, 1, 1], [], []>} : vector<288x32xbf16>, vector<32x16xbf16>, vector<288x16xf32> -> vector<288x16xf32>
    %46 = arith.addf %40, %45 : vector<288x16xf32>
    %47 = vector.extract_strided_slice %3 {offsets = [37, 0], sizes = [288, 32], strides = [1, 1]} : vector<342x32xf32> to vector<288x32xf32>
    %48 = arith.truncf %47 : vector<288x32xf32> to vector<288x32xbf16>
    %c7 = arith.constant 7 : index
    %c0_26 = arith.constant 0 : index
    %c0_27 = arith.constant 0 : index
    %49 = vector.load %arg3[%c7, %c0_26, %c0_27] : memref<9x32x16xbf16, #tpu.memory_space<vmem>>, vector<1x32x16xbf16>
    %50 = vector.shape_cast %49 : vector<1x32x16xbf16> to vector<32x16xbf16>
    %cst_28 = arith.constant dense<0.000000e+00> : vector<288x16xf32>
    %51 = tpu.matmul %48, %50, %cst_28 {dimension_numbers = #tpu.dot_dimension_numbers<[1], [0], [0], [1], [0, 0, 1, 1], [], []>} : vector<288x32xbf16>, vector<32x16xbf16>, vector<288x16xf32> -> vector<288x16xf32>
    %52 = arith.addf %46, %51 : vector<288x16xf32>
    %53 = vector.extract_strided_slice %3 {offsets = [38, 0], sizes = [288, 32], strides = [1, 1]} : vector<342x32xf32> to vector<288x32xf32>
    %54 = arith.truncf %53 : vector<288x32xf32> to vector<288x32xbf16>
    %c8 = arith.constant 8 : index
    %c0_29 = arith.constant 0 : index
    %c0_30 = arith.constant 0 : index
    %55 = vector.load %arg3[%c8, %c0_29, %c0_30] : memref<9x32x16xbf16, #tpu.memory_space<vmem>>, vector<1x32x16xbf16>
    %56 = vector.shape_cast %55 : vector<1x32x16xbf16> to vector<32x16xbf16>
    %cst_31 = arith.constant dense<0.000000e+00> : vector<288x16xf32>
    %57 = tpu.matmul %54, %56, %cst_31 {dimension_numbers = #tpu.dot_dimension_numbers<[1], [0], [0], [1], [0, 0, 1, 1], [], []>} : vector<288x32xbf16>, vector<32x16xbf16>, vector<288x16xf32> -> vector<288x16xf32>
    %58 = arith.addf %52, %57 : vector<288x16xf32>
    %59 = vector.broadcast %0 : vector<288x1xf32> to vector<288x16xf32>
    %60 = arith.mulf %58, %59 : vector<288x16xf32>
    %61 = vector.shape_cast %60 : vector<288x16xf32> to vector<1x288x16xf32>
    %cst_32 = arith.constant dense<0.000000e+00> : vector<1xf32>
    %62 = vector.multi_reduction <add>, %61, %cst_32 [1, 2] : vector<1x288x16xf32> to vector<1xf32>
    %63 = vector.shape_cast %62 : vector<1xf32> to vector<1x1x1xf32>
    %64 = vector.extract %63[0, 0, 0] : f32 from vector<1x1x1xf32>
    %65 = arith.mulf %60, %60 : vector<288x16xf32>
    %66 = vector.shape_cast %65 : vector<288x16xf32> to vector<1x288x16xf32>
    %cst_33 = arith.constant dense<0.000000e+00> : vector<1xf32>
    %67 = vector.multi_reduction <add>, %66, %cst_33 [1, 2] : vector<1x288x16xf32> to vector<1xf32>
    %68 = vector.shape_cast %67 : vector<1xf32> to vector<1x1x1xf32>
    %69 = vector.extract %68[0, 0, 0] : f32 from vector<1x1x1xf32>
    %cst_34 = arith.constant 4.096000e+03 : f32
    %70 = arith.divf %64, %cst_34 : f32
    %cst_35 = arith.constant 4.096000e+03 : f32
    %71 = arith.divf %69, %cst_35 : f32
    %72 = arith.mulf %70, %70 : f32
    %73 = arith.subf %71, %72 : f32
    %cst_36 = arith.constant 0.000000e+00 : f32
    %74 = arith.maximumf %73, %cst_36 : f32
    %cst_37 = arith.constant 9.99999974E-6 : f32
    %75 = arith.addf %74, %cst_37 : f32
    %76 = math.rsqrt %75 : f32
    %77 = vector.broadcast %70 : f32 to vector<288x16xf32>
    %78 = arith.subf %58, %77 : vector<288x16xf32>
    %79 = vector.broadcast %76 : f32 to vector<288x16xf32>
    %80 = arith.mulf %78, %79 : vector<288x16xf32>
    %c0_38 = arith.constant 0 : index
    %c0_39 = arith.constant 0 : index
    %81 = vector.load %arg4[%c0_38, %c0_39] : memref<1x16xf32, #tpu.memory_space<vmem>>, vector<1x16xf32>
    %82 = vector.broadcast %81 : vector<1x16xf32> to vector<288x16xf32>
    %83 = arith.mulf %80, %82 : vector<288x16xf32>
    %c0_40 = arith.constant 0 : index
    %c0_41 = arith.constant 0 : index
    %84 = vector.load %arg5[%c0_40, %c0_41] : memref<1x16xf32, #tpu.memory_space<vmem>>, vector<1x16xf32>
    %85 = vector.broadcast %84 : vector<1x16xf32> to vector<288x16xf32>
    %86 = arith.addf %83, %85 : vector<288x16xf32>
    %cst_42 = arith.constant 0.000000e+00 : f32
    %87 = vector.broadcast %cst_42 : f32 to vector<288x16xf32>
    %88 = arith.cmpf oge, %86, %87 : vector<288x16xf32>
    %cst_43 = arith.constant 0.00999999977 : f32
    %89 = vector.broadcast %cst_43 : f32 to vector<288x16xf32>
    %90 = arith.mulf %89, %86 : vector<288x16xf32>
    %91 = arith.select %88, %86, %90 : vector<288x16xi1>, vector<288x16xf32>
    %92 = vector.broadcast %0 : vector<288x1xf32> to vector<288x16xf32>
    %93 = arith.mulf %91, %92 : vector<288x16xf32>
    %cst_44 = arith.constant 0.000000e+00 : f32
    %94 = vector.broadcast %cst_44 : f32 to vector<342x16xf32>
    %c0_45 = arith.constant 0 : index
    %c0_46 = arith.constant 0 : index
    %95 = vector.load %arg8[%c0_45, %c0_46] : memref<342x16xf32, #tpu.memory_space<vmem>>, vector<342x16xf32>
    tpu.vector_store %arg8[%c0_45, %c0_46], %94 {strides = array<i32>} : memref<342x16xf32, #tpu.memory_space<vmem>>, vector<342x16xf32>,
    %c19 = arith.constant 19 : index
    %c0_47 = arith.constant 0 : index
    %96 = vector.load %arg8[%c19, %c0_47] : memref<342x16xf32, #tpu.memory_space<vmem>>, vector<288x16xf32>
    tpu.vector_store %arg8[%c19, %c0_47], %93 {strides = array<i32>} : memref<342x16xf32, #tpu.memory_space<vmem>>, vector<288x16xf32>,
    %c0_48 = arith.constant 0 : index
    %c0_49 = arith.constant 0 : index
    %97 = vector.load %arg8[%c0_48, %c0_49] : memref<342x16xf32, #tpu.memory_space<vmem>>, vector<342x16xf32>
    %cst_50 = arith.constant 0.000000e+00 : f32
    %98 = vector.broadcast %cst_50 : f32 to vector<288x128xf32>
    %99 = vector.extract_strided_slice %97 {offsets = [0, 0], sizes = [288, 16], strides = [1, 1]} : vector<342x16xf32> to vector<288x16xf32>
    %100 = arith.truncf %99 : vector<288x16xf32> to vector<288x16xbf16>
    %c0_51 = arith.constant 0 : index
    %c0_52 = arith.constant 0 : index
    %c0_53 = arith.constant 0 : index
    %101 = vector.load %arg6[%c0_51, %c0_52, %c0_53] : memref<9x16x128xbf16, #tpu.memory_space<vmem>>, vector<1x16x128xbf16>
    %102 = vector.shape_cast %101 : vector<1x16x128xbf16> to vector<16x128xbf16>
    %cst_54 = arith.constant dense<0.000000e+00> : vector<288x128xf32>
    %103 = tpu.matmul %100, %102, %cst_54 {dimension_numbers = #tpu.dot_dimension_numbers<[1], [0], [0], [1], [0, 0, 1, 1], [], []>} : vector<288x16xbf16>, vector<16x128xbf16>, vector<288x128xf32> -> vector<288x128xf32>
    %104 = arith.addf %98, %103 : vector<288x128xf32>
    %105 = vector.extract_strided_slice %97 {offsets = [1, 0], sizes = [288, 16], strides = [1, 1]} : vector<342x16xf32> to vector<288x16xf32>
    %106 = arith.truncf %105 : vector<288x16xf32> to vector<288x16xbf16>
    %c1_55 = arith.constant 1 : index
    %c0_56 = arith.constant 0 : index
    %c0_57 = arith.constant 0 : index
    %107 = vector.load %arg6[%c1_55, %c0_56, %c0_57] : memref<9x16x128xbf16, #tpu.memory_space<vmem>>, vector<1x16x128xbf16>
    %108 = vector.shape_cast %107 : vector<1x16x128xbf16> to vector<16x128xbf16>
    %cst_58 = arith.constant dense<0.000000e+00> : vector<288x128xf32>
    %109 = tpu.matmul %106, %108, %cst_58 {dimension_numbers = #tpu.dot_dimension_numbers<[1], [0], [0], [1], [0, 0, 1, 1], [], []>} : vector<288x16xbf16>, vector<16x128xbf16>, vector<288x128xf32> -> vector<288x128xf32>
    %110 = arith.addf %104, %109 : vector<288x128xf32>
    %111 = vector.extract_strided_slice %97 {offsets = [2, 0], sizes = [288, 16], strides = [1, 1]} : vector<342x16xf32> to vector<288x16xf32>
    %112 = arith.truncf %111 : vector<288x16xf32> to vector<288x16xbf16>
    %c2_59 = arith.constant 2 : index
    %c0_60 = arith.constant 0 : index
    %c0_61 = arith.constant 0 : index
    %113 = vector.load %arg6[%c2_59, %c0_60, %c0_61] : memref<9x16x128xbf16, #tpu.memory_space<vmem>>, vector<1x16x128xbf16>
    %114 = vector.shape_cast %113 : vector<1x16x128xbf16> to vector<16x128xbf16>
    %cst_62 = arith.constant dense<0.000000e+00> : vector<288x128xf32>
    %115 = tpu.matmul %112, %114, %cst_62 {dimension_numbers = #tpu.dot_dimension_numbers<[1], [0], [0], [1], [0, 0, 1, 1], [], []>} : vector<288x16xbf16>, vector<16x128xbf16>, vector<288x128xf32> -> vector<288x128xf32>
    %116 = arith.addf %110, %115 : vector<288x128xf32>
    %117 = vector.extract_strided_slice %97 {offsets = [18, 0], sizes = [288, 16], strides = [1, 1]} : vector<342x16xf32> to vector<288x16xf32>
    %118 = arith.truncf %117 : vector<288x16xf32> to vector<288x16xbf16>
    %c3_63 = arith.constant 3 : index
    %c0_64 = arith.constant 0 : index
    %c0_65 = arith.constant 0 : index
    %119 = vector.load %arg6[%c3_63, %c0_64, %c0_65] : memref<9x16x128xbf16, #tpu.memory_space<vmem>>, vector<1x16x128xbf16>
    %120 = vector.shape_cast %119 : vector<1x16x128xbf16> to vector<16x128xbf16>
    %cst_66 = arith.constant dense<0.000000e+00> : vector<288x128xf32>
    %121 = tpu.matmul %118, %120, %cst_66 {dimension_numbers = #tpu.dot_dimension_numbers<[1], [0], [0], [1], [0, 0, 1, 1], [], []>} : vector<288x16xbf16>, vector<16x128xbf16>, vector<288x128xf32> -> vector<288x128xf32>
    %122 = arith.addf %116, %121 : vector<288x128xf32>
    %123 = vector.extract_strided_slice %97 {offsets = [19, 0], sizes = [288, 16], strides = [1, 1]} : vector<342x16xf32> to vector<288x16xf32>
    %124 = arith.truncf %123 : vector<288x16xf32> to vector<288x16xbf16>
    %c4_67 = arith.constant 4 : index
    %c0_68 = arith.constant 0 : index
    %c0_69 = arith.constant 0 : index
    %125 = vector.load %arg6[%c4_67, %c0_68, %c0_69] : memref<9x16x128xbf16, #tpu.memory_space<vmem>>, vector<1x16x128xbf16>
    %126 = vector.shape_cast %125 : vector<1x16x128xbf16> to vector<16x128xbf16>
    %cst_70 = arith.constant dense<0.000000e+00> : vector<288x128xf32>
    %127 = tpu.matmul %124, %126, %cst_70 {dimension_numbers = #tpu.dot_dimension_numbers<[1], [0], [0], [1], [0, 0, 1, 1], [], []>} : vector<288x16xbf16>, vector<16x128xbf16>, vector<288x128xf32> -> vector<288x128xf32>
    %128 = arith.addf %122, %127 : vector<288x128xf32>
    %129 = vector.extract_strided_slice %97 {offsets = [20, 0], sizes = [288, 16], strides = [1, 1]} : vector<342x16xf32> to vector<288x16xf32>
    %130 = arith.truncf %129 : vector<288x16xf32> to vector<288x16xbf16>
    %c5_71 = arith.constant 5 : index
    %c0_72 = arith.constant 0 : index
    %c0_73 = arith.constant 0 : index
    %131 = vector.load %arg6[%c5_71, %c0_72, %c0_73] : memref<9x16x128xbf16, #tpu.memory_space<vmem>>, vector<1x16x128xbf16>
    %132 = vector.shape_cast %131 : vector<1x16x128xbf16> to vector<16x128xbf16>
    %cst_74 = arith.constant dense<0.000000e+00> : vector<288x128xf32>
    %133 = tpu.matmul %130, %132, %cst_74 {dimension_numbers = #tpu.dot_dimension_numbers<[1], [0], [0], [1], [0, 0, 1, 1], [], []>} : vector<288x16xbf16>, vector<16x128xbf16>, vector<288x128xf32> -> vector<288x128xf32>
    %134 = arith.addf %128, %133 : vector<288x128xf32>
    %135 = vector.extract_strided_slice %97 {offsets = [36, 0], sizes = [288, 16], strides = [1, 1]} : vector<342x16xf32> to vector<288x16xf32>
    %136 = arith.truncf %135 : vector<288x16xf32> to vector<288x16xbf16>
    %c6_75 = arith.constant 6 : index
    %c0_76 = arith.constant 0 : index
    %c0_77 = arith.constant 0 : index
    %137 = vector.load %arg6[%c6_75, %c0_76, %c0_77] : memref<9x16x128xbf16, #tpu.memory_space<vmem>>, vector<1x16x128xbf16>
    %138 = vector.shape_cast %137 : vector<1x16x128xbf16> to vector<16x128xbf16>
    %cst_78 = arith.constant dense<0.000000e+00> : vector<288x128xf32>
    %139 = tpu.matmul %136, %138, %cst_78 {dimension_numbers = #tpu.dot_dimension_numbers<[1], [0], [0], [1], [0, 0, 1, 1], [], []>} : vector<288x16xbf16>, vector<16x128xbf16>, vector<288x128xf32> -> vector<288x128xf32>
    %140 = arith.addf %134, %139 : vector<288x128xf32>
    %141 = vector.extract_strided_slice %97 {offsets = [37, 0], sizes = [288, 16], strides = [1, 1]} : vector<342x16xf32> to vector<288x16xf32>
    %142 = arith.truncf %141 : vector<288x16xf32> to vector<288x16xbf16>
    %c7_79 = arith.constant 7 : index
    %c0_80 = arith.constant 0 : index
    %c0_81 = arith.constant 0 : index
    %143 = vector.load %arg6[%c7_79, %c0_80, %c0_81] : memref<9x16x128xbf16, #tpu.memory_space<vmem>>, vector<1x16x128xbf16>
    %144 = vector.shape_cast %143 : vector<1x16x128xbf16> to vector<16x128xbf16>
    %cst_82 = arith.constant dense<0.000000e+00> : vector<288x128xf32>
    %145 = tpu.matmul %142, %144, %cst_82 {dimension_numbers = #tpu.dot_dimension_numbers<[1], [0], [0], [1], [0, 0, 1, 1], [], []>} : vector<288x16xbf16>, vector<16x128xbf16>, vector<288x128xf32> -> vector<288x128xf32>
    %146 = arith.addf %140, %145 : vector<288x128xf32>
    %147 = vector.extract_strided_slice %97 {offsets = [38, 0], sizes = [288, 16], strides = [1, 1]} : vector<342x16xf32> to vector<288x16xf32>
    %148 = arith.truncf %147 : vector<288x16xf32> to vector<288x16xbf16>
    %c8_83 = arith.constant 8 : index
    %c0_84 = arith.constant 0 : index
    %c0_85 = arith.constant 0 : index
    %149 = vector.load %arg6[%c8_83, %c0_84, %c0_85] : memref<9x16x128xbf16, #tpu.memory_space<vmem>>, vector<1x16x128xbf16>
    %150 = vector.shape_cast %149 : vector<1x16x128xbf16> to vector<16x128xbf16>
    %cst_86 = arith.constant dense<0.000000e+00> : vector<288x128xf32>
    %151 = tpu.matmul %148, %150, %cst_86 {dimension_numbers = #tpu.dot_dimension_numbers<[1], [0], [0], [1], [0, 0, 1, 1], [], []>} : vector<288x16xbf16>, vector<16x128xbf16>, vector<288x128xf32> -> vector<288x128xf32>
    %152 = arith.addf %146, %151 : vector<288x128xf32>
    %cst_87 = arith.constant 0.000000e+00 : f32
    %153 = vector.broadcast %cst_87 : f32 to vector<288x128xf32>
    %154 = arith.cmpf oge, %152, %153 : vector<288x128xf32>
    %cst_88 = arith.constant 0.00999999977 : f32
    %155 = vector.broadcast %cst_88 : f32 to vector<288x128xf32>
    %156 = arith.mulf %155, %152 : vector<288x128xf32>
    %157 = arith.select %154, %152, %156 : vector<288x128xi1>, vector<288x128xf32>
    %c0_89 = arith.constant 0 : index
    %c0_90 = arith.constant 0 : index
    %c0_91 = arith.constant 0 : index
    %158 = vector.load %arg7[%c0_89, %c0_90, %c0_91] : memref<1x288x128xf32, #tpu.memory_space<vmem>>, vector<1x288x128xf32>
    %159 = vector.shape_cast %158 : vector<1x288x128xf32> to vector<288x128xf32>
    %160 = vector.shape_cast %157 : vector<288x128xf32> to vector<1x288x128xf32>
    tpu.vector_store %arg7[%c0_89, %c0_90, %c0_91], %160 {strides = array<i32>} : memref<1x288x128xf32, #tpu.memory_space<vmem>>, vector<1x288x128xf32>,
    return
  }
  func.func @transform_0(%arg0: i32) -> (i32, i32) {
    %c0_i32 = arith.constant 0 : i32
    %c0_i32_0 = arith.constant 0 : i32
    %c0_i32_1 = arith.constant 0 : i32
    return %c0_i32, %c0_i32_0 : i32, i32
  }
  func.func @transform_1(%arg0: i32) -> (i32, i32, i32) {
    %c0_i32 = arith.constant 0 : i32
    %c0_i32_0 = arith.constant 0 : i32
    %c0_i32_1 = arith.constant 0 : i32
    return %arg0, %c0_i32, %c0_i32_0 : i32, i32, i32
  }
  func.func @transform_2(%arg0: i32) -> (i32, i32, i32) {
    %c0_i32 = arith.constant 0 : i32
    %c0_i32_0 = arith.constant 0 : i32
    %c0_i32_1 = arith.constant 0 : i32
    %c0_i32_2 = arith.constant 0 : i32
    return %c0_i32, %c0_i32_0, %c0_i32_1 : i32, i32, i32
  }
  func.func @transform_3(%arg0: i32) -> (i32, i32) {
    %c0_i32 = arith.constant 0 : i32
    %c0_i32_0 = arith.constant 0 : i32
    %c0_i32_1 = arith.constant 0 : i32
    return %c0_i32, %c0_i32_0 : i32, i32
  }
  func.func @transform_4(%arg0: i32) -> (i32, i32) {
    %c0_i32 = arith.constant 0 : i32
    %c0_i32_0 = arith.constant 0 : i32
    %c0_i32_1 = arith.constant 0 : i32
    return %c0_i32, %c0_i32_0 : i32, i32
  }
  func.func @transform_5(%arg0: i32) -> (i32, i32, i32) {
    %c0_i32 = arith.constant 0 : i32
    %c0_i32_0 = arith.constant 0 : i32
    %c0_i32_1 = arith.constant 0 : i32
    %c0_i32_2 = arith.constant 0 : i32
    return %c0_i32, %c0_i32_0, %c0_i32_1 : i32, i32, i32
  }
  func.func @transform_6(%arg0: i32) -> (i32, i32, i32) {
    %c0_i32 = arith.constant 0 : i32
    %c0_i32_0 = arith.constant 0 : i32
    %c0_i32_1 = arith.constant 0 : i32
    return %arg0, %c0_i32, %c0_i32_0 : i32, i32, i32
  }
}

</mosaic_0001>

<llo_original>
// kernel: up_forward.2
$region0: #{up_forward.2}
  #allocation0 [shape = 'u32[]', space=smem, size = 0x4, offset = 0x4, fixed_abs, tag = 'smem constant byte address 0x4 - core index']
  #allocation1 [shape = 'u32[144,128]{1,0:T(1,128)}', space=vmem, size = 0x12000, scoped, tag = 'internal scratch']
  %s0 = inlined_call_operand.vmem [shape: bf16[2,64,32], index: 0, kind: input, shape index: {}]
  %s1 = inlined_call_operand.vmem [shape: bf16[32,128], index: 1, kind: input, shape index: {}]
  %s2 = inlined_call_operand.vmem [shape: f32[1,128], index: 2, kind: input, shape index: {}]
  %s3 = inlined_call_operand.vmem [shape: bf16[2,64,128], index: 3, kind: output, shape index: {}]
  %s4 = sld [smem:[#allocation0]]
  $region45: #{up_forward.2} parent=0
    _
  %s6 = ssub.s32 1, %s4
  %s7 = scalar_select 0, %s6, %s4
  loop: start=0, step=1, limit=4
  $region2: #{up_forward.2} parent=0 // loop_pre_header
    _
  $region3: #{up_forward.2} parent=0 // loop_header
    %s9 = sphi 0, %s13
    %p10 = scmp.ge.s32.totalorder %s9, 4
    %s19 = sphi 0, %s21
    %s22 = sphi 0, %s19
    %s23 = sphi 0, %s22
    %s39 = sphi 0, %s23
    %s43 = sphi 0, %s43
    %s45 = sphi 0, %s43
    %s46 = sphi 0, %s45
    %s60 = sphi 0, %s46
    %s64 = sphi 0, %s64
    %s66 = sphi 0, %s64
    %s67 = sphi 0, %s66
    %s81 = sphi 0, %s67
    %s87 = sphi 0, %s89
    %s90 = sphi 0, %s87
    %s91 = sphi 0, %s90
    %s107 = sphi 0, %s91
  $region4: #{up_forward.2} parent=0 // loop_header_branch
    %12 = sbr.rel (%p10) target = $region8
  $region5: #{up_forward.2} parent=0 // loop_body
    %s14 = ssub.s32 %s9, 1
    %s15 = ssub.s32 %s9, 2
    %s16 = sadd.s32 %s9, 1
    %s17 = ssub.s32 %s9, %s16
    %p18 = scmp.eq.s32.totalorder %s17, 0
    %s20 = sadd.s32 %s19, 1
    %s21 = scalar_select %p18, %s19, %s20
    %p24 = pneg %p18
    %p25 = scmp.eq.s32.totalorder %s9, 1
    %p26 = por %p24, %p25
    %p27 = scmp.ne.s32.totalorder %s19, %s22
    %p28 = scmp.eq.s32.totalorder %s9, 0
    %p29 = por %p27, %p28
    %p30 = scmp.ne.s32.totalorder %s19, %s22
    %p31 = scmp.eq.s32.totalorder %s14, 1
    %p32 = por %p30, %p31
    %p33 = scmp.ne.s32.totalorder %s22, %s23
    %p34 = scmp.eq.s32.totalorder %s14, 0
    %p35 = por %p33, %p34
    %p36 = scmp.ne.s32.totalorder %s22, %s23
    %p37 = scmp.eq.s32.totalorder %s15, 1
    %p38 = por %p36, %p37
    %p40 = scmp.ne.s32.totalorder %s23, %s39
    %p41 = scmp.eq.s32.totalorder %s15, 0
    %p42 = por %p40, %p41
    %s44 = sadd.s32 %s43, 1
    %p47 = scmp.eq.s32.totalorder %s9, 1
    %p48 = scmp.ne.s32.totalorder %s43, %s45
    %p49 = scmp.eq.s32.totalorder %s9, 0
    %p50 = por %p48, %p49
    %p51 = scmp.ne.s32.totalorder %s43, %s45
    %p52 = scmp.eq.s32.totalorder %s14, 1
    %p53 = por %p51, %p52
    %p54 = scmp.ne.s32.totalorder %s45, %s46
    %p55 = scmp.eq.s32.totalorder %s14, 0
    %p56 = por %p54, %p55
    %p57 = scmp.ne.s32.totalorder %s45, %s46
    %p58 = scmp.eq.s32.totalorder %s15, 1
    %p59 = por %p57, %p58
    %p61 = scmp.ne.s32.totalorder %s46, %s60
    %p62 = scmp.eq.s32.totalorder %s15, 0
    %p63 = por %p61, %p62
    %s65 = sadd.s32 %s64, 1
    %p68 = scmp.eq.s32.totalorder %s9, 1
    %p69 = scmp.ne.s32.totalorder %s64, %s66
    %p70 = scmp.eq.s32.totalorder %s9, 0
    %p71 = por %p69, %p70
    %p72 = scmp.ne.s32.totalorder %s64, %s66
    %p73 = scmp.eq.s32.totalorder %s14, 1
    %p74 = por %p72, %p73
    %p75 = scmp.ne.s32.totalorder %s66, %s67
    %p76 = scmp.eq.s32.totalorder %s14, 0
    %p77 = por %p75, %p76
    %p78 = scmp.ne.s32.totalorder %s66, %s67
    %p79 = scmp.eq.s32.totalorder %s15, 1
    %p80 = por %p78, %p79
    %p82 = scmp.ne.s32.totalorder %s67, %s81
    %p83 = scmp.eq.s32.totalorder %s15, 0
    %p84 = por %p82, %p83
    %s85 = ssub.s32 %s9, %s16
    %p86 = scmp.eq.s32.totalorder %s85, 0
    %s88 = sadd.s32 %s87, 1
    %s89 = scalar_select %p86, %s87, %s88
    %p92 = pneg %p86
    %p93 = scmp.eq.s32.totalorder %s9, 1
    %p94 = por %p92, %p93
    %p95 = scmp.ne.s32.totalorder %s87, %s90
    %p96 = scmp.eq.s32.totalorder %s9, 0
    %p97 = por %p95, %p96
    %p98 = scmp.ne.s32.totalorder %s87, %s90
    %p99 = scmp.eq.s32.totalorder %s14, 1
    %p100 = por %p98, %p99
    %p101 = scmp.ne.s32.totalorder %s90, %s91
    %p102 = scmp.eq.s32.totalorder %s14, 0
    %p103 = por %p101, %p102
    %p104 = scmp.ne.s32.totalorder %s90, %s91
    %p105 = scmp.eq.s32.totalorder %s15, 1
    %p106 = por %p104, %p105
    %p108 = scmp.ne.s32.totalorder %s91, %s107
    %p109 = scmp.eq.s32.totalorder %s15, 0
    %p110 = por %p108, %p109
    %p111 = scmp.le.s32.totalorder 1, %s9
    %p112 = scmp.lt.s32.totalorder %s9, 3
    %p113 = pnand %p111, %p112
    %p114 = pneg %p113
    // Predicated region
    $region9: #{up_forward.2} parent=5 // pred_check
      _
    $region10: #{up_forward.2} parent=5 // pred_check_branch
      %116 = sbr.rel (%p113) target = $region12
    $region11: #{up_forward.2} parent=5 // pred_region
      %s117 = ssub.s32 %s9, 1
      // Predicated region
      $region13: #{up_forward.2} parent=11 // pred_check
        %p118 = pneg %p56
      $region14: #{up_forward.2} parent=11 // pred_check_branch
        %120 = sbr.rel (%p118) target = $region16
      $region15: #{up_forward.2} parent=11 // pred_region
        _
      $region16: #{up_forward.2} parent=11 // pred_fallthru
        _
      // Predicated region
      $region17: #{up_forward.2} parent=11 // pred_check
        %p121 = pneg %p77
      $region18: #{up_forward.2} parent=11 // pred_check_branch
        %123 = sbr.rel (%p121) target = $region20
      $region19: #{up_forward.2} parent=11 // pred_region
        _
      $region20: #{up_forward.2} parent=11 // pred_fallthru
        _
    $region12: #{up_forward.2} parent=5 // pred_fallthru
      _
    %p124 = scmp.lt.s32.totalorder %s9, 2
    // Predicated region
    $region21: #{up_forward.2} parent=5 // pred_check
      %p125 = pneg %p124
    $region22: #{up_forward.2} parent=5 // pred_check_branch
      %127 = sbr.rel (%p125) target = $region24
    $region23: #{up_forward.2} parent=5 // pred_region
      // Predicated region
      $region25: #{up_forward.2} parent=23 // pred_check
        %p128 = pneg %p29
      $region26: #{up_forward.2} parent=23 // pred_check_branch
        %130 = sbr.rel (%p128) target = $region28
      $region27: #{up_forward.2} parent=23 // pred_region
        %p131 = scmp.lt.s32.totalorder %s9, 1
        %s132 = scalar_select %p131, %s9, 1
        %s133 = smul.addr %s132, 8
        %s134 = smul.addr %s133, 4
        %s135 = scalar_lea.vmem %s0, %s134
      $region28: #{up_forward.2} parent=23 // pred_fallthru
        _
    $region24: #{up_forward.2} parent=5 // pred_fallthru
      _
    %p136 = scmp.le.s32.totalorder 1, %s9
    %p137 = scmp.lt.s32.totalorder %s9, 3
    %p138 = pnand %p136, %p137
    %p139 = pneg %p138
    // Predicated region
    $region29: #{up_forward.2} parent=5 // pred_check
      _
    $region30: #{up_forward.2} parent=5 // pred_check_branch
      %141 = sbr.rel (%p138) target = $region32
    $region31: #{up_forward.2} parent=5 // pred_region
      %s142 = ssub.s32 %s9, 1
      %p143 = scmp.lt.s32.totalorder %s14, 1
      %s144 = scalar_select %p143, %s14, 1
      %s145 = smul.addr %s144, 8
      %s146 = smul.addr %s145, 4
      %s147 = scalar_lea.vmem %s0, %s146
      %p148 = pneg %p35
      %p149 = pneg %p32
      %p150 = pneg %p56
      %p151 = pneg %p53
      %p152 = pneg %p77
      %p153 = pneg %p74
      %p154 = pneg %p103
      %p155 = pneg %p100
      %p156 = scmp.lt.s32.totalorder %s14, 1
      %s157 = scalar_select %p156, %s14, 1
      %s158 = smul.addr %s157, 8
      %s159 = smul.addr %s158, 4
      %s160 = scalar_lea.vmem %s3, %s159
      %p161 = scmp.lt.s32.totalorder %s14, 1
      %s162 = scalar_select %p161, %s14, 1
      %s163 = smul.addr %s162, 8
      %s164 = smul.addr %s163, 4
      %s165 = scalar_lea.vmem %s0, %s164
      %p166 = scmp.lt.s32.totalorder %s14, 1
      %s167 = scalar_select %p166, %s14, 1
      %s168 = smul.addr %s167, 8
      %s169 = smul.addr %s168, 4
      %s170 = scalar_lea.vmem %s3, %s169
      %v172 = vld [vmem:[%s165] sm:$0xf]
      %v173 = vld [vmem:[%s165 + $0x4] sm:$0xf]
      %v174 = vld [vmem:[%s165 + $0x8] sm:$0xf]
      %v175 = vld [vmem:[%s165 + $0xc] sm:$0xf]
      %v176 = vld [vmem:[%s165 + $0x10] sm:$0xf]
      %v177 = vld [vmem:[%s165 + $0x14] sm:$0xf]
      %v178 = vld [vmem:[%s165 + $0x18] sm:$0xf]
      %v179 = vld [vmem:[%s165 + $0x1c] sm:$0xf]
      %v180 = vld [vmem:[%s1] sm:$0xf]
      %v181 = vld [vmem:[%s1 + $0x4] sm:$0xf]
      %v182 = vld [vmem:[%s1 + $0x8] sm:$0xf]
      %v183 = vld [vmem:[%s1 + $0xc] sm:$0xf]
      %v184 = vld [vmem:[%s2] sm:$0x1]
      %v186 = vlaneseq
      %v187 = vshrl.u32 %v186, 7
      %v188 = vsub.s32 0, %v187
      %v189 = vrot.slane %v184, %v188
      %v199 = vunpack.c.l.b16 %v172
      %v200 = vunpack.c.l.b16 %v173
      %v201 = vunpack.c.l.b16 %v174
      %v202 = vunpack.c.l.b16 %v175
      %v203 = vunpack.c.l.b16 %v176
      %v204 = vunpack.c.l.b16 %v177
      %v205 = vunpack.c.l.b16 %v178
      %v206 = vunpack.c.l.b16 %v179
      %v207 = vpack.c.b16 %v200, %v199
      %v208 = vpack.c.b16 %v202, %v201
      %v209 = vpack.c.b16 %v204, %v203
      %v210 = vpack.c.b16 %v206, %v205
      %v215 = vunpack.c.l.b16 %v180
      %v216 = vunpack.c.l.b16 %v181
      %v217 = vunpack.c.l.b16 %v182
      %v218 = vunpack.c.l.b16 %v183
      %v219 = vpack.c.b16 %v216, %v215
      %v220 = vpack.c.b16 %v218, %v217
      %vm223 = vcmask 261120
      %v225 = vsel %vm223, %v207, 0
      %v228 = vsel %vm223, %v208, 0
      %v231 = vsel %vm223, %v209, 0
      %v234 = vsel %vm223, %v210, 0
      %236 = vmatprep.subr.bf16.mxu0 0
      %237 = vmatpush1.bf16.msra.mxu0 %v219
      %238 = vmatprep.subr.bf16.mxu0 0
      %239 = vmatpush1.bf16.msra.mxu0 %v220
      %240 = vmatprep.subr.bf16.mxu0 0
      %241 = vmatpush1.bf16.msra.mxu0 0
      %242 = vmatprep.subr.bf16.mxu0 0
      %243 = vmatpush1.bf16.msra.mxu0 0
      %244 = vmatprep.subr.bf16.mxu0 0
      %245 = vmatpush1.bf16.msra.mxu0 0
      %246 = vmatprep.subr.bf16.mxu0 0
      %247 = vmatpush1.bf16.msra.mxu0 0
      %248 = vmatprep.subr.bf16.mxu0 0
      %249 = vmatpush1.bf16.msra.mxu0 0
      %250 = vmatprep.subr.bf16.mxu0 0
      %251 = vmatpush1.bf16.msra.mxu0 0
      %252 = vmatprep.subr.bf16.mxu0 0
      %253 = vmatpush1.bf16.msra.mxu0 0
      %254 = vmatprep.subr.bf16.mxu0 0
      %255 = vmatpush1.bf16.msra.mxu0 0
      %256 = vmatprep.subr.bf16.mxu0 0
      %257 = vmatpush1.bf16.msra.mxu0 0
      %258 = vmatprep.subr.bf16.mxu0 0
      %259 = vmatpush1.bf16.msra.mxu0 0
      %260 = vmatprep.subr.bf16.mxu0 0
      %261 = vmatpush1.bf16.msra.mxu0 0
      %262 = vmatprep.subr.bf16.mxu0 0
      %263 = vmatpush1.bf16.msra.mxu0 0
      %264 = vmatprep.subr.bf16.mxu0 0
      %265 = vmatpush1.bf16.msra.mxu0 0
      %266 = vmatprep.subr.bf16.mxu0 0
      %267 = vmatpush1.bf16.msra.mxu0 0
      %268 = vmatprep.mubr.bf16.mxu0 0
      %269 = vmatmul.mubr.bf16.gmra.mrb[0].mxu0 %v225
      %v270 = vpop.f32.mrb[0].mxu0
      %v271 = vadd.f32 %v189, %v270
      %v272 = vpop.f32.mrb[0].mxu0
      %v273 = vpop.f32.mrb[0].mxu0
      %v274 = vadd.f32 %v189, %v273
      %v275 = vpop.f32.mrb[0].mxu0
      %276 = vmatprep.mubr.bf16.mxu0 0
      %277 = vmatmul.mubr.bf16.gmra.mrb[0].mxu0 %v228
      %v278 = vpop.f32.mrb[0].mxu0
      %v279 = vadd.f32 %v189, %v278
      %v280 = vpop.f32.mrb[0].mxu0
      %v281 = vpop.f32.mrb[0].mxu0
      %v282 = vadd.f32 %v189, %v281
      %v283 = vpop.f32.mrb[0].mxu0
      %284 = vmatprep.mubr.bf16.mxu0 0
      %285 = vmatmul.mubr.bf16.gmra.mrb[0].mxu0 %v231
      %v286 = vpop.f32.mrb[0].mxu0
      %v287 = vadd.f32 %v189, %v286
      %v288 = vpop.f32.mrb[0].mxu0
      %v289 = vpop.f32.mrb[0].mxu0
      %v290 = vadd.f32 %v189, %v289
      %v291 = vpop.f32.mrb[0].mxu0
      %292 = vmatprep.mubr.bf16.mxu0 0
      %293 = vmatmul.mubr.bf16.gmra.mrb[0].mxu0 %v234
      %v294 = vpop.f32.mrb[0].mxu0
      %v295 = vadd.f32 %v189, %v294
      %v296 = vpop.f32.mrb[0].mxu0
      %v297 = vpop.f32.mrb[0].mxu0
      %v298 = vadd.f32 %v189, %v297
      %v299 = vpop.f32.mrb[0].mxu0
      %300 = vdwg.mxu0
      %v301 = vpack.c.bf16 %v274, %v271
      %v302 = vpack.c.bf16 %v282, %v279
      %v303 = vpack.c.bf16 %v290, %v287
      %v304 = vpack.c.bf16 %v298, %v295
      %v309 = vunpack.c.l.b16 %v301
      %v310 = vunpack.c.h.b16 %v301
      %v311 = vunpack.c.l.b16 %v302
      %v312 = vunpack.c.h.b16 %v302
      %v313 = vunpack.c.l.b16 %v303
      %v314 = vunpack.c.h.b16 %v303
      %v315 = vunpack.c.l.b16 %v304
      %v316 = vunpack.c.h.b16 %v304
      %v317 = vpack.c.b16 %v309, %v309
      %v318 = vpack.c.b16 %v310, %v310
      %v319 = vpack.c.b16 %v311, %v311
      %v320 = vpack.c.b16 %v312, %v312
      %v321 = vpack.c.b16 %v313, %v313
      %v322 = vpack.c.b16 %v314, %v314
      %v323 = vpack.c.b16 %v315, %v315
      %v324 = vpack.c.b16 %v316, %v316
      %333 = vst [vmem:[%s170] sm:$0xf] %v317
      %334 = vst [vmem:[%s170 + $0x4] sm:$0xf] %v318
      %335 = vst [vmem:[%s170 + $0x8] sm:$0xf] %v319
      %336 = vst [vmem:[%s170 + $0xc] sm:$0xf] %v320
      %337 = vst [vmem:[%s170 + $0x10] sm:$0xf] %v321
      %338 = vst [vmem:[%s170 + $0x14] sm:$0xf] %v322
      %339 = vst [vmem:[%s170 + $0x18] sm:$0xf] %v323
      %340 = vst [vmem:[%s170 + $0x1c] sm:$0xf] %v324
      %p341 = scmp.lt.s32.totalorder %s14, 1
      %s342 = scalar_select %p341, %s14, 1
      %s343 = smul.addr %s342, 8
      %s344 = smul.addr %s343, 4
      %s345 = scalar_lea.vmem %s3, %s344
      // Predicated region
      $region33: #{up_forward.2} parent=31 // pred_check
        %p346 = pneg %p100
      $region34: #{up_forward.2} parent=31 // pred_check_branch
        %348 = sbr.rel (%p346) target = $region36
      $region35: #{up_forward.2} parent=31 // pred_region
        _
      $region36: #{up_forward.2} parent=31 // pred_fallthru
        _
    $region32: #{up_forward.2} parent=5 // pred_fallthru
      _
    %p349 = scmp.le.s32.totalorder 2, %s9
    // Predicated region
    $region37: #{up_forward.2} parent=5 // pred_check
      %p350 = pneg %p349
    $region38: #{up_forward.2} parent=5 // pred_check_branch
      %352 = sbr.rel (%p350) target = $region40
    $region39: #{up_forward.2} parent=5 // pred_region
      %s353 = ssub.s32 %s9, 2
      // Predicated region
      $region41: #{up_forward.2} parent=39 // pred_check
        %p354 = pneg %p106
      $region42: #{up_forward.2} parent=39 // pred_check_branch
        %356 = sbr.rel (%p354) target = $region44
      $region43: #{up_forward.2} parent=39 // pred_region
        %p357 = scmp.lt.s32.totalorder %s15, 1
        %s358 = scalar_select %p357, %s15, 1
        %s359 = smul.addr %s358, 8
        %s360 = smul.addr %s359, 4
        %s361 = scalar_lea.vmem %s3, %s360
      $region44: #{up_forward.2} parent=39 // pred_fallthru
        _
    $region40: #{up_forward.2} parent=5 // pred_fallthru
      _
  $region6: #{up_forward.2} parent=0 // loop_footer
    %s13 = sadd.s32 1, %s9
  $region7: #{up_forward.2} parent=0 // loop_footer_branch
    %8 = sbr.rel target = $region3
  $region8: #{up_forward.2} parent=0 // loop_exit
    _

// kernel: up_forward.3
$region0: #{up_forward.3}
  #allocation0 [shape = 'u32[]', space=smem, size = 0x4, offset = 0x4, fixed_abs, tag = 'smem constant byte address 0x4 - core index']
  #allocation1 [shape = 'u32[144,128]{1,0:T(1,128)}', space=vmem, size = 0x12000, scoped, tag = 'internal scratch']
  #allocation2 [shape = 'f32[342,16]{1,0:T(8,128)}', space=vmem, size = 0x2b000, scoped, tag = 'scratch operand']
  %s0 = inlined_call_operand.vmem [shape: f32[288,1], index: 0, kind: input, shape index: {}]
  %s1 = inlined_call_operand.vmem [shape: bf16[2,342,32], index: 1, kind: input, shape index: {}]
  %s2 = inlined_call_operand.vmem [shape: bf16[9,32,16], index: 2, kind: input, shape index: {}]
  %s3 = inlined_call_operand.vmem [shape: f32[1,16], index: 3, kind: input, shape index: {}]
  %s4 = inlined_call_operand.vmem [shape: f32[1,16], index: 4, kind: input, shape index: {}]
  %s5 = inlined_call_operand.vmem [shape: bf16[9,16,128], index: 5, kind: input, shape index: {}]
  %s6 = inlined_call_operand.vmem [shape: f32[2,288,128], index: 6, kind: output, shape index: {}]
  %s7 = sld [smem:[#allocation0]]
  $region57: #{up_forward.3} parent=0
    _
  %s9 = ssub.s32 1, %s7
  %s10 = scalar_select 0, %s9, %s7
  loop: start=0, step=1, limit=4
  $region2: #{up_forward.3} parent=0 // loop_pre_header
    _
  $region3: #{up_forward.3} parent=0 // loop_header
    %s12 = sphi 0, %s16
    %p13 = scmp.ge.s32.totalorder %s12, 4
    %s20 = sphi 0, %s20
    %s22 = sphi 0, %s20
    %s23 = sphi 0, %s22
    %s37 = sphi 0, %s23
    %s43 = sphi 0, %s45
    %s46 = sphi 0, %s43
    %s47 = sphi 0, %s46
    %s63 = sphi 0, %s47
    %s67 = sphi 0, %s67
    %s69 = sphi 0, %s67
    %s70 = sphi 0, %s69
    %s84 = sphi 0, %s70
    %s88 = sphi 0, %s88
    %s90 = sphi 0, %s88
    %s91 = sphi 0, %s90
    %s105 = sphi 0, %s91
    %s109 = sphi 0, %s109
    %s111 = sphi 0, %s109
    %s112 = sphi 0, %s111
    %s126 = sphi 0, %s112
    %s130 = sphi 0, %s130
    %s132 = sphi 0, %s130
    %s133 = sphi 0, %s132
    %s147 = sphi 0, %s133
    %s153 = sphi 0, %s155
    %s156 = sphi 0, %s153
    %s157 = sphi 0, %s156
    %s173 = sphi 0, %s157
  $region4: #{up_forward.3} parent=0 // loop_header_branch
    %15 = sbr.rel (%p13) target = $region8
  $region5: #{up_forward.3} parent=0 // loop_body
    %s17 = ssub.s32 %s12, 1
    %s18 = ssub.s32 %s12, 2
    %s19 = sadd.s32 %s12, 1
    %s21 = sadd.s32 %s20, 1
    %p24 = scmp.eq.s32.totalorder %s12, 1
    %p25 = scmp.ne.s32.totalorder %s20, %s22
    %p26 = scmp.eq.s32.totalorder %s12, 0
    %p27 = por %p25, %p26
    %p28 = scmp.ne.s32.totalorder %s20, %s22
    %p29 = scmp.eq.s32.totalorder %s17, 1
    %p30 = por %p28, %p29
    %p31 = scmp.ne.s32.totalorder %s22, %s23
    %p32 = scmp.eq.s32.totalorder %s17, 0
    %p33 = por %p31, %p32
    %p34 = scmp.ne.s32.totalorder %s22, %s23
    %p35 = scmp.eq.s32.totalorder %s18, 1
    %p36 = por %p34, %p35
    %p38 = scmp.ne.s32.totalorder %s23, %s37
    %p39 = scmp.eq.s32.totalorder %s18, 0
    %p40 = por %p38, %p39
    %s41 = ssub.s32 %s12, %s19
    %p42 = scmp.eq.s32.totalorder %s41, 0
    %s44 = sadd.s32 %s43, 1
    %s45 = scalar_select %p42, %s43, %s44
    %p48 = pneg %p42
    %p49 = scmp.eq.s32.totalorder %s12, 1
    %p50 = por %p48, %p49
    %p51 = scmp.ne.s32.totalorder %s43, %s46
    %p52 = scmp.eq.s32.totalorder %s12, 0
    %p53 = por %p51, %p52
    %p54 = scmp.ne.s32.totalorder %s43, %s46
    %p55 = scmp.eq.s32.totalorder %s17, 1
    %p56 = por %p54, %p55
    %p57 = scmp.ne.s32.totalorder %s46, %s47
    %p58 = scmp.eq.s32.totalorder %s17, 0
    %p59 = por %p57, %p58
    %p60 = scmp.ne.s32.totalorder %s46, %s47
    %p61 = scmp.eq.s32.totalorder %s18, 1
    %p62 = por %p60, %p61
    %p64 = scmp.ne.s32.totalorder %s47, %s63
    %p65 = scmp.eq.s32.totalorder %s18, 0
    %p66 = por %p64, %p65
    %s68 = sadd.s32 %s67, 1
    %p71 = scmp.eq.s32.totalorder %s12, 1
    %p72 = scmp.ne.s32.totalorder %s67, %s69
    %p73 = scmp.eq.s32.totalorder %s12, 0
    %p74 = por %p72, %p73
    %p75 = scmp.ne.s32.totalorder %s67, %s69
    %p76 = scmp.eq.s32.totalorder %s17, 1
    %p77 = por %p75, %p76
    %p78 = scmp.ne.s32.totalorder %s69, %s70
    %p79 = scmp.eq.s32.totalorder %s17, 0
    %p80 = por %p78, %p79
    %p81 = scmp.ne.s32.totalorder %s69, %s70
    %p82 = scmp.eq.s32.totalorder %s18, 1
    %p83 = por %p81, %p82
    %p85 = scmp.ne.s32.totalorder %s70, %s84
    %p86 = scmp.eq.s32.totalorder %s18, 0
    %p87 = por %p85, %p86
    %s89 = sadd.s32 %s88, 1
    %p92 = scmp.eq.s32.totalorder %s12, 1
    %p93 = scmp.ne.s32.totalorder %s88, %s90
    %p94 = scmp.eq.s32.totalorder %s12, 0
    %p95 = por %p93, %p94
    %p96 = scmp.ne.s32.totalorder %s88, %s90
    %p97 = scmp.eq.s32.totalorder %s17, 1
    %p98 = por %p96, %p97
    %p99 = scmp.ne.s32.totalorder %s90, %s91
    %p100 = scmp.eq.s32.totalorder %s17, 0
    %p101 = por %p99, %p100
    %p102 = scmp.ne.s32.totalorder %s90, %s91
    %p103 = scmp.eq.s32.totalorder %s18, 1
    %p104 = por %p102, %p103
    %p106 = scmp.ne.s32.totalorder %s91, %s105
    %p107 = scmp.eq.s32.totalorder %s18, 0
    %p108 = por %p106, %p107
    %s110 = sadd.s32 %s109, 1
    %p113 = scmp.eq.s32.totalorder %s12, 1
    %p114 = scmp.ne.s32.totalorder %s109, %s111
    %p115 = scmp.eq.s32.totalorder %s12, 0
    %p116 = por %p114, %p115
    %p117 = scmp.ne.s32.totalorder %s109, %s111
    %p118 = scmp.eq.s32.totalorder %s17, 1
    %p119 = por %p117, %p118
    %p120 = scmp.ne.s32.totalorder %s111, %s112
    %p121 = scmp.eq.s32.totalorder %s17, 0
    %p122 = por %p120, %p121
    %p123 = scmp.ne.s32.totalorder %s111, %s112
    %p124 = scmp.eq.s32.totalorder %s18, 1
    %p125 = por %p123, %p124
    %p127 = scmp.ne.s32.totalorder %s112, %s126
    %p128 = scmp.eq.s32.totalorder %s18, 0
    %p129 = por %p127, %p128
    %s131 = sadd.s32 %s130, 1
    %p134 = scmp.eq.s32.totalorder %s12, 1
    %p135 = scmp.ne.s32.totalorder %s130, %s132
    %p136 = scmp.eq.s32.totalorder %s12, 0
    %p137 = por %p135, %p136
    %p138 = scmp.ne.s32.totalorder %s130, %s132
    %p139 = scmp.eq.s32.totalorder %s17, 1
    %p140 = por %p138, %p139
    %p141 = scmp.ne.s32.totalorder %s132, %s133
    %p142 = scmp.eq.s32.totalorder %s17, 0
    %p143 = por %p141, %p142
    %p144 = scmp.ne.s32.totalorder %s132, %s133
    %p145 = scmp.eq.s32.totalorder %s18, 1
    %p146 = por %p144, %p145
    %p148 = scmp.ne.s32.totalorder %s133, %s147
    %p149 = scmp.eq.s32.totalorder %s18, 0
    %p150 = por %p148, %p149
    %s151 = ssub.s32 %s12, %s19
    %p152 = scmp.eq.s32.totalorder %s151, 0
    %s154 = sadd.s32 %s153, 1
    %s155 = scalar_select %p152, %s153, %s154
    %p158 = pneg %p152
    %p159 = scmp.eq.s32.totalorder %s12, 1
    %p160 = por %p158, %p159
    %p161 = scmp.ne.s32.totalorder %s153, %s156
    %p162 = scmp.eq.s32.totalorder %s12, 0
    %p163 = por %p161, %p162
    %p164 = scmp.ne.s32.totalorder %s153, %s156
    %p165 = scmp.eq.s32.totalorder %s17, 1
    %p166 = por %p164, %p165
    %p167 = scmp.ne.s32.totalorder %s156, %s157
    %p168 = scmp.eq.s32.totalorder %s17, 0
    %p169 = por %p167, %p168
    %p170 = scmp.ne.s32.totalorder %s156, %s157
    %p171 = scmp.eq.s32.totalorder %s18, 1
    %p172 = por %p170, %p171
    %p174 = scmp.ne.s32.totalorder %s157, %s173
    %p175 = scmp.eq.s32.totalorder %s18, 0
    %p176 = por %p174, %p175
    %p177 = scmp.le.s32.totalorder 1, %s12
    %p178 = scmp.lt.s32.totalorder %s12, 3
    %p179 = pnand %p177, %p178
    %p180 = pneg %p179
    // Predicated region
    $region9: #{up_forward.3} parent=5 // pred_check
      _
    $region10: #{up_forward.3} parent=5 // pred_check_branch
      %182 = sbr.rel (%p179) target = $region12
    $region11: #{up_forward.3} parent=5 // pred_region
      %s183 = ssub.s32 %s12, 1
      // Predicated region
      $region13: #{up_forward.3} parent=11 // pred_check
        %p184 = pneg %p33
      $region14: #{up_forward.3} parent=11 // pred_check_branch
        %186 = sbr.rel (%p184) target = $region16
      $region15: #{up_forward.3} parent=11 // pred_region
        _
      $region16: #{up_forward.3} parent=11 // pred_fallthru
        _
      // Predicated region
      $region17: #{up_forward.3} parent=11 // pred_check
        %p187 = pneg %p80
      $region18: #{up_forward.3} parent=11 // pred_check_branch
        %189 = sbr.rel (%p187) target = $region20
      $region19: #{up_forward.3} parent=11 // pred_region
        _
      $region20: #{up_forward.3} parent=11 // pred_fallthru
        _
      // Predicated region
      $region21: #{up_forward.3} parent=11 // pred_check
        %p190 = pneg %p101
      $region22: #{up_forward.3} parent=11 // pred_check_branch
        %192 = sbr.rel (%p190) target = $region24
      $region23: #{up_forward.3} parent=11 // pred_region
        _
      $region24: #{up_forward.3} parent=11 // pred_fallthru
        _
      // Predicated region
      $region25: #{up_forward.3} parent=11 // pred_check
        %p193 = pneg %p122
      $region26: #{up_forward.3} parent=11 // pred_check_branch
        %195 = sbr.rel (%p193) target = $region28
      $region27: #{up_forward.3} parent=11 // pred_region
        _
      $region28: #{up_forward.3} parent=11 // pred_fallthru
        _
      // Predicated region
      $region29: #{up_forward.3} parent=11 // pred_check
        %p196 = pneg %p143
      $region30: #{up_forward.3} parent=11 // pred_check_branch
        %198 = sbr.rel (%p196) target = $region32
      $region31: #{up_forward.3} parent=11 // pred_region
        _
      $region32: #{up_forward.3} parent=11 // pred_fallthru
        _
    $region12: #{up_forward.3} parent=5 // pred_fallthru
      _
    %p199 = scmp.lt.s32.totalorder %s12, 2
    // Predicated region
    $region33: #{up_forward.3} parent=5 // pred_check
      %p200 = pneg %p199
    $region34: #{up_forward.3} parent=5 // pred_check_branch
      %202 = sbr.rel (%p200) target = $region36
    $region35: #{up_forward.3} parent=5 // pred_region
      // Predicated region
      $region37: #{up_forward.3} parent=35 // pred_check
        %p203 = pneg %p53
      $region38: #{up_forward.3} parent=35 // pred_check_branch
        %205 = sbr.rel (%p203) target = $region40
      $region39: #{up_forward.3} parent=35 // pred_region
        %p206 = scmp.lt.s32.totalorder %s12, 1
        %s207 = scalar_select %p206, %s12, 1
        %s208 = smul.addr %s207, 43
        %s209 = smul.addr %s208, 4
        %s210 = scalar_lea.vmem %s1, %s209
      $region40: #{up_forward.3} parent=35 // pred_fallthru
        _
    $region36: #{up_forward.3} parent=5 // pred_fallthru
      _
    %p211 = scmp.le.s32.totalorder 1, %s12
    %p212 = scmp.lt.s32.totalorder %s12, 3
    %p213 = pnand %p211, %p212
    %p214 = pneg %p213
    // Predicated region
    $region41: #{up_forward.3} parent=5 // pred_check
      _
    $region42: #{up_forward.3} parent=5 // pred_check_branch
      %216 = sbr.rel (%p213) target = $region44
    $region43: #{up_forward.3} parent=5 // pred_region
      %s217 = ssub.s32 %s12, 1
      %p218 = pneg %p33
      %p219 = pneg %p30
      %p220 = scmp.lt.s32.totalorder %s17, 1
      %s221 = scalar_select %p220, %s17, 1
      %s222 = smul.addr %s221, 43
      %s223 = smul.addr %s222, 4
      %s224 = scalar_lea.vmem %s1, %s223
      %p225 = pneg %p59
      %p226 = pneg %p56
      %p227 = pneg %p80
      %p228 = pneg %p77
      %p229 = pneg %p101
      %p230 = pneg %p98
      %p231 = pneg %p122
      %p232 = pneg %p119
      %p233 = pneg %p143
      %p234 = pneg %p140
      %p235 = pneg %p169
      %p236 = pneg %p166
      %p237 = scmp.lt.s32.totalorder %s17, 1
      %s238 = scalar_select %p237, %s17, 1
      %s239 = smul.addr %s238, 36
      %s240 = smul.addr %s239, 8
      %s241 = scalar_lea.vmem %s6, %s240
      %p242 = scmp.lt.s32.totalorder %s17, 1
      %s243 = scalar_select %p242, %s17, 1
      %s244 = smul.addr %s243, 43
      %s245 = smul.addr %s244, 4
      %s246 = scalar_lea.vmem %s1, %s245
      %p247 = scmp.lt.s32.totalorder %s17, 1
      %s248 = scalar_select %p247, %s17, 1
      %s249 = smul.addr %s248, 36
      %s250 = smul.addr %s249, 8
      %s251 = scalar_lea.vmem %s6, %s250
      %v253 = vld [vmem:[%s0] sm:$0xff]
      %v254 = vld [vmem:[%s0 + $0x8] sm:$0xff]
      %v255 = vld [vmem:[%s0 + $0x10] sm:$0xff]
      %v256 = vld [vmem:[%s0 + $0x18] sm:$0xff]
      %v257 = vld [vmem:[%s0 + $0x20] sm:$0xff]
      %v258 = vld [vmem:[%s0 + $0x28] sm:$0xff]
      %v259 = vld [vmem:[%s0 + $0x30] sm:$0xff]
      %v260 = vld [vmem:[%s0 + $0x38] sm:$0xff]
      %v261 = vld [vmem:[%s0 + $0x40] sm:$0xff]
      %v262 = vld [vmem:[%s0 + $0x48] sm:$0xff]
      %v263 = vld [vmem:[%s0 + $0x50] sm:$0xff]
      %v264 = vld [vmem:[%s0 + $0x58] sm:$0xff]
      %v265 = vld [vmem:[%s0 + $0x60] sm:$0xff]
      %v266 = vld [vmem:[%s0 + $0x68] sm:$0xff]
      %v267 = vld [vmem:[%s0 + $0x70] sm:$0xff]
      %v268 = vld [vmem:[%s0 + $0x78] sm:$0xff]
      %v269 = vld [vmem:[%s0 + $0x80] sm:$0xff]
      %v270 = vld [vmem:[%s0 + $0x88] sm:$0xff]
      %v271 = vld [vmem:[%s0 + $0x90] sm:$0xff]
      %v272 = vld [vmem:[%s0 + $0x98] sm:$0xff]
      %v273 = vld [vmem:[%s0 + $0xa0] sm:$0xff]
      %v274 = vld [vmem:[%s0 + $0xa8] sm:$0xff]
      %v275 = vld [vmem:[%s0 + $0xb0] sm:$0xff]
      %v276 = vld [vmem:[%s0 + $0xb8] sm:$0xff]
      %v277 = vld [vmem:[%s0 + $0xc0] sm:$0xff]
      %v278 = vld [vmem:[%s0 + $0xc8] sm:$0xff]
      %v279 = vld [vmem:[%s0 + $0xd0] sm:$0xff]
      %v280 = vld [vmem:[%s0 + $0xd8] sm:$0xff]
      %v281 = vld [vmem:[%s0 + $0xe0] sm:$0xff]
      %v282 = vld [vmem:[%s0 + $0xe8] sm:$0xff]
      %v283 = vld [vmem:[%s0 + $0xf0] sm:$0xff]
      %v284 = vld [vmem:[%s0 + $0xf8] sm:$0xff]
      %v285 = vld [vmem:[%s0 + $0x100] sm:$0xff]
      %v286 = vld [vmem:[%s0 + $0x108] sm:$0xff]
      %v287 = vld [vmem:[%s0 + $0x110] sm:$0xff]
      %v288 = vld [vmem:[%s0 + $0x118] sm:$0xff]
      %v289 = vld [vmem:[%s246] sm:$0xf]
      %v290 = vld [vmem:[%s246 + $0x4] sm:$0xf]
      %v291 = vld [vmem:[%s246 + $0x8] sm:$0xf]
      %v292 = vld [vmem:[%s246 + $0xc] sm:$0xf]
      %v293 = vld [vmem:[%s246 + $0x10] sm:$0xf]
      %v294 = vld [vmem:[%s246 + $0x14] sm:$0xf]
      %v295 = vld [vmem:[%s246 + $0x18] sm:$0xf]
      %v296 = vld [vmem:[%s246 + $0x1c] sm:$0xf]
      %v297 = vld [vmem:[%s246 + $0x20] sm:$0xf]
      %v298 = vld [vmem:[%s246 + $0x24] sm:$0xf]
      %v299 = vld [vmem:[%s246 + $0x28] sm:$0xf]
      %v300 = vld [vmem:[%s246 + $0x2c] sm:$0xf]
      %v301 = vld [vmem:[%s246 + $0x30] sm:$0xf]
      %v302 = vld [vmem:[%s246 + $0x34] sm:$0xf]
      %v303 = vld [vmem:[%s246 + $0x38] sm:$0xf]
      %v304 = vld [vmem:[%s246 + $0x3c] sm:$0xf]
      %v305 = vld [vmem:[%s246 + $0x40] sm:$0xf]
      %v306 = vld [vmem:[%s246 + $0x44] sm:$0xf]
      %v307 = vld [vmem:[%s246 + $0x48] sm:$0xf]
      %v308 = vld [vmem:[%s246 + $0x4c] sm:$0xf]
      %v309 = vld [vmem:[%s246 + $0x50] sm:$0xf]
      %v310 = vld [vmem:[%s246 + $0x54] sm:$0xf]
      %v311 = vld [vmem:[%s246 + $0x58] sm:$0xf]
      %v312 = vld [vmem:[%s246 + $0x5c] sm:$0xf]
      %v313 = vld [vmem:[%s246 + $0x60] sm:$0xf]
      %v314 = vld [vmem:[%s246 + $0x64] sm:$0xf]
      %v315 = vld [vmem:[%s246 + $0x68] sm:$0xf]
      %v316 = vld [vmem:[%s246 + $0x6c] sm:$0xf]
      %v317 = vld [vmem:[%s246 + $0x70] sm:$0xf]
      %v318 = vld [vmem:[%s246 + $0x74] sm:$0xf]
      %v319 = vld [vmem:[%s246 + $0x78] sm:$0xf]
      %v320 = vld [vmem:[%s246 + $0x7c] sm:$0xf]
      %v321 = vld [vmem:[%s246 + $0x80] sm:$0xf]
      %v322 = vld [vmem:[%s246 + $0x84] sm:$0xf]
      %v323 = vld [vmem:[%s246 + $0x88] sm:$0xf]
      %v324 = vld [vmem:[%s246 + $0x8c] sm:$0xf]
      %v325 = vld [vmem:[%s246 + $0x90] sm:$0xf]
      %v326 = vld [vmem:[%s246 + $0x94] sm:$0xf]
      %v327 = vld [vmem:[%s246 + $0x98] sm:$0xf]
      %v328 = vld [vmem:[%s246 + $0x9c] sm:$0xf]
      %v329 = vld [vmem:[%s246 + $0xa0] sm:$0xf]
      %v330 = vunpack.c.l.bf16 %v289
      %v331 = vunpack.c.l.bf16 %v290
      %v332 = vunpack.c.l.bf16 %v291
      %v333 = vunpack.c.l.bf16 %v292
      %v334 = vunpack.c.l.bf16 %v293
      %v335 = vunpack.c.l.bf16 %v294
      %v336 = vunpack.c.l.bf16 %v295
      %v337 = vunpack.c.l.bf16 %v296
      %v338 = vunpack.c.l.bf16 %v297
      %v339 = vunpack.c.l.bf16 %v298
      %v340 = vunpack.c.l.bf16 %v299
      %v341 = vunpack.c.l.bf16 %v300
      %v342 = vunpack.c.l.bf16 %v301
      %v343 = vunpack.c.l.bf16 %v302
      %v344 = vunpack.c.l.bf16 %v303
      %v345 = vunpack.c.l.bf16 %v304
      %v346 = vunpack.c.l.bf16 %v305
      %v347 = vunpack.c.l.bf16 %v306
      %v348 = vunpack.c.l.bf16 %v307
      %v349 = vunpack.c.l.bf16 %v308
      %v350 = vunpack.c.l.bf16 %v309
      %v351 = vunpack.c.l.bf16 %v310
      %v352 = vunpack.c.l.bf16 %v311
      %v353 = vunpack.c.l.bf16 %v312
      %v354 = vunpack.c.l.bf16 %v313
      %v355 = vunpack.c.l.bf16 %v314
      %v356 = vunpack.c.l.bf16 %v315
      %v357 = vunpack.c.l.bf16 %v316
      %v358 = vunpack.c.l.bf16 %v317
      %v359 = vunpack.c.l.bf16 %v318
      %v360 = vunpack.c.l.bf16 %v319
      %v361 = vunpack.c.l.bf16 %v320
      %v362 = vunpack.c.l.bf16 %v321
      %v363 = vunpack.c.l.bf16 %v322
      %v364 = vunpack.c.l.bf16 %v323
      %v365 = vunpack.c.l.bf16 %v324
      %v366 = vunpack.c.l.bf16 %v325
      %v367 = vunpack.c.l.bf16 %v326
      %v368 = vunpack.c.l.bf16 %v327
      %v369 = vunpack.c.l.bf16 %v328
      %v370 = vunpack.c.l.bf16 %v329
      %v371 = vpack.c.bf16 %v331, %v330
      %v372 = vpack.c.bf16 %v333, %v332
      %v373 = vpack.c.bf16 %v335, %v334
      %v374 = vpack.c.bf16 %v337, %v336
      %v375 = vpack.c.bf16 %v339, %v338
      %v376 = vpack.c.bf16 %v341, %v340
      %v377 = vpack.c.bf16 %v343, %v342
      %v378 = vpack.c.bf16 %v345, %v344
      %v379 = vpack.c.bf16 %v347, %v346
      %v380 = vpack.c.bf16 %v349, %v348
      %v381 = vpack.c.bf16 %v351, %v350
      %v382 = vpack.c.bf16 %v353, %v352
      %v383 = vpack.c.bf16 %v355, %v354
      %v384 = vpack.c.bf16 %v357, %v356
      %v385 = vpack.c.bf16 %v359, %v358
      %v386 = vpack.c.bf16 %v361, %v360
      %v387 = vpack.c.bf16 %v363, %v362
      %v388 = vpack.c.bf16 %v365, %v364
      %v389 = vld [vmem:[%s2] sm:$0xf]
      %v390 = vld [vmem:[%s2 + $0x4] sm:$0xf]
      %v391 = vld [vmem:[%s2 + $0x8] sm:$0xf]
      %v392 = vld [vmem:[%s2 + $0xc] sm:$0xf]
      %v393 = vpack.c.bf16 %v366, %v366
      %s394 = scalar_lea.vmem %s2, 16
      %v395 = vld [vmem:[%s394] sm:$0xf]
      %v396 = vld [vmem:[%s394 + $0x4] sm:$0xf]
      %v397 = vld [vmem:[%s394 + $0x8] sm:$0xf]
      %v398 = vld [vmem:[%s394 + $0xc] sm:$0xf]
      %vm399 = vsmask.f32 7424
      %v401 = vshrl.u32 %v371, 16
      %v403 = vshll.u32 %v371, 16
      %v405 = vrot.slane %v403, 1
      %v406 = vor.u32 %v401, %v405
      %v408 = vshll.u32 %v372, 16
      %v410 = vrot.slane %v408, 1
      %v411 = vsel %vm399, %v406, %v410
      %v412 = vshrl.u32 %v372, 16
      %v414 = vor.u32 %v412, %v410
      %v416 = vshll.u32 %v373, 16
      %v418 = vrot.slane %v416, 1
      %v419 = vsel %vm399, %v414, %v418
      %v420 = vshrl.u32 %v373, 16
      %v422 = vor.u32 %v420, %v418
      %v424 = vshll.u32 %v374, 16
      %v426 = vrot.slane %v424, 1
      %v427 = vsel %vm399, %v422, %v426
      %v428 = vshrl.u32 %v374, 16
      %v430 = vor.u32 %v428, %v426
      %v432 = vshll.u32 %v375, 16
      %v434 = vrot.slane %v432, 1
      %v435 = vsel %vm399, %v430, %v434
      %v436 = vshrl.u32 %v375, 16
      %v438 = vor.u32 %v436, %v434
      %v440 = vshll.u32 %v376, 16
      %v442 = vrot.slane %v440, 1
      %v443 = vsel %vm399, %v438, %v442
      %v444 = vshrl.u32 %v376, 16
      %v446 = vor.u32 %v444, %v442
      %v448 = vshll.u32 %v377, 16
      %v450 = vrot.slane %v448, 1
      %v451 = vsel %vm399, %v446, %v450
      %v452 = vshrl.u32 %v377, 16
      %v454 = vor.u32 %v452, %v450
      %v456 = vshll.u32 %v378, 16
      %v458 = vrot.slane %v456, 1
      %v459 = vsel %vm399, %v454, %v458
      %v460 = vshrl.u32 %v378, 16
      %v462 = vor.u32 %v460, %v458
      %v464 = vshll.u32 %v379, 16
      %v466 = vrot.slane %v464, 1
      %v467 = vsel %vm399, %v462, %v466
      %v468 = vshrl.u32 %v379, 16
      %v470 = vor.u32 %v468, %v466
      %v472 = vshll.u32 %v380, 16
      %v474 = vrot.slane %v472, 1
      %v475 = vsel %vm399, %v470, %v474
      %v476 = vshrl.u32 %v380, 16
      %v478 = vor.u32 %v476, %v474
      %v480 = vshll.u32 %v381, 16
      %v482 = vrot.slane %v480, 1
      %v483 = vsel %vm399, %v478, %v482
      %v484 = vshrl.u32 %v381, 16
      %v486 = vor.u32 %v484, %v482
      %v488 = vshll.u32 %v382, 16
      %v490 = vrot.slane %v488, 1
      %v491 = vsel %vm399, %v486, %v490
      %v492 = vshrl.u32 %v382, 16
      %v494 = vor.u32 %v492, %v490
      %v496 = vshll.u32 %v383, 16
      %v498 = vrot.slane %v496, 1
      %v499 = vsel %vm399, %v494, %v498
      %v500 = vshrl.u32 %v383, 16
      %v502 = vor.u32 %v500, %v498
      %v504 = vshll.u32 %v384, 16
      %v506 = vrot.slane %v504, 1
      %v507 = vsel %vm399, %v502, %v506
      %v508 = vshrl.u32 %v384, 16
      %v510 = vor.u32 %v508, %v506
      %v512 = vshll.u32 %v385, 16
      %v514 = vrot.slane %v512, 1
      %v515 = vsel %vm399, %v510, %v514
      %v516 = vshrl.u32 %v385, 16
      %v518 = vor.u32 %v516, %v514
      %v520 = vshll.u32 %v386, 16
      %v522 = vrot.slane %v520, 1
      %v523 = vsel %vm399, %v518, %v522
      %v524 = vshrl.u32 %v386, 16
      %v526 = vor.u32 %v524, %v522
      %v528 = vshll.u32 %v387, 16
      %v530 = vrot.slane %v528, 1
      %v531 = vsel %vm399, %v526, %v530
      %v532 = vshrl.u32 %v387, 16
      %v534 = vor.u32 %v532, %v530
      %v536 = vshll.u32 %v388, 16
      %v538 = vrot.slane %v536, 1
      %v539 = vsel %vm399, %v534, %v538
      %v540 = vshrl.u32 %v388, 16
      %v542 = vor.u32 %v540, %v538
      %v544 = vshll.u32 %v393, 16
      %v546 = vrot.slane %v544, 1
      %v547 = vsel %vm399, %v542, %v546
      %v552 = vunpack.c.l.b16 %v395
      %v553 = vunpack.c.l.b16 %v396
      %v554 = vunpack.c.l.b16 %v397
      %v555 = vunpack.c.l.b16 %v398
      %v556 = vpack.c.b16 %v553, %v552
      %v557 = vpack.c.b16 %v555, %v554
      %vm560 = vcmask 261120
      %v562 = vsel %vm560, %v411, 0
      %v565 = vsel %vm560, %v419, 0
      %v568 = vsel %vm560, %v427, 0
      %v571 = vsel %vm560, %v435, 0
      %v574 = vsel %vm560, %v443, 0
      %v577 = vsel %vm560, %v451, 0
      %v580 = vsel %vm560, %v459, 0
      %v583 = vsel %vm560, %v467, 0
      %v586 = vsel %vm560, %v475, 0
      %v589 = vsel %vm560, %v483, 0
      %v592 = vsel %vm560, %v491, 0
      %v595 = vsel %vm560, %v499, 0
      %v598 = vsel %vm560, %v507, 0
      %v601 = vsel %vm560, %v515, 0
      %v604 = vsel %vm560, %v523, 0
      %v607 = vsel %vm560, %v531, 0
      %v610 = vsel %vm560, %v539, 0
      %v613 = vsel %vm560, %v547, 0
      %615 = vmatprep.subr.bf16.mxu0 0
      %616 = vmatpush1.bf16.msra.mxu0 %v556
      %617 = vmatprep.subr.bf16.mxu0 0
      %618 = vmatpush1.bf16.msra.mxu0 %v557
      %619 = vmatprep.subr.bf16.mxu0 0
      %620 = vmatpush1.bf16.msra.mxu0 0
      %621 = vmatprep.subr.bf16.mxu0 0
      %622 = vmatpush1.bf16.msra.mxu0 0
      %623 = vmatprep.subr.bf16.mxu0 0
      %624 = vmatpush1.bf16.msra.mxu0 0
      %625 = vmatprep.subr.bf16.mxu0 0
      %626 = vmatpush1.bf16.msra.mxu0 0
      %627 = vmatprep.subr.bf16.mxu0 0
      %628 = vmatpush1.bf16.msra.mxu0 0
      %629 = vmatprep.subr.bf16.mxu0 0
      %630 = vmatpush1.bf16.msra.mxu0 0
      %631 = vmatprep.subr.bf16.mxu0 0
      %632 = vmatpush1.bf16.msra.mxu0 0
      %633 = vmatprep.subr.bf16.mxu0 0
      %634 = vmatpush1.bf16.msra.mxu0 0
      %635 = vmatprep.subr.bf16.mxu0 0
      %636 = vmatpush1.bf16.msra.mxu0 0
      %637 = vmatprep.subr.bf16.mxu0 0
      %638 = vmatpush1.bf16.msra.mxu0 0
      %639 = vmatprep.subr.bf16.mxu0 0
      %640 = vmatpush1.bf16.msra.mxu0 0
      %641 = vmatprep.subr.bf16.mxu0 0
      %642 = vmatpush1.bf16.msra.mxu0 0
      %643 = vmatprep.subr.bf16.mxu0 0
      %644 = vmatpush1.bf16.msra.mxu0 0
      %645 = vmatprep.subr.bf16.mxu0 0
      %646 = vmatpush1.bf16.msra.mxu0 0
      %647 = vmatprep.mubr.bf16.mxu0 0
      %648 = vmatmul.mubr.bf16.gmra.mrb[0].mxu0 %v562
      %v649 = vpop.f32.mrb[0].mxu0
      %v650 = vadd.f32 0.0, %v649
      %v651 = vpop.f32.mrb[0].mxu0
      %v652 = vpop.f32.mrb[0].mxu0
      %v653 = vadd.f32 0.0, %v652
      %v654 = vpop.f32.mrb[0].mxu0
      %655 = vmatprep.mubr.bf16.mxu0 0
      %656 = vmatmul.mubr.bf16.gmra.mrb[0].mxu0 %v565
      %v657 = vpop.f32.mrb[0].mxu0
      %v658 = vadd.f32 0.0, %v657
      %v659 = vpop.f32.mrb[0].mxu0
      %v660 = vpop.f32.mrb[0].mxu0
      %v661 = vadd.f32 0.0, %v660
      %v662 = vpop.f32.mrb[0].mxu0
      %663 = vmatprep.mubr.bf16.mxu0 0
      %664 = vmatmul.mubr.bf16.gmra.mrb[0].mxu0 %v568
      %v665 = vpop.f32.mrb[0].mxu0
      %v666 = vadd.f32 0.0, %v665
      %v667 = vpop.f32.mrb[0].mxu0
      %v668 = vpop.f32.mrb[0].mxu0
      %v669 = vadd.f32 0.0, %v668
      %v670 = vpop.f32.mrb[0].mxu0
      %671 = vmatprep.mubr.bf16.mxu0 0
      %672 = vmatmul.mubr.bf16.gmra.mrb[0].mxu0 %v571
      %v673 = vpop.f32.mrb[0].mxu0
      %v674 = vadd.f32 0.0, %v673
      %v675 = vpop.f32.mrb[0].mxu0
      %v676 = vpop.f32.mrb[0].mxu0
      %v677 = vadd.f32 0.0, %v676
      %v678 = vpop.f32.mrb[0].mxu0
      %679 = vmatprep.mubr.bf16.mxu0 0
      %680 = vmatmul.mubr.bf16.gmra.mrb[0].mxu0 %v574
      %v681 = vpop.f32.mrb[0].mxu0
      %v682 = vadd.f32 0.0, %v681
      %v683 = vpop.f32.mrb[0].mxu0
      %v684 = vpop.f32.mrb[0].mxu0
      %v685 = vadd.f32 0.0, %v684
      %v686 = vpop.f32.mrb[0].mxu0
      %687 = vmatprep.mubr.bf16.mxu0 0
      %688 = vmatmul.mubr.bf16.gmra.mrb[0].mxu0 %v577
      %v689 = vpop.f32.mrb[0].mxu0
      %v690 = vadd.f32 0.0, %v689
      %v691 = vpop.f32.mrb[0].mxu0
      %v692 = vpop.f32.mrb[0].mxu0
      %v693 = vadd.f32 0.0, %v692
      %v694 = vpop.f32.mrb[0].mxu0
      %695 = vmatprep.mubr.bf16.mxu0 0
      %696 = vmatmul.mubr.bf16.gmra.mrb[0].mxu0 %v580
      %v697 = vpop.f32.mrb[0].mxu0
      %v698 = vadd.f32 0.0, %v697
      %v699 = vpop.f32.mrb[0].mxu0
      %v700 = vpop.f32.mrb[0].mxu0
      %v701 = vadd.f32 0.0, %v700
      %v702 = vpop.f32.mrb[0].mxu0
      %703 = vmatprep.mubr.bf16.mxu0 0
      %704 = vmatmul.mubr.bf16.gmra.mrb[0].mxu0 %v583
      %v705 = vpop.f32.mrb[0].mxu0
      %v706 = vadd.f32 0.0, %v705
      %v707 = vpop.f32.mrb[0].mxu0
      %v708 = vpop.f32.mrb[0].mxu0
      %v709 = vadd.f32 0.0, %v708
      %v710 = vpop.f32.mrb[0].mxu0
      %711 = vmatprep.mubr.bf16.mxu0 0
      %712 = vmatmul.mubr.bf16.gmra.mrb[0].mxu0 %v586
      %v713 = vpop.f32.mrb[0].mxu0
      %v714 = vadd.f32 0.0, %v713
      %v715 = vpop.f32.mrb[0].mxu0
      %v716 = vpop.f32.mrb[0].mxu0
      %v717 = vadd.f32 0.0, %v716
      %v718 = vpop.f32.mrb[0].mxu0
      %719 = vmatprep.mubr.bf16.mxu0 0
      %720 = vmatmul.mubr.bf16.gmra.mrb[0].mxu0 %v589
      %v721 = vpop.f32.mrb[0].mxu0
      %v722 = vadd.f32 0.0, %v721
      %v723 = vpop.f32.mrb[0].mxu0
      %v724 = vpop.f32.mrb[0].mxu0
      %v725 = vadd.f32 0.0, %v724
      %v726 = vpop.f32.mrb[0].mxu0
      %727 = vmatprep.mubr.bf16.mxu0 0
      %728 = vmatmul.mubr.bf16.gmra.mrb[0].mxu0 %v592
      %v729 = vpop.f32.mrb[0].mxu0
      %v730 = vadd.f32 0.0, %v729
      %v731 = vpop.f32.mrb[0].mxu0
      %v732 = vpop.f32.mrb[0].mxu0
      %v733 = vadd.f32 0.0, %v732
      %v734 = vpop.f32.mrb[0].mxu0
      %735 = vmatprep.mubr.bf16.mxu0 0
      %736 = vmatmul.mubr.bf16.gmra.mrb[0].mxu0 %v595
      %v737 = vpop.f32.mrb[0].mxu0
      %v738 = vadd.f32 0.0, %v737
      %v739 = vpop.f32.mrb[0].mxu0
      %v740 = vpop.f32.mrb[0].mxu0
      %v741 = vadd.f32 0.0, %v740
      %v742 = vpop.f32.mrb[0].mxu0
      %743 = vmatprep.mubr.bf16.mxu0 0
      %744 = vmatmul.mubr.bf16.gmra.mrb[0].mxu0 %v598
      %v745 = vpop.f32.mrb[0].mxu0
      %v746 = vadd.f32 0.0, %v745
      %v747 = vpop.f32.mrb[0].mxu0
      %v748 = vpop.f32.mrb[0].mxu0
      %v749 = vadd.f32 0.0, %v748
      %v750 = vpop.f32.mrb[0].mxu0
      %751 = vmatprep.mubr.bf16.mxu0 0
      %752 = vmatmul.mubr.bf16.gmra.mrb[0].mxu0 %v601
      %v753 = vpop.f32.mrb[0].mxu0
      %v754 = vadd.f32 0.0, %v753
      %v755 = vpop.f32.mrb[0].mxu0
      %v756 = vpop.f32.mrb[0].mxu0
      %v757 = vadd.f32 0.0, %v756
      %v758 = vpop.f32.mrb[0].mxu0
      %759 = vmatprep.mubr.bf16.mxu0 0
      %760 = vmatmul.mubr.bf16.gmra.mrb[0].mxu0 %v604
      %v761 = vpop.f32.mrb[0].mxu0
      %v762 = vadd.f32 0.0, %v761
      %v763 = vpop.f32.mrb[0].mxu0
      %v764 = vpop.f32.mrb[0].mxu0
      %v765 = vadd.f32 0.0, %v764
      %v766 = vpop.f32.mrb[0].mxu0
      %767 = vmatprep.mubr.bf16.mxu0 0
      %768 = vmatmul.mubr.bf16.gmra.mrb[0].mxu0 %v607
      %v769 = vpop.f32.mrb[0].mxu0
      %v770 = vadd.f32 0.0, %v769
      %v771 = vpop.f32.mrb[0].mxu0
      %v772 = vpop.f32.mrb[0].mxu0
      %v773 = vadd.f32 0.0, %v772
      %v774 = vpop.f32.mrb[0].mxu0
      %775 = vmatprep.mubr.bf16.mxu0 0
      %776 = vmatmul.mubr.bf16.gmra.mrb[0].mxu0 %v610
      %v777 = vpop.f32.mrb[0].mxu0
      %v778 = vadd.f32 0.0, %v777
      %v779 = vpop.f32.mrb[0].mxu0
      %v780 = vpop.f32.mrb[0].mxu0
      %v781 = vadd.f32 0.0, %v780
      %v782 = vpop.f32.mrb[0].mxu0
      %783 = vmatprep.mubr.bf16.mxu0 0
      %784 = vmatmul.mubr.bf16.gmra.mrb[0].mxu0 %v613
      %v785 = vpop.f32.mrb[0].mxu0
      %v786 = vadd.f32 0.0, %v785
      %v787 = vpop.f32.mrb[0].mxu0
      %v788 = vpop.f32.mrb[0].mxu0
      %v789 = vadd.f32 0.0, %v788
      %v790 = vpop.f32.mrb[0].mxu0
      %791 = vdwg.mxu0
      %v796 = vunpack.c.l.b16 %v389
      %v797 = vunpack.c.l.b16 %v390
      %v798 = vunpack.c.l.b16 %v391
      %v799 = vunpack.c.l.b16 %v392
      %v800 = vpack.c.b16 %v797, %v796
      %v801 = vpack.c.b16 %v799, %v798
      %v804 = vsel %vm560, %v371, 0
      %v806 = vsel %vm560, %v372, 0
      %v808 = vsel %vm560, %v373, 0
      %v810 = vsel %vm560, %v374, 0
      %v812 = vsel %vm560, %v375, 0
      %v814 = vsel %vm560, %v376, 0
      %v816 = vsel %vm560, %v377, 0
      %v818 = vsel %vm560, %v378, 0
      %v820 = vsel %vm560, %v379, 0
      %v822 = vsel %vm560, %v380, 0
      %v824 = vsel %vm560, %v381, 0
      %v826 = vsel %vm560, %v382, 0
      %v828 = vsel %vm560, %v383, 0
      %v830 = vsel %vm560, %v384, 0
      %v832 = vsel %vm560, %v385, 0
      %v834 = vsel %vm560, %v386, 0
      %v836 = vsel %vm560, %v387, 0
      %v838 = vsel %vm560, %v388, 0
      %840 = vmatprep.subr.bf16.mxu0 0
      %841 = vmatpush1.bf16.msra.mxu0 %v800
      %842 = vmatprep.subr.bf16.mxu0 0
      %843 = vmatpush1.bf16.msra.mxu0 %v801
      %844 = vmatprep.subr.bf16.mxu0 0
      %845 = vmatpush1.bf16.msra.mxu0 0
      %846 = vmatprep.subr.bf16.mxu0 0
      %847 = vmatpush1.bf16.msra.mxu0 0
      %848 = vmatprep.subr.bf16.mxu0 0
      %849 = vmatpush1.bf16.msra.mxu0 0
      %850 = vmatprep.subr.bf16.mxu0 0
      %851 = vmatpush1.bf16.msra.mxu0 0
      %852 = vmatprep.subr.bf16.mxu0 0
      %853 = vmatpush1.bf16.msra.mxu0 0
      %854 = vmatprep.subr.bf16.mxu0 0
      %855 = vmatpush1.bf16.msra.mxu0 0
      %856 = vmatprep.subr.bf16.mxu0 0
      %857 = vmatpush1.bf16.msra.mxu0 0
      %858 = vmatprep.subr.bf16.mxu0 0
      %859 = vmatpush1.bf16.msra.mxu0 0
      %860 = vmatprep.subr.bf16.mxu0 0
      %861 = vmatpush1.bf16.msra.mxu0 0
      %862 = vmatprep.subr.bf16.mxu0 0
      %863 = vmatpush1.bf16.msra.mxu0 0
      %864 = vmatprep.subr.bf16.mxu0 0
      %865 = vmatpush1.bf16.msra.mxu0 0
      %866 = vmatprep.subr.bf16.mxu0 0
      %867 = vmatpush1.bf16.msra.mxu0 0
      %868 = vmatprep.subr.bf16.mxu0 0
      %869 = vmatpush1.bf16.msra.mxu0 0
      %870 = vmatprep.subr.bf16.mxu0 0
      %871 = vmatpush1.bf16.msra.mxu0 0
      %872 = vmatprep.mubr.bf16.mxu0 0
      %873 = vmatmul.mubr.bf16.gmra.mrb[0].mxu0 %v804
      %v874 = vpop.f32.mrb[0].mxu0
      %v875 = vadd.f32 %v650, %v874
      %v876 = vpop.f32.mrb[0].mxu0
      %v877 = vpop.f32.mrb[0].mxu0
      %v878 = vadd.f32 %v653, %v877
      %v879 = vpop.f32.mrb[0].mxu0
      %880 = vmatprep.mubr.bf16.mxu0 0
      %881 = vmatmul.mubr.bf16.gmra.mrb[0].mxu0 %v806
      %v882 = vpop.f32.mrb[0].mxu0
      %v883 = vadd.f32 %v658, %v882
      %v884 = vpop.f32.mrb[0].mxu0
      %v885 = vpop.f32.mrb[0].mxu0
      %v886 = vadd.f32 %v661, %v885
      %v887 = vpop.f32.mrb[0].mxu0
      %888 = vmatprep.mubr.bf16.mxu0 0
      %889 = vmatmul.mubr.bf16.gmra.mrb[0].mxu0 %v808
      %v890 = vpop.f32.mrb[0].mxu0
      %v891 = vadd.f32 %v666, %v890
      %v892 = vpop.f32.mrb[0].mxu0
      %v893 = vpop.f32.mrb[0].mxu0
      %v894 = vadd.f32 %v669, %v893
      %v895 = vpop.f32.mrb[0].mxu0
      %896 = vmatprep.mubr.bf16.mxu0 0
      %897 = vmatmul.mubr.bf16.gmra.mrb[0].mxu0 %v810
      %v898 = vpop.f32.mrb[0].mxu0
      %v899 = vadd.f32 %v674, %v898
      %v900 = vpop.f32.mrb[0].mxu0
      %v901 = vpop.f32.mrb[0].mxu0
      %v902 = vadd.f32 %v677, %v901
      %v903 = vpop.f32.mrb[0].mxu0
      %904 = vmatprep.mubr.bf16.mxu0 0
      %905 = vmatmul.mubr.bf16.gmra.mrb[0].mxu0 %v812
      %v906 = vpop.f32.mrb[0].mxu0
      %v907 = vadd.f32 %v682, %v906
      %v908 = vpop.f32.mrb[0].mxu0
      %v909 = vpop.f32.mrb[0].mxu0
      %v910 = vadd.f32 %v685, %v909
      %v911 = vpop.f32.mrb[0].mxu0
      %912 = vmatprep.mubr.bf16.mxu0 0
      %913 = vmatmul.mubr.bf16.gmra.mrb[0].mxu0 %v814
      %v914 = vpop.f32.mrb[0].mxu0
      %v915 = vadd.f32 %v690, %v914
      %v916 = vpop.f32.mrb[0].mxu0
      %v917 = vpop.f32.mrb[0].mxu0
      %v918 = vadd.f32 %v693, %v917
      %v919 = vpop.f32.mrb[0].mxu0
      %920 = vmatprep.mubr.bf16.mxu0 0
      %921 = vmatmul.mubr.bf16.gmra.mrb[0].mxu0 %v816
      %v922 = vpop.f32.mrb[0].mxu0
      %v923 = vadd.f32 %v698, %v922
      %v924 = vpop.f32.mrb[0].mxu0
      %v925 = vpop.f32.mrb[0].mxu0
      %v926 = vadd.f32 %v701, %v925
      %v927 = vpop.f32.mrb[0].mxu0
      %928 = vmatprep.mubr.bf16.mxu0 0
      %929 = vmatmul.mubr.bf16.gmra.mrb[0].mxu0 %v818
      %v930 = vpop.f32.mrb[0].mxu0
      %v931 = vadd.f32 %v706, %v930
      %v932 = vpop.f32.mrb[0].mxu0
      %v933 = vpop.f32.mrb[0].mxu0
      %v934 = vadd.f32 %v709, %v933
      %v935 = vpop.f32.mrb[0].mxu0
      %936 = vmatprep.mubr.bf16.mxu0 0
      %937 = vmatmul.mubr.bf16.gmra.mrb[0].mxu0 %v820
      %v938 = vpop.f32.mrb[0].mxu0
      %v939 = vadd.f32 %v714, %v938
      %v940 = vpop.f32.mrb[0].mxu0
      %v941 = vpop.f32.mrb[0].mxu0
      %v942 = vadd.f32 %v717, %v941
      %v943 = vpop.f32.mrb[0].mxu0
      %944 = vmatprep.mubr.bf16.mxu0 0
      %945 = vmatmul.mubr.bf16.gmra.mrb[0].mxu0 %v822
      %v946 = vpop.f32.mrb[0].mxu0
      %v947 = vadd.f32 %v722, %v946
      %v948 = vpop.f32.mrb[0].mxu0
      %v949 = vpop.f32.mrb[0].mxu0
      %v950 = vadd.f32 %v725, %v949
      %v951 = vpop.f32.mrb[0].mxu0
      %952 = vmatprep.mubr.bf16.mxu0 0
      %953 = vmatmul.mubr.bf16.gmra.mrb[0].mxu0 %v824
      %v954 = vpop.f32.mrb[0].mxu0
      %v955 = vadd.f32 %v730, %v954
      %v956 = vpop.f32.mrb[0].mxu0
      %v957 = vpop.f32.mrb[0].mxu0
      %v958 = vadd.f32 %v733, %v957
      %v959 = vpop.f32.mrb[0].mxu0
      %960 = vmatprep.mubr.bf16.mxu0 0
      %961 = vmatmul.mubr.bf16.gmra.mrb[0].mxu0 %v826
      %v962 = vpop.f32.mrb[0].mxu0
      %v963 = vadd.f32 %v738, %v962
      %v964 = vpop.f32.mrb[0].mxu0
      %v965 = vpop.f32.mrb[0].mxu0
      %v966 = vadd.f32 %v741, %v965
      %v967 = vpop.f32.mrb[0].mxu0
      %968 = vmatprep.mubr.bf16.mxu0 0
      %969 = vmatmul.mubr.bf16.gmra.mrb[0].mxu0 %v828
      %v970 = vpop.f32.mrb[0].mxu0
      %v971 = vadd.f32 %v746, %v970
      %v972 = vpop.f32.mrb[0].mxu0
      %v973 = vpop.f32.mrb[0].mxu0
      %v974 = vadd.f32 %v749, %v973
      %v975 = vpop.f32.mrb[0].mxu0
      %976 = vmatprep.mubr.bf16.mxu0 0
      %977 = vmatmul.mubr.bf16.gmra.mrb[0].mxu0 %v830
      %v978 = vpop.f32.mrb[0].mxu0
      %v979 = vadd.f32 %v754, %v978
      %v980 = vpop.f32.mrb[0].mxu0
      %v981 = vpop.f32.mrb[0].mxu0
      %v982 = vadd.f32 %v757, %v981
      %v983 = vpop.f32.mrb[0].mxu0
      %984 = vmatprep.mubr.bf16.mxu0 0
      %985 = vmatmul.mubr.bf16.gmra.mrb[0].mxu0 %v832
      %v986 = vpop.f32.mrb[0].mxu0
      %v987 = vadd.f32 %v762, %v986
      %v988 = vpop.f32.mrb[0].mxu0
      %v989 = vpop.f32.mrb[0].mxu0
      %v990 = vadd.f32 %v765, %v989
      %v991 = vpop.f32.mrb[0].mxu0
      %992 = vmatprep.mubr.bf16.mxu0 0
      %993 = vmatmul.mubr.bf16.gmra.mrb[0].mxu0 %v834
      %v994 = vpop.f32.mrb[0].mxu0
      %v995 = vadd.f32 %v770, %v994
      %v996 = vpop.f32.mrb[0].mxu0
      %v997 = vpop.f32.mrb[0].mxu0
      %v998 = vadd.f32 %v773, %v997
      %v999 = vpop.f32.mrb[0].mxu0
      %1000 = vmatprep.mubr.bf16.mxu0 0
      %1001 = vmatmul.mubr.bf16.gmra.mrb[0].mxu0 %v836
      %v1002 = vpop.f32.mrb[0].mxu0
      %v1003 = vadd.f32 %v778, %v1002
      %v1004 = vpop.f32.mrb[0].mxu0
      %v1005 = vpop.f32.mrb[0].mxu0
      %v1006 = vadd.f32 %v781, %v1005
      %v1007 = vpop.f32.mrb[0].mxu0
      %1008 = vmatprep.mubr.bf16.mxu0 0
      %1009 = vmatmul.mubr.bf16.gmra.mrb[0].mxu0 %v838
      %v1010 = vpop.f32.mrb[0].mxu0
      %v1011 = vadd.f32 %v786, %v1010
      %v1012 = vpop.f32.mrb[0].mxu0
      %v1013 = vpop.f32.mrb[0].mxu0
      %v1014 = vadd.f32 %v789, %v1013
      %v1015 = vpop.f32.mrb[0].mxu0
      %1016 = vdwg.mxu0
      %s1017 = scalar_lea.vmem %s2, 32
      %v1018 = vld [vmem:[%s1017] sm:$0xf]
      %v1019 = vld [vmem:[%s1017 + $0x4] sm:$0xf]
      %v1020 = vld [vmem:[%s1017 + $0x8] sm:$0xf]
      %v1021 = vld [vmem:[%s1017 + $0xc] sm:$0xf]
      %vm1041 = vcmask 1046528
      %v1042 = vrot.slane %v371, 1
      %v1043 = vrot.slane %v372, 1
      %v1044 = vsel %vm1041, %v1042, %v1043
      %v1045 = vrot.slane %v373, 1
      %v1046 = vsel %vm1041, %v1043, %v1045
      %v1047 = vrot.slane %v374, 1
      %v1048 = vsel %vm1041, %v1045, %v1047
      %v1049 = vrot.slane %v375, 1
      %v1050 = vsel %vm1041, %v1047, %v1049
      %v1051 = vrot.slane %v376, 1
      %v1052 = vsel %vm1041, %v1049, %v1051
      %v1053 = vrot.slane %v377, 1
      %v1054 = vsel %vm1041, %v1051, %v1053
      %v1055 = vrot.slane %v378, 1
      %v1056 = vsel %vm1041, %v1053, %v1055
      %v1057 = vrot.slane %v379, 1
      %v1058 = vsel %vm1041, %v1055, %v1057
      %v1059 = vrot.slane %v380, 1
      %v1060 = vsel %vm1041, %v1057, %v1059
      %v1061 = vrot.slane %v381, 1
      %v1062 = vsel %vm1041, %v1059, %v1061
      %v1063 = vrot.slane %v382, 1
      %v1064 = vsel %vm1041, %v1061, %v1063
      %v1065 = vrot.slane %v383, 1
      %v1066 = vsel %vm1041, %v1063, %v1065
      %v1067 = vrot.slane %v384, 1
      %v1068 = vsel %vm1041, %v1065, %v1067
      %v1069 = vrot.slane %v385, 1
      %v1070 = vsel %vm1041, %v1067, %v1069
      %v1071 = vrot.slane %v386, 1
      %v1072 = vsel %vm1041, %v1069, %v1071
      %v1073 = vrot.slane %v387, 1
      %v1074 = vsel %vm1041, %v1071, %v1073
      %v1075 = vrot.slane %v388, 1
      %v1076 = vsel %vm1041, %v1073, %v1075
      %v1077 = vrot.slane %v393, 1
      %v1078 = vsel %vm1041, %v1075, %v1077
      %v1083 = vunpack.c.l.b16 %v1018
      %v1084 = vunpack.c.l.b16 %v1019
      %v1085 = vunpack.c.l.b16 %v1020
      %v1086 = vunpack.c.l.b16 %v1021
      %v1087 = vpack.c.b16 %v1084, %v1083
      %v1088 = vpack.c.b16 %v1086, %v1085
      %v1092 = vsel %vm560, %v1044, 0
      %v1095 = vsel %vm560, %v1046, 0
      %v1098 = vsel %vm560, %v1048, 0
      %v1101 = vsel %vm560, %v1050, 0
      %v1104 = vsel %vm560, %v1052, 0
      %v1107 = vsel %vm560, %v1054, 0
      %v1110 = vsel %vm560, %v1056, 0
      %v1113 = vsel %vm560, %v1058, 0
      %v1116 = vsel %vm560, %v1060, 0
      %v1119 = vsel %vm560, %v1062, 0
      %v1122 = vsel %vm560, %v1064, 0
      %v1125 = vsel %vm560, %v1066, 0
      %v1128 = vsel %vm560, %v1068, 0
      %v1131 = vsel %vm560, %v1070, 0
      %v1134 = vsel %vm560, %v1072, 0
      %v1137 = vsel %vm560, %v1074, 0
      %v1140 = vsel %vm560, %v1076, 0
      %v1143 = vsel %vm560, %v1078, 0
      %1145 = vmatprep.subr.bf16.mxu0 0
      %1146 = vmatpush1.bf16.msra.mxu0 %v1087
      %1147 = vmatprep.subr.bf16.mxu0 0
      %1148 = vmatpush1.bf16.msra.mxu0 %v1088
      %1149 = vmatprep.subr.bf16.mxu0 0
      %1150 = vmatpush1.bf16.msra.mxu0 0
      %1151 = vmatprep.subr.bf16.mxu0 0
      %1152 = vmatpush1.bf16.msra.mxu0 0
      %1153 = vmatprep.subr.bf16.mxu0 0
      %1154 = vmatpush1.bf16.msra.mxu0 0
      %1155 = vmatprep.subr.bf16.mxu0 0
      %1156 = vmatpush1.bf16.msra.mxu0 0
      %1157 = vmatprep.subr.bf16.mxu0 0
      %1158 = vmatpush1.bf16.msra.mxu0 0
      %1159 = vmatprep.subr.bf16.mxu0 0
      %1160 = vmatpush1.bf16.msra.mxu0 0
      %1161 = vmatprep.subr.bf16.mxu0 0
      %1162 = vmatpush1.bf16.msra.mxu0 0
      %1163 = vmatprep.subr.bf16.mxu0 0
      %1164 = vmatpush1.bf16.msra.mxu0 0
      %1165 = vmatprep.subr.bf16.mxu0 0
      %1166 = vmatpush1.bf16.msra.mxu0 0
      %1167 = vmatprep.subr.bf16.mxu0 0
      %1168 = vmatpush1.bf16.msra.mxu0 0
      %1169 = vmatprep.subr.bf16.mxu0 0
      %1170 = vmatpush1.bf16.msra.mxu0 0
      %1171 = vmatprep.subr.bf16.mxu0 0
      %1172 = vmatpush1.bf16.msra.mxu0 0
      %1173 = vmatprep.subr.bf16.mxu0 0
      %1174 = vmatpush1.bf16.msra.mxu0 0
      %1175 = vmatprep.subr.bf16.mxu0 0
      %1176 = vmatpush1.bf16.msra.mxu0 0
      %1177 = vmatprep.mubr.bf16.mxu0 0
      %1178 = vmatmul.mubr.bf16.gmra.mrb[0].mxu0 %v1092
      %v1179 = vpop.f32.mrb[0].mxu0
      %v1180 = vadd.f32 0.0, %v1179
      %v1181 = vpop.f32.mrb[0].mxu0
      %v1182 = vpop.f32.mrb[0].mxu0
      %v1183 = vadd.f32 0.0, %v1182
      %v1184 = vpop.f32.mrb[0].mxu0
      %1185 = vmatprep.mubr.bf16.mxu0 0
      %1186 = vmatmul.mubr.bf16.gmra.mrb[0].mxu0 %v1095
      %v1187 = vpop.f32.mrb[0].mxu0
      %v1188 = vadd.f32 0.0, %v1187
      %v1189 = vpop.f32.mrb[0].mxu0
      %v1190 = vpop.f32.mrb[0].mxu0
      %v1191 = vadd.f32 0.0, %v1190
      %v1192 = vpop.f32.mrb[0].mxu0
      %1193 = vmatprep.mubr.bf16.mxu0 0
      %1194 = vmatmul.mubr.bf16.gmra.mrb[0].mxu0 %v1098
      %v1195 = vpop.f32.mrb[0].mxu0
      %v1196 = vadd.f32 0.0, %v1195
      %v1197 = vpop.f32.mrb[0].mxu0
      %v1198 = vpop.f32.mrb[0].mxu0
      %v1199 = vadd.f32 0.0, %v1198
      %v1200 = vpop.f32.mrb[0].mxu0
      %1201 = vmatprep.mubr.bf16.mxu0 0
      %1202 = vmatmul.mubr.bf16.gmra.mrb[0].mxu0 %v1101
      %v1203 = vpop.f32.mrb[0].mxu0
      %v1204 = vadd.f32 0.0, %v1203
      %v1205 = vpop.f32.mrb[0].mxu0
      %v1206 = vpop.f32.mrb[0].mxu0
      %v1207 = vadd.f32 0.0, %v1206
      %v1208 = vpop.f32.mrb[0].mxu0
      %1209 = vmatprep.mubr.bf16.mxu0 0
      %1210 = vmatmul.mubr.bf16.gmra.mrb[0].mxu0 %v1104
      %v1211 = vpop.f32.mrb[0].mxu0
      %v1212 = vadd.f32 0.0, %v1211
      %v1213 = vpop.f32.mrb[0].mxu0
      %v1214 = vpop.f32.mrb[0].mxu0
      %v1215 = vadd.f32 0.0, %v1214
      %v1216 = vpop.f32.mrb[0].mxu0
      %1217 = vmatprep.mubr.bf16.mxu0 0
      %1218 = vmatmul.mubr.bf16.gmra.mrb[0].mxu0 %v1107
      %v1219 = vpop.f32.mrb[0].mxu0
      %v1220 = vadd.f32 0.0, %v1219
      %v1221 = vpop.f32.mrb[0].mxu0
      %v1222 = vpop.f32.mrb[0].mxu0
      %v1223 = vadd.f32 0.0, %v1222
      %v1224 = vpop.f32.mrb[0].mxu0
      %1225 = vmatprep.mubr.bf16.mxu0 0
      %1226 = vmatmul.mubr.bf16.gmra.mrb[0].mxu0 %v1110
      %v1227 = vpop.f32.mrb[0].mxu0
      %v1228 = vadd.f32 0.0, %v1227
      %v1229 = vpop.f32.mrb[0].mxu0
      %v1230 = vpop.f32.mrb[0].mxu0
      %v1231 = vadd.f32 0.0, %v1230
      %v1232 = vpop.f32.mrb[0].mxu0
      %1233 = vmatprep.mubr.bf16.mxu0 0
      %1234 = vmatmul.mubr.bf16.gmra.mrb[0].mxu0 %v1113
      %v1235 = vpop.f32.mrb[0].mxu0
      %v1236 = vadd.f32 0.0, %v1235
      %v1237 = vpop.f32.mrb[0].mxu0
      %v1238 = vpop.f32.mrb[0].mxu0
      %v1239 = vadd.f32 0.0, %v1238
      %v1240 = vpop.f32.mrb[0].mxu0
      %1241 = vmatprep.mubr.bf16.mxu0 0
      %1242 = vmatmul.mubr.bf16.gmra.mrb[0].mxu0 %v1116
      %v1243 = vpop.f32.mrb[0].mxu0
      %v1244 = vadd.f32 0.0, %v1243
      %v1245 = vpop.f32.mrb[0].mxu0
      %v1246 = vpop.f32.mrb[0].mxu0
      %v1247 = vadd.f32 0.0, %v1246
      %v1248 = vpop.f32.mrb[0].mxu0
      %1249 = vmatprep.mubr.bf16.mxu0 0
      %1250 = vmatmul.mubr.bf16.gmra.mrb[0].mxu0 %v1119
      %v1251 = vpop.f32.mrb[0].mxu0
      %v1252 = vadd.f32 0.0, %v1251
      %v1253 = vpop.f32.mrb[0].mxu0
      %v1254 = vpop.f32.mrb[0].mxu0
      %v1255 = vadd.f32 0.0, %v1254
      %v1256 = vpop.f32.mrb[0].mxu0
      %1257 = vmatprep.mubr.bf16.mxu0 0
      %1258 = vmatmul.mubr.bf16.gmra.mrb[0].mxu0 %v1122
      %v1259 = vpop.f32.mrb[0].mxu0
      %v1260 = vadd.f32 0.0, %v1259
      %v1261 = vpop.f32.mrb[0].mxu0
      %v1262 = vpop.f32.mrb[0].mxu0
      %v1263 = vadd.f32 0.0, %v1262
      %v1264 = vpop.f32.mrb[0].mxu0
      %1265 = vmatprep.mubr.bf16.mxu0 0
      %1266 = vmatmul.mubr.bf16.gmra.mrb[0].mxu0 %v1125
      %v1267 = vpop.f32.mrb[0].mxu0
      %v1268 = vadd.f32 0.0, %v1267
      %v1269 = vpop.f32.mrb[0].mxu0
      %v1270 = vpop.f32.mrb[0].mxu0
      %v1271 = vadd.f32 0.0, %v1270
      %v1272 = vpop.f32.mrb[0].mxu0
      %1273 = vmatprep.mubr.bf16.mxu0 0
      %1274 = vmatmul.mubr.bf16.gmra.mrb[0].mxu0 %v1128
      %v1275 = vpop.f32.mrb[0].mxu0
      %v1276 = vadd.f32 0.0, %v1275
      %v1277 = vpop.f32.mrb[0].mxu0
      %v1278 = vpop.f32.mrb[0].mxu0
      %v1279 = vadd.f32 0.0, %v1278
      %v1280 = vpop.f32.mrb[0].mxu0
      %1281 = vmatprep.mubr.bf16.mxu0 0
      %1282 = vmatmul.mubr.bf16.gmra.mrb[0].mxu0 %v1131
      %v1283 = vpop.f32.mrb[0].mxu0
      %v1284 = vadd.f32 0.0, %v1283
      %v1285 = vpop.f32.mrb[0].mxu0
      %v1286 = vpop.f32.mrb[0].mxu0
      %v1287 = vadd.f32 0.0, %v1286
      %v1288 = vpop.f32.mrb[0].mxu0
      %1289 = vmatprep.mubr.bf16.mxu0 0
      %1290 = vmatmul.mubr.bf16.gmra.mrb[0].mxu0 %v1134
      %v1291 = vpop.f32.mrb[0].mxu0
      %v1292 = vadd.f32 0.0, %v1291
      %v1293 = vpop.f32.mrb[0].mxu0
      %v1294 = vpop.f32.mrb[0].mxu0
      %v1295 = vadd.f32 0.0, %v1294
      %v1296 = vpop.f32.mrb[0].mxu0
      %1297 = vmatprep.mubr.bf16.mxu0 0
      %1298 = vmatmul.mubr.bf16.gmra.mrb[0].mxu0 %v1137
      %v1299 = vpop.f32.mrb[0].mxu0
      %v1300 = vadd.f32 0.0, %v1299
      %v1301 = vpop.f32.mrb[0].mxu0
      %v1302 = vpop.f32.mrb[0].mxu0
      %v1303 = vadd.f32 0.0, %v1302
      %v1304 = vpop.f32.mrb[0].mxu0
      %1305 = vmatprep.mubr.bf16.mxu0 0
      %1306 = vmatmul.mubr.bf16.gmra.mrb[0].mxu0 %v1140
      %v1307 = vpop.f32.mrb[0].mxu0
      %v1308 = vadd.f32 0.0, %v1307
      %v1309 = vpop.f32.mrb[0].mxu0
      %v1310 = vpop.f32.mrb[0].mxu0
      %v1311 = vadd.f32 0.0, %v1310
      %v1312 = vpop.f32.mrb[0].mxu0
      %1313 = vmatprep.mubr.bf16.mxu0 0
      %1314 = vmatmul.mubr.bf16.gmra.mrb[0].mxu0 %v1143
      %v1315 = vpop.f32.mrb[0].mxu0
      %v1316 = vadd.f32 0.0, %v1315
      %v1317 = vpop.f32.mrb[0].mxu0
      %v1318 = vpop.f32.mrb[0].mxu0
      %v1319 = vadd.f32 0.0, %v1318
      %v1320 = vpop.f32.mrb[0].mxu0
      %1321 = vdwg.mxu0
      %v1322 = vadd.f32 %v875, %v1180
      %v1323 = vadd.f32 %v878, %v1183
      %v1324 = vadd.f32 %v883, %v1188
      %v1325 = vadd.f32 %v886, %v1191
      %v1326 = vadd.f32 %v891, %v1196
      %v1327 = vadd.f32 %v894, %v1199
      %v1328 = vadd.f32 %v899, %v1204
      %v1329 = vadd.f32 %v902, %v1207
      %v1330 = vadd.f32 %v907, %v1212
      %v1331 = vadd.f32 %v910, %v1215
      %v1332 = vadd.f32 %v915, %v1220
      %v1333 = vadd.f32 %v918, %v1223
      %v1334 = vadd.f32 %v923, %v1228
      %v1335 = vadd.f32 %v926, %v1231
      %v1336 = vadd.f32 %v931, %v1236
      %v1337 = vadd.f32 %v934, %v1239
      %v1338 = vadd.f32 %v939, %v1244
      %v1339 = vadd.f32 %v942, %v1247
      %v1340 = vadd.f32 %v947, %v1252
      %v1341 = vadd.f32 %v950, %v1255
      %v1342 = vadd.f32 %v955, %v1260
      %v1343 = vadd.f32 %v958, %v1263
      %v1344 = vadd.f32 %v963, %v1268
      %v1345 = vadd.f32 %v966, %v1271
      %v1346 = vadd.f32 %v971, %v1276
      %v1347 = vadd.f32 %v974, %v1279
      %v1348 = vadd.f32 %v979, %v1284
      %v1349 = vadd.f32 %v982, %v1287
      %v1350 = vadd.f32 %v987, %v1292
      %v1351 = vadd.f32 %v990, %v1295
      %v1352 = vadd.f32 %v995, %v1300
      %v1353 = vadd.f32 %v998, %v1303
      %v1354 = vadd.f32 %v1003, %v1308
      %v1355 = vadd.f32 %v1006, %v1311
      %v1356 = vadd.f32 %v1011, %v1316
      %v1357 = vadd.f32 %v1014, %v1319
      %v1358 = vpack.c.bf16 %v367, %v366
      %v1359 = vpack.c.bf16 %v368, %v368
      %s1360 = scalar_lea.vmem %s2, 48
      %v1361 = vld [vmem:[%s1360] sm:$0xf]
      %v1362 = vld [vmem:[%s1360 + $0x4] sm:$0xf]
      %v1363 = vld [vmem:[%s1360 + $0x8] sm:$0xf]
      %v1364 = vld [vmem:[%s1360 + $0xc] sm:$0xf]
      %v1367 = vrot.slane %v1358, 1
      %v1368 = vsel %vm1041, %v1075, %v1367
      %v1369 = vrot.slane %v1359, 1
      %v1370 = vsel %vm1041, %v1367, %v1369
      %v1375 = vunpack.c.l.b16 %v1361
      %v1376 = vunpack.c.l.b16 %v1362
      %v1377 = vunpack.c.l.b16 %v1363
      %v1378 = vunpack.c.l.b16 %v1364
      %v1379 = vpack.c.b16 %v1376, %v1375
      %v1380 = vpack.c.b16 %v1378, %v1377
      %v1384 = vsel %vm560, %v1368, 0
      %v1387 = vsel %vm560, %v1370, 0
      %1389 = vmatprep.subr.bf16.mxu0 0
      %1390 = vmatpush1.bf16.msra.mxu0 %v1379
      %1391 = vmatprep.subr.bf16.mxu0 0
      %1392 = vmatpush1.bf16.msra.mxu0 %v1380
      %1393 = vmatprep.subr.bf16.mxu0 0
      %1394 = vmatpush1.bf16.msra.mxu0 0
      %1395 = vmatprep.subr.bf16.mxu0 0
      %1396 = vmatpush1.bf16.msra.mxu0 0
      %1397 = vmatprep.subr.bf16.mxu0 0
      %1398 = vmatpush1.bf16.msra.mxu0 0
      %1399 = vmatprep.subr.bf16.mxu0 0
      %1400 = vmatpush1.bf16.msra.mxu0 0
      %1401 = vmatprep.subr.bf16.mxu0 0
      %1402 = vmatpush1.bf16.msra.mxu0 0
      %1403 = vmatprep.subr.bf16.mxu0 0
      %1404 = vmatpush1.bf16.msra.mxu0 0
      %1405 = vmatprep.subr.bf16.mxu0 0
      %1406 = vmatpush1.bf16.msra.mxu0 0
      %1407 = vmatprep.subr.bf16.mxu0 0
      %1408 = vmatpush1.bf16.msra.mxu0 0
      %1409 = vmatprep.subr.bf16.mxu0 0
      %1410 = vmatpush1.bf16.msra.mxu0 0
      %1411 = vmatprep.subr.bf16.mxu0 0
      %1412 = vmatpush1.bf16.msra.mxu0 0
      %1413 = vmatprep.subr.bf16.mxu0 0
      %1414 = vmatpush1.bf16.msra.mxu0 0
      %1415 = vmatprep.subr.bf16.mxu0 0
      %1416 = vmatpush1.bf16.msra.mxu0 0
      %1417 = vmatprep.subr.bf16.mxu0 0
      %1418 = vmatpush1.bf16.msra.mxu0 0
      %1419 = vmatprep.subr.bf16.mxu0 0
      %1420 = vmatpush1.bf16.msra.mxu0 0
      %1421 = vmatprep.mubr.bf16.mxu0 0
      %1422 = vmatmul.mubr.bf16.gmra.mrb[0].mxu0 %v1095
      %v1423 = vpop.f32.mrb[0].mxu0
      %v1424 = vadd.f32 0.0, %v1423
      %v1425 = vpop.f32.mrb[0].mxu0
      %v1426 = vpop.f32.mrb[0].mxu0
      %v1427 = vadd.f32 0.0, %v1426
      %v1428 = vpop.f32.mrb[0].mxu0
      %1429 = vmatprep.mubr.bf16.mxu0 0
      %1430 = vmatmul.mubr.bf16.gmra.mrb[0].mxu0 %v1098
      %v1431 = vpop.f32.mrb[0].mxu0
      %v1432 = vadd.f32 0.0, %v1431
      %v1433 = vpop.f32.mrb[0].mxu0
      %v1434 = vpop.f32.mrb[0].mxu0
      %v1435 = vadd.f32 0.0, %v1434
      %v1436 = vpop.f32.mrb[0].mxu0
      %1437 = vmatprep.mubr.bf16.mxu0 0
      %1438 = vmatmul.mubr.bf16.gmra.mrb[0].mxu0 %v1101
      %v1439 = vpop.f32.mrb[0].mxu0
      %v1440 = vadd.f32 0.0, %v1439
      %v1441 = vpop.f32.mrb[0].mxu0
      %v1442 = vpop.f32.mrb[0].mxu0
      %v1443 = vadd.f32 0.0, %v1442
      %v1444 = vpop.f32.mrb[0].mxu0
      %1445 = vmatprep.mubr.bf16.mxu0 0
      %1446 = vmatmul.mubr.bf16.gmra.mrb[0].mxu0 %v1104
      %v1447 = vpop.f32.mrb[0].mxu0
      %v1448 = vadd.f32 0.0, %v1447
      %v1449 = vpop.f32.mrb[0].mxu0
      %v1450 = vpop.f32.mrb[0].mxu0
      %v1451 = vadd.f32 0.0, %v1450
      %v1452 = vpop.f32.mrb[0].mxu0
      %1453 = vmatprep.mubr.bf16.mxu0 0
      %1454 = vmatmul.mubr.bf16.gmra.mrb[0].mxu0 %v1107
      %v1455 = vpop.f32.mrb[0].mxu0
      %v1456 = vadd.f32 0.0, %v1455
      %v1457 = vpop.f32.mrb[0].mxu0
      %v1458 = vpop.f32.mrb[0].mxu0
      %v1459 = vadd.f32 0.0, %v1458
      %v1460 = vpop.f32.mrb[0].mxu0
      %1461 = vmatprep.mubr.bf16.mxu0 0
      %1462 = vmatmul.mubr.bf16.gmra.mrb[0].mxu0 %v1110
      %v1463 = vpop.f32.mrb[0].mxu0
      %v1464 = vadd.f32 0.0, %v1463
      %v1465 = vpop.f32.mrb[0].mxu0
      %v1466 = vpop.f32.mrb[0].mxu0
      %v1467 = vadd.f32 0.0, %v1466
      %v1468 = vpop.f32.mrb[0].mxu0
      %1469 = vmatprep.mubr.bf16.mxu0 0
      %1470 = vmatmul.mubr.bf16.gmra.mrb[0].mxu0 %v1113
      %v1471 = vpop.f32.mrb[0].mxu0
      %v1472 = vadd.f32 0.0, %v1471
      %v1473 = vpop.f32.mrb[0].mxu0
      %v1474 = vpop.f32.mrb[0].mxu0
      %v1475 = vadd.f32 0.0, %v1474
      %v1476 = vpop.f32.mrb[0].mxu0
      %1477 = vmatprep.mubr.bf16.mxu0 0
      %1478 = vmatmul.mubr.bf16.gmra.mrb[0].mxu0 %v1116
      %v1479 = vpop.f32.mrb[0].mxu0
      %v1480 = vadd.f32 0.0, %v1479
      %v1481 = vpop.f32.mrb[0].mxu0
      %v1482 = vpop.f32.mrb[0].mxu0
      %v1483 = vadd.f32 0.0, %v1482
      %v1484 = vpop.f32.mrb[0].mxu0
      %1485 = vmatprep.mubr.bf16.mxu0 0
      %1486 = vmatmul.mubr.bf16.gmra.mrb[0].mxu0 %v1119
      %v1487 = vpop.f32.mrb[0].mxu0
      %v1488 = vadd.f32 0.0, %v1487
      %v1489 = vpop.f32.mrb[0].mxu0
      %v1490 = vpop.f32.mrb[0].mxu0
      %v1491 = vadd.f32 0.0, %v1490
      %v1492 = vpop.f32.mrb[0].mxu0
      %1493 = vmatprep.mubr.bf16.mxu0 0
      %1494 = vmatmul.mubr.bf16.gmra.mrb[0].mxu0 %v1122
      %v1495 = vpop.f32.mrb[0].mxu0
      %v1496 = vadd.f32 0.0, %v1495
      %v1497 = vpop.f32.mrb[0].mxu0
      %v1498 = vpop.f32.mrb[0].mxu0
      %v1499 = vadd.f32 0.0, %v1498
      %v1500 = vpop.f32.mrb[0].mxu0
      %1501 = vmatprep.mubr.bf16.mxu0 0
      %1502 = vmatmul.mubr.bf16.gmra.mrb[0].mxu0 %v1125
      %v1503 = vpop.f32.mrb[0].mxu0
      %v1504 = vadd.f32 0.0, %v1503
      %v1505 = vpop.f32.mrb[0].mxu0
      %v1506 = vpop.f32.mrb[0].mxu0
      %v1507 = vadd.f32 0.0, %v1506
      %v1508 = vpop.f32.mrb[0].mxu0
      %1509 = vmatprep.mubr.bf16.mxu0 0
      %1510 = vmatmul.mubr.bf16.gmra.mrb[0].mxu0 %v1128
      %v1511 = vpop.f32.mrb[0].mxu0
      %v1512 = vadd.f32 0.0, %v1511
      %v1513 = vpop.f32.mrb[0].mxu0
      %v1514 = vpop.f32.mrb[0].mxu0
      %v1515 = vadd.f32 0.0, %v1514
      %v1516 = vpop.f32.mrb[0].mxu0
      %1517 = vmatprep.mubr.bf16.mxu0 0
      %1518 = vmatmul.mubr.bf16.gmra.mrb[0].mxu0 %v1131
      %v1519 = vpop.f32.mrb[0].mxu0
      %v1520 = vadd.f32 0.0, %v1519
      %v1521 = vpop.f32.mrb[0].mxu0
      %v1522 = vpop.f32.mrb[0].mxu0
      %v1523 = vadd.f32 0.0, %v1522
      %v1524 = vpop.f32.mrb[0].mxu0
      %1525 = vmatprep.mubr.bf16.mxu0 0
      %1526 = vmatmul.mubr.bf16.gmra.mrb[0].mxu0 %v1134
      %v1527 = vpop.f32.mrb[0].mxu0
      %v1528 = vadd.f32 0.0, %v1527
      %v1529 = vpop.f32.mrb[0].mxu0
      %v1530 = vpop.f32.mrb[0].mxu0
      %v1531 = vadd.f32 0.0, %v1530
      %v1532 = vpop.f32.mrb[0].mxu0
      %1533 = vmatprep.mubr.bf16.mxu0 0
      %1534 = vmatmul.mubr.bf16.gmra.mrb[0].mxu0 %v1137
      %v1535 = vpop.f32.mrb[0].mxu0
      %v1536 = vadd.f32 0.0, %v1535
      %v1537 = vpop.f32.mrb[0].mxu0
      %v1538 = vpop.f32.mrb[0].mxu0
      %v1539 = vadd.f32 0.0, %v1538
      %v1540 = vpop.f32.mrb[0].mxu0
      %1541 = vmatprep.mubr.bf16.mxu0 0
      %1542 = vmatmul.mubr.bf16.gmra.mrb[0].mxu0 %v1140
      %v1543 = vpop.f32.mrb[0].mxu0
      %v1544 = vadd.f32 0.0, %v1543
      %v1545 = vpop.f32.mrb[0].mxu0
      %v1546 = vpop.f32.mrb[0].mxu0
      %v1547 = vadd.f32 0.0, %v1546
      %v1548 = vpop.f32.mrb[0].mxu0
      %1549 = vmatprep.mubr.bf16.mxu0 0
      %1550 = vmatmul.mubr.bf16.gmra.mrb[0].mxu0 %v1384
      %v1551 = vpop.f32.mrb[0].mxu0
      %v1552 = vadd.f32 0.0, %v1551
      %v1553 = vpop.f32.mrb[0].mxu0
      %v1554 = vpop.f32.mrb[0].mxu0
      %v1555 = vadd.f32 0.0, %v1554
      %v1556 = vpop.f32.mrb[0].mxu0
      %1557 = vmatprep.mubr.bf16.mxu0 0
      %1558 = vmatmul.mubr.bf16.gmra.mrb[0].mxu0 %v1387
      %v1559 = vpop.f32.mrb[0].mxu0
      %v1560 = vadd.f32 0.0, %v1559
      %v1561 = vpop.f32.mrb[0].mxu0
      %v1562 = vpop.f32.mrb[0].mxu0
      %v1563 = vadd.f32 0.0, %v1562
      %v1564 = vpop.f32.mrb[0].mxu0
      %1565 = vdwg.mxu0
      %v1566 = vadd.f32 %v1322, %v1424
      %v1567 = vadd.f32 %v1323, %v1427
      %v1568 = vadd.f32 %v1324, %v1432
      %v1569 = vadd.f32 %v1325, %v1435
      %v1570 = vadd.f32 %v1326, %v1440
      %v1571 = vadd.f32 %v1327, %v1443
      %v1572 = vadd.f32 %v1328, %v1448
      %v1573 = vadd.f32 %v1329, %v1451
      %v1574 = vadd.f32 %v1330, %v1456
      %v1575 = vadd.f32 %v1331, %v1459
      %v1576 = vadd.f32 %v1332, %v1464
      %v1577 = vadd.f32 %v1333, %v1467
      %v1578 = vadd.f32 %v1334, %v1472
      %v1579 = vadd.f32 %v1335, %v1475
      %v1580 = vadd.f32 %v1336, %v1480
      %v1581 = vadd.f32 %v1337, %v1483
      %v1582 = vadd.f32 %v1338, %v1488
      %v1583 = vadd.f32 %v1339, %v1491
      %v1584 = vadd.f32 %v1340, %v1496
      %v1585 = vadd.f32 %v1341, %v1499
      %v1586 = vadd.f32 %v1342, %v1504
      %v1587 = vadd.f32 %v1343, %v1507
      %v1588 = vadd.f32 %v1344, %v1512
      %v1589 = vadd.f32 %v1345, %v1515
      %v1590 = vadd.f32 %v1346, %v1520
      %v1591 = vadd.f32 %v1347, %v1523
      %v1592 = vadd.f32 %v1348, %v1528
      %v1593 = vadd.f32 %v1349, %v1531
      %v1594 = vadd.f32 %v1350, %v1536
      %v1595 = vadd.f32 %v1351, %v1539
      %v1596 = vadd.f32 %v1352, %v1544
      %v1597 = vadd.f32 %v1353, %v1547
      %v1598 = vadd.f32 %v1354, %v1552
      %v1599 = vadd.f32 %v1355, %v1555
      %v1600 = vadd.f32 %v1356, %v1560
      %v1601 = vadd.f32 %v1357, %v1563
      %s1602 = scalar_lea.vmem %s2, 64
      %v1603 = vld [vmem:[%s1602] sm:$0xf]
      %v1604 = vld [vmem:[%s1602 + $0x4] sm:$0xf]
      %v1605 = vld [vmem:[%s1602 + $0x8] sm:$0xf]
      %v1606 = vld [vmem:[%s1602 + $0xc] sm:$0xf]
      %vm1607 = vsmask.f32 6400
      %v1608 = vrot.slane %v412, 1
      %v1609 = vrot.slane %v408, 2
      %v1610 = vor.u32 %v1608, %v1609
      %v1611 = vrot.slane %v420, 1
      %v1612 = vrot.slane %v416, 2
      %v1613 = vor.u32 %v1611, %v1612
      %v1614 = vsel %vm1607, %v1610, %v1613
      %v1615 = vrot.slane %v428, 1
      %v1616 = vrot.slane %v424, 2
      %v1617 = vor.u32 %v1615, %v1616
      %v1618 = vsel %vm1607, %v1613, %v1617
      %v1619 = vrot.slane %v436, 1
      %v1620 = vrot.slane %v432, 2
      %v1621 = vor.u32 %v1619, %v1620
      %v1622 = vsel %vm1607, %v1617, %v1621
      %v1623 = vrot.slane %v444, 1
      %v1624 = vrot.slane %v440, 2
      %v1625 = vor.u32 %v1623, %v1624
      %v1626 = vsel %vm1607, %v1621, %v1625
      %v1627 = vrot.slane %v452, 1
      %v1628 = vrot.slane %v448, 2
      %v1629 = vor.u32 %v1627, %v1628
      %v1630 = vsel %vm1607, %v1625, %v1629
      %v1631 = vrot.slane %v460, 1
      %v1632 = vrot.slane %v456, 2
      %v1633 = vor.u32 %v1631, %v1632
      %v1634 = vsel %vm1607, %v1629, %v1633
      %v1635 = vrot.slane %v468, 1
      %v1636 = vrot.slane %v464, 2
      %v1637 = vor.u32 %v1635, %v1636
      %v1638 = vsel %vm1607, %v1633, %v1637
      %v1639 = vrot.slane %v476, 1
      %v1640 = vrot.slane %v472, 2
      %v1641 = vor.u32 %v1639, %v1640
      %v1642 = vsel %vm1607, %v1637, %v1641
      %v1643 = vrot.slane %v484, 1
      %v1644 = vrot.slane %v480, 2
      %v1645 = vor.u32 %v1643, %v1644
      %v1646 = vsel %vm1607, %v1641, %v1645
      %v1647 = vrot.slane %v492, 1
      %v1648 = vrot.slane %v488, 2
      %v1649 = vor.u32 %v1647, %v1648
      %v1650 = vsel %vm1607, %v1645, %v1649
      %v1651 = vrot.slane %v500, 1
      %v1652 = vrot.slane %v496, 2
      %v1653 = vor.u32 %v1651, %v1652
      %v1654 = vsel %vm1607, %v1649, %v1653
      %v1655 = vrot.slane %v508, 1
      %v1656 = vrot.slane %v504, 2
      %v1657 = vor.u32 %v1655, %v1656
      %v1658 = vsel %vm1607, %v1653, %v1657
      %v1659 = vrot.slane %v516, 1
      %v1660 = vrot.slane %v512, 2
      %v1661 = vor.u32 %v1659, %v1660
      %v1662 = vsel %vm1607, %v1657, %v1661
      %v1663 = vrot.slane %v524, 1
      %v1664 = vrot.slane %v520, 2
      %v1665 = vor.u32 %v1663, %v1664
      %v1666 = vsel %vm1607, %v1661, %v1665
      %v1667 = vrot.slane %v532, 1
      %v1668 = vrot.slane %v528, 2
      %v1669 = vor.u32 %v1667, %v1668
      %v1670 = vsel %vm1607, %v1665, %v1669
      %v1671 = vrot.slane %v540, 1
      %v1672 = vrot.slane %v536, 2
      %v1673 = vor.u32 %v1671, %v1672
      %v1674 = vsel %vm1607, %v1669, %v1673
      %v1676 = vshrl.u32 %v1358, 16
      %v1678 = vrot.slane %v1676, 1
      %v1679 = vshll.u32 %v1358, 16
      %v1681 = vrot.slane %v1679, 2
      %v1682 = vor.u32 %v1678, %v1681
      %v1683 = vsel %vm1607, %v1673, %v1682
      %v1685 = vshrl.u32 %v1359, 16
      %v1687 = vrot.slane %v1685, 1
      %v1688 = vshll.u32 %v1359, 16
      %v1690 = vrot.slane %v1688, 2
      %v1691 = vor.u32 %v1687, %v1690
      %v1692 = vsel %vm1607, %v1682, %v1691
      %v1697 = vunpack.c.l.b16 %v1603
      %v1698 = vunpack.c.l.b16 %v1604
      %v1699 = vunpack.c.l.b16 %v1605
      %v1700 = vunpack.c.l.b16 %v1606
      %v1701 = vpack.c.b16 %v1698, %v1697
      %v1702 = vpack.c.b16 %v1700, %v1699
      %v1706 = vsel %vm560, %v1614, 0
      %v1709 = vsel %vm560, %v1618, 0
      %v1712 = vsel %vm560, %v1622, 0
      %v1715 = vsel %vm560, %v1626, 0
      %v1718 = vsel %vm560, %v1630, 0
      %v1721 = vsel %vm560, %v1634, 0
      %v1724 = vsel %vm560, %v1638, 0
      %v1727 = vsel %vm560, %v1642, 0
      %v1730 = vsel %vm560, %v1646, 0
      %v1733 = vsel %vm560, %v1650, 0
      %v1736 = vsel %vm560, %v1654, 0
      %v1739 = vsel %vm560, %v1658, 0
      %v1742 = vsel %vm560, %v1662, 0
      %v1745 = vsel %vm560, %v1666, 0
      %v1748 = vsel %vm560, %v1670, 0
      %v1751 = vsel %vm560, %v1674, 0
      %v1754 = vsel %vm560, %v1683, 0
      %v1757 = vsel %vm560, %v1692, 0
      %1759 = vmatprep.subr.bf16.mxu0 0
      %1760 = vmatpush1.bf16.msra.mxu0 %v1701
      %1761 = vmatprep.subr.bf16.mxu0 0
      %1762 = vmatpush1.bf16.msra.mxu0 %v1702
      %1763 = vmatprep.subr.bf16.mxu0 0
      %1764 = vmatpush1.bf16.msra.mxu0 0
      %1765 = vmatprep.subr.bf16.mxu0 0
      %1766 = vmatpush1.bf16.msra.mxu0 0
      %1767 = vmatprep.subr.bf16.mxu0 0
      %1768 = vmatpush1.bf16.msra.mxu0 0
      %1769 = vmatprep.subr.bf16.mxu0 0
      %1770 = vmatpush1.bf16.msra.mxu0 0
      %1771 = vmatprep.subr.bf16.mxu0 0
      %1772 = vmatpush1.bf16.msra.mxu0 0
      %1773 = vmatprep.subr.bf16.mxu0 0
      %1774 = vmatpush1.bf16.msra.mxu0 0
      %1775 = vmatprep.subr.bf16.mxu0 0
      %1776 = vmatpush1.bf16.msra.mxu0 0
      %1777 = vmatprep.subr.bf16.mxu0 0
      %1778 = vmatpush1.bf16.msra.mxu0 0
      %1779 = vmatprep.subr.bf16.mxu0 0
      %1780 = vmatpush1.bf16.msra.mxu0 0
      %1781 = vmatprep.subr.bf16.mxu0 0
      %1782 = vmatpush1.bf16.msra.mxu0 0
      %1783 = vmatprep.subr.bf16.mxu0 0
      %1784 = vmatpush1.bf16.msra.mxu0 0
      %1785 = vmatprep.subr.bf16.mxu0 0
      %1786 = vmatpush1.bf16.msra.mxu0 0
      %1787 = vmatprep.subr.bf16.mxu0 0
      %1788 = vmatpush1.bf16.msra.mxu0 0
      %1789 = vmatprep.subr.bf16.mxu0 0
      %1790 = vmatpush1.bf16.msra.mxu0 0
      %1791 = vmatprep.mubr.bf16.mxu0 0
      %1792 = vmatmul.mubr.bf16.gmra.mrb[0].mxu0 %v1706
      %v1793 = vpop.f32.mrb[0].mxu0
      %v1794 = vadd.f32 0.0, %v1793
      %v1795 = vpop.f32.mrb[0].mxu0
      %v1796 = vpop.f32.mrb[0].mxu0
      %v1797 = vadd.f32 0.0, %v1796
      %v1798 = vpop.f32.mrb[0].mxu0
      %1799 = vmatprep.mubr.bf16.mxu0 0
      %1800 = vmatmul.mubr.bf16.gmra.mrb[0].mxu0 %v1709
      %v1801 = vpop.f32.mrb[0].mxu0
      %v1802 = vadd.f32 0.0, %v1801
      %v1803 = vpop.f32.mrb[0].mxu0
      %v1804 = vpop.f32.mrb[0].mxu0
      %v1805 = vadd.f32 0.0, %v1804
      %v1806 = vpop.f32.mrb[0].mxu0
      %1807 = vmatprep.mubr.bf16.mxu0 0
      %1808 = vmatmul.mubr.bf16.gmra.mrb[0].mxu0 %v1712
      %v1809 = vpop.f32.mrb[0].mxu0
      %v1810 = vadd.f32 0.0, %v1809
      %v1811 = vpop.f32.mrb[0].mxu0
      %v1812 = vpop.f32.mrb[0].mxu0
      %v1813 = vadd.f32 0.0, %v1812
      %v1814 = vpop.f32.mrb[0].mxu0
      %1815 = vmatprep.mubr.bf16.mxu0 0
      %1816 = vmatmul.mubr.bf16.gmra.mrb[0].mxu0 %v1715
      %v1817 = vpop.f32.mrb[0].mxu0
      %v1818 = vadd.f32 0.0, %v1817
      %v1819 = vpop.f32.mrb[0].mxu0
      %v1820 = vpop.f32.mrb[0].mxu0
      %v1821 = vadd.f32 0.0, %v1820
      %v1822 = vpop.f32.mrb[0].mxu0
      %1823 = vmatprep.mubr.bf16.mxu0 0
      %1824 = vmatmul.mubr.bf16.gmra.mrb[0].mxu0 %v1718
      %v1825 = vpop.f32.mrb[0].mxu0
      %v1826 = vadd.f32 0.0, %v1825
      %v1827 = vpop.f32.mrb[0].mxu0
      %v1828 = vpop.f32.mrb[0].mxu0
      %v1829 = vadd.f32 0.0, %v1828
      %v1830 = vpop.f32.mrb[0].mxu0
      %1831 = vmatprep.mubr.bf16.mxu0 0
      %1832 = vmatmul.mubr.bf16.gmra.mrb[0].mxu0 %v1721
      %v1833 = vpop.f32.mrb[0].mxu0
      %v1834 = vadd.f32 0.0, %v1833
      %v1835 = vpop.f32.mrb[0].mxu0
      %v1836 = vpop.f32.mrb[0].mxu0
      %v1837 = vadd.f32 0.0, %v1836
      %v1838 = vpop.f32.mrb[0].mxu0
      %1839 = vmatprep.mubr.bf16.mxu0 0
      %1840 = vmatmul.mubr.bf16.gmra.mrb[0].mxu0 %v1724
      %v1841 = vpop.f32.mrb[0].mxu0
      %v1842 = vadd.f32 0.0, %v1841
      %v1843 = vpop.f32.mrb[0].mxu0
      %v1844 = vpop.f32.mrb[0].mxu0
      %v1845 = vadd.f32 0.0, %v1844
      %v1846 = vpop.f32.mrb[0].mxu0
      %1847 = vmatprep.mubr.bf16.mxu0 0
      %1848 = vmatmul.mubr.bf16.gmra.mrb[0].mxu0 %v1727
      %v1849 = vpop.f32.mrb[0].mxu0
      %v1850 = vadd.f32 0.0, %v1849
      %v1851 = vpop.f32.mrb[0].mxu0
      %v1852 = vpop.f32.mrb[0].mxu0
      %v1853 = vadd.f32 0.0, %v1852
      %v1854 = vpop.f32.mrb[0].mxu0
      %1855 = vmatprep.mubr.bf16.mxu0 0
      %1856 = vmatmul.mubr.bf16.gmra.mrb[0].mxu0 %v1730
      %v1857 = vpop.f32.mrb[0].mxu0
      %v1858 = vadd.f32 0.0, %v1857
      %v1859 = vpop.f32.mrb[0].mxu0
      %v1860 = vpop.f32.mrb[0].mxu0
      %v1861 = vadd.f32 0.0, %v1860
      %v1862 = vpop.f32.mrb[0].mxu0
      %1863 = vmatprep.mubr.bf16.mxu0 0
      %1864 = vmatmul.mubr.bf16.gmra.mrb[0].mxu0 %v1733
      %v1865 = vpop.f32.mrb[0].mxu0
      %v1866 = vadd.f32 0.0, %v1865
      %v1867 = vpop.f32.mrb[0].mxu0
      %v1868 = vpop.f32.mrb[0].mxu0
      %v1869 = vadd.f32 0.0, %v1868
      %v1870 = vpop.f32.mrb[0].mxu0
      %1871 = vmatprep.mubr.bf16.mxu0 0
      %1872 = vmatmul.mubr.bf16.gmra.mrb[0].mxu0 %v1736
      %v1873 = vpop.f32.mrb[0].mxu0
      %v1874 = vadd.f32 0.0, %v1873
      %v1875 = vpop.f32.mrb[0].mxu0
      %v1876 = vpop.f32.mrb[0].mxu0
      %v1877 = vadd.f32 0.0, %v1876
      %v1878 = vpop.f32.mrb[0].mxu0
      %1879 = vmatprep.mubr.bf16.mxu0 0
      %1880 = vmatmul.mubr.bf16.gmra.mrb[0].mxu0 %v1739
      %v1881 = vpop.f32.mrb[0].mxu0
      %v1882 = vadd.f32 0.0, %v1881
      %v1883 = vpop.f32.mrb[0].mxu0
      %v1884 = vpop.f32.mrb[0].mxu0
      %v1885 = vadd.f32 0.0, %v1884
      %v1886 = vpop.f32.mrb[0].mxu0
      %1887 = vmatprep.mubr.bf16.mxu0 0
      %1888 = vmatmul.mubr.bf16.gmra.mrb[0].mxu0 %v1742
      %v1889 = vpop.f32.mrb[0].mxu0
      %v1890 = vadd.f32 0.0, %v1889
      %v1891 = vpop.f32.mrb[0].mxu0
      %v1892 = vpop.f32.mrb[0].mxu0
      %v1893 = vadd.f32 0.0, %v1892
      %v1894 = vpop.f32.mrb[0].mxu0
      %1895 = vmatprep.mubr.bf16.mxu0 0
      %1896 = vmatmul.mubr.bf16.gmra.mrb[0].mxu0 %v1745
      %v1897 = vpop.f32.mrb[0].mxu0
      %v1898 = vadd.f32 0.0, %v1897
      %v1899 = vpop.f32.mrb[0].mxu0
      %v1900 = vpop.f32.mrb[0].mxu0
      %v1901 = vadd.f32 0.0, %v1900
      %v1902 = vpop.f32.mrb[0].mxu0
      %1903 = vmatprep.mubr.bf16.mxu0 0
      %1904 = vmatmul.mubr.bf16.gmra.mrb[0].mxu0 %v1748
      %v1905 = vpop.f32.mrb[0].mxu0
      %v1906 = vadd.f32 0.0, %v1905
      %v1907 = vpop.f32.mrb[0].mxu0
      %v1908 = vpop.f32.mrb[0].mxu0
      %v1909 = vadd.f32 0.0, %v1908
      %v1910 = vpop.f32.mrb[0].mxu0
      %1911 = vmatprep.mubr.bf16.mxu0 0
      %1912 = vmatmul.mubr.bf16.gmra.mrb[0].mxu0 %v1751
      %v1913 = vpop.f32.mrb[0].mxu0
      %v1914 = vadd.f32 0.0, %v1913
      %v1915 = vpop.f32.mrb[0].mxu0
      %v1916 = vpop.f32.mrb[0].mxu0
      %v1917 = vadd.f32 0.0, %v1916
      %v1918 = vpop.f32.mrb[0].mxu0
      %1919 = vmatprep.mubr.bf16.mxu0 0
      %1920 = vmatmul.mubr.bf16.gmra.mrb[0].mxu0 %v1754
      %v1921 = vpop.f32.mrb[0].mxu0
      %v1922 = vadd.f32 0.0, %v1921
      %v1923 = vpop.f32.mrb[0].mxu0
      %v1924 = vpop.f32.mrb[0].mxu0
      %v1925 = vadd.f32 0.0, %v1924
      %v1926 = vpop.f32.mrb[0].mxu0
      %1927 = vmatprep.mubr.bf16.mxu0 0
      %1928 = vmatmul.mubr.bf16.gmra.mrb[0].mxu0 %v1757
      %v1929 = vpop.f32.mrb[0].mxu0
      %v1930 = vadd.f32 0.0, %v1929
      %v1931 = vpop.f32.mrb[0].mxu0
      %v1932 = vpop.f32.mrb[0].mxu0
      %v1933 = vadd.f32 0.0, %v1932
      %v1934 = vpop.f32.mrb[0].mxu0
      %1935 = vdwg.mxu0
      %v1936 = vadd.f32 %v1566, %v1794
      %v1937 = vadd.f32 %v1567, %v1797
      %v1938 = vadd.f32 %v1568, %v1802
      %v1939 = vadd.f32 %v1569, %v1805
      %v1940 = vadd.f32 %v1570, %v1810
      %v1941 = vadd.f32 %v1571, %v1813
      %v1942 = vadd.f32 %v1572, %v1818
      %v1943 = vadd.f32 %v1573, %v1821
      %v1944 = vadd.f32 %v1574, %v1826
      %v1945 = vadd.f32 %v1575, %v1829
      %v1946 = vadd.f32 %v1576, %v1834
      %v1947 = vadd.f32 %v1577, %v1837
      %v1948 = vadd.f32 %v1578, %v1842
      %v1949 = vadd.f32 %v1579, %v1845
      %v1950 = vadd.f32 %v1580, %v1850
      %v1951 = vadd.f32 %v1581, %v1853
      %v1952 = vadd.f32 %v1582, %v1858
      %v1953 = vadd.f32 %v1583, %v1861
      %v1954 = vadd.f32 %v1584, %v1866
      %v1955 = vadd.f32 %v1585, %v1869
      %v1956 = vadd.f32 %v1586, %v1874
      %v1957 = vadd.f32 %v1587, %v1877
      %v1958 = vadd.f32 %v1588, %v1882
      %v1959 = vadd.f32 %v1589, %v1885
      %v1960 = vadd.f32 %v1590, %v1890
      %v1961 = vadd.f32 %v1591, %v1893
      %v1962 = vadd.f32 %v1592, %v1898
      %v1963 = vadd.f32 %v1593, %v1901
      %v1964 = vadd.f32 %v1594, %v1906
      %v1965 = vadd.f32 %v1595, %v1909
      %v1966 = vadd.f32 %v1596, %v1914
      %v1967 = vadd.f32 %v1597, %v1917
      %v1968 = vadd.f32 %v1598, %v1922
      %v1969 = vadd.f32 %v1599, %v1925
      %v1970 = vadd.f32 %v1600, %v1930
      %v1971 = vadd.f32 %v1601, %v1933
      %s1972 = scalar_lea.vmem %s2, 80
      %v1973 = vld [vmem:[%s1972] sm:$0xf]
      %v1974 = vld [vmem:[%s1972 + $0x4] sm:$0xf]
      %v1975 = vld [vmem:[%s1972 + $0x8] sm:$0xf]
      %v1976 = vld [vmem:[%s1972 + $0xc] sm:$0xf]
      %vm1977 = vcmask 1045504
      %v1978 = vrot.slane %v372, 2
      %v1979 = vrot.slane %v373, 2
      %v1980 = vsel %vm1977, %v1978, %v1979
      %v1981 = vrot.slane %v374, 2
      %v1982 = vsel %vm1977, %v1979, %v1981
      %v1983 = vrot.slane %v375, 2
      %v1984 = vsel %vm1977, %v1981, %v1983
      %v1985 = vrot.slane %v376, 2
      %v1986 = vsel %vm1977, %v1983, %v1985
      %v1987 = vrot.slane %v377, 2
      %v1988 = vsel %vm1977, %v1985, %v1987
      %v1989 = vrot.slane %v378, 2
      %v1990 = vsel %vm1977, %v1987, %v1989
      %v1991 = vrot.slane %v379, 2
      %v1992 = vsel %vm1977, %v1989, %v1991
      %v1993 = vrot.slane %v380, 2
      %v1994 = vsel %vm1977, %v1991, %v1993
      %v1995 = vrot.slane %v381, 2
      %v1996 = vsel %vm1977, %v1993, %v1995
      %v1997 = vrot.slane %v382, 2
      %v1998 = vsel %vm1977, %v1995, %v1997
      %v1999 = vrot.slane %v383, 2
      %v2000 = vsel %vm1977, %v1997, %v1999
      %v2001 = vrot.slane %v384, 2
      %v2002 = vsel %vm1977, %v1999, %v2001
      %v2003 = vrot.slane %v385, 2
      %v2004 = vsel %vm1977, %v2001, %v2003
      %v2005 = vrot.slane %v386, 2
      %v2006 = vsel %vm1977, %v2003, %v2005
      %v2007 = vrot.slane %v387, 2
      %v2008 = vsel %vm1977, %v2005, %v2007
      %v2009 = vrot.slane %v388, 2
      %v2010 = vsel %vm1977, %v2007, %v2009
      %v2011 = vrot.slane %v1358, 2
      %v2012 = vsel %vm1977, %v2009, %v2011
      %v2013 = vrot.slane %v1359, 2
      %v2014 = vsel %vm1977, %v2011, %v2013
      %v2019 = vunpack.c.l.b16 %v1973
      %v2020 = vunpack.c.l.b16 %v1974
      %v2021 = vunpack.c.l.b16 %v1975
      %v2022 = vunpack.c.l.b16 %v1976
      %v2023 = vpack.c.b16 %v2020, %v2019
      %v2024 = vpack.c.b16 %v2022, %v2021
      %v2028 = vsel %vm560, %v1980, 0
      %v2031 = vsel %vm560, %v1982, 0
      %v2034 = vsel %vm560, %v1984, 0
      %v2037 = vsel %vm560, %v1986, 0
      %v2040 = vsel %vm560, %v1988, 0
      %v2043 = vsel %vm560, %v1990, 0
      %v2046 = vsel %vm560, %v1992, 0
      %v2049 = vsel %vm560, %v1994, 0
      %v2052 = vsel %vm560, %v1996, 0
      %v2055 = vsel %vm560, %v1998, 0
      %v2058 = vsel %vm560, %v2000, 0
      %v2061 = vsel %vm560, %v2002, 0
      %v2064 = vsel %vm560, %v2004, 0
      %v2067 = vsel %vm560, %v2006, 0
      %v2070 = vsel %vm560, %v2008, 0
      %v2073 = vsel %vm560, %v2010, 0
      %v2076 = vsel %vm560, %v2012, 0
      %v2079 = vsel %vm560, %v2014, 0
      %2081 = vmatprep.subr.bf16.mxu0 0
      %2082 = vmatpush1.bf16.msra.mxu0 %v2023
      %2083 = vmatprep.subr.bf16.mxu0 0
      %2084 = vmatpush1.bf16.msra.mxu0 %v2024
      %2085 = vmatprep.subr.bf16.mxu0 0
      %2086 = vmatpush1.bf16.msra.mxu0 0
      %2087 = vmatprep.subr.bf16.mxu0 0
      %2088 = vmatpush1.bf16.msra.mxu0 0
      %2089 = vmatprep.subr.bf16.mxu0 0
      %2090 = vmatpush1.bf16.msra.mxu0 0
      %2091 = vmatprep.subr.bf16.mxu0 0
      %2092 = vmatpush1.bf16.msra.mxu0 0
      %2093 = vmatprep.subr.bf16.mxu0 0
      %2094 = vmatpush1.bf16.msra.mxu0 0
      %2095 = vmatprep.subr.bf16.mxu0 0
      %2096 = vmatpush1.bf16.msra.mxu0 0
      %2097 = vmatprep.subr.bf16.mxu0 0
      %2098 = vmatpush1.bf16.msra.mxu0 0
      %2099 = vmatprep.subr.bf16.mxu0 0
      %2100 = vmatpush1.bf16.msra.mxu0 0
      %2101 = vmatprep.subr.bf16.mxu0 0
      %2102 = vmatpush1.bf16.msra.mxu0 0
      %2103 = vmatprep.subr.bf16.mxu0 0
      %2104 = vmatpush1.bf16.msra.mxu0 0
      %2105 = vmatprep.subr.bf16.mxu0 0
      %2106 = vmatpush1.bf16.msra.mxu0 0
      %2107 = vmatprep.subr.bf16.mxu0 0
      %2108 = vmatpush1.bf16.msra.mxu0 0
      %2109 = vmatprep.subr.bf16.mxu0 0
      %2110 = vmatpush1.bf16.msra.mxu0 0
      %2111 = vmatprep.subr.bf16.mxu0 0
      %2112 = vmatpush1.bf16.msra.mxu0 0
      %2113 = vmatprep.mubr.bf16.mxu0 0
      %2114 = vmatmul.mubr.bf16.gmra.mrb[0].mxu0 %v2028
      %v2115 = vpop.f32.mrb[0].mxu0
      %v2116 = vadd.f32 0.0, %v2115
      %v2117 = vpop.f32.mrb[0].mxu0
      %v2118 = vpop.f32.mrb[0].mxu0
      %v2119 = vadd.f32 0.0, %v2118
      %v2120 = vpop.f32.mrb[0].mxu0
      %2121 = vmatprep.mubr.bf16.mxu0 0
      %2122 = vmatmul.mubr.bf16.gmra.mrb[0].mxu0 %v2031
      %v2123 = vpop.f32.mrb[0].mxu0
      %v2124 = vadd.f32 0.0, %v2123
      %v2125 = vpop.f32.mrb[0].mxu0
      %v2126 = vpop.f32.mrb[0].mxu0
      %v2127 = vadd.f32 0.0, %v2126
      %v2128 = vpop.f32.mrb[0].mxu0
      %2129 = vmatprep.mubr.bf16.mxu0 0
      %2130 = vmatmul.mubr.bf16.gmra.mrb[0].mxu0 %v2034
      %v2131 = vpop.f32.mrb[0].mxu0
      %v2132 = vadd.f32 0.0, %v2131
      %v2133 = vpop.f32.mrb[0].mxu0
      %v2134 = vpop.f32.mrb[0].mxu0
      %v2135 = vadd.f32 0.0, %v2134
      %v2136 = vpop.f32.mrb[0].mxu0
      %2137 = vmatprep.mubr.bf16.mxu0 0
      %2138 = vmatmul.mubr.bf16.gmra.mrb[0].mxu0 %v2037
      %v2139 = vpop.f32.mrb[0].mxu0
      %v2140 = vadd.f32 0.0, %v2139
      %v2141 = vpop.f32.mrb[0].mxu0
      %v2142 = vpop.f32.mrb[0].mxu0
      %v2143 = vadd.f32 0.0, %v2142
      %v2144 = vpop.f32.mrb[0].mxu0
      %2145 = vmatprep.mubr.bf16.mxu0 0
      %2146 = vmatmul.mubr.bf16.gmra.mrb[0].mxu0 %v2040
      %v2147 = vpop.f32.mrb[0].mxu0
      %v2148 = vadd.f32 0.0, %v2147
      %v2149 = vpop.f32.mrb[0].mxu0
      %v2150 = vpop.f32.mrb[0].mxu0
      %v2151 = vadd.f32 0.0, %v2150
      %v2152 = vpop.f32.mrb[0].mxu0
      %2153 = vmatprep.mubr.bf16.mxu0 0
      %2154 = vmatmul.mubr.bf16.gmra.mrb[0].mxu0 %v2043
      %v2155 = vpop.f32.mrb[0].mxu0
      %v2156 = vadd.f32 0.0, %v2155
      %v2157 = vpop.f32.mrb[0].mxu0
      %v2158 = vpop.f32.mrb[0].mxu0
      %v2159 = vadd.f32 0.0, %v2158
      %v2160 = vpop.f32.mrb[0].mxu0
      %2161 = vmatprep.mubr.bf16.mxu0 0
      %2162 = vmatmul.mubr.bf16.gmra.mrb[0].mxu0 %v2046
      %v2163 = vpop.f32.mrb[0].mxu0
      %v2164 = vadd.f32 0.0, %v2163
      %v2165 = vpop.f32.mrb[0].mxu0
      %v2166 = vpop.f32.mrb[0].mxu0
      %v2167 = vadd.f32 0.0, %v2166
      %v2168 = vpop.f32.mrb[0].mxu0
      %2169 = vmatprep.mubr.bf16.mxu0 0
      %2170 = vmatmul.mubr.bf16.gmra.mrb[0].mxu0 %v2049
      %v2171 = vpop.f32.mrb[0].mxu0
      %v2172 = vadd.f32 0.0, %v2171
      %v2173 = vpop.f32.mrb[0].mxu0
      %v2174 = vpop.f32.mrb[0].mxu0
      %v2175 = vadd.f32 0.0, %v2174
      %v2176 = vpop.f32.mrb[0].mxu0
      %2177 = vmatprep.mubr.bf16.mxu0 0
      %2178 = vmatmul.mubr.bf16.gmra.mrb[0].mxu0 %v2052
      %v2179 = vpop.f32.mrb[0].mxu0
      %v2180 = vadd.f32 0.0, %v2179
      %v2181 = vpop.f32.mrb[0].mxu0
      %v2182 = vpop.f32.mrb[0].mxu0
      %v2183 = vadd.f32 0.0, %v2182
      %v2184 = vpop.f32.mrb[0].mxu0
      %2185 = vmatprep.mubr.bf16.mxu0 0
      %2186 = vmatmul.mubr.bf16.gmra.mrb[0].mxu0 %v2055
      %v2187 = vpop.f32.mrb[0].mxu0
      %v2188 = vadd.f32 0.0, %v2187
      %v2189 = vpop.f32.mrb[0].mxu0
      %v2190 = vpop.f32.mrb[0].mxu0
      %v2191 = vadd.f32 0.0, %v2190
      %v2192 = vpop.f32.mrb[0].mxu0
      %2193 = vmatprep.mubr.bf16.mxu0 0
      %2194 = vmatmul.mubr.bf16.gmra.mrb[0].mxu0 %v2058
      %v2195 = vpop.f32.mrb[0].mxu0
      %v2196 = vadd.f32 0.0, %v2195
      %v2197 = vpop.f32.mrb[0].mxu0
      %v2198 = vpop.f32.mrb[0].mxu0
      %v2199 = vadd.f32 0.0, %v2198
      %v2200 = vpop.f32.mrb[0].mxu0
      %2201 = vmatprep.mubr.bf16.mxu0 0
      %2202 = vmatmul.mubr.bf16.gmra.mrb[0].mxu0 %v2061
      %v2203 = vpop.f32.mrb[0].mxu0
      %v2204 = vadd.f32 0.0, %v2203
      %v2205 = vpop.f32.mrb[0].mxu0
      %v2206 = vpop.f32.mrb[0].mxu0
      %v2207 = vadd.f32 0.0, %v2206
      %v2208 = vpop.f32.mrb[0].mxu0
      %2209 = vmatprep.mubr.bf16.mxu0 0
      %2210 = vmatmul.mubr.bf16.gmra.mrb[0].mxu0 %v2064
      %v2211 = vpop.f32.mrb[0].mxu0
      %v2212 = vadd.f32 0.0, %v2211
      %v2213 = vpop.f32.mrb[0].mxu0
      %v2214 = vpop.f32.mrb[0].mxu0
      %v2215 = vadd.f32 0.0, %v2214
      %v2216 = vpop.f32.mrb[0].mxu0
      %2217 = vmatprep.mubr.bf16.mxu0 0
      %2218 = vmatmul.mubr.bf16.gmra.mrb[0].mxu0 %v2067
      %v2219 = vpop.f32.mrb[0].mxu0
      %v2220 = vadd.f32 0.0, %v2219
      %v2221 = vpop.f32.mrb[0].mxu0
      %v2222 = vpop.f32.mrb[0].mxu0
      %v2223 = vadd.f32 0.0, %v2222
      %v2224 = vpop.f32.mrb[0].mxu0
      %2225 = vmatprep.mubr.bf16.mxu0 0
      %2226 = vmatmul.mubr.bf16.gmra.mrb[0].mxu0 %v2070
      %v2227 = vpop.f32.mrb[0].mxu0
      %v2228 = vadd.f32 0.0, %v2227
      %v2229 = vpop.f32.mrb[0].mxu0
      %v2230 = vpop.f32.mrb[0].mxu0
      %v2231 = vadd.f32 0.0, %v2230
      %v2232 = vpop.f32.mrb[0].mxu0
      %2233 = vmatprep.mubr.bf16.mxu0 0
      %2234 = vmatmul.mubr.bf16.gmra.mrb[0].mxu0 %v2073
      %v2235 = vpop.f32.mrb[0].mxu0
      %v2236 = vadd.f32 0.0, %v2235
      %v2237 = vpop.f32.mrb[0].mxu0
      %v2238 = vpop.f32.mrb[0].mxu0
      %v2239 = vadd.f32 0.0, %v2238
      %v2240 = vpop.f32.mrb[0].mxu0
      %2241 = vmatprep.mubr.bf16.mxu0 0
      %2242 = vmatmul.mubr.bf16.gmra.mrb[0].mxu0 %v2076
      %v2243 = vpop.f32.mrb[0].mxu0
      %v2244 = vadd.f32 0.0, %v2243
      %v2245 = vpop.f32.mrb[0].mxu0
      %v2246 = vpop.f32.mrb[0].mxu0
      %v2247 = vadd.f32 0.0, %v2246
      %v2248 = vpop.f32.mrb[0].mxu0
      %2249 = vmatprep.mubr.bf16.mxu0 0
      %2250 = vmatmul.mubr.bf16.gmra.mrb[0].mxu0 %v2079
      %v2251 = vpop.f32.mrb[0].mxu0
      %v2252 = vadd.f32 0.0, %v2251
      %v2253 = vpop.f32.mrb[0].mxu0
      %v2254 = vpop.f32.mrb[0].mxu0
      %v2255 = vadd.f32 0.0, %v2254
      %v2256 = vpop.f32.mrb[0].mxu0
      %2257 = vdwg.mxu0
      %v2258 = vadd.f32 %v1936, %v2116
      %v2259 = vadd.f32 %v1937, %v2119
      %v2260 = vadd.f32 %v1938, %v2124
      %v2261 = vadd.f32 %v1939, %v2127
      %v2262 = vadd.f32 %v1940, %v2132
      %v2263 = vadd.f32 %v1941, %v2135
      %v2264 = vadd.f32 %v1942, %v2140
      %v2265 = vadd.f32 %v1943, %v2143
      %v2266 = vadd.f32 %v1944, %v2148
      %v2267 = vadd.f32 %v1945, %v2151
      %v2268 = vadd.f32 %v1946, %v2156
      %v2269 = vadd.f32 %v1947, %v2159
      %v2270 = vadd.f32 %v1948, %v2164
      %v2271 = vadd.f32 %v1949, %v2167
      %v2272 = vadd.f32 %v1950, %v2172
      %v2273 = vadd.f32 %v1951, %v2175
      %v2274 = vadd.f32 %v1952, %v2180
      %v2275 = vadd.f32 %v1953, %v2183
      %v2276 = vadd.f32 %v1954, %v2188
      %v2277 = vadd.f32 %v1955, %v2191
      %v2278 = vadd.f32 %v1956, %v2196
      %v2279 = vadd.f32 %v1957, %v2199
      %v2280 = vadd.f32 %v1958, %v2204
      %v2281 = vadd.f32 %v1959, %v2207
      %v2282 = vadd.f32 %v1960, %v2212
      %v2283 = vadd.f32 %v1961, %v2215
      %v2284 = vadd.f32 %v1962, %v2220
      %v2285 = vadd.f32 %v1963, %v2223
      %v2286 = vadd.f32 %v1964, %v2228
      %v2287 = vadd.f32 %v1965, %v2231
      %v2288 = vadd.f32 %v1966, %v2236
      %v2289 = vadd.f32 %v1967, %v2239
      %v2290 = vadd.f32 %v1968, %v2244
      %v2291 = vadd.f32 %v1969, %v2247
      %v2292 = vadd.f32 %v1970, %v2252
      %v2293 = vadd.f32 %v1971, %v2255
      %v2294 = vpack.c.bf16 %v369, %v368
      %v2295 = vpack.c.bf16 %v370, %v370
      %s2296 = scalar_lea.vmem %s2, 96
      %v2297 = vld [vmem:[%s2296] sm:$0xf]
      %v2298 = vld [vmem:[%s2296 + $0x4] sm:$0xf]
      %v2299 = vld [vmem:[%s2296 + $0x8] sm:$0xf]
      %v2300 = vld [vmem:[%s2296 + $0xc] sm:$0xf]
      %v2303 = vrot.slane %v2294, 2
      %v2304 = vsel %vm1977, %v2011, %v2303
      %v2305 = vrot.slane %v2295, 2
      %v2306 = vsel %vm1977, %v2303, %v2305
      %v2311 = vunpack.c.l.b16 %v2297
      %v2312 = vunpack.c.l.b16 %v2298
      %v2313 = vunpack.c.l.b16 %v2299
      %v2314 = vunpack.c.l.b16 %v2300
      %v2315 = vpack.c.b16 %v2312, %v2311
      %v2316 = vpack.c.b16 %v2314, %v2313
      %v2320 = vsel %vm560, %v2304, 0
      %v2323 = vsel %vm560, %v2306, 0
      %2325 = vmatprep.subr.bf16.mxu0 0
      %2326 = vmatpush1.bf16.msra.mxu0 %v2315
      %2327 = vmatprep.subr.bf16.mxu0 0
      %2328 = vmatpush1.bf16.msra.mxu0 %v2316
      %2329 = vmatprep.subr.bf16.mxu0 0
      %2330 = vmatpush1.bf16.msra.mxu0 0
      %2331 = vmatprep.subr.bf16.mxu0 0
      %2332 = vmatpush1.bf16.msra.mxu0 0
      %2333 = vmatprep.subr.bf16.mxu0 0
      %2334 = vmatpush1.bf16.msra.mxu0 0
      %2335 = vmatprep.subr.bf16.mxu0 0
      %2336 = vmatpush1.bf16.msra.mxu0 0
      %2337 = vmatprep.subr.bf16.mxu0 0
      %2338 = vmatpush1.bf16.msra.mxu0 0
      %2339 = vmatprep.subr.bf16.mxu0 0
      %2340 = vmatpush1.bf16.msra.mxu0 0
      %2341 = vmatprep.subr.bf16.mxu0 0
      %2342 = vmatpush1.bf16.msra.mxu0 0
      %2343 = vmatprep.subr.bf16.mxu0 0
      %2344 = vmatpush1.bf16.msra.mxu0 0
      %2345 = vmatprep.subr.bf16.mxu0 0
      %2346 = vmatpush1.bf16.msra.mxu0 0
      %2347 = vmatprep.subr.bf16.mxu0 0
      %2348 = vmatpush1.bf16.msra.mxu0 0
      %2349 = vmatprep.subr.bf16.mxu0 0
      %2350 = vmatpush1.bf16.msra.mxu0 0
      %2351 = vmatprep.subr.bf16.mxu0 0
      %2352 = vmatpush1.bf16.msra.mxu0 0
      %2353 = vmatprep.subr.bf16.mxu0 0
      %2354 = vmatpush1.bf16.msra.mxu0 0
      %2355 = vmatprep.subr.bf16.mxu0 0
      %2356 = vmatpush1.bf16.msra.mxu0 0
      %2357 = vmatprep.mubr.bf16.mxu0 0
      %2358 = vmatmul.mubr.bf16.gmra.mrb[0].mxu0 %v2031
      %v2359 = vpop.f32.mrb[0].mxu0
      %v2360 = vadd.f32 0.0, %v2359
      %v2361 = vpop.f32.mrb[0].mxu0
      %v2362 = vpop.f32.mrb[0].mxu0
      %v2363 = vadd.f32 0.0, %v2362
      %v2364 = vpop.f32.mrb[0].mxu0
      %2365 = vmatprep.mubr.bf16.mxu0 0
      %2366 = vmatmul.mubr.bf16.gmra.mrb[0].mxu0 %v2034
      %v2367 = vpop.f32.mrb[0].mxu0
      %v2368 = vadd.f32 0.0, %v2367
      %v2369 = vpop.f32.mrb[0].mxu0
      %v2370 = vpop.f32.mrb[0].mxu0
      %v2371 = vadd.f32 0.0, %v2370
      %v2372 = vpop.f32.mrb[0].mxu0
      %2373 = vmatprep.mubr.bf16.mxu0 0
      %2374 = vmatmul.mubr.bf16.gmra.mrb[0].mxu0 %v2037
      %v2375 = vpop.f32.mrb[0].mxu0
      %v2376 = vadd.f32 0.0, %v2375
      %v2377 = vpop.f32.mrb[0].mxu0
      %v2378 = vpop.f32.mrb[0].mxu0
      %v2379 = vadd.f32 0.0, %v2378
      %v2380 = vpop.f32.mrb[0].mxu0
      %2381 = vmatprep.mubr.bf16.mxu0 0
      %2382 = vmatmul.mubr.bf16.gmra.mrb[0].mxu0 %v2040
      %v2383 = vpop.f32.mrb[0].mxu0
      %v2384 = vadd.f32 0.0, %v2383
      %v2385 = vpop.f32.mrb[0].mxu0
      %v2386 = vpop.f32.mrb[0].mxu0
      %v2387 = vadd.f32 0.0, %v2386
      %v2388 = vpop.f32.mrb[0].mxu0
      %2389 = vmatprep.mubr.bf16.mxu0 0
      %2390 = vmatmul.mubr.bf16.gmra.mrb[0].mxu0 %v2043
      %v2391 = vpop.f32.mrb[0].mxu0
      %v2392 = vadd.f32 0.0, %v2391
      %v2393 = vpop.f32.mrb[0].mxu0
      %v2394 = vpop.f32.mrb[0].mxu0
      %v2395 = vadd.f32 0.0, %v2394
      %v2396 = vpop.f32.mrb[0].mxu0
      %2397 = vmatprep.mubr.bf16.mxu0 0
      %2398 = vmatmul.mubr.bf16.gmra.mrb[0].mxu0 %v2046
      %v2399 = vpop.f32.mrb[0].mxu0
      %v2400 = vadd.f32 0.0, %v2399
      %v2401 = vpop.f32.mrb[0].mxu0
      %v2402 = vpop.f32.mrb[0].mxu0
      %v2403 = vadd.f32 0.0, %v2402
      %v2404 = vpop.f32.mrb[0].mxu0
      %2405 = vmatprep.mubr.bf16.mxu0 0
      %2406 = vmatmul.mubr.bf16.gmra.mrb[0].mxu0 %v2049
      %v2407 = vpop.f32.mrb[0].mxu0
      %v2408 = vadd.f32 0.0, %v2407
      %v2409 = vpop.f32.mrb[0].mxu0
      %v2410 = vpop.f32.mrb[0].mxu0
      %v2411 = vadd.f32 0.0, %v2410
      %v2412 = vpop.f32.mrb[0].mxu0
      %2413 = vmatprep.mubr.bf16.mxu0 0
      %2414 = vmatmul.mubr.bf16.gmra.mrb[0].mxu0 %v2052
      %v2415 = vpop.f32.mrb[0].mxu0
      %v2416 = vadd.f32 0.0, %v2415
      %v2417 = vpop.f32.mrb[0].mxu0
      %v2418 = vpop.f32.mrb[0].mxu0
      %v2419 = vadd.f32 0.0, %v2418
      %v2420 = vpop.f32.mrb[0].mxu0
      %2421 = vmatprep.mubr.bf16.mxu0 0
      %2422 = vmatmul.mubr.bf16.gmra.mrb[0].mxu0 %v2055
      %v2423 = vpop.f32.mrb[0].mxu0
      %v2424 = vadd.f32 0.0, %v2423
      %v2425 = vpop.f32.mrb[0].mxu0
      %v2426 = vpop.f32.mrb[0].mxu0
      %v2427 = vadd.f32 0.0, %v2426
      %v2428 = vpop.f32.mrb[0].mxu0
      %2429 = vmatprep.mubr.bf16.mxu0 0
      %2430 = vmatmul.mubr.bf16.gmra.mrb[0].mxu0 %v2058
      %v2431 = vpop.f32.mrb[0].mxu0
      %v2432 = vadd.f32 0.0, %v2431
      %v2433 = vpop.f32.mrb[0].mxu0
      %v2434 = vpop.f32.mrb[0].mxu0
      %v2435 = vadd.f32 0.0, %v2434
      %v2436 = vpop.f32.mrb[0].mxu0
      %2437 = vmatprep.mubr.bf16.mxu0 0
      %2438 = vmatmul.mubr.bf16.gmra.mrb[0].mxu0 %v2061
      %v2439 = vpop.f32.mrb[0].mxu0
      %v2440 = vadd.f32 0.0, %v2439
      %v2441 = vpop.f32.mrb[0].mxu0
      %v2442 = vpop.f32.mrb[0].mxu0
      %v2443 = vadd.f32 0.0, %v2442
      %v2444 = vpop.f32.mrb[0].mxu0
      %2445 = vmatprep.mubr.bf16.mxu0 0
      %2446 = vmatmul.mubr.bf16.gmra.mrb[0].mxu0 %v2064
      %v2447 = vpop.f32.mrb[0].mxu0
      %v2448 = vadd.f32 0.0, %v2447
      %v2449 = vpop.f32.mrb[0].mxu0
      %v2450 = vpop.f32.mrb[0].mxu0
      %v2451 = vadd.f32 0.0, %v2450
      %v2452 = vpop.f32.mrb[0].mxu0
      %2453 = vmatprep.mubr.bf16.mxu0 0
      %2454 = vmatmul.mubr.bf16.gmra.mrb[0].mxu0 %v2067
      %v2455 = vpop.f32.mrb[0].mxu0
      %v2456 = vadd.f32 0.0, %v2455
      %v2457 = vpop.f32.mrb[0].mxu0
      %v2458 = vpop.f32.mrb[0].mxu0
      %v2459 = vadd.f32 0.0, %v2458
      %v2460 = vpop.f32.mrb[0].mxu0
      %2461 = vmatprep.mubr.bf16.mxu0 0
      %2462 = vmatmul.mubr.bf16.gmra.mrb[0].mxu0 %v2070
      %v2463 = vpop.f32.mrb[0].mxu0
      %v2464 = vadd.f32 0.0, %v2463
      %v2465 = vpop.f32.mrb[0].mxu0
      %v2466 = vpop.f32.mrb[0].mxu0
      %v2467 = vadd.f32 0.0, %v2466
      %v2468 = vpop.f32.mrb[0].mxu0
      %2469 = vmatprep.mubr.bf16.mxu0 0
      %2470 = vmatmul.mubr.bf16.gmra.mrb[0].mxu0 %v2073
      %v2471 = vpop.f32.mrb[0].mxu0
      %v2472 = vadd.f32 0.0, %v2471
      %v2473 = vpop.f32.mrb[0].mxu0
      %v2474 = vpop.f32.mrb[0].mxu0
      %v2475 = vadd.f32 0.0, %v2474
      %v2476 = vpop.f32.mrb[0].mxu0
      %2477 = vmatprep.mubr.bf16.mxu0 0
      %2478 = vmatmul.mubr.bf16.gmra.mrb[0].mxu0 %v2076
      %v2479 = vpop.f32.mrb[0].mxu0
      %v2480 = vadd.f32 0.0, %v2479
      %v2481 = vpop.f32.mrb[0].mxu0
      %v2482 = vpop.f32.mrb[0].mxu0
      %v2483 = vadd.f32 0.0, %v2482
      %v2484 = vpop.f32.mrb[0].mxu0
      %2485 = vmatprep.mubr.bf16.mxu0 0
      %2486 = vmatmul.mubr.bf16.gmra.mrb[0].mxu0 %v2320
      %v2487 = vpop.f32.mrb[0].mxu0
      %v2488 = vadd.f32 0.0, %v2487
      %v2489 = vpop.f32.mrb[0].mxu0
      %v2490 = vpop.f32.mrb[0].mxu0
      %v2491 = vadd.f32 0.0, %v2490
      %v2492 = vpop.f32.mrb[0].mxu0
      %2493 = vmatprep.mubr.bf16.mxu0 0
      %2494 = vmatmul.mubr.bf16.gmra.mrb[0].mxu0 %v2323
      %v2495 = vpop.f32.mrb[0].mxu0
      %v2496 = vadd.f32 0.0, %v2495
      %v2497 = vpop.f32.mrb[0].mxu0
      %v2498 = vpop.f32.mrb[0].mxu0
      %v2499 = vadd.f32 0.0, %v2498
      %v2500 = vpop.f32.mrb[0].mxu0
      %2501 = vdwg.mxu0
      %v2502 = vadd.f32 %v2258, %v2360
      %v2503 = vadd.f32 %v2259, %v2363
      %v2504 = vadd.f32 %v2260, %v2368
      %v2505 = vadd.f32 %v2261, %v2371
      %v2506 = vadd.f32 %v2262, %v2376
      %v2507 = vadd.f32 %v2263, %v2379
      %v2508 = vadd.f32 %v2264, %v2384
      %v2509 = vadd.f32 %v2265, %v2387
      %v2510 = vadd.f32 %v2266, %v2392
      %v2511 = vadd.f32 %v2267, %v2395
      %v2512 = vadd.f32 %v2268, %v2400
      %v2513 = vadd.f32 %v2269, %v2403
      %v2514 = vadd.f32 %v2270, %v2408
      %v2515 = vadd.f32 %v2271, %v2411
      %v2516 = vadd.f32 %v2272, %v2416
      %v2517 = vadd.f32 %v2273, %v2419
      %v2518 = vadd.f32 %v2274, %v2424
      %v2519 = vadd.f32 %v2275, %v2427
      %v2520 = vadd.f32 %v2276, %v2432
      %v2521 = vadd.f32 %v2277, %v2435
      %v2522 = vadd.f32 %v2278, %v2440
      %v2523 = vadd.f32 %v2279, %v2443
      %v2524 = vadd.f32 %v2280, %v2448
      %v2525 = vadd.f32 %v2281, %v2451
      %v2526 = vadd.f32 %v2282, %v2456
      %v2527 = vadd.f32 %v2283, %v2459
      %v2528 = vadd.f32 %v2284, %v2464
      %v2529 = vadd.f32 %v2285, %v2467
      %v2530 = vadd.f32 %v2286, %v2472
      %v2531 = vadd.f32 %v2287, %v2475
      %v2532 = vadd.f32 %v2288, %v2480
      %v2533 = vadd.f32 %v2289, %v2483
      %v2534 = vadd.f32 %v2290, %v2488
      %v2535 = vadd.f32 %v2291, %v2491
      %v2536 = vadd.f32 %v2292, %v2496
      %v2537 = vadd.f32 %v2293, %v2499
      %s2538 = scalar_lea.vmem %s2, 112
      %v2539 = vld [vmem:[%s2538] sm:$0xf]
      %v2540 = vld [vmem:[%s2538 + $0x4] sm:$0xf]
      %v2541 = vld [vmem:[%s2538 + $0x8] sm:$0xf]
      %v2542 = vld [vmem:[%s2538 + $0xc] sm:$0xf]
      %vm2543 = vsmask.f32 5376
      %v2544 = vrot.slane %v420, 2
      %v2545 = vrot.slane %v416, 3
      %v2546 = vor.u32 %v2544, %v2545
      %v2547 = vrot.slane %v428, 2
      %v2548 = vrot.slane %v424, 3
      %v2549 = vor.u32 %v2547, %v2548
      %v2550 = vsel %vm2543, %v2546, %v2549
      %v2551 = vrot.slane %v436, 2
      %v2552 = vrot.slane %v432, 3
      %v2553 = vor.u32 %v2551, %v2552
      %v2554 = vsel %vm2543, %v2549, %v2553
      %v2555 = vrot.slane %v444, 2
      %v2556 = vrot.slane %v440, 3
      %v2557 = vor.u32 %v2555, %v2556
      %v2558 = vsel %vm2543, %v2553, %v2557
      %v2559 = vrot.slane %v452, 2
      %v2560 = vrot.slane %v448, 3
      %v2561 = vor.u32 %v2559, %v2560
      %v2562 = vsel %vm2543, %v2557, %v2561
      %v2563 = vrot.slane %v460, 2
      %v2564 = vrot.slane %v456, 3
      %v2565 = vor.u32 %v2563, %v2564
      %v2566 = vsel %vm2543, %v2561, %v2565
      %v2567 = vrot.slane %v468, 2
      %v2568 = vrot.slane %v464, 3
      %v2569 = vor.u32 %v2567, %v2568
      %v2570 = vsel %vm2543, %v2565, %v2569
      %v2571 = vrot.slane %v476, 2
      %v2572 = vrot.slane %v472, 3
      %v2573 = vor.u32 %v2571, %v2572
      %v2574 = vsel %vm2543, %v2569, %v2573
      %v2575 = vrot.slane %v484, 2
      %v2576 = vrot.slane %v480, 3
      %v2577 = vor.u32 %v2575, %v2576
      %v2578 = vsel %vm2543, %v2573, %v2577
      %v2579 = vrot.slane %v492, 2
      %v2580 = vrot.slane %v488, 3
      %v2581 = vor.u32 %v2579, %v2580
      %v2582 = vsel %vm2543, %v2577, %v2581
      %v2583 = vrot.slane %v500, 2
      %v2584 = vrot.slane %v496, 3
      %v2585 = vor.u32 %v2583, %v2584
      %v2586 = vsel %vm2543, %v2581, %v2585
      %v2587 = vrot.slane %v508, 2
      %v2588 = vrot.slane %v504, 3
      %v2589 = vor.u32 %v2587, %v2588
      %v2590 = vsel %vm2543, %v2585, %v2589
      %v2591 = vrot.slane %v516, 2
      %v2592 = vrot.slane %v512, 3
      %v2593 = vor.u32 %v2591, %v2592
      %v2594 = vsel %vm2543, %v2589, %v2593
      %v2595 = vrot.slane %v524, 2
      %v2596 = vrot.slane %v520, 3
      %v2597 = vor.u32 %v2595, %v2596
      %v2598 = vsel %vm2543, %v2593, %v2597
      %v2599 = vrot.slane %v532, 2
      %v2600 = vrot.slane %v528, 3
      %v2601 = vor.u32 %v2599, %v2600
      %v2602 = vsel %vm2543, %v2597, %v2601
      %v2603 = vrot.slane %v540, 2
      %v2604 = vrot.slane %v536, 3
      %v2605 = vor.u32 %v2603, %v2604
      %v2606 = vsel %vm2543, %v2601, %v2605
      %v2607 = vrot.slane %v1676, 2
      %v2608 = vrot.slane %v1679, 3
      %v2609 = vor.u32 %v2607, %v2608
      %v2610 = vsel %vm2543, %v2605, %v2609
      %v2612 = vshrl.u32 %v2294, 16
      %v2614 = vrot.slane %v2612, 2
      %v2615 = vshll.u32 %v2294, 16
      %v2617 = vrot.slane %v2615, 3
      %v2618 = vor.u32 %v2614, %v2617
      %v2619 = vsel %vm2543, %v2609, %v2618
      %v2621 = vshrl.u32 %v2295, 16
      %v2623 = vrot.slane %v2621, 2
      %v2624 = vshll.u32 %v2295, 16
      %v2626 = vrot.slane %v2624, 3
      %v2627 = vor.u32 %v2623, %v2626
      %v2628 = vsel %vm2543, %v2618, %v2627
      %v2633 = vunpack.c.l.b16 %v2539
      %v2634 = vunpack.c.l.b16 %v2540
      %v2635 = vunpack.c.l.b16 %v2541
      %v2636 = vunpack.c.l.b16 %v2542
      %v2637 = vpack.c.b16 %v2634, %v2633
      %v2638 = vpack.c.b16 %v2636, %v2635
      %v2642 = vsel %vm560, %v2550, 0
      %v2645 = vsel %vm560, %v2554, 0
      %v2648 = vsel %vm560, %v2558, 0
      %v2651 = vsel %vm560, %v2562, 0
      %v2654 = vsel %vm560, %v2566, 0
      %v2657 = vsel %vm560, %v2570, 0
      %v2660 = vsel %vm560, %v2574, 0
      %v2663 = vsel %vm560, %v2578, 0
      %v2666 = vsel %vm560, %v2582, 0
      %v2669 = vsel %vm560, %v2586, 0
      %v2672 = vsel %vm560, %v2590, 0
      %v2675 = vsel %vm560, %v2594, 0
      %v2678 = vsel %vm560, %v2598, 0
      %v2681 = vsel %vm560, %v2602, 0
      %v2684 = vsel %vm560, %v2606, 0
      %v2687 = vsel %vm560, %v2610, 0
      %v2690 = vsel %vm560, %v2619, 0
      %v2693 = vsel %vm560, %v2628, 0
      %2695 = vmatprep.subr.bf16.mxu0 0
      %2696 = vmatpush1.bf16.msra.mxu0 %v2637
      %2697 = vmatprep.subr.bf16.mxu0 0
      %2698 = vmatpush1.bf16.msra.mxu0 %v2638
      %2699 = vmatprep.subr.bf16.mxu0 0
      %2700 = vmatpush1.bf16.msra.mxu0 0
      %2701 = vmatprep.subr.bf16.mxu0 0
      %2702 = vmatpush1.bf16.msra.mxu0 0
      %2703 = vmatprep.subr.bf16.mxu0 0
      %2704 = vmatpush1.bf16.msra.mxu0 0
      %2705 = vmatprep.subr.bf16.mxu0 0
      %2706 = vmatpush1.bf16.msra.mxu0 0
      %2707 = vmatprep.subr.bf16.mxu0 0
      %2708 = vmatpush1.bf16.msra.mxu0 0
      %2709 = vmatprep.subr.bf16.mxu0 0
      %2710 = vmatpush1.bf16.msra.mxu0 0
      %2711 = vmatprep.subr.bf16.mxu0 0
      %2712 = vmatpush1.bf16.msra.mxu0 0
      %2713 = vmatprep.subr.bf16.mxu0 0
      %2714 = vmatpush1.bf16.msra.mxu0 0
      %2715 = vmatprep.subr.bf16.mxu0 0
      %2716 = vmatpush1.bf16.msra.mxu0 0
      %2717 = vmatprep.subr.bf16.mxu0 0
      %2718 = vmatpush1.bf16.msra.mxu0 0
      %2719 = vmatprep.subr.bf16.mxu0 0
      %2720 = vmatpush1.bf16.msra.mxu0 0
      %2721 = vmatprep.subr.bf16.mxu0 0
      %2722 = vmatpush1.bf16.msra.mxu0 0
      %2723 = vmatprep.subr.bf16.mxu0 0
      %2724 = vmatpush1.bf16.msra.mxu0 0
      %2725 = vmatprep.subr.bf16.mxu0 0
      %2726 = vmatpush1.bf16.msra.mxu0 0
      %2727 = vmatprep.mubr.bf16.mxu0 0
      %2728 = vmatmul.mubr.bf16.gmra.mrb[0].mxu0 %v2642
      %v2729 = vpop.f32.mrb[0].mxu0
      %v2730 = vadd.f32 0.0, %v2729
      %v2731 = vpop.f32.mrb[0].mxu0
      %v2732 = vpop.f32.mrb[0].mxu0
      %v2733 = vadd.f32 0.0, %v2732
      %v2734 = vpop.f32.mrb[0].mxu0
      %2735 = vmatprep.mubr.bf16.mxu0 0
      %2736 = vmatmul.mubr.bf16.gmra.mrb[0].mxu0 %v2645
      %v2737 = vpop.f32.mrb[0].mxu0
      %v2738 = vadd.f32 0.0, %v2737
      %v2739 = vpop.f32.mrb[0].mxu0
      %v2740 = vpop.f32.mrb[0].mxu0
      %v2741 = vadd.f32 0.0, %v2740
      %v2742 = vpop.f32.mrb[0].mxu0
      %2743 = vmatprep.mubr.bf16.mxu0 0
      %2744 = vmatmul.mubr.bf16.gmra.mrb[0].mxu0 %v2648
      %v2745 = vpop.f32.mrb[0].mxu0
      %v2746 = vadd.f32 0.0, %v2745
      %v2747 = vpop.f32.mrb[0].mxu0
      %v2748 = vpop.f32.mrb[0].mxu0
      %v2749 = vadd.f32 0.0, %v2748
      %v2750 = vpop.f32.mrb[0].mxu0
      %2751 = vmatprep.mubr.bf16.mxu0 0
      %2752 = vmatmul.mubr.bf16.gmra.mrb[0].mxu0 %v2651
      %v2753 = vpop.f32.mrb[0].mxu0
      %v2754 = vadd.f32 0.0, %v2753
      %v2755 = vpop.f32.mrb[0].mxu0
      %v2756 = vpop.f32.mrb[0].mxu0
      %v2757 = vadd.f32 0.0, %v2756
      %v2758 = vpop.f32.mrb[0].mxu0
      %2759 = vmatprep.mubr.bf16.mxu0 0
      %2760 = vmatmul.mubr.bf16.gmra.mrb[0].mxu0 %v2654
      %v2761 = vpop.f32.mrb[0].mxu0
      %v2762 = vadd.f32 0.0, %v2761
      %v2763 = vpop.f32.mrb[0].mxu0
      %v2764 = vpop.f32.mrb[0].mxu0
      %v2765 = vadd.f32 0.0, %v2764
      %v2766 = vpop.f32.mrb[0].mxu0
      %2767 = vmatprep.mubr.bf16.mxu0 0
      %2768 = vmatmul.mubr.bf16.gmra.mrb[0].mxu0 %v2657
      %v2769 = vpop.f32.mrb[0].mxu0
      %v2770 = vadd.f32 0.0, %v2769
      %v2771 = vpop.f32.mrb[0].mxu0
      %v2772 = vpop.f32.mrb[0].mxu0
      %v2773 = vadd.f32 0.0, %v2772
      %v2774 = vpop.f32.mrb[0].mxu0
      %2775 = vmatprep.mubr.bf16.mxu0 0
      %2776 = vmatmul.mubr.bf16.gmra.mrb[0].mxu0 %v2660
      %v2777 = vpop.f32.mrb[0].mxu0
      %v2778 = vadd.f32 0.0, %v2777
      %v2779 = vpop.f32.mrb[0].mxu0
      %v2780 = vpop.f32.mrb[0].mxu0
      %v2781 = vadd.f32 0.0, %v2780
      %v2782 = vpop.f32.mrb[0].mxu0
      %2783 = vmatprep.mubr.bf16.mxu0 0
      %2784 = vmatmul.mubr.bf16.gmra.mrb[0].mxu0 %v2663
      %v2785 = vpop.f32.mrb[0].mxu0
      %v2786 = vadd.f32 0.0, %v2785
      %v2787 = vpop.f32.mrb[0].mxu0
      %v2788 = vpop.f32.mrb[0].mxu0
      %v2789 = vadd.f32 0.0, %v2788
      %v2790 = vpop.f32.mrb[0].mxu0
      %2791 = vmatprep.mubr.bf16.mxu0 0
      %2792 = vmatmul.mubr.bf16.gmra.mrb[0].mxu0 %v2666
      %v2793 = vpop.f32.mrb[0].mxu0
      %v2794 = vadd.f32 0.0, %v2793
      %v2795 = vpop.f32.mrb[0].mxu0
      %v2796 = vpop.f32.mrb[0].mxu0
      %v2797 = vadd.f32 0.0, %v2796
      %v2798 = vpop.f32.mrb[0].mxu0
      %2799 = vmatprep.mubr.bf16.mxu0 0
      %2800 = vmatmul.mubr.bf16.gmra.mrb[0].mxu0 %v2669
      %v2801 = vpop.f32.mrb[0].mxu0
      %v2802 = vadd.f32 0.0, %v2801
      %v2803 = vpop.f32.mrb[0].mxu0
      %v2804 = vpop.f32.mrb[0].mxu0
      %v2805 = vadd.f32 0.0, %v2804
      %v2806 = vpop.f32.mrb[0].mxu0
      %2807 = vmatprep.mubr.bf16.mxu0 0
      %2808 = vmatmul.mubr.bf16.gmra.mrb[0].mxu0 %v2672
      %v2809 = vpop.f32.mrb[0].mxu0
      %v2810 = vadd.f32 0.0, %v2809
      %v2811 = vpop.f32.mrb[0].mxu0
      %v2812 = vpop.f32.mrb[0].mxu0
      %v2813 = vadd.f32 0.0, %v2812
      %v2814 = vpop.f32.mrb[0].mxu0
      %2815 = vmatprep.mubr.bf16.mxu0 0
      %2816 = vmatmul.mubr.bf16.gmra.mrb[0].mxu0 %v2675
      %v2817 = vpop.f32.mrb[0].mxu0
      %v2818 = vadd.f32 0.0, %v2817
      %v2819 = vpop.f32.mrb[0].mxu0
      %v2820 = vpop.f32.mrb[0].mxu0
      %v2821 = vadd.f32 0.0, %v2820
      %v2822 = vpop.f32.mrb[0].mxu0
      %2823 = vmatprep.mubr.bf16.mxu0 0
      %2824 = vmatmul.mubr.bf16.gmra.mrb[0].mxu0 %v2678
      %v2825 = vpop.f32.mrb[0].mxu0
      %v2826 = vadd.f32 0.0, %v2825
      %v2827 = vpop.f32.mrb[0].mxu0
      %v2828 = vpop.f32.mrb[0].mxu0
      %v2829 = vadd.f32 0.0, %v2828
      %v2830 = vpop.f32.mrb[0].mxu0
      %2831 = vmatprep.mubr.bf16.mxu0 0
      %2832 = vmatmul.mubr.bf16.gmra.mrb[0].mxu0 %v2681
      %v2833 = vpop.f32.mrb[0].mxu0
      %v2834 = vadd.f32 0.0, %v2833
      %v2835 = vpop.f32.mrb[0].mxu0
      %v2836 = vpop.f32.mrb[0].mxu0
      %v2837 = vadd.f32 0.0, %v2836
      %v2838 = vpop.f32.mrb[0].mxu0
      %2839 = vmatprep.mubr.bf16.mxu0 0
      %2840 = vmatmul.mubr.bf16.gmra.mrb[0].mxu0 %v2684
      %v2841 = vpop.f32.mrb[0].mxu0
      %v2842 = vadd.f32 0.0, %v2841
      %v2843 = vpop.f32.mrb[0].mxu0
      %v2844 = vpop.f32.mrb[0].mxu0
      %v2845 = vadd.f32 0.0, %v2844
      %v2846 = vpop.f32.mrb[0].mxu0
      %2847 = vmatprep.mubr.bf16.mxu0 0
      %2848 = vmatmul.mubr.bf16.gmra.mrb[0].mxu0 %v2687
      %v2849 = vpop.f32.mrb[0].mxu0
      %v2850 = vadd.f32 0.0, %v2849
      %v2851 = vpop.f32.mrb[0].mxu0
      %v2852 = vpop.f32.mrb[0].mxu0
      %v2853 = vadd.f32 0.0, %v2852
      %v2854 = vpop.f32.mrb[0].mxu0
      %2855 = vmatprep.mubr.bf16.mxu0 0
      %2856 = vmatmul.mubr.bf16.gmra.mrb[0].mxu0 %v2690
      %v2857 = vpop.f32.mrb[0].mxu0
      %v2858 = vadd.f32 0.0, %v2857
      %v2859 = vpop.f32.mrb[0].mxu0
      %v2860 = vpop.f32.mrb[0].mxu0
      %v2861 = vadd.f32 0.0, %v2860
      %v2862 = vpop.f32.mrb[0].mxu0
      %2863 = vmatprep.mubr.bf16.mxu0 0
      %2864 = vmatmul.mubr.bf16.gmra.mrb[0].mxu0 %v2693
      %v2865 = vpop.f32.mrb[0].mxu0
      %v2866 = vadd.f32 0.0, %v2865
      %v2867 = vpop.f32.mrb[0].mxu0
      %v2868 = vpop.f32.mrb[0].mxu0
      %v2869 = vadd.f32 0.0, %v2868
      %v2870 = vpop.f32.mrb[0].mxu0
      %2871 = vdwg.mxu0
      %v2872 = vadd.f32 %v2502, %v2730
      %v2873 = vadd.f32 %v2503, %v2733
      %v2874 = vadd.f32 %v2504, %v2738
      %v2875 = vadd.f32 %v2505, %v2741
      %v2876 = vadd.f32 %v2506, %v2746
      %v2877 = vadd.f32 %v2507, %v2749
      %v2878 = vadd.f32 %v2508, %v2754
      %v2879 = vadd.f32 %v2509, %v2757
      %v2880 = vadd.f32 %v2510, %v2762
      %v2881 = vadd.f32 %v2511, %v2765
      %v2882 = vadd.f32 %v2512, %v2770
      %v2883 = vadd.f32 %v2513, %v2773
      %v2884 = vadd.f32 %v2514, %v2778
      %v2885 = vadd.f32 %v2515, %v2781
      %v2886 = vadd.f32 %v2516, %v2786
      %v2887 = vadd.f32 %v2517, %v2789
      %v2888 = vadd.f32 %v2518, %v2794
      %v2889 = vadd.f32 %v2519, %v2797
      %v2890 = vadd.f32 %v2520, %v2802
      %v2891 = vadd.f32 %v2521, %v2805
      %v2892 = vadd.f32 %v2522, %v2810
      %v2893 = vadd.f32 %v2523, %v2813
      %v2894 = vadd.f32 %v2524, %v2818
      %v2895 = vadd.f32 %v2525, %v2821
      %v2896 = vadd.f32 %v2526, %v2826
      %v2897 = vadd.f32 %v2527, %v2829
      %v2898 = vadd.f32 %v2528, %v2834
      %v2899 = vadd.f32 %v2529, %v2837
      %v2900 = vadd.f32 %v2530, %v2842
      %v2901 = vadd.f32 %v2531, %v2845
      %v2902 = vadd.f32 %v2532, %v2850
      %v2903 = vadd.f32 %v2533, %v2853
      %v2904 = vadd.f32 %v2534, %v2858
      %v2905 = vadd.f32 %v2535, %v2861
      %v2906 = vadd.f32 %v2536, %v2866
      %v2907 = vadd.f32 %v2537, %v2869
      %s2908 = scalar_lea.vmem %s2, 128
      %v2909 = vld [vmem:[%s2908] sm:$0xf]
      %v2910 = vld [vmem:[%s2908 + $0x4] sm:$0xf]
      %v2911 = vld [vmem:[%s2908 + $0x8] sm:$0xf]
      %v2912 = vld [vmem:[%s2908 + $0xc] sm:$0xf]
      %vm2913 = vcmask 1044480
      %v2914 = vrot.slane %v373, 3
      %v2915 = vrot.slane %v374, 3
      %v2916 = vsel %vm2913, %v2914, %v2915
      %v2917 = vrot.slane %v375, 3
      %v2918 = vsel %vm2913, %v2915, %v2917
      %v2919 = vrot.slane %v376, 3
      %v2920 = vsel %vm2913, %v2917, %v2919
      %v2921 = vrot.slane %v377, 3
      %v2922 = vsel %vm2913, %v2919, %v2921
      %v2923 = vrot.slane %v378, 3
      %v2924 = vsel %vm2913, %v2921, %v2923
      %v2925 = vrot.slane %v379, 3
      %v2926 = vsel %vm2913, %v2923, %v2925
      %v2927 = vrot.slane %v380, 3
      %v2928 = vsel %vm2913, %v2925, %v2927
      %v2929 = vrot.slane %v381, 3
      %v2930 = vsel %vm2913, %v2927, %v2929
      %v2931 = vrot.slane %v382, 3
      %v2932 = vsel %vm2913, %v2929, %v2931
      %v2933 = vrot.slane %v383, 3
      %v2934 = vsel %vm2913, %v2931, %v2933
      %v2935 = vrot.slane %v384, 3
      %v2936 = vsel %vm2913, %v2933, %v2935
      %v2937 = vrot.slane %v385, 3
      %v2938 = vsel %vm2913, %v2935, %v2937
      %v2939 = vrot.slane %v386, 3
      %v2940 = vsel %vm2913, %v2937, %v2939
      %v2941 = vrot.slane %v387, 3
      %v2942 = vsel %vm2913, %v2939, %v2941
      %v2943 = vrot.slane %v388, 3
      %v2944 = vsel %vm2913, %v2941, %v2943
      %v2945 = vrot.slane %v1358, 3
      %v2946 = vsel %vm2913, %v2943, %v2945
      %v2947 = vrot.slane %v2294, 3
      %v2948 = vsel %vm2913, %v2945, %v2947
      %v2949 = vrot.slane %v2295, 3
      %v2950 = vsel %vm2913, %v2947, %v2949
      %v2955 = vunpack.c.l.b16 %v2909
      %v2956 = vunpack.c.l.b16 %v2910
      %v2957 = vunpack.c.l.b16 %v2911
      %v2958 = vunpack.c.l.b16 %v2912
      %v2959 = vpack.c.b16 %v2956, %v2955
      %v2960 = vpack.c.b16 %v2958, %v2957
      %v2964 = vsel %vm560, %v2916, 0
      %v2967 = vsel %vm560, %v2918, 0
      %v2970 = vsel %vm560, %v2920, 0
      %v2973 = vsel %vm560, %v2922, 0
      %v2976 = vsel %vm560, %v2924, 0
      %v2979 = vsel %vm560, %v2926, 0
      %v2982 = vsel %vm560, %v2928, 0
      %v2985 = vsel %vm560, %v2930, 0
      %v2988 = vsel %vm560, %v2932, 0
      %v2991 = vsel %vm560, %v2934, 0
      %v2994 = vsel %vm560, %v2936, 0
      %v2997 = vsel %vm560, %v2938, 0
      %v3000 = vsel %vm560, %v2940, 0
      %v3003 = vsel %vm560, %v2942, 0
      %v3006 = vsel %vm560, %v2944, 0
      %v3009 = vsel %vm560, %v2946, 0
      %v3012 = vsel %vm560, %v2948, 0
      %v3015 = vsel %vm560, %v2950, 0
      %3017 = vmatprep.subr.bf16.mxu0 0
      %3018 = vmatpush1.bf16.msra.mxu0 %v2959
      %3019 = vmatprep.subr.bf16.mxu0 0
      %3020 = vmatpush1.bf16.msra.mxu0 %v2960
      %3021 = vmatprep.subr.bf16.mxu0 0
      %3022 = vmatpush1.bf16.msra.mxu0 0
      %3023 = vmatprep.subr.bf16.mxu0 0
      %3024 = vmatpush1.bf16.msra.mxu0 0
      %3025 = vmatprep.subr.bf16.mxu0 0
      %3026 = vmatpush1.bf16.msra.mxu0 0
      %3027 = vmatprep.subr.bf16.mxu0 0
      %3028 = vmatpush1.bf16.msra.mxu0 0
      %3029 = vmatprep.subr.bf16.mxu0 0
      %3030 = vmatpush1.bf16.msra.mxu0 0
      %3031 = vmatprep.subr.bf16.mxu0 0
      %3032 = vmatpush1.bf16.msra.mxu0 0
      %3033 = vmatprep.subr.bf16.mxu0 0
      %3034 = vmatpush1.bf16.msra.mxu0 0
      %3035 = vmatprep.subr.bf16.mxu0 0
      %3036 = vmatpush1.bf16.msra.mxu0 0
      %3037 = vmatprep.subr.bf16.mxu0 0
      %3038 = vmatpush1.bf16.msra.mxu0 0
      %3039 = vmatprep.subr.bf16.mxu0 0
      %3040 = vmatpush1.bf16.msra.mxu0 0
      %3041 = vmatprep.subr.bf16.mxu0 0
      %3042 = vmatpush1.bf16.msra.mxu0 0
      %3043 = vmatprep.subr.bf16.mxu0 0
      %3044 = vmatpush1.bf16.msra.mxu0 0
      %3045 = vmatprep.subr.bf16.mxu0 0
      %3046 = vmatpush1.bf16.msra.mxu0 0
      %3047 = vmatprep.subr.bf16.mxu0 0
      %3048 = vmatpush1.bf16.msra.mxu0 0
      %3049 = vmatprep.mubr.bf16.mxu0 0
      %3050 = vmatmul.mubr.bf16.gmra.mrb[0].mxu0 %v2964
      %v3051 = vpop.f32.mrb[0].mxu0
      %v3052 = vadd.f32 0.0, %v3051
      %v3053 = vpop.f32.mrb[0].mxu0
      %v3054 = vpop.f32.mrb[0].mxu0
      %v3055 = vadd.f32 0.0, %v3054
      %v3056 = vpop.f32.mrb[0].mxu0
      %3057 = vmatprep.mubr.bf16.mxu0 0
      %3058 = vmatmul.mubr.bf16.gmra.mrb[0].mxu0 %v2967
      %v3059 = vpop.f32.mrb[0].mxu0
      %v3060 = vadd.f32 0.0, %v3059
      %v3061 = vpop.f32.mrb[0].mxu0
      %v3062 = vpop.f32.mrb[0].mxu0
      %v3063 = vadd.f32 0.0, %v3062
      %v3064 = vpop.f32.mrb[0].mxu0
      %3065 = vmatprep.mubr.bf16.mxu0 0
      %3066 = vmatmul.mubr.bf16.gmra.mrb[0].mxu0 %v2970
      %v3067 = vpop.f32.mrb[0].mxu0
      %v3068 = vadd.f32 0.0, %v3067
      %v3069 = vpop.f32.mrb[0].mxu0
      %v3070 = vpop.f32.mrb[0].mxu0
      %v3071 = vadd.f32 0.0, %v3070
      %v3072 = vpop.f32.mrb[0].mxu0
      %3073 = vmatprep.mubr.bf16.mxu0 0
      %3074 = vmatmul.mubr.bf16.gmra.mrb[0].mxu0 %v2973
      %v3075 = vpop.f32.mrb[0].mxu0
      %v3076 = vadd.f32 0.0, %v3075
      %v3077 = vpop.f32.mrb[0].mxu0
      %v3078 = vpop.f32.mrb[0].mxu0
      %v3079 = vadd.f32 0.0, %v3078
      %v3080 = vpop.f32.mrb[0].mxu0
      %3081 = vmatprep.mubr.bf16.mxu0 0
      %3082 = vmatmul.mubr.bf16.gmra.mrb[0].mxu0 %v2976
      %v3083 = vpop.f32.mrb[0].mxu0
      %v3084 = vadd.f32 0.0, %v3083
      %v3085 = vpop.f32.mrb[0].mxu0
      %v3086 = vpop.f32.mrb[0].mxu0
      %v3087 = vadd.f32 0.0, %v3086
      %v3088 = vpop.f32.mrb[0].mxu0
      %3089 = vmatprep.mubr.bf16.mxu0 0
      %3090 = vmatmul.mubr.bf16.gmra.mrb[0].mxu0 %v2979
      %v3091 = vpop.f32.mrb[0].mxu0
      %v3092 = vadd.f32 0.0, %v3091
      %v3093 = vpop.f32.mrb[0].mxu0
      %v3094 = vpop.f32.mrb[0].mxu0
      %v3095 = vadd.f32 0.0, %v3094
      %v3096 = vpop.f32.mrb[0].mxu0
      %3097 = vmatprep.mubr.bf16.mxu0 0
      %3098 = vmatmul.mubr.bf16.gmra.mrb[0].mxu0 %v2982
      %v3099 = vpop.f32.mrb[0].mxu0
      %v3100 = vadd.f32 0.0, %v3099
      %v3101 = vpop.f32.mrb[0].mxu0
      %v3102 = vpop.f32.mrb[0].mxu0
      %v3103 = vadd.f32 0.0, %v3102
      %v3104 = vpop.f32.mrb[0].mxu0
      %3105 = vmatprep.mubr.bf16.mxu0 0
      %3106 = vmatmul.mubr.bf16.gmra.mrb[0].mxu0 %v2985
      %v3107 = vpop.f32.mrb[0].mxu0
      %v3108 = vadd.f32 0.0, %v3107
      %v3109 = vpop.f32.mrb[0].mxu0
      %v3110 = vpop.f32.mrb[0].mxu0
      %v3111 = vadd.f32 0.0, %v3110
      %v3112 = vpop.f32.mrb[0].mxu0
      %3113 = vmatprep.mubr.bf16.mxu0 0
      %3114 = vmatmul.mubr.bf16.gmra.mrb[0].mxu0 %v2988
      %v3115 = vpop.f32.mrb[0].mxu0
      %v3116 = vadd.f32 0.0, %v3115
      %v3117 = vpop.f32.mrb[0].mxu0
      %v3118 = vpop.f32.mrb[0].mxu0
      %v3119 = vadd.f32 0.0, %v3118
      %v3120 = vpop.f32.mrb[0].mxu0
      %3121 = vmatprep.mubr.bf16.mxu0 0
      %3122 = vmatmul.mubr.bf16.gmra.mrb[0].mxu0 %v2991
      %v3123 = vpop.f32.mrb[0].mxu0
      %v3124 = vadd.f32 0.0, %v3123
      %v3125 = vpop.f32.mrb[0].mxu0
      %v3126 = vpop.f32.mrb[0].mxu0
      %v3127 = vadd.f32 0.0, %v3126
      %v3128 = vpop.f32.mrb[0].mxu0
      %3129 = vmatprep.mubr.bf16.mxu0 0
      %3130 = vmatmul.mubr.bf16.gmra.mrb[0].mxu0 %v2994
      %v3131 = vpop.f32.mrb[0].mxu0
      %v3132 = vadd.f32 0.0, %v3131
      %v3133 = vpop.f32.mrb[0].mxu0
      %v3134 = vpop.f32.mrb[0].mxu0
      %v3135 = vadd.f32 0.0, %v3134
      %v3136 = vpop.f32.mrb[0].mxu0
      %3137 = vmatprep.mubr.bf16.mxu0 0
      %3138 = vmatmul.mubr.bf16.gmra.mrb[0].mxu0 %v2997
      %v3139 = vpop.f32.mrb[0].mxu0
      %v3140 = vadd.f32 0.0, %v3139
      %v3141 = vpop.f32.mrb[0].mxu0
      %v3142 = vpop.f32.mrb[0].mxu0
      %v3143 = vadd.f32 0.0, %v3142
      %v3144 = vpop.f32.mrb[0].mxu0
      %3145 = vmatprep.mubr.bf16.mxu0 0
      %3146 = vmatmul.mubr.bf16.gmra.mrb[0].mxu0 %v3000
      %v3147 = vpop.f32.mrb[0].mxu0
      %v3148 = vadd.f32 0.0, %v3147
      %v3149 = vpop.f32.mrb[0].mxu0
      %v3150 = vpop.f32.mrb[0].mxu0
      %v3151 = vadd.f32 0.0, %v3150
      %v3152 = vpop.f32.mrb[0].mxu0
      %3153 = vmatprep.mubr.bf16.mxu0 0
      %3154 = vmatmul.mubr.bf16.gmra.mrb[0].mxu0 %v3003
      %v3155 = vpop.f32.mrb[0].mxu0
      %v3156 = vadd.f32 0.0, %v3155
      %v3157 = vpop.f32.mrb[0].mxu0
      %v3158 = vpop.f32.mrb[0].mxu0
      %v3159 = vadd.f32 0.0, %v3158
      %v3160 = vpop.f32.mrb[0].mxu0
      %3161 = vmatprep.mubr.bf16.mxu0 0
      %3162 = vmatmul.mubr.bf16.gmra.mrb[0].mxu0 %v3006
      %v3163 = vpop.f32.mrb[0].mxu0
      %v3164 = vadd.f32 0.0, %v3163
      %v3165 = vpop.f32.mrb[0].mxu0
      %v3166 = vpop.f32.mrb[0].mxu0
      %v3167 = vadd.f32 0.0, %v3166
      %v3168 = vpop.f32.mrb[0].mxu0
      %3169 = vmatprep.mubr.bf16.mxu0 0
      %3170 = vmatmul.mubr.bf16.gmra.mrb[0].mxu0 %v3009
      %v3171 = vpop.f32.mrb[0].mxu0
      %v3172 = vadd.f32 0.0, %v3171
      %v3173 = vpop.f32.mrb[0].mxu0
      %v3174 = vpop.f32.mrb[0].mxu0
      %v3175 = vadd.f32 0.0, %v3174
      %v3176 = vpop.f32.mrb[0].mxu0
      %3177 = vmatprep.mubr.bf16.mxu0 0
      %3178 = vmatmul.mubr.bf16.gmra.mrb[0].mxu0 %v3012
      %v3179 = vpop.f32.mrb[0].mxu0
      %v3180 = vadd.f32 0.0, %v3179
      %v3181 = vpop.f32.mrb[0].mxu0
      %v3182 = vpop.f32.mrb[0].mxu0
      %v3183 = vadd.f32 0.0, %v3182
      %v3184 = vpop.f32.mrb[0].mxu0
      %3185 = vmatprep.mubr.bf16.mxu0 0
      %3186 = vmatmul.mubr.bf16.gmra.mrb[0].mxu0 %v3015
      %v3187 = vpop.f32.mrb[0].mxu0
      %v3188 = vadd.f32 0.0, %v3187
      %v3189 = vpop.f32.mrb[0].mxu0
      %v3190 = vpop.f32.mrb[0].mxu0
      %v3191 = vadd.f32 0.0, %v3190
      %v3192 = vpop.f32.mrb[0].mxu0
      %3193 = vdwg.mxu0
      %v3194 = vadd.f32 %v2872, %v3052
      %v3195 = vadd.f32 %v2873, %v3055
      %v3196 = vadd.f32 %v2874, %v3060
      %v3197 = vadd.f32 %v2875, %v3063
      %v3198 = vadd.f32 %v2876, %v3068
      %v3199 = vadd.f32 %v2877, %v3071
      %v3200 = vadd.f32 %v2878, %v3076
      %v3201 = vadd.f32 %v2879, %v3079
      %v3202 = vadd.f32 %v2880, %v3084
      %v3203 = vadd.f32 %v2881, %v3087
      %v3204 = vadd.f32 %v2882, %v3092
      %v3205 = vadd.f32 %v2883, %v3095
      %v3206 = vadd.f32 %v2884, %v3100
      %v3207 = vadd.f32 %v2885, %v3103
      %v3208 = vadd.f32 %v2886, %v3108
      %v3209 = vadd.f32 %v2887, %v3111
      %v3210 = vadd.f32 %v2888, %v3116
      %v3211 = vadd.f32 %v2889, %v3119
      %v3212 = vadd.f32 %v2890, %v3124
      %v3213 = vadd.f32 %v2891, %v3127
      %v3214 = vadd.f32 %v2892, %v3132
      %v3215 = vadd.f32 %v2893, %v3135
      %v3216 = vadd.f32 %v2894, %v3140
      %v3217 = vadd.f32 %v2895, %v3143
      %v3218 = vadd.f32 %v2896, %v3148
      %v3219 = vadd.f32 %v2897, %v3151
      %v3220 = vadd.f32 %v2898, %v3156
      %v3221 = vadd.f32 %v2899, %v3159
      %v3222 = vadd.f32 %v2900, %v3164
      %v3223 = vadd.f32 %v2901, %v3167
      %v3224 = vadd.f32 %v2902, %v3172
      %v3225 = vadd.f32 %v2903, %v3175
      %v3226 = vadd.f32 %v2904, %v3180
      %v3227 = vadd.f32 %v2905, %v3183
      %v3228 = vadd.f32 %v2906, %v3188
      %v3229 = vadd.f32 %v2907, %v3191
      %3231 = vset.pattern.permute.xlu0 0
      %3232 = vperm.xlu0 %3231, %v253
      %v3233 = vpop.permute.xlu0 %3232
      %3236 = vset.pattern.permute.xlu0 0
      %3237 = vperm.xlu0 %3236, %v254
      %v3238 = vpop.permute.xlu0 %3237
      %3241 = vset.pattern.permute.xlu0 0
      %3242 = vperm.xlu0 %3241, %v255
      %v3243 = vpop.permute.xlu0 %3242
      %3246 = vset.pattern.permute.xlu0 0
      %3247 = vperm.xlu0 %3246, %v256
      %v3248 = vpop.permute.xlu0 %3247
      %3251 = vset.pattern.permute.xlu0 0
      %3252 = vperm.xlu0 %3251, %v257
      %v3253 = vpop.permute.xlu0 %3252
      %3256 = vset.pattern.permute.xlu0 0
      %3257 = vperm.xlu0 %3256, %v258
      %v3258 = vpop.permute.xlu0 %3257
      %3261 = vset.pattern.permute.xlu0 0
      %3262 = vperm.xlu0 %3261, %v259
      %v3263 = vpop.permute.xlu0 %3262
      %3266 = vset.pattern.permute.xlu0 0
      %3267 = vperm.xlu0 %3266, %v260
      %v3268 = vpop.permute.xlu0 %3267
      %3271 = vset.pattern.permute.xlu0 0
      %3272 = vperm.xlu0 %3271, %v261
      %v3273 = vpop.permute.xlu0 %3272
      %3276 = vset.pattern.permute.xlu0 0
      %3277 = vperm.xlu0 %3276, %v262
      %v3278 = vpop.permute.xlu0 %3277
      %3281 = vset.pattern.permute.xlu0 0
      %3282 = vperm.xlu0 %3281, %v263
      %v3283 = vpop.permute.xlu0 %3282
      %3286 = vset.pattern.permute.xlu0 0
      %3287 = vperm.xlu0 %3286, %v264
      %v3288 = vpop.permute.xlu0 %3287
      %3291 = vset.pattern.permute.xlu0 0
      %3292 = vperm.xlu0 %3291, %v265
      %v3293 = vpop.permute.xlu0 %3292
      %3296 = vset.pattern.permute.xlu0 0
      %3297 = vperm.xlu0 %3296, %v266
      %v3298 = vpop.permute.xlu0 %3297
      %3301 = vset.pattern.permute.xlu0 0
      %3302 = vperm.xlu0 %3301, %v267
      %v3303 = vpop.permute.xlu0 %3302
      %3306 = vset.pattern.permute.xlu0 0
      %3307 = vperm.xlu0 %3306, %v268
      %v3308 = vpop.permute.xlu0 %3307
      %3311 = vset.pattern.permute.xlu0 0
      %3312 = vperm.xlu0 %3311, %v269
      %v3313 = vpop.permute.xlu0 %3312
      %3316 = vset.pattern.permute.xlu0 0
      %3317 = vperm.xlu0 %3316, %v270
      %v3318 = vpop.permute.xlu0 %3317
      %3321 = vset.pattern.permute.xlu0 0
      %3322 = vperm.xlu0 %3321, %v271
      %v3323 = vpop.permute.xlu0 %3322
      %3326 = vset.pattern.permute.xlu0 0
      %3327 = vperm.xlu0 %3326, %v272
      %v3328 = vpop.permute.xlu0 %3327
      %3331 = vset.pattern.permute.xlu0 0
      %3332 = vperm.xlu0 %3331, %v273
      %v3333 = vpop.permute.xlu0 %3332
      %3336 = vset.pattern.permute.xlu0 0
      %3337 = vperm.xlu0 %3336, %v274
      %v3338 = vpop.permute.xlu0 %3337
      %3341 = vset.pattern.permute.xlu0 0
      %3342 = vperm.xlu0 %3341, %v275
      %v3343 = vpop.permute.xlu0 %3342
      %3346 = vset.pattern.permute.xlu0 0
      %3347 = vperm.xlu0 %3346, %v276
      %v3348 = vpop.permute.xlu0 %3347
      %3351 = vset.pattern.permute.xlu0 0
      %3352 = vperm.xlu0 %3351, %v277
      %v3353 = vpop.permute.xlu0 %3352
      %3356 = vset.pattern.permute.xlu0 0
      %3357 = vperm.xlu0 %3356, %v278
      %v3358 = vpop.permute.xlu0 %3357
      %3361 = vset.pattern.permute.xlu0 0
      %3362 = vperm.xlu0 %3361, %v279
      %v3363 = vpop.permute.xlu0 %3362
      %3366 = vset.pattern.permute.xlu0 0
      %3367 = vperm.xlu0 %3366, %v280
      %v3368 = vpop.permute.xlu0 %3367
      %3371 = vset.pattern.permute.xlu0 0
      %3372 = vperm.xlu0 %3371, %v281
      %v3373 = vpop.permute.xlu0 %3372
      %3376 = vset.pattern.permute.xlu0 0
      %3377 = vperm.xlu0 %3376, %v282
      %v3378 = vpop.permute.xlu0 %3377
      %3381 = vset.pattern.permute.xlu0 0
      %3382 = vperm.xlu0 %3381, %v283
      %v3383 = vpop.permute.xlu0 %3382
      %3386 = vset.pattern.permute.xlu0 0
      %3387 = vperm.xlu0 %3386, %v284
      %v3388 = vpop.permute.xlu0 %3387
      %3391 = vset.pattern.permute.xlu0 0
      %3392 = vperm.xlu0 %3391, %v285
      %v3393 = vpop.permute.xlu0 %3392
      %3396 = vset.pattern.permute.xlu0 0
      %3397 = vperm.xlu0 %3396, %v286
      %v3398 = vpop.permute.xlu0 %3397
      %3401 = vset.pattern.permute.xlu0 0
      %3402 = vperm.xlu0 %3401, %v287
      %v3403 = vpop.permute.xlu0 %3402
      %3406 = vset.pattern.permute.xlu0 0
      %3407 = vperm.xlu0 %3406, %v288
      %v3408 = vpop.permute.xlu0 %3407
      %v3410 = vmul.f32 %v3194, %v3233
      %v3411 = vmul.f32 %v3195, %v3238
      %v3412 = vmul.f32 %v3196, %v3243
      %v3413 = vmul.f32 %v3197, %v3248
      %v3414 = vmul.f32 %v3198, %v3253
      %v3415 = vmul.f32 %v3199, %v3258
      %v3416 = vmul.f32 %v3200, %v3263
      %v3417 = vmul.f32 %v3201, %v3268
      %v3418 = vmul.f32 %v3202, %v3273
      %v3419 = vmul.f32 %v3203, %v3278
      %v3420 = vmul.f32 %v3204, %v3283
      %v3421 = vmul.f32 %v3205, %v3288
      %v3422 = vmul.f32 %v3206, %v3293
      %v3423 = vmul.f32 %v3207, %v3298
      %v3424 = vmul.f32 %v3208, %v3303
      %v3425 = vmul.f32 %v3209, %v3308
      %v3426 = vmul.f32 %v3210, %v3313
      %v3427 = vmul.f32 %v3211, %v3318
      %v3428 = vmul.f32 %v3212, %v3323
      %v3429 = vmul.f32 %v3213, %v3328
      %v3430 = vmul.f32 %v3214, %v3333
      %v3431 = vmul.f32 %v3215, %v3338
      %v3432 = vmul.f32 %v3216, %v3343
      %v3433 = vmul.f32 %v3217, %v3348
      %v3434 = vmul.f32 %v3218, %v3353
      %v3435 = vmul.f32 %v3219, %v3358
      %v3436 = vmul.f32 %v3220, %v3363
      %v3437 = vmul.f32 %v3221, %v3368
      %v3438 = vmul.f32 %v3222, %v3373
      %v3439 = vmul.f32 %v3223, %v3378
      %v3440 = vmul.f32 %v3224, %v3383
      %v3441 = vmul.f32 %v3225, %v3388
      %v3442 = vmul.f32 %v3226, %v3393
      %v3443 = vmul.f32 %v3227, %v3398
      %v3444 = vmul.f32 %v3228, %v3403
      %v3445 = vmul.f32 %v3229, %v3408
      %vm3446 = vcmask 130048
      %v3447 = vsel %vm3446, %v3410, 0.0
      %v3448 = vsel %vm3446, %v3411, 0.0
      %v3449 = vadd.f32 %v3447, %v3448
      %v3450 = vsel %vm3446, %v3412, 0.0
      %v3451 = vadd.f32 %v3449, %v3450
      %v3452 = vsel %vm3446, %v3413, 0.0
      %v3453 = vadd.f32 %v3451, %v3452
      %v3454 = vsel %vm3446, %v3414, 0.0
      %v3455 = vadd.f32 %v3453, %v3454
      %v3456 = vsel %vm3446, %v3415, 0.0
      %v3457 = vadd.f32 %v3455, %v3456
      %v3458 = vsel %vm3446, %v3416, 0.0
      %v3459 = vadd.f32 %v3457, %v3458
      %v3460 = vsel %vm3446, %v3417, 0.0
      %v3461 = vadd.f32 %v3459, %v3460
      %v3462 = vsel %vm3446, %v3418, 0.0
      %v3463 = vadd.f32 %v3461, %v3462
      %v3464 = vsel %vm3446, %v3419, 0.0
      %v3465 = vadd.f32 %v3463, %v3464
      %v3466 = vsel %vm3446, %v3420, 0.0
      %v3467 = vadd.f32 %v3465, %v3466
      %v3468 = vsel %vm3446, %v3421, 0.0
      %v3469 = vadd.f32 %v3467, %v3468
      %v3470 = vsel %vm3446, %v3422, 0.0
      %v3471 = vadd.f32 %v3469, %v3470
      %v3472 = vsel %vm3446, %v3423, 0.0
      %v3473 = vadd.f32 %v3471, %v3472
      %v3474 = vsel %vm3446, %v3424, 0.0
      %v3475 = vadd.f32 %v3473, %v3474
      %v3476 = vsel %vm3446, %v3425, 0.0
      %v3477 = vadd.f32 %v3475, %v3476
      %v3478 = vsel %vm3446, %v3426, 0.0
      %v3479 = vadd.f32 %v3477, %v3478
      %v3480 = vsel %vm3446, %v3427, 0.0
      %v3481 = vadd.f32 %v3479, %v3480
      %v3482 = vsel %vm3446, %v3428, 0.0
      %v3483 = vadd.f32 %v3481, %v3482
      %v3484 = vsel %vm3446, %v3429, 0.0
      %v3485 = vadd.f32 %v3483, %v3484
      %v3486 = vsel %vm3446, %v3430, 0.0
      %v3487 = vadd.f32 %v3485, %v3486
      %v3488 = vsel %vm3446, %v3431, 0.0
      %v3489 = vadd.f32 %v3487, %v3488
      %v3490 = vsel %vm3446, %v3432, 0.0
      %v3491 = vadd.f32 %v3489, %v3490
      %v3492 = vsel %vm3446, %v3433, 0.0
      %v3493 = vadd.f32 %v3491, %v3492
      %v3494 = vsel %vm3446, %v3434, 0.0
      %v3495 = vadd.f32 %v3493, %v3494
      %v3496 = vsel %vm3446, %v3435, 0.0
      %v3497 = vadd.f32 %v3495, %v3496
      %v3498 = vsel %vm3446, %v3436, 0.0
      %v3499 = vadd.f32 %v3497, %v3498
      %v3500 = vsel %vm3446, %v3437, 0.0
      %v3501 = vadd.f32 %v3499, %v3500
      %v3502 = vsel %vm3446, %v3438, 0.0
      %v3503 = vadd.f32 %v3501, %v3502
      %v3504 = vsel %vm3446, %v3439, 0.0
      %v3505 = vadd.f32 %v3503, %v3504
      %v3506 = vsel %vm3446, %v3440, 0.0
      %v3507 = vadd.f32 %v3505, %v3506
      %v3508 = vsel %vm3446, %v3441, 0.0
      %v3509 = vadd.f32 %v3507, %v3508
      %v3510 = vsel %vm3446, %v3442, 0.0
      %v3511 = vadd.f32 %v3509, %v3510
      %v3512 = vsel %vm3446, %v3443, 0.0
      %v3513 = vadd.f32 %v3511, %v3512
      %v3514 = vsel %vm3446, %v3444, 0.0
      %v3515 = vadd.f32 %v3513, %v3514
      %v3516 = vsel %vm3446, %v3445, 0.0
      %v3517 = vadd.f32 %v3515, %v3516
      %3518 = vadd.xlane.f32.xlu0 %v3517
      %v3519 = vpop.xlane.xlu0 %3518
      %v3520 = vrot.slane %v3519, 4
      %v3521 = vadd.f32 %v3519, %v3520
      %v3522 = vrot.slane %v3521, 2
      %v3523 = vadd.f32 %v3521, %v3522
      %v3524 = vrot.slane %v3523, 1
      %v3525 = vadd.f32 %v3523, %v3524
      %s3526 = vtos %v3525
      %v3527 = vmul.f32 %v3410, %v3410
      %v3528 = vmul.f32 %v3411, %v3411
      %v3529 = vmul.f32 %v3412, %v3412
      %v3530 = vmul.f32 %v3413, %v3413
      %v3531 = vmul.f32 %v3414, %v3414
      %v3532 = vmul.f32 %v3415, %v3415
      %v3533 = vmul.f32 %v3416, %v3416
      %v3534 = vmul.f32 %v3417, %v3417
      %v3535 = vmul.f32 %v3418, %v3418
      %v3536 = vmul.f32 %v3419, %v3419
      %v3537 = vmul.f32 %v3420, %v3420
      %v3538 = vmul.f32 %v3421, %v3421
      %v3539 = vmul.f32 %v3422, %v3422
      %v3540 = vmul.f32 %v3423, %v3423
      %v3541 = vmul.f32 %v3424, %v3424
      %v3542 = vmul.f32 %v3425, %v3425
      %v3543 = vmul.f32 %v3426, %v3426
      %v3544 = vmul.f32 %v3427, %v3427
      %v3545 = vmul.f32 %v3428, %v3428
      %v3546 = vmul.f32 %v3429, %v3429
      %v3547 = vmul.f32 %v3430, %v3430
      %v3548 = vmul.f32 %v3431, %v3431
      %v3549 = vmul.f32 %v3432, %v3432
      %v3550 = vmul.f32 %v3433, %v3433
      %v3551 = vmul.f32 %v3434, %v3434
      %v3552 = vmul.f32 %v3435, %v3435
      %v3553 = vmul.f32 %v3436, %v3436
      %v3554 = vmul.f32 %v3437, %v3437
      %v3555 = vmul.f32 %v3438, %v3438
      %v3556 = vmul.f32 %v3439, %v3439
      %v3557 = vmul.f32 %v3440, %v3440
      %v3558 = vmul.f32 %v3441, %v3441
      %v3559 = vmul.f32 %v3442, %v3442
      %v3560 = vmul.f32 %v3443, %v3443
      %v3561 = vmul.f32 %v3444, %v3444
      %v3562 = vmul.f32 %v3445, %v3445
      %v3563 = vsel %vm3446, %v3527, 0.0
      %v3564 = vsel %vm3446, %v3528, 0.0
      %v3565 = vadd.f32 %v3563, %v3564
      %v3566 = vsel %vm3446, %v3529, 0.0
      %v3567 = vadd.f32 %v3565, %v3566
      %v3568 = vsel %vm3446, %v3530, 0.0
      %v3569 = vadd.f32 %v3567, %v3568
      %v3570 = vsel %vm3446, %v3531, 0.0
      %v3571 = vadd.f32 %v3569, %v3570
      %v3572 = vsel %vm3446, %v3532, 0.0
      %v3573 = vadd.f32 %v3571, %v3572
      %v3574 = vsel %vm3446, %v3533, 0.0
      %v3575 = vadd.f32 %v3573, %v3574
      %v3576 = vsel %vm3446, %v3534, 0.0
      %v3577 = vadd.f32 %v3575, %v3576
      %v3578 = vsel %vm3446, %v3535, 0.0
      %v3579 = vadd.f32 %v3577, %v3578
      %v3580 = vsel %vm3446, %v3536, 0.0
      %v3581 = vadd.f32 %v3579, %v3580
      %v3582 = vsel %vm3446, %v3537, 0.0
      %v3583 = vadd.f32 %v3581, %v3582
      %v3584 = vsel %vm3446, %v3538, 0.0
      %v3585 = vadd.f32 %v3583, %v3584
      %v3586 = vsel %vm3446, %v3539, 0.0
      %v3587 = vadd.f32 %v3585, %v3586
      %v3588 = vsel %vm3446, %v3540, 0.0
      %v3589 = vadd.f32 %v3587, %v3588
      %v3590 = vsel %vm3446, %v3541, 0.0
      %v3591 = vadd.f32 %v3589, %v3590
      %v3592 = vsel %vm3446, %v3542, 0.0
      %v3593 = vadd.f32 %v3591, %v3592
      %v3594 = vsel %vm3446, %v3543, 0.0
      %v3595 = vadd.f32 %v3593, %v3594
      %v3596 = vsel %vm3446, %v3544, 0.0
      %v3597 = vadd.f32 %v3595, %v3596
      %v3598 = vsel %vm3446, %v3545, 0.0
      %v3599 = vadd.f32 %v3597, %v3598
      %v3600 = vsel %vm3446, %v3546, 0.0
      %v3601 = vadd.f32 %v3599, %v3600
      %v3602 = vsel %vm3446, %v3547, 0.0
      %v3603 = vadd.f32 %v3601, %v3602
      %v3604 = vsel %vm3446, %v3548, 0.0
      %v3605 = vadd.f32 %v3603, %v3604
      %v3606 = vsel %vm3446, %v3549, 0.0
      %v3607 = vadd.f32 %v3605, %v3606
      %v3608 = vsel %vm3446, %v3550, 0.0
      %v3609 = vadd.f32 %v3607, %v3608
      %v3610 = vsel %vm3446, %v3551, 0.0
      %v3611 = vadd.f32 %v3609, %v3610
      %v3612 = vsel %vm3446, %v3552, 0.0
      %v3613 = vadd.f32 %v3611, %v3612
      %v3614 = vsel %vm3446, %v3553, 0.0
      %v3615 = vadd.f32 %v3613, %v3614
      %v3616 = vsel %vm3446, %v3554, 0.0
      %v3617 = vadd.f32 %v3615, %v3616
      %v3618 = vsel %vm3446, %v3555, 0.0
      %v3619 = vadd.f32 %v3617, %v3618
      %v3620 = vsel %vm3446, %v3556, 0.0
      %v3621 = vadd.f32 %v3619, %v3620
      %v3622 = vsel %vm3446, %v3557, 0.0
      %v3623 = vadd.f32 %v3621, %v3622
      %v3624 = vsel %vm3446, %v3558, 0.0
      %v3625 = vadd.f32 %v3623, %v3624
      %v3626 = vsel %vm3446, %v3559, 0.0
      %v3627 = vadd.f32 %v3625, %v3626
      %v3628 = vsel %vm3446, %v3560, 0.0
      %v3629 = vadd.f32 %v3627, %v3628
      %v3630 = vsel %vm3446, %v3561, 0.0
      %v3631 = vadd.f32 %v3629, %v3630
      %v3632 = vsel %vm3446, %v3562, 0.0
      %v3633 = vadd.f32 %v3631, %v3632
      %3634 = vadd.xlane.f32.xlu0 %v3633
      %v3635 = vpop.xlane.xlu0 %3634
      %v3636 = vrot.slane %v3635, 4
      %v3637 = vadd.f32 %v3635, %v3636
      %v3638 = vrot.slane %v3637, 2
      %v3639 = vadd.f32 %v3637, %v3638
      %v3640 = vrot.slane %v3639, 1
      %v3641 = vadd.f32 %v3639, %v3640
      %s3642 = vtos %v3641
      %v3643 = vrcp.pop 4096.0
      %s3644 = vtos %v3643
      %s3645 = smul.f32 %s3526, %s3644
      %v3646 = vrcp.pop 4096.0
      %s3647 = vtos %v3646
      %s3648 = smul.f32 %s3642, %s3647
      %s3649 = smul.f32 %s3645, %s3645
      %s3650 = ssub.f32 %s3648, %s3649
      %s3651 = smax.f32 %s3650, 0.0
      %s3652 = sadd.f32 %s3651, 1e-05
      %v3653 = vstv %s3652
      %v3654 = vrsqrt.pop %v3653
      %s3655 = vtos %v3654
      %v3656 = vstv %s3645
      %v3657 = vsub.f32 %v3194, %v3656
      %v3658 = vsub.f32 %v3195, %v3656
      %v3659 = vsub.f32 %v3196, %v3656
      %v3660 = vsub.f32 %v3197, %v3656
      %v3661 = vsub.f32 %v3198, %v3656
      %v3662 = vsub.f32 %v3199, %v3656
      %v3663 = vsub.f32 %v3200, %v3656
      %v3664 = vsub.f32 %v3201, %v3656
      %v3665 = vsub.f32 %v3202, %v3656
      %v3666 = vsub.f32 %v3203, %v3656
      %v3667 = vsub.f32 %v3204, %v3656
      %v3668 = vsub.f32 %v3205, %v3656
      %v3669 = vsub.f32 %v3206, %v3656
      %v3670 = vsub.f32 %v3207, %v3656
      %v3671 = vsub.f32 %v3208, %v3656
      %v3672 = vsub.f32 %v3209, %v3656
      %v3673 = vsub.f32 %v3210, %v3656
      %v3674 = vsub.f32 %v3211, %v3656
      %v3675 = vsub.f32 %v3212, %v3656
      %v3676 = vsub.f32 %v3213, %v3656
      %v3677 = vsub.f32 %v3214, %v3656
      %v3678 = vsub.f32 %v3215, %v3656
      %v3679 = vsub.f32 %v3216, %v3656
      %v3680 = vsub.f32 %v3217, %v3656
      %v3681 = vsub.f32 %v3218, %v3656
      %v3682 = vsub.f32 %v3219, %v3656
      %v3683 = vsub.f32 %v3220, %v3656
      %v3684 = vsub.f32 %v3221, %v3656
      %v3685 = vsub.f32 %v3222, %v3656
      %v3686 = vsub.f32 %v3223, %v3656
      %v3687 = vsub.f32 %v3224, %v3656
      %v3688 = vsub.f32 %v3225, %v3656
      %v3689 = vsub.f32 %v3226, %v3656
      %v3690 = vsub.f32 %v3227, %v3656
      %v3691 = vsub.f32 %v3228, %v3656
      %v3692 = vsub.f32 %v3229, %v3656
      %v3693 = vstv %s3655
      %v3694 = vmul.f32 %v3657, %v3693
      %v3695 = vmul.f32 %v3658, %v3693
      %v3696 = vmul.f32 %v3659, %v3693
      %v3697 = vmul.f32 %v3660, %v3693
      %v3698 = vmul.f32 %v3661, %v3693
      %v3699 = vmul.f32 %v3662, %v3693
      %v3700 = vmul.f32 %v3663, %v3693
      %v3701 = vmul.f32 %v3664, %v3693
      %v3702 = vmul.f32 %v3665, %v3693
      %v3703 = vmul.f32 %v3666, %v3693
      %v3704 = vmul.f32 %v3667, %v3693
      %v3705 = vmul.f32 %v3668, %v3693
      %v3706 = vmul.f32 %v3669, %v3693
      %v3707 = vmul.f32 %v3670, %v3693
      %v3708 = vmul.f32 %v3671, %v3693
      %v3709 = vmul.f32 %v3672, %v3693
      %v3710 = vmul.f32 %v3673, %v3693
      %v3711 = vmul.f32 %v3674, %v3693
      %v3712 = vmul.f32 %v3675, %v3693
      %v3713 = vmul.f32 %v3676, %v3693
      %v3714 = vmul.f32 %v3677, %v3693
      %v3715 = vmul.f32 %v3678, %v3693
      %v3716 = vmul.f32 %v3679, %v3693
      %v3717 = vmul.f32 %v3680, %v3693
      %v3718 = vmul.f32 %v3681, %v3693
      %v3719 = vmul.f32 %v3682, %v3693
      %v3720 = vmul.f32 %v3683, %v3693
      %v3721 = vmul.f32 %v3684, %v3693
      %v3722 = vmul.f32 %v3685, %v3693
      %v3723 = vmul.f32 %v3686, %v3693
      %v3724 = vmul.f32 %v3687, %v3693
      %v3725 = vmul.f32 %v3688, %v3693
      %v3726 = vmul.f32 %v3689, %v3693
      %v3727 = vmul.f32 %v3690, %v3693
      %v3728 = vmul.f32 %v3691, %v3693
      %v3729 = vmul.f32 %v3692, %v3693
      %v3730 = vld [vmem:[%s3] sm:$0x1]
      %v3732 = vlaneseq
      %v3733 = vshrl.u32 %v3732, 7
      %v3734 = vsub.s32 0, %v3733
      %v3735 = vrot.slane %v3730, %v3734
      %v3737 = vmul.f32 %v3694, %v3735
      %v3738 = vmul.f32 %v3695, %v3735
      %v3739 = vmul.f32 %v3696, %v3735
      %v3740 = vmul.f32 %v3697, %v3735
      %v3741 = vmul.f32 %v3698, %v3735
      %v3742 = vmul.f32 %v3699, %v3735
      %v3743 = vmul.f32 %v3700, %v3735
      %v3744 = vmul.f32 %v3701, %v3735
      %v3745 = vmul.f32 %v3702, %v3735
      %v3746 = vmul.f32 %v3703, %v3735
      %v3747 = vmul.f32 %v3704, %v3735
      %v3748 = vmul.f32 %v3705, %v3735
      %v3749 = vmul.f32 %v3706, %v3735
      %v3750 = vmul.f32 %v3707, %v3735
      %v3751 = vmul.f32 %v3708, %v3735
      %v3752 = vmul.f32 %v3709, %v3735
      %v3753 = vmul.f32 %v3710, %v3735
      %v3754 = vmul.f32 %v3711, %v3735
      %v3755 = vmul.f32 %v3712, %v3735
      %v3756 = vmul.f32 %v3713, %v3735
      %v3757 = vmul.f32 %v3714, %v3735
      %v3758 = vmul.f32 %v3715, %v3735
      %v3759 = vmul.f32 %v3716, %v3735
      %v3760 = vmul.f32 %v3717, %v3735
      %v3761 = vmul.f32 %v3718, %v3735
      %v3762 = vmul.f32 %v3719, %v3735
      %v3763 = vmul.f32 %v3720, %v3735
      %v3764 = vmul.f32 %v3721, %v3735
      %v3765 = vmul.f32 %v3722, %v3735
      %v3766 = vmul.f32 %v3723, %v3735
      %v3767 = vmul.f32 %v3724, %v3735
      %v3768 = vmul.f32 %v3725, %v3735
      %v3769 = vmul.f32 %v3726, %v3735
      %v3770 = vmul.f32 %v3727, %v3735
      %v3771 = vmul.f32 %v3728, %v3735
      %v3772 = vmul.f32 %v3729, %v3735
      %v3773 = vld [vmem:[%s4] sm:$0x1]
      %v3775 = vlaneseq
      %v3776 = vshrl.u32 %v3775, 7
      %v3777 = vsub.s32 0, %v3776
      %v3778 = vrot.slane %v3773, %v3777
      %v3780 = vadd.f32 %v3737, %v3778
      %v3781 = vadd.f32 %v3738, %v3778
      %v3782 = vadd.f32 %v3739, %v3778
      %v3783 = vadd.f32 %v3740, %v3778
      %v3784 = vadd.f32 %v3741, %v3778
      %v3785 = vadd.f32 %v3742, %v3778
      %v3786 = vadd.f32 %v3743, %v3778
      %v3787 = vadd.f32 %v3744, %v3778
      %v3788 = vadd.f32 %v3745, %v3778
      %v3789 = vadd.f32 %v3746, %v3778
      %v3790 = vadd.f32 %v3747, %v3778
      %v3791 = vadd.f32 %v3748, %v3778
      %v3792 = vadd.f32 %v3749, %v3778
      %v3793 = vadd.f32 %v3750, %v3778
      %v3794 = vadd.f32 %v3751, %v3778
      %v3795 = vadd.f32 %v3752, %v3778
      %v3796 = vadd.f32 %v3753, %v3778
      %v3797 = vadd.f32 %v3754, %v3778
      %v3798 = vadd.f32 %v3755, %v3778
      %v3799 = vadd.f32 %v3756, %v3778
      %v3800 = vadd.f32 %v3757, %v3778
      %v3801 = vadd.f32 %v3758, %v3778
      %v3802 = vadd.f32 %v3759, %v3778
      %v3803 = vadd.f32 %v3760, %v3778
      %v3804 = vadd.f32 %v3761, %v3778
      %v3805 = vadd.f32 %v3762, %v3778
      %v3806 = vadd.f32 %v3763, %v3778
      %v3807 = vadd.f32 %v3764, %v3778
      %v3808 = vadd.f32 %v3765, %v3778
      %v3809 = vadd.f32 %v3766, %v3778
      %v3810 = vadd.f32 %v3767, %v3778
      %v3811 = vadd.f32 %v3768, %v3778
      %v3812 = vadd.f32 %v3769, %v3778
      %v3813 = vadd.f32 %v3770, %v3778
      %v3814 = vadd.f32 %v3771, %v3778
      %v3815 = vadd.f32 %v3772, %v3778
      %vm3816 = vcmp.ge.f32.partialorder %v3780, 0.0
      %vm3817 = vcmp.ge.f32.partialorder %v3781, 0.0
      %vm3818 = vcmp.ge.f32.partialorder %v3782, 0.0
      %vm3819 = vcmp.ge.f32.partialorder %v3783, 0.0
      %vm3820 = vcmp.ge.f32.partialorder %v3784, 0.0
      %vm3821 = vcmp.ge.f32.partialorder %v3785, 0.0
      %vm3822 = vcmp.ge.f32.partialorder %v3786, 0.0
      %vm3823 = vcmp.ge.f32.partialorder %v3787, 0.0
      %vm3824 = vcmp.ge.f32.partialorder %v3788, 0.0
      %vm3825 = vcmp.ge.f32.partialorder %v3789, 0.0
      %vm3826 = vcmp.ge.f32.partialorder %v3790, 0.0
      %vm3827 = vcmp.ge.f32.partialorder %v3791, 0.0
      %vm3828 = vcmp.ge.f32.partialorder %v3792, 0.0
      %vm3829 = vcmp.ge.f32.partialorder %v3793, 0.0
      %vm3830 = vcmp.ge.f32.partialorder %v3794, 0.0
      %vm3831 = vcmp.ge.f32.partialorder %v3795, 0.0
      %vm3832 = vcmp.ge.f32.partialorder %v3796, 0.0
      %vm3833 = vcmp.ge.f32.partialorder %v3797, 0.0
      %vm3834 = vcmp.ge.f32.partialorder %v3798, 0.0
      %vm3835 = vcmp.ge.f32.partialorder %v3799, 0.0
      %vm3836 = vcmp.ge.f32.partialorder %v3800, 0.0
      %vm3837 = vcmp.ge.f32.partialorder %v3801, 0.0
      %vm3838 = vcmp.ge.f32.partialorder %v3802, 0.0
      %vm3839 = vcmp.ge.f32.partialorder %v3803, 0.0
      %vm3840 = vcmp.ge.f32.partialorder %v3804, 0.0
      %vm3841 = vcmp.ge.f32.partialorder %v3805, 0.0
      %vm3842 = vcmp.ge.f32.partialorder %v3806, 0.0
      %vm3843 = vcmp.ge.f32.partialorder %v3807, 0.0
      %vm3844 = vcmp.ge.f32.partialorder %v3808, 0.0
      %vm3845 = vcmp.ge.f32.partialorder %v3809, 0.0
      %vm3846 = vcmp.ge.f32.partialorder %v3810, 0.0
      %vm3847 = vcmp.ge.f32.partialorder %v3811, 0.0
      %vm3848 = vcmp.ge.f32.partialorder %v3812, 0.0
      %vm3849 = vcmp.ge.f32.partialorder %v3813, 0.0
      %vm3850 = vcmp.ge.f32.partialorder %v3814, 0.0
      %vm3851 = vcmp.ge.f32.partialorder %v3815, 0.0
      %v3852 = vmul.f32 %v3780, 0.01
      %v3853 = vmul.f32 %v3781, 0.01
      %v3854 = vmul.f32 %v3782, 0.01
      %v3855 = vmul.f32 %v3783, 0.01
      %v3856 = vmul.f32 %v3784, 0.01
      %v3857 = vmul.f32 %v3785, 0.01
      %v3858 = vmul.f32 %v3786, 0.01
      %v3859 = vmul.f32 %v3787, 0.01
      %v3860 = vmul.f32 %v3788, 0.01
      %v3861 = vmul.f32 %v3789, 0.01
      %v3862 = vmul.f32 %v3790, 0.01
      %v3863 = vmul.f32 %v3791, 0.01
      %v3864 = vmul.f32 %v3792, 0.01
      %v3865 = vmul.f32 %v3793, 0.01
      %v3866 = vmul.f32 %v3794, 0.01
      %v3867 = vmul.f32 %v3795, 0.01
      %v3868 = vmul.f32 %v3796, 0.01
      %v3869 = vmul.f32 %v3797, 0.01
      %v3870 = vmul.f32 %v3798, 0.01
      %v3871 = vmul.f32 %v3799, 0.01
      %v3872 = vmul.f32 %v3800, 0.01
      %v3873 = vmul.f32 %v3801, 0.01
      %v3874 = vmul.f32 %v3802, 0.01
      %v3875 = vmul.f32 %v3803, 0.01
      %v3876 = vmul.f32 %v3804, 0.01
      %v3877 = vmul.f32 %v3805, 0.01
      %v3878 = vmul.f32 %v3806, 0.01
      %v3879 = vmul.f32 %v3807, 0.01
      %v3880 = vmul.f32 %v3808, 0.01
      %v3881 = vmul.f32 %v3809, 0.01
      %v3882 = vmul.f32 %v3810, 0.01
      %v3883 = vmul.f32 %v3811, 0.01
      %v3884 = vmul.f32 %v3812, 0.01
      %v3885 = vmul.f32 %v3813, 0.01
      %v3886 = vmul.f32 %v3814, 0.01
      %v3887 = vmul.f32 %v3815, 0.01
      %v3888 = vsel %vm3816, %v3780, %v3852
      %v3889 = vsel %vm3817, %v3781, %v3853
      %v3890 = vsel %vm3818, %v3782, %v3854
      %v3891 = vsel %vm3819, %v3783, %v3855
      %v3892 = vsel %vm3820, %v3784, %v3856
      %v3893 = vsel %vm3821, %v3785, %v3857
      %v3894 = vsel %vm3822, %v3786, %v3858
      %v3895 = vsel %vm3823, %v3787, %v3859
      %v3896 = vsel %vm3824, %v3788, %v3860
      %v3897 = vsel %vm3825, %v3789, %v3861
      %v3898 = vsel %vm3826, %v3790, %v3862
      %v3899 = vsel %vm3827, %v3791, %v3863
      %v3900 = vsel %vm3828, %v3792, %v3864
      %v3901 = vsel %vm3829, %v3793, %v3865
      %v3902 = vsel %vm3830, %v3794, %v3866
      %v3903 = vsel %vm3831, %v3795, %v3867
      %v3904 = vsel %vm3832, %v3796, %v3868
      %v3905 = vsel %vm3833, %v3797, %v3869
      %v3906 = vsel %vm3834, %v3798, %v3870
      %v3907 = vsel %vm3835, %v3799, %v3871
      %v3908 = vsel %vm3836, %v3800, %v3872
      %v3909 = vsel %vm3837, %v3801, %v3873
      %v3910 = vsel %vm3838, %v3802, %v3874
      %v3911 = vsel %vm3839, %v3803, %v3875
      %v3912 = vsel %vm3840, %v3804, %v3876
      %v3913 = vsel %vm3841, %v3805, %v3877
      %v3914 = vsel %vm3842, %v3806, %v3878
      %v3915 = vsel %vm3843, %v3807, %v3879
      %v3916 = vsel %vm3844, %v3808, %v3880
      %v3917 = vsel %vm3845, %v3809, %v3881
      %v3918 = vsel %vm3846, %v3810, %v3882
      %v3919 = vsel %vm3847, %v3811, %v3883
      %v3920 = vsel %vm3848, %v3812, %v3884
      %v3921 = vsel %vm3849, %v3813, %v3885
      %v3922 = vsel %vm3850, %v3814, %v3886
      %v3923 = vsel %vm3851, %v3815, %v3887
      %v3924 = vmul.f32 %v3888, %v3233
      %v3925 = vmul.f32 %v3889, %v3238
      %v3926 = vmul.f32 %v3890, %v3243
      %v3927 = vmul.f32 %v3891, %v3248
      %v3928 = vmul.f32 %v3892, %v3253
      %v3929 = vmul.f32 %v3893, %v3258
      %v3930 = vmul.f32 %v3894, %v3263
      %v3931 = vmul.f32 %v3895, %v3268
      %v3932 = vmul.f32 %v3896, %v3273
      %v3933 = vmul.f32 %v3897, %v3278
      %v3934 = vmul.f32 %v3898, %v3283
      %v3935 = vmul.f32 %v3899, %v3288
      %v3936 = vmul.f32 %v3900, %v3293
      %v3937 = vmul.f32 %v3901, %v3298
      %v3938 = vmul.f32 %v3902, %v3303
      %v3939 = vmul.f32 %v3903, %v3308
      %v3940 = vmul.f32 %v3904, %v3313
      %v3941 = vmul.f32 %v3905, %v3318
      %v3942 = vmul.f32 %v3906, %v3323
      %v3943 = vmul.f32 %v3907, %v3328
      %v3944 = vmul.f32 %v3908, %v3333
      %v3945 = vmul.f32 %v3909, %v3338
      %v3946 = vmul.f32 %v3910, %v3343
      %v3947 = vmul.f32 %v3911, %v3348
      %v3948 = vmul.f32 %v3912, %v3353
      %v3949 = vmul.f32 %v3913, %v3358
      %v3950 = vmul.f32 %v3914, %v3363
      %v3951 = vmul.f32 %v3915, %v3368
      %v3952 = vmul.f32 %v3916, %v3373
      %v3953 = vmul.f32 %v3917, %v3378
      %v3954 = vmul.f32 %v3918, %v3383
      %v3955 = vmul.f32 %v3919, %v3388
      %v3956 = vmul.f32 %v3920, %v3393
      %v3957 = vmul.f32 %v3921, %v3398
      %v3958 = vmul.f32 %v3922, %v3403
      %v3959 = vmul.f32 %v3923, %v3408
      %3960 = vst.msk [vmem:[#allocation2] sm:$0xff] %vm3446, 0.0
      %3961 = vst.msk [vmem:[#allocation2 + $0x8] sm:$0xff] %vm3446, 0.0
      %3962 = vst.msk [vmem:[#allocation2 + $0x10] sm:$0xff] %vm3446, 0.0
      %3963 = vst.msk [vmem:[#allocation2 + $0x18] sm:$0xff] %vm3446, 0.0
      %3964 = vst.msk [vmem:[#allocation2 + $0x20] sm:$0xff] %vm3446, 0.0
      %3965 = vst.msk [vmem:[#allocation2 + $0x28] sm:$0xff] %vm3446, 0.0
      %3966 = vst.msk [vmem:[#allocation2 + $0x30] sm:$0xff] %vm3446, 0.0
      %3967 = vst.msk [vmem:[#allocation2 + $0x38] sm:$0xff] %vm3446, 0.0
      %3968 = vst.msk [vmem:[#allocation2 + $0x40] sm:$0xff] %vm3446, 0.0
      %3969 = vst.msk [vmem:[#allocation2 + $0x48] sm:$0xff] %vm3446, 0.0
      %3970 = vst.msk [vmem:[#allocation2 + $0x50] sm:$0xff] %vm3446, 0.0
      %3971 = vst.msk [vmem:[#allocation2 + $0x58] sm:$0xff] %vm3446, 0.0
      %3972 = vst.msk [vmem:[#allocation2 + $0x60] sm:$0xff] %vm3446, 0.0
      %3973 = vst.msk [vmem:[#allocation2 + $0x68] sm:$0xff] %vm3446, 0.0
      %3974 = vst.msk [vmem:[#allocation2 + $0x70] sm:$0xff] %vm3446, 0.0
      %3975 = vst.msk [vmem:[#allocation2 + $0x78] sm:$0xff] %vm3446, 0.0
      %3976 = vst.msk [vmem:[#allocation2 + $0x80] sm:$0xff] %vm3446, 0.0
      %3977 = vst.msk [vmem:[#allocation2 + $0x88] sm:$0xff] %vm3446, 0.0
      %3978 = vst.msk [vmem:[#allocation2 + $0x90] sm:$0xff] %vm3446, 0.0
      %3979 = vst.msk [vmem:[#allocation2 + $0x98] sm:$0xff] %vm3446, 0.0
      %3980 = vst.msk [vmem:[#allocation2 + $0xa0] sm:$0xff] %vm3446, 0.0
      %3981 = vst.msk [vmem:[#allocation2 + $0xa8] sm:$0xff] %vm3446, 0.0
      %3982 = vst.msk [vmem:[#allocation2 + $0xb0] sm:$0xff] %vm3446, 0.0
      %3983 = vst.msk [vmem:[#allocation2 + $0xb8] sm:$0xff] %vm3446, 0.0
      %3984 = vst.msk [vmem:[#allocation2 + $0xc0] sm:$0xff] %vm3446, 0.0
      %3985 = vst.msk [vmem:[#allocation2 + $0xc8] sm:$0xff] %vm3446, 0.0
      %3986 = vst.msk [vmem:[#allocation2 + $0xd0] sm:$0xff] %vm3446, 0.0
      %3987 = vst.msk [vmem:[#allocation2 + $0xd8] sm:$0xff] %vm3446, 0.0
      %3988 = vst.msk [vmem:[#allocation2 + $0xe0] sm:$0xff] %vm3446, 0.0
      %3989 = vst.msk [vmem:[#allocation2 + $0xe8] sm:$0xff] %vm3446, 0.0
      %3990 = vst.msk [vmem:[#allocation2 + $0xf0] sm:$0xff] %vm3446, 0.0
      %3991 = vst.msk [vmem:[#allocation2 + $0xf8] sm:$0xff] %vm3446, 0.0
      %3992 = vst.msk [vmem:[#allocation2 + $0x100] sm:$0xff] %vm3446, 0.0
      %3993 = vst.msk [vmem:[#allocation2 + $0x108] sm:$0xff] %vm3446, 0.0
      %3994 = vst.msk [vmem:[#allocation2 + $0x110] sm:$0xff] %vm3446, 0.0
      %3995 = vst.msk [vmem:[#allocation2 + $0x118] sm:$0xff] %vm3446, 0.0
      %3996 = vst.msk [vmem:[#allocation2 + $0x120] sm:$0xff] %vm3446, 0.0
      %3997 = vst.msk [vmem:[#allocation2 + $0x128] sm:$0xff] %vm3446, 0.0
      %3998 = vst.msk [vmem:[#allocation2 + $0x130] sm:$0xff] %vm3446, 0.0
      %3999 = vst.msk [vmem:[#allocation2 + $0x138] sm:$0xff] %vm3446, 0.0
      %4000 = vst.msk [vmem:[#allocation2 + $0x140] sm:$0xff] %vm3446, 0.0
      %4001 = vst.msk [vmem:[#allocation2 + $0x148] sm:$0xff] %vm3446, 0.0
      %vm4002 = vcmask 128000
      %4003 = vst.msk [vmem:[#allocation2 + $0x150] sm:$0x3f] %vm4002, 0.0
      %4004 = vst.msk [vmem:[#allocation2 + $0x13] sm:$0xff] %vm3446, %v3924
      %4005 = vst.msk [vmem:[#allocation2 + $0x1b] sm:$0xff] %vm3446, %v3925
      %4006 = vst.msk [vmem:[#allocation2 + $0x23] sm:$0xff] %vm3446, %v3926
      %4007 = vst.msk [vmem:[#allocation2 + $0x2b] sm:$0xff] %vm3446, %v3927
      %4008 = vst.msk [vmem:[#allocation2 + $0x33] sm:$0xff] %vm3446, %v3928
      %4009 = vst.msk [vmem:[#allocation2 + $0x3b] sm:$0xff] %vm3446, %v3929
      %4010 = vst.msk [vmem:[#allocation2 + $0x43] sm:$0xff] %vm3446, %v3930
      %4011 = vst.msk [vmem:[#allocation2 + $0x4b] sm:$0xff] %vm3446, %v3931
      %4012 = vst.msk [vmem:[#allocation2 + $0x53] sm:$0xff] %vm3446, %v3932
      %4013 = vst.msk [vmem:[#allocation2 + $0x5b] sm:$0xff] %vm3446, %v3933
      %4014 = vst.msk [vmem:[#allocation2 + $0x63] sm:$0xff] %vm3446, %v3934
      %4015 = vst.msk [vmem:[#allocation2 + $0x6b] sm:$0xff] %vm3446, %v3935
      %4016 = vst.msk [vmem:[#allocation2 + $0x73] sm:$0xff] %vm3446, %v3936
      %4017 = vst.msk [vmem:[#allocation2 + $0x7b] sm:$0xff] %vm3446, %v3937
      %4018 = vst.msk [vmem:[#allocation2 + $0x83] sm:$0xff] %vm3446, %v3938
      %4019 = vst.msk [vmem:[#allocation2 + $0x8b] sm:$0xff] %vm3446, %v3939
      %4020 = vst.msk [vmem:[#allocation2 + $0x93] sm:$0xff] %vm3446, %v3940
      %4021 = vst.msk [vmem:[#allocation2 + $0x9b] sm:$0xff] %vm3446, %v3941
      %4022 = vst.msk [vmem:[#allocation2 + $0xa3] sm:$0xff] %vm3446, %v3942
      %4023 = vst.msk [vmem:[#allocation2 + $0xab] sm:$0xff] %vm3446, %v3943
      %4024 = vst.msk [vmem:[#allocation2 + $0xb3] sm:$0xff] %vm3446, %v3944
      %4025 = vst.msk [vmem:[#allocation2 + $0xbb] sm:$0xff] %vm3446, %v3945
      %4026 = vst.msk [vmem:[#allocation2 + $0xc3] sm:$0xff] %vm3446, %v3946
      %4027 = vst.msk [vmem:[#allocation2 + $0xcb] sm:$0xff] %vm3446, %v3947
      %4028 = vst.msk [vmem:[#allocation2 + $0xd3] sm:$0xff] %vm3446, %v3948
      %4029 = vst.msk [vmem:[#allocation2 + $0xdb] sm:$0xff] %vm3446, %v3949
      %4030 = vst.msk [vmem:[#allocation2 + $0xe3] sm:$0xff] %vm3446, %v3950
      %4031 = vst.msk [vmem:[#allocation2 + $0xeb] sm:$0xff] %vm3446, %v3951
      %4032 = vst.msk [vmem:[#allocation2 + $0xf3] sm:$0xff] %vm3446, %v3952
      %4033 = vst.msk [vmem:[#allocation2 + $0xfb] sm:$0xff] %vm3446, %v3953
      %4034 = vst.msk [vmem:[#allocation2 + $0x103] sm:$0xff] %vm3446, %v3954
      %4035 = vst.msk [vmem:[#allocation2 + $0x10b] sm:$0xff] %vm3446, %v3955
      %4036 = vst.msk [vmem:[#allocation2 + $0x113] sm:$0xff] %vm3446, %v3956
      %4037 = vst.msk [vmem:[#allocation2 + $0x11b] sm:$0xff] %vm3446, %v3957
      %4038 = vst.msk [vmem:[#allocation2 + $0x123] sm:$0xff] %vm3446, %v3958
      %4039 = vst.msk [vmem:[#allocation2 + $0x12b] sm:$0xff] %vm3446, %v3959
      %v4040 = vld [vmem:[#allocation2] sm:$0xff]
      %v4041 = vld [vmem:[#allocation2 + $0x8] sm:$0xff]
      %v4042 = vld [vmem:[#allocation2 + $0x10] sm:$0xff]
      %v4043 = vld [vmem:[#allocation2 + $0x18] sm:$0xff]
      %v4044 = vld [vmem:[#allocation2 + $0x20] sm:$0xff]
      %v4045 = vld [vmem:[#allocation2 + $0x28] sm:$0xff]
      %v4046 = vld [vmem:[#allocation2 + $0x30] sm:$0xff]
      %v4047 = vld [vmem:[#allocation2 + $0x38] sm:$0xff]
      %v4048 = vld [vmem:[#allocation2 + $0x40] sm:$0xff]
      %v4049 = vld [vmem:[#allocation2 + $0x48] sm:$0xff]
      %v4050 = vld [vmem:[#allocation2 + $0x50] sm:$0xff]
      %v4051 = vld [vmem:[#allocation2 + $0x58] sm:$0xff]
      %v4052 = vld [vmem:[#allocation2 + $0x60] sm:$0xff]
      %v4053 = vld [vmem:[#allocation2 + $0x68] sm:$0xff]
      %v4054 = vld [vmem:[#allocation2 + $0x70] sm:$0xff]
      %v4055 = vld [vmem:[#allocation2 + $0x78] sm:$0xff]
      %v4056 = vld [vmem:[#allocation2 + $0x80] sm:$0xff]
      %v4057 = vld [vmem:[#allocation2 + $0x88] sm:$0xff]
      %v4058 = vld [vmem:[#allocation2 + $0x90] sm:$0xff]
      %v4059 = vld [vmem:[#allocation2 + $0x98] sm:$0xff]
      %v4060 = vld [vmem:[#allocation2 + $0xa0] sm:$0xff]
      %v4061 = vld [vmem:[#allocation2 + $0xa8] sm:$0xff]
      %v4062 = vld [vmem:[#allocation2 + $0xb0] sm:$0xff]
      %v4063 = vld [vmem:[#allocation2 + $0xb8] sm:$0xff]
      %v4064 = vld [vmem:[#allocation2 + $0xc0] sm:$0xff]
      %v4065 = vld [vmem:[#allocation2 + $0xc8] sm:$0xff]
      %v4066 = vld [vmem:[#allocation2 + $0xd0] sm:$0xff]
      %v4067 = vld [vmem:[#allocation2 + $0xd8] sm:$0xff]
      %v4068 = vld [vmem:[#allocation2 + $0xe0] sm:$0xff]
      %v4069 = vld [vmem:[#allocation2 + $0xe8] sm:$0xff]
      %v4070 = vld [vmem:[#allocation2 + $0xf0] sm:$0xff]
      %v4071 = vld [vmem:[#allocation2 + $0xf8] sm:$0xff]
      %v4072 = vld [vmem:[#allocation2 + $0x100] sm:$0xff]
      %v4073 = vld [vmem:[#allocation2 + $0x108] sm:$0xff]
      %v4074 = vld [vmem:[#allocation2 + $0x110] sm:$0xff]
      %v4075 = vld [vmem:[#allocation2 + $0x118] sm:$0xff]
      %v4076 = vld [vmem:[#allocation2 + $0x120] sm:$0xff]
      %v4077 = vld [vmem:[#allocation2 + $0x128] sm:$0xff]
      %v4078 = vld [vmem:[#allocation2 + $0x130] sm:$0xff]
      %v4079 = vld [vmem:[#allocation2 + $0x138] sm:$0xff]
      %v4080 = vld [vmem:[#allocation2 + $0x140] sm:$0xff]
      %v4081 = vpack.c.bf16 %v4041, %v4040
      %v4082 = vpack.c.bf16 %v4043, %v4042
      %v4083 = vpack.c.bf16 %v4045, %v4044
      %v4084 = vpack.c.bf16 %v4047, %v4046
      %v4085 = vpack.c.bf16 %v4049, %v4048
      %v4086 = vpack.c.bf16 %v4051, %v4050
      %v4087 = vpack.c.bf16 %v4053, %v4052
      %v4088 = vpack.c.bf16 %v4055, %v4054
      %v4089 = vpack.c.bf16 %v4057, %v4056
      %v4090 = vpack.c.bf16 %v4059, %v4058
      %v4091 = vpack.c.bf16 %v4061, %v4060
      %v4092 = vpack.c.bf16 %v4063, %v4062
      %v4093 = vpack.c.bf16 %v4065, %v4064
      %v4094 = vpack.c.bf16 %v4067, %v4066
      %v4095 = vpack.c.bf16 %v4069, %v4068
      %v4096 = vpack.c.bf16 %v4071, %v4070
      %v4097 = vpack.c.bf16 %v4073, %v4072
      %v4098 = vpack.c.bf16 %v4075, %v4074
      %v4099 = vld [vmem:[%s5] sm:$0xf]
      %v4100 = vld [vmem:[%s5 + $0x4] sm:$0xf]
      %v4101 = vpack.c.bf16 %v4076, %v4076
      %s4102 = scalar_lea.vmem %s5, 8
      %v4103 = vld [vmem:[%s4102] sm:$0xf]
      %v4104 = vld [vmem:[%s4102 + $0x4] sm:$0xf]
      %v4106 = vshrl.u32 %v4081, 16
      %v4108 = vshll.u32 %v4081, 16
      %v4110 = vrot.slane %v4108, 1
      %v4111 = vor.u32 %v4106, %v4110
      %v4113 = vshll.u32 %v4082, 16
      %v4115 = vrot.slane %v4113, 1
      %v4116 = vsel %vm399, %v4111, %v4115
      %v4117 = vshrl.u32 %v4082, 16
      %v4119 = vor.u32 %v4117, %v4115
      %v4121 = vshll.u32 %v4083, 16
      %v4123 = vrot.slane %v4121, 1
      %v4124 = vsel %vm399, %v4119, %v4123
      %v4125 = vshrl.u32 %v4083, 16
      %v4127 = vor.u32 %v4125, %v4123
      %v4129 = vshll.u32 %v4084, 16
      %v4131 = vrot.slane %v4129, 1
      %v4132 = vsel %vm399, %v4127, %v4131
      %v4133 = vshrl.u32 %v4084, 16
      %v4135 = vor.u32 %v4133, %v4131
      %v4137 = vshll.u32 %v4085, 16
      %v4139 = vrot.slane %v4137, 1
      %v4140 = vsel %vm399, %v4135, %v4139
      %v4141 = vshrl.u32 %v4085, 16
      %v4143 = vor.u32 %v4141, %v4139
      %v4145 = vshll.u32 %v4086, 16
      %v4147 = vrot.slane %v4145, 1
      %v4148 = vsel %vm399, %v4143, %v4147
      %v4149 = vshrl.u32 %v4086, 16
      %v4151 = vor.u32 %v4149, %v4147
      %v4153 = vshll.u32 %v4087, 16
      %v4155 = vrot.slane %v4153, 1
      %v4156 = vsel %vm399, %v4151, %v4155
      %v4157 = vshrl.u32 %v4087, 16
      %v4159 = vor.u32 %v4157, %v4155
      %v4161 = vshll.u32 %v4088, 16
      %v4163 = vrot.slane %v4161, 1
      %v4164 = vsel %vm399, %v4159, %v4163
      %v4165 = vshrl.u32 %v4088, 16
      %v4167 = vor.u32 %v4165, %v4163
      %v4169 = vshll.u32 %v4089, 16
      %v4171 = vrot.slane %v4169, 1
      %v4172 = vsel %vm399, %v4167, %v4171
      %v4173 = vshrl.u32 %v4089, 16
      %v4175 = vor.u32 %v4173, %v4171
      %v4177 = vshll.u32 %v4090, 16
      %v4179 = vrot.slane %v4177, 1
      %v4180 = vsel %vm399, %v4175, %v4179
      %v4181 = vshrl.u32 %v4090, 16
      %v4183 = vor.u32 %v4181, %v4179
      %v4185 = vshll.u32 %v4091, 16
      %v4187 = vrot.slane %v4185, 1
      %v4188 = vsel %vm399, %v4183, %v4187
      %v4189 = vshrl.u32 %v4091, 16
      %v4191 = vor.u32 %v4189, %v4187
      %v4193 = vshll.u32 %v4092, 16
      %v4195 = vrot.slane %v4193, 1
      %v4196 = vsel %vm399, %v4191, %v4195
      %v4197 = vshrl.u32 %v4092, 16
      %v4199 = vor.u32 %v4197, %v4195
      %v4201 = vshll.u32 %v4093, 16
      %v4203 = vrot.slane %v4201, 1
      %v4204 = vsel %vm399, %v4199, %v4203
      %v4205 = vshrl.u32 %v4093, 16
      %v4207 = vor.u32 %v4205, %v4203
      %v4209 = vshll.u32 %v4094, 16
      %v4211 = vrot.slane %v4209, 1
      %v4212 = vsel %vm399, %v4207, %v4211
      %v4213 = vshrl.u32 %v4094, 16
      %v4215 = vor.u32 %v4213, %v4211
      %v4217 = vshll.u32 %v4095, 16
      %v4219 = vrot.slane %v4217, 1
      %v4220 = vsel %vm399, %v4215, %v4219
      %v4221 = vshrl.u32 %v4095, 16
      %v4223 = vor.u32 %v4221, %v4219
      %v4225 = vshll.u32 %v4096, 16
      %v4227 = vrot.slane %v4225, 1
      %v4228 = vsel %vm399, %v4223, %v4227
      %v4229 = vshrl.u32 %v4096, 16
      %v4231 = vor.u32 %v4229, %v4227
      %v4233 = vshll.u32 %v4097, 16
      %v4235 = vrot.slane %v4233, 1
      %v4236 = vsel %vm399, %v4231, %v4235
      %v4237 = vshrl.u32 %v4097, 16
      %v4239 = vor.u32 %v4237, %v4235
      %v4241 = vshll.u32 %v4098, 16
      %v4243 = vrot.slane %v4241, 1
      %v4244 = vsel %vm399, %v4239, %v4243
      %v4245 = vshrl.u32 %v4098, 16
      %v4247 = vor.u32 %v4245, %v4243
      %v4249 = vshll.u32 %v4101, 16
      %v4251 = vrot.slane %v4249, 1
      %v4252 = vsel %vm399, %v4247, %v4251
      %v4255 = vunpack.c.l.b16 %v4103
      %v4256 = vunpack.c.l.b16 %v4104
      %v4257 = vpack.c.b16 %v4256, %v4255
      %v4260 = vsel %vm3446, %v4116, 0
      %v4263 = vsel %vm3446, %v4124, 0
      %v4266 = vsel %vm3446, %v4132, 0
      %v4269 = vsel %vm3446, %v4140, 0
      %v4272 = vsel %vm3446, %v4148, 0
      %v4275 = vsel %vm3446, %v4156, 0
      %v4278 = vsel %vm3446, %v4164, 0
      %v4281 = vsel %vm3446, %v4172, 0
      %v4284 = vsel %vm3446, %v4180, 0
      %v4287 = vsel %vm3446, %v4188, 0
      %v4290 = vsel %vm3446, %v4196, 0
      %v4293 = vsel %vm3446, %v4204, 0
      %v4296 = vsel %vm3446, %v4212, 0
      %v4299 = vsel %vm3446, %v4220, 0
      %v4302 = vsel %vm3446, %v4228, 0
      %v4305 = vsel %vm3446, %v4236, 0
      %v4308 = vsel %vm3446, %v4244, 0
      %v4311 = vsel %vm3446, %v4252, 0
      %4313 = vmatprep.subr.bf16.mxu0 0
      %4314 = vmatpush1.bf16.msra.mxu0 %v4257
      %4315 = vmatprep.subr.bf16.mxu0 0
      %4316 = vmatpush1.bf16.msra.mxu0 0
      %4317 = vmatprep.subr.bf16.mxu0 0
      %4318 = vmatpush1.bf16.msra.mxu0 0
      %4319 = vmatprep.subr.bf16.mxu0 0
      %4320 = vmatpush1.bf16.msra.mxu0 0
      %4321 = vmatprep.subr.bf16.mxu0 0
      %4322 = vmatpush1.bf16.msra.mxu0 0
      %4323 = vmatprep.subr.bf16.mxu0 0
      %4324 = vmatpush1.bf16.msra.mxu0 0
      %4325 = vmatprep.subr.bf16.mxu0 0
      %4326 = vmatpush1.bf16.msra.mxu0 0
      %4327 = vmatprep.subr.bf16.mxu0 0
      %4328 = vmatpush1.bf16.msra.mxu0 0
      %4329 = vmatprep.subr.bf16.mxu0 0
      %4330 = vmatpush1.bf16.msra.mxu0 0
      %4331 = vmatprep.subr.bf16.mxu0 0
      %4332 = vmatpush1.bf16.msra.mxu0 0
      %4333 = vmatprep.subr.bf16.mxu0 0
      %4334 = vmatpush1.bf16.msra.mxu0 0
      %4335 = vmatprep.subr.bf16.mxu0 0
      %4336 = vmatpush1.bf16.msra.mxu0 0
      %4337 = vmatprep.subr.bf16.mxu0 0
      %4338 = vmatpush1.bf16.msra.mxu0 0
      %4339 = vmatprep.subr.bf16.mxu0 0
      %4340 = vmatpush1.bf16.msra.mxu0 0
      %4341 = vmatprep.subr.bf16.mxu0 0
      %4342 = vmatpush1.bf16.msra.mxu0 0
      %4343 = vmatprep.subr.bf16.mxu0 0
      %4344 = vmatpush1.bf16.msra.mxu0 0
      %4345 = vmatprep.mubr.bf16.mxu0 0
      %4346 = vmatmul.mubr.bf16.gmra.mrb[0].mxu0 %v4260
      %v4347 = vpop.f32.mrb[0].mxu0
      %v4348 = vadd.f32 0.0, %v4347
      %v4349 = vpop.f32.mrb[0].mxu0
      %v4350 = vpop.f32.mrb[0].mxu0
      %v4351 = vadd.f32 0.0, %v4350
      %v4352 = vpop.f32.mrb[0].mxu0
      %4353 = vmatprep.mubr.bf16.mxu0 0
      %4354 = vmatmul.mubr.bf16.gmra.mrb[0].mxu0 %v4263
      %v4355 = vpop.f32.mrb[0].mxu0
      %v4356 = vadd.f32 0.0, %v4355
      %v4357 = vpop.f32.mrb[0].mxu0
      %v4358 = vpop.f32.mrb[0].mxu0
      %v4359 = vadd.f32 0.0, %v4358
      %v4360 = vpop.f32.mrb[0].mxu0
      %4361 = vmatprep.mubr.bf16.mxu0 0
      %4362 = vmatmul.mubr.bf16.gmra.mrb[0].mxu0 %v4266
      %v4363 = vpop.f32.mrb[0].mxu0
      %v4364 = vadd.f32 0.0, %v4363
      %v4365 = vpop.f32.mrb[0].mxu0
      %v4366 = vpop.f32.mrb[0].mxu0
      %v4367 = vadd.f32 0.0, %v4366
      %v4368 = vpop.f32.mrb[0].mxu0
      %4369 = vmatprep.mubr.bf16.mxu0 0
      %4370 = vmatmul.mubr.bf16.gmra.mrb[0].mxu0 %v4269
      %v4371 = vpop.f32.mrb[0].mxu0
      %v4372 = vadd.f32 0.0, %v4371
      %v4373 = vpop.f32.mrb[0].mxu0
      %v4374 = vpop.f32.mrb[0].mxu0
      %v4375 = vadd.f32 0.0, %v4374
      %v4376 = vpop.f32.mrb[0].mxu0
      %4377 = vmatprep.mubr.bf16.mxu0 0
      %4378 = vmatmul.mubr.bf16.gmra.mrb[0].mxu0 %v4272
      %v4379 = vpop.f32.mrb[0].mxu0
      %v4380 = vadd.f32 0.0, %v4379
      %v4381 = vpop.f32.mrb[0].mxu0
      %v4382 = vpop.f32.mrb[0].mxu0
      %v4383 = vadd.f32 0.0, %v4382
      %v4384 = vpop.f32.mrb[0].mxu0
      %4385 = vmatprep.mubr.bf16.mxu0 0
      %4386 = vmatmul.mubr.bf16.gmra.mrb[0].mxu0 %v4275
      %v4387 = vpop.f32.mrb[0].mxu0
      %v4388 = vadd.f32 0.0, %v4387
      %v4389 = vpop.f32.mrb[0].mxu0
      %v4390 = vpop.f32.mrb[0].mxu0
      %v4391 = vadd.f32 0.0, %v4390
      %v4392 = vpop.f32.mrb[0].mxu0
      %4393 = vmatprep.mubr.bf16.mxu0 0
      %4394 = vmatmul.mubr.bf16.gmra.mrb[0].mxu0 %v4278
      %v4395 = vpop.f32.mrb[0].mxu0
      %v4396 = vadd.f32 0.0, %v4395
      %v4397 = vpop.f32.mrb[0].mxu0
      %v4398 = vpop.f32.mrb[0].mxu0
      %v4399 = vadd.f32 0.0, %v4398
      %v4400 = vpop.f32.mrb[0].mxu0
      %4401 = vmatprep.mubr.bf16.mxu0 0
      %4402 = vmatmul.mubr.bf16.gmra.mrb[0].mxu0 %v4281
      %v4403 = vpop.f32.mrb[0].mxu0
      %v4404 = vadd.f32 0.0, %v4403
      %v4405 = vpop.f32.mrb[0].mxu0
      %v4406 = vpop.f32.mrb[0].mxu0
      %v4407 = vadd.f32 0.0, %v4406
      %v4408 = vpop.f32.mrb[0].mxu0
      %4409 = vmatprep.mubr.bf16.mxu0 0
      %4410 = vmatmul.mubr.bf16.gmra.mrb[0].mxu0 %v4284
      %v4411 = vpop.f32.mrb[0].mxu0
      %v4412 = vadd.f32 0.0, %v4411
      %v4413 = vpop.f32.mrb[0].mxu0
      %v4414 = vpop.f32.mrb[0].mxu0
      %v4415 = vadd.f32 0.0, %v4414
      %v4416 = vpop.f32.mrb[0].mxu0
      %4417 = vmatprep.mubr.bf16.mxu0 0
      %4418 = vmatmul.mubr.bf16.gmra.mrb[0].mxu0 %v4287
      %v4419 = vpop.f32.mrb[0].mxu0
      %v4420 = vadd.f32 0.0, %v4419
      %v4421 = vpop.f32.mrb[0].mxu0
      %v4422 = vpop.f32.mrb[0].mxu0
      %v4423 = vadd.f32 0.0, %v4422
      %v4424 = vpop.f32.mrb[0].mxu0
      %4425 = vmatprep.mubr.bf16.mxu0 0
      %4426 = vmatmul.mubr.bf16.gmra.mrb[0].mxu0 %v4290
      %v4427 = vpop.f32.mrb[0].mxu0
      %v4428 = vadd.f32 0.0, %v4427
      %v4429 = vpop.f32.mrb[0].mxu0
      %v4430 = vpop.f32.mrb[0].mxu0
      %v4431 = vadd.f32 0.0, %v4430
      %v4432 = vpop.f32.mrb[0].mxu0
      %4433 = vmatprep.mubr.bf16.mxu0 0
      %4434 = vmatmul.mubr.bf16.gmra.mrb[0].mxu0 %v4293
      %v4435 = vpop.f32.mrb[0].mxu0
      %v4436 = vadd.f32 0.0, %v4435
      %v4437 = vpop.f32.mrb[0].mxu0
      %v4438 = vpop.f32.mrb[0].mxu0
      %v4439 = vadd.f32 0.0, %v4438
      %v4440 = vpop.f32.mrb[0].mxu0
      %4441 = vmatprep.mubr.bf16.mxu0 0
      %4442 = vmatmul.mubr.bf16.gmra.mrb[0].mxu0 %v4296
      %v4443 = vpop.f32.mrb[0].mxu0
      %v4444 = vadd.f32 0.0, %v4443
      %v4445 = vpop.f32.mrb[0].mxu0
      %v4446 = vpop.f32.mrb[0].mxu0
      %v4447 = vadd.f32 0.0, %v4446
      %v4448 = vpop.f32.mrb[0].mxu0
      %4449 = vmatprep.mubr.bf16.mxu0 0
      %4450 = vmatmul.mubr.bf16.gmra.mrb[0].mxu0 %v4299
      %v4451 = vpop.f32.mrb[0].mxu0
      %v4452 = vadd.f32 0.0, %v4451
      %v4453 = vpop.f32.mrb[0].mxu0
      %v4454 = vpop.f32.mrb[0].mxu0
      %v4455 = vadd.f32 0.0, %v4454
      %v4456 = vpop.f32.mrb[0].mxu0
      %4457 = vmatprep.mubr.bf16.mxu0 0
      %4458 = vmatmul.mubr.bf16.gmra.mrb[0].mxu0 %v4302
      %v4459 = vpop.f32.mrb[0].mxu0
      %v4460 = vadd.f32 0.0, %v4459
      %v4461 = vpop.f32.mrb[0].mxu0
      %v4462 = vpop.f32.mrb[0].mxu0
      %v4463 = vadd.f32 0.0, %v4462
      %v4464 = vpop.f32.mrb[0].mxu0
      %4465 = vmatprep.mubr.bf16.mxu0 0
      %4466 = vmatmul.mubr.bf16.gmra.mrb[0].mxu0 %v4305
      %v4467 = vpop.f32.mrb[0].mxu0
      %v4468 = vadd.f32 0.0, %v4467
      %v4469 = vpop.f32.mrb[0].mxu0
      %v4470 = vpop.f32.mrb[0].mxu0
      %v4471 = vadd.f32 0.0, %v4470
      %v4472 = vpop.f32.mrb[0].mxu0
      %4473 = vmatprep.mubr.bf16.mxu0 0
      %4474 = vmatmul.mubr.bf16.gmra.mrb[0].mxu0 %v4308
      %v4475 = vpop.f32.mrb[0].mxu0
      %v4476 = vadd.f32 0.0, %v4475
      %v4477 = vpop.f32.mrb[0].mxu0
      %v4478 = vpop.f32.mrb[0].mxu0
      %v4479 = vadd.f32 0.0, %v4478
      %v4480 = vpop.f32.mrb[0].mxu0
      %4481 = vmatprep.mubr.bf16.mxu0 0
      %4482 = vmatmul.mubr.bf16.gmra.mrb[0].mxu0 %v4311
      %v4483 = vpop.f32.mrb[0].mxu0
      %v4484 = vadd.f32 0.0, %v4483
      %v4485 = vpop.f32.mrb[0].mxu0
      %v4486 = vpop.f32.mrb[0].mxu0
      %v4487 = vadd.f32 0.0, %v4486
      %v4488 = vpop.f32.mrb[0].mxu0
      %4489 = vdwg.mxu0
      %v4492 = vunpack.c.l.b16 %v4099
      %v4493 = vunpack.c.l.b16 %v4100
      %v4494 = vpack.c.b16 %v4493, %v4492
      %v4496 = vsel %vm3446, %v4081, 0
      %v4498 = vsel %vm3446, %v4082, 0
      %v4500 = vsel %vm3446, %v4083, 0
      %v4502 = vsel %vm3446, %v4084, 0
      %v4504 = vsel %vm3446, %v4085, 0
      %v4506 = vsel %vm3446, %v4086, 0
      %v4508 = vsel %vm3446, %v4087, 0
      %v4510 = vsel %vm3446, %v4088, 0
      %v4512 = vsel %vm3446, %v4089, 0
      %v4514 = vsel %vm3446, %v4090, 0
      %v4516 = vsel %vm3446, %v4091, 0
      %v4518 = vsel %vm3446, %v4092, 0
      %v4520 = vsel %vm3446, %v4093, 0
      %v4522 = vsel %vm3446, %v4094, 0
      %v4524 = vsel %vm3446, %v4095, 0
      %v4526 = vsel %vm3446, %v4096, 0
      %v4528 = vsel %vm3446, %v4097, 0
      %v4530 = vsel %vm3446, %v4098, 0
      %4532 = vmatprep.subr.bf16.mxu0 0
      %4533 = vmatpush1.bf16.msra.mxu0 %v4494
      %4534 = vmatprep.subr.bf16.mxu0 0
      %4535 = vmatpush1.bf16.msra.mxu0 0
      %4536 = vmatprep.subr.bf16.mxu0 0
      %4537 = vmatpush1.bf16.msra.mxu0 0
      %4538 = vmatprep.subr.bf16.mxu0 0
      %4539 = vmatpush1.bf16.msra.mxu0 0
      %4540 = vmatprep.subr.bf16.mxu0 0
      %4541 = vmatpush1.bf16.msra.mxu0 0
      %4542 = vmatprep.subr.bf16.mxu0 0
      %4543 = vmatpush1.bf16.msra.mxu0 0
      %4544 = vmatprep.subr.bf16.mxu0 0
      %4545 = vmatpush1.bf16.msra.mxu0 0
      %4546 = vmatprep.subr.bf16.mxu0 0
      %4547 = vmatpush1.bf16.msra.mxu0 0
      %4548 = vmatprep.subr.bf16.mxu0 0
      %4549 = vmatpush1.bf16.msra.mxu0 0
      %4550 = vmatprep.subr.bf16.mxu0 0
      %4551 = vmatpush1.bf16.msra.mxu0 0
      %4552 = vmatprep.subr.bf16.mxu0 0
      %4553 = vmatpush1.bf16.msra.mxu0 0
      %4554 = vmatprep.subr.bf16.mxu0 0
      %4555 = vmatpush1.bf16.msra.mxu0 0
      %4556 = vmatprep.subr.bf16.mxu0 0
      %4557 = vmatpush1.bf16.msra.mxu0 0
      %4558 = vmatprep.subr.bf16.mxu0 0
      %4559 = vmatpush1.bf16.msra.mxu0 0
      %4560 = vmatprep.subr.bf16.mxu0 0
      %4561 = vmatpush1.bf16.msra.mxu0 0
      %4562 = vmatprep.subr.bf16.mxu0 0
      %4563 = vmatpush1.bf16.msra.mxu0 0
      %4564 = vmatprep.mubr.bf16.mxu0 0
      %4565 = vmatmul.mubr.bf16.gmra.mrb[0].mxu0 %v4496
      %v4566 = vpop.f32.mrb[0].mxu0
      %v4567 = vadd.f32 %v4348, %v4566
      %v4568 = vpop.f32.mrb[0].mxu0
      %v4569 = vpop.f32.mrb[0].mxu0
      %v4570 = vadd.f32 %v4351, %v4569
      %v4571 = vpop.f32.mrb[0].mxu0
      %4572 = vmatprep.mubr.bf16.mxu0 0
      %4573 = vmatmul.mubr.bf16.gmra.mrb[0].mxu0 %v4498
      %v4574 = vpop.f32.mrb[0].mxu0
      %v4575 = vadd.f32 %v4356, %v4574
      %v4576 = vpop.f32.mrb[0].mxu0
      %v4577 = vpop.f32.mrb[0].mxu0
      %v4578 = vadd.f32 %v4359, %v4577
      %v4579 = vpop.f32.mrb[0].mxu0
      %4580 = vmatprep.mubr.bf16.mxu0 0
      %4581 = vmatmul.mubr.bf16.gmra.mrb[0].mxu0 %v4500
      %v4582 = vpop.f32.mrb[0].mxu0
      %v4583 = vadd.f32 %v4364, %v4582
      %v4584 = vpop.f32.mrb[0].mxu0
      %v4585 = vpop.f32.mrb[0].mxu0
      %v4586 = vadd.f32 %v4367, %v4585
      %v4587 = vpop.f32.mrb[0].mxu0
      %4588 = vmatprep.mubr.bf16.mxu0 0
      %4589 = vmatmul.mubr.bf16.gmra.mrb[0].mxu0 %v4502
      %v4590 = vpop.f32.mrb[0].mxu0
      %v4591 = vadd.f32 %v4372, %v4590
      %v4592 = vpop.f32.mrb[0].mxu0
      %v4593 = vpop.f32.mrb[0].mxu0
      %v4594 = vadd.f32 %v4375, %v4593
      %v4595 = vpop.f32.mrb[0].mxu0
      %4596 = vmatprep.mubr.bf16.mxu0 0
      %4597 = vmatmul.mubr.bf16.gmra.mrb[0].mxu0 %v4504
      %v4598 = vpop.f32.mrb[0].mxu0
      %v4599 = vadd.f32 %v4380, %v4598
      %v4600 = vpop.f32.mrb[0].mxu0
      %v4601 = vpop.f32.mrb[0].mxu0
      %v4602 = vadd.f32 %v4383, %v4601
      %v4603 = vpop.f32.mrb[0].mxu0
      %4604 = vmatprep.mubr.bf16.mxu0 0
      %4605 = vmatmul.mubr.bf16.gmra.mrb[0].mxu0 %v4506
      %v4606 = vpop.f32.mrb[0].mxu0
      %v4607 = vadd.f32 %v4388, %v4606
      %v4608 = vpop.f32.mrb[0].mxu0
      %v4609 = vpop.f32.mrb[0].mxu0
      %v4610 = vadd.f32 %v4391, %v4609
      %v4611 = vpop.f32.mrb[0].mxu0
      %4612 = vmatprep.mubr.bf16.mxu0 0
      %4613 = vmatmul.mubr.bf16.gmra.mrb[0].mxu0 %v4508
      %v4614 = vpop.f32.mrb[0].mxu0
      %v4615 = vadd.f32 %v4396, %v4614
      %v4616 = vpop.f32.mrb[0].mxu0
      %v4617 = vpop.f32.mrb[0].mxu0
      %v4618 = vadd.f32 %v4399, %v4617
      %v4619 = vpop.f32.mrb[0].mxu0
      %4620 = vmatprep.mubr.bf16.mxu0 0
      %4621 = vmatmul.mubr.bf16.gmra.mrb[0].mxu0 %v4510
      %v4622 = vpop.f32.mrb[0].mxu0
      %v4623 = vadd.f32 %v4404, %v4622
      %v4624 = vpop.f32.mrb[0].mxu0
      %v4625 = vpop.f32.mrb[0].mxu0
      %v4626 = vadd.f32 %v4407, %v4625
      %v4627 = vpop.f32.mrb[0].mxu0
      %4628 = vmatprep.mubr.bf16.mxu0 0
      %4629 = vmatmul.mubr.bf16.gmra.mrb[0].mxu0 %v4512
      %v4630 = vpop.f32.mrb[0].mxu0
      %v4631 = vadd.f32 %v4412, %v4630
      %v4632 = vpop.f32.mrb[0].mxu0
      %v4633 = vpop.f32.mrb[0].mxu0
      %v4634 = vadd.f32 %v4415, %v4633
      %v4635 = vpop.f32.mrb[0].mxu0
      %4636 = vmatprep.mubr.bf16.mxu0 0
      %4637 = vmatmul.mubr.bf16.gmra.mrb[0].mxu0 %v4514
      %v4638 = vpop.f32.mrb[0].mxu0
      %v4639 = vadd.f32 %v4420, %v4638
      %v4640 = vpop.f32.mrb[0].mxu0
      %v4641 = vpop.f32.mrb[0].mxu0
      %v4642 = vadd.f32 %v4423, %v4641
      %v4643 = vpop.f32.mrb[0].mxu0
      %4644 = vmatprep.mubr.bf16.mxu0 0
      %4645 = vmatmul.mubr.bf16.gmra.mrb[0].mxu0 %v4516
      %v4646 = vpop.f32.mrb[0].mxu0
      %v4647 = vadd.f32 %v4428, %v4646
      %v4648 = vpop.f32.mrb[0].mxu0
      %v4649 = vpop.f32.mrb[0].mxu0
      %v4650 = vadd.f32 %v4431, %v4649
      %v4651 = vpop.f32.mrb[0].mxu0
      %4652 = vmatprep.mubr.bf16.mxu0 0
      %4653 = vmatmul.mubr.bf16.gmra.mrb[0].mxu0 %v4518
      %v4654 = vpop.f32.mrb[0].mxu0
      %v4655 = vadd.f32 %v4436, %v4654
      %v4656 = vpop.f32.mrb[0].mxu0
      %v4657 = vpop.f32.mrb[0].mxu0
      %v4658 = vadd.f32 %v4439, %v4657
      %v4659 = vpop.f32.mrb[0].mxu0
      %4660 = vmatprep.mubr.bf16.mxu0 0
      %4661 = vmatmul.mubr.bf16.gmra.mrb[0].mxu0 %v4520
      %v4662 = vpop.f32.mrb[0].mxu0
      %v4663 = vadd.f32 %v4444, %v4662
      %v4664 = vpop.f32.mrb[0].mxu0
      %v4665 = vpop.f32.mrb[0].mxu0
      %v4666 = vadd.f32 %v4447, %v4665
      %v4667 = vpop.f32.mrb[0].mxu0
      %4668 = vmatprep.mubr.bf16.mxu0 0
      %4669 = vmatmul.mubr.bf16.gmra.mrb[0].mxu0 %v4522
      %v4670 = vpop.f32.mrb[0].mxu0
      %v4671 = vadd.f32 %v4452, %v4670
      %v4672 = vpop.f32.mrb[0].mxu0
      %v4673 = vpop.f32.mrb[0].mxu0
      %v4674 = vadd.f32 %v4455, %v4673
      %v4675 = vpop.f32.mrb[0].mxu0
      %4676 = vmatprep.mubr.bf16.mxu0 0
      %4677 = vmatmul.mubr.bf16.gmra.mrb[0].mxu0 %v4524
      %v4678 = vpop.f32.mrb[0].mxu0
      %v4679 = vadd.f32 %v4460, %v4678
      %v4680 = vpop.f32.mrb[0].mxu0
      %v4681 = vpop.f32.mrb[0].mxu0
      %v4682 = vadd.f32 %v4463, %v4681
      %v4683 = vpop.f32.mrb[0].mxu0
      %4684 = vmatprep.mubr.bf16.mxu0 0
      %4685 = vmatmul.mubr.bf16.gmra.mrb[0].mxu0 %v4526
      %v4686 = vpop.f32.mrb[0].mxu0
      %v4687 = vadd.f32 %v4468, %v4686
      %v4688 = vpop.f32.mrb[0].mxu0
      %v4689 = vpop.f32.mrb[0].mxu0
      %v4690 = vadd.f32 %v4471, %v4689
      %v4691 = vpop.f32.mrb[0].mxu0
      %4692 = vmatprep.mubr.bf16.mxu0 0
      %4693 = vmatmul.mubr.bf16.gmra.mrb[0].mxu0 %v4528
      %v4694 = vpop.f32.mrb[0].mxu0
      %v4695 = vadd.f32 %v4476, %v4694
      %v4696 = vpop.f32.mrb[0].mxu0
      %v4697 = vpop.f32.mrb[0].mxu0
      %v4698 = vadd.f32 %v4479, %v4697
      %v4699 = vpop.f32.mrb[0].mxu0
      %4700 = vmatprep.mubr.bf16.mxu0 0
      %4701 = vmatmul.mubr.bf16.gmra.mrb[0].mxu0 %v4530
      %v4702 = vpop.f32.mrb[0].mxu0
      %v4703 = vadd.f32 %v4484, %v4702
      %v4704 = vpop.f32.mrb[0].mxu0
      %v4705 = vpop.f32.mrb[0].mxu0
      %v4706 = vadd.f32 %v4487, %v4705
      %v4707 = vpop.f32.mrb[0].mxu0
      %4708 = vdwg.mxu0
      %s4709 = scalar_lea.vmem %s5, 16
      %v4710 = vld [vmem:[%s4709] sm:$0xf]
      %v4711 = vld [vmem:[%s4709 + $0x4] sm:$0xf]
      %v4731 = vrot.slane %v4081, 1
      %v4732 = vrot.slane %v4082, 1
      %v4733 = vsel %vm1041, %v4731, %v4732
      %v4734 = vrot.slane %v4083, 1
      %v4735 = vsel %vm1041, %v4732, %v4734
      %v4736 = vrot.slane %v4084, 1
      %v4737 = vsel %vm1041, %v4734, %v4736
      %v4738 = vrot.slane %v4085, 1
      %v4739 = vsel %vm1041, %v4736, %v4738
      %v4740 = vrot.slane %v4086, 1
      %v4741 = vsel %vm1041, %v4738, %v4740
      %v4742 = vrot.slane %v4087, 1
      %v4743 = vsel %vm1041, %v4740, %v4742
      %v4744 = vrot.slane %v4088, 1
      %v4745 = vsel %vm1041, %v4742, %v4744
      %v4746 = vrot.slane %v4089, 1
      %v4747 = vsel %vm1041, %v4744, %v4746
      %v4748 = vrot.slane %v4090, 1
      %v4749 = vsel %vm1041, %v4746, %v4748
      %v4750 = vrot.slane %v4091, 1
      %v4751 = vsel %vm1041, %v4748, %v4750
      %v4752 = vrot.slane %v4092, 1
      %v4753 = vsel %vm1041, %v4750, %v4752
      %v4754 = vrot.slane %v4093, 1
      %v4755 = vsel %vm1041, %v4752, %v4754
      %v4756 = vrot.slane %v4094, 1
      %v4757 = vsel %vm1041, %v4754, %v4756
      %v4758 = vrot.slane %v4095, 1
      %v4759 = vsel %vm1041, %v4756, %v4758
      %v4760 = vrot.slane %v4096, 1
      %v4761 = vsel %vm1041, %v4758, %v4760
      %v4762 = vrot.slane %v4097, 1
      %v4763 = vsel %vm1041, %v4760, %v4762
      %v4764 = vrot.slane %v4098, 1
      %v4765 = vsel %vm1041, %v4762, %v4764
      %v4766 = vrot.slane %v4101, 1
      %v4767 = vsel %vm1041, %v4764, %v4766
      %v4770 = vunpack.c.l.b16 %v4710
      %v4771 = vunpack.c.l.b16 %v4711
      %v4772 = vpack.c.b16 %v4771, %v4770
      %v4775 = vsel %vm3446, %v4733, 0
      %v4778 = vsel %vm3446, %v4735, 0
      %v4781 = vsel %vm3446, %v4737, 0
      %v4784 = vsel %vm3446, %v4739, 0
      %v4787 = vsel %vm3446, %v4741, 0
      %v4790 = vsel %vm3446, %v4743, 0
      %v4793 = vsel %vm3446, %v4745, 0
      %v4796 = vsel %vm3446, %v4747, 0
      %v4799 = vsel %vm3446, %v4749, 0
      %v4802 = vsel %vm3446, %v4751, 0
      %v4805 = vsel %vm3446, %v4753, 0
      %v4808 = vsel %vm3446, %v4755, 0
      %v4811 = vsel %vm3446, %v4757, 0
      %v4814 = vsel %vm3446, %v4759, 0
      %v4817 = vsel %vm3446, %v4761, 0
      %v4820 = vsel %vm3446, %v4763, 0
      %v4823 = vsel %vm3446, %v4765, 0
      %v4826 = vsel %vm3446, %v4767, 0
      %4828 = vmatprep.subr.bf16.mxu0 0
      %4829 = vmatpush1.bf16.msra.mxu0 %v4772
      %4830 = vmatprep.subr.bf16.mxu0 0
      %4831 = vmatpush1.bf16.msra.mxu0 0
      %4832 = vmatprep.subr.bf16.mxu0 0
      %4833 = vmatpush1.bf16.msra.mxu0 0
      %4834 = vmatprep.subr.bf16.mxu0 0
      %4835 = vmatpush1.bf16.msra.mxu0 0
      %4836 = vmatprep.subr.bf16.mxu0 0
      %4837 = vmatpush1.bf16.msra.mxu0 0
      %4838 = vmatprep.subr.bf16.mxu0 0
      %4839 = vmatpush1.bf16.msra.mxu0 0
      %4840 = vmatprep.subr.bf16.mxu0 0
      %4841 = vmatpush1.bf16.msra.mxu0 0
      %4842 = vmatprep.subr.bf16.mxu0 0
      %4843 = vmatpush1.bf16.msra.mxu0 0
      %4844 = vmatprep.subr.bf16.mxu0 0
      %4845 = vmatpush1.bf16.msra.mxu0 0
      %4846 = vmatprep.subr.bf16.mxu0 0
      %4847 = vmatpush1.bf16.msra.mxu0 0
      %4848 = vmatprep.subr.bf16.mxu0 0
      %4849 = vmatpush1.bf16.msra.mxu0 0
      %4850 = vmatprep.subr.bf16.mxu0 0
      %4851 = vmatpush1.bf16.msra.mxu0 0
      %4852 = vmatprep.subr.bf16.mxu0 0
      %4853 = vmatpush1.bf16.msra.mxu0 0
      %4854 = vmatprep.subr.bf16.mxu0 0
      %4855 = vmatpush1.bf16.msra.mxu0 0
      %4856 = vmatprep.subr.bf16.mxu0 0
      %4857 = vmatpush1.bf16.msra.mxu0 0
      %4858 = vmatprep.subr.bf16.mxu0 0
      %4859 = vmatpush1.bf16.msra.mxu0 0
      %4860 = vmatprep.mubr.bf16.mxu0 0
      %4861 = vmatmul.mubr.bf16.gmra.mrb[0].mxu0 %v4775
      %v4862 = vpop.f32.mrb[0].mxu0
      %v4863 = vadd.f32 0.0, %v4862
      %v4864 = vpop.f32.mrb[0].mxu0
      %v4865 = vpop.f32.mrb[0].mxu0
      %v4866 = vadd.f32 0.0, %v4865
      %v4867 = vpop.f32.mrb[0].mxu0
      %4868 = vmatprep.mubr.bf16.mxu0 0
      %4869 = vmatmul.mubr.bf16.gmra.mrb[0].mxu0 %v4778
      %v4870 = vpop.f32.mrb[0].mxu0
      %v4871 = vadd.f32 0.0, %v4870
      %v4872 = vpop.f32.mrb[0].mxu0
      %v4873 = vpop.f32.mrb[0].mxu0
      %v4874 = vadd.f32 0.0, %v4873
      %v4875 = vpop.f32.mrb[0].mxu0
      %4876 = vmatprep.mubr.bf16.mxu0 0
      %4877 = vmatmul.mubr.bf16.gmra.mrb[0].mxu0 %v4781
      %v4878 = vpop.f32.mrb[0].mxu0
      %v4879 = vadd.f32 0.0, %v4878
      %v4880 = vpop.f32.mrb[0].mxu0
      %v4881 = vpop.f32.mrb[0].mxu0
      %v4882 = vadd.f32 0.0, %v4881
      %v4883 = vpop.f32.mrb[0].mxu0
      %4884 = vmatprep.mubr.bf16.mxu0 0
      %4885 = vmatmul.mubr.bf16.gmra.mrb[0].mxu0 %v4784
      %v4886 = vpop.f32.mrb[0].mxu0
      %v4887 = vadd.f32 0.0, %v4886
      %v4888 = vpop.f32.mrb[0].mxu0
      %v4889 = vpop.f32.mrb[0].mxu0
      %v4890 = vadd.f32 0.0, %v4889
      %v4891 = vpop.f32.mrb[0].mxu0
      %4892 = vmatprep.mubr.bf16.mxu0 0
      %4893 = vmatmul.mubr.bf16.gmra.mrb[0].mxu0 %v4787
      %v4894 = vpop.f32.mrb[0].mxu0
      %v4895 = vadd.f32 0.0, %v4894
      %v4896 = vpop.f32.mrb[0].mxu0
      %v4897 = vpop.f32.mrb[0].mxu0
      %v4898 = vadd.f32 0.0, %v4897
      %v4899 = vpop.f32.mrb[0].mxu0
      %4900 = vmatprep.mubr.bf16.mxu0 0
      %4901 = vmatmul.mubr.bf16.gmra.mrb[0].mxu0 %v4790
      %v4902 = vpop.f32.mrb[0].mxu0
      %v4903 = vadd.f32 0.0, %v4902
      %v4904 = vpop.f32.mrb[0].mxu0
      %v4905 = vpop.f32.mrb[0].mxu0
      %v4906 = vadd.f32 0.0, %v4905
      %v4907 = vpop.f32.mrb[0].mxu0
      %4908 = vmatprep.mubr.bf16.mxu0 0
      %4909 = vmatmul.mubr.bf16.gmra.mrb[0].mxu0 %v4793
      %v4910 = vpop.f32.mrb[0].mxu0
      %v4911 = vadd.f32 0.0, %v4910
      %v4912 = vpop.f32.mrb[0].mxu0
      %v4913 = vpop.f32.mrb[0].mxu0
      %v4914 = vadd.f32 0.0, %v4913
      %v4915 = vpop.f32.mrb[0].mxu0
      %4916 = vmatprep.mubr.bf16.mxu0 0
      %4917 = vmatmul.mubr.bf16.gmra.mrb[0].mxu0 %v4796
      %v4918 = vpop.f32.mrb[0].mxu0
      %v4919 = vadd.f32 0.0, %v4918
      %v4920 = vpop.f32.mrb[0].mxu0
      %v4921 = vpop.f32.mrb[0].mxu0
      %v4922 = vadd.f32 0.0, %v4921
      %v4923 = vpop.f32.mrb[0].mxu0
      %4924 = vmatprep.mubr.bf16.mxu0 0
      %4925 = vmatmul.mubr.bf16.gmra.mrb[0].mxu0 %v4799
      %v4926 = vpop.f32.mrb[0].mxu0
      %v4927 = vadd.f32 0.0, %v4926
      %v4928 = vpop.f32.mrb[0].mxu0
      %v4929 = vpop.f32.mrb[0].mxu0
      %v4930 = vadd.f32 0.0, %v4929
      %v4931 = vpop.f32.mrb[0].mxu0
      %4932 = vmatprep.mubr.bf16.mxu0 0
      %4933 = vmatmul.mubr.bf16.gmra.mrb[0].mxu0 %v4802
      %v4934 = vpop.f32.mrb[0].mxu0
      %v4935 = vadd.f32 0.0, %v4934
      %v4936 = vpop.f32.mrb[0].mxu0
      %v4937 = vpop.f32.mrb[0].mxu0
      %v4938 = vadd.f32 0.0, %v4937
      %v4939 = vpop.f32.mrb[0].mxu0
      %4940 = vmatprep.mubr.bf16.mxu0 0
      %4941 = vmatmul.mubr.bf16.gmra.mrb[0].mxu0 %v4805
      %v4942 = vpop.f32.mrb[0].mxu0
      %v4943 = vadd.f32 0.0, %v4942
      %v4944 = vpop.f32.mrb[0].mxu0
      %v4945 = vpop.f32.mrb[0].mxu0
      %v4946 = vadd.f32 0.0, %v4945
      %v4947 = vpop.f32.mrb[0].mxu0
      %4948 = vmatprep.mubr.bf16.mxu0 0
      %4949 = vmatmul.mubr.bf16.gmra.mrb[0].mxu0 %v4808
      %v4950 = vpop.f32.mrb[0].mxu0
      %v4951 = vadd.f32 0.0, %v4950
      %v4952 = vpop.f32.mrb[0].mxu0
      %v4953 = vpop.f32.mrb[0].mxu0
      %v4954 = vadd.f32 0.0, %v4953
      %v4955 = vpop.f32.mrb[0].mxu0
      %4956 = vmatprep.mubr.bf16.mxu0 0
      %4957 = vmatmul.mubr.bf16.gmra.mrb[0].mxu0 %v4811
      %v4958 = vpop.f32.mrb[0].mxu0
      %v4959 = vadd.f32 0.0, %v4958
      %v4960 = vpop.f32.mrb[0].mxu0
      %v4961 = vpop.f32.mrb[0].mxu0
      %v4962 = vadd.f32 0.0, %v4961
      %v4963 = vpop.f32.mrb[0].mxu0
      %4964 = vmatprep.mubr.bf16.mxu0 0
      %4965 = vmatmul.mubr.bf16.gmra.mrb[0].mxu0 %v4814
      %v4966 = vpop.f32.mrb[0].mxu0
      %v4967 = vadd.f32 0.0, %v4966
      %v4968 = vpop.f32.mrb[0].mxu0
      %v4969 = vpop.f32.mrb[0].mxu0
      %v4970 = vadd.f32 0.0, %v4969
      %v4971 = vpop.f32.mrb[0].mxu0
      %4972 = vmatprep.mubr.bf16.mxu0 0
      %4973 = vmatmul.mubr.bf16.gmra.mrb[0].mxu0 %v4817
      %v4974 = vpop.f32.mrb[0].mxu0
      %v4975 = vadd.f32 0.0, %v4974
      %v4976 = vpop.f32.mrb[0].mxu0
      %v4977 = vpop.f32.mrb[0].mxu0
      %v4978 = vadd.f32 0.0, %v4977
      %v4979 = vpop.f32.mrb[0].mxu0
      %4980 = vmatprep.mubr.bf16.mxu0 0
      %4981 = vmatmul.mubr.bf16.gmra.mrb[0].mxu0 %v4820
      %v4982 = vpop.f32.mrb[0].mxu0
      %v4983 = vadd.f32 0.0, %v4982
      %v4984 = vpop.f32.mrb[0].mxu0
      %v4985 = vpop.f32.mrb[0].mxu0
      %v4986 = vadd.f32 0.0, %v4985
      %v4987 = vpop.f32.mrb[0].mxu0
      %4988 = vmatprep.mubr.bf16.mxu0 0
      %4989 = vmatmul.mubr.bf16.gmra.mrb[0].mxu0 %v4823
      %v4990 = vpop.f32.mrb[0].mxu0
      %v4991 = vadd.f32 0.0, %v4990
      %v4992 = vpop.f32.mrb[0].mxu0
      %v4993 = vpop.f32.mrb[0].mxu0
      %v4994 = vadd.f32 0.0, %v4993
      %v4995 = vpop.f32.mrb[0].mxu0
      %4996 = vmatprep.mubr.bf16.mxu0 0
      %4997 = vmatmul.mubr.bf16.gmra.mrb[0].mxu0 %v4826
      %v4998 = vpop.f32.mrb[0].mxu0
      %v4999 = vadd.f32 0.0, %v4998
      %v5000 = vpop.f32.mrb[0].mxu0
      %v5001 = vpop.f32.mrb[0].mxu0
      %v5002 = vadd.f32 0.0, %v5001
      %v5003 = vpop.f32.mrb[0].mxu0
      %5004 = vdwg.mxu0
      %v5005 = vadd.f32 %v4567, %v4863
      %v5006 = vadd.f32 %v4570, %v4866
      %v5007 = vadd.f32 %v4575, %v4871
      %v5008 = vadd.f32 %v4578, %v4874
      %v5009 = vadd.f32 %v4583, %v4879
      %v5010 = vadd.f32 %v4586, %v4882
      %v5011 = vadd.f32 %v4591, %v4887
      %v5012 = vadd.f32 %v4594, %v4890
      %v5013 = vadd.f32 %v4599, %v4895
      %v5014 = vadd.f32 %v4602, %v4898
      %v5015 = vadd.f32 %v4607, %v4903
      %v5016 = vadd.f32 %v4610, %v4906
      %v5017 = vadd.f32 %v4615, %v4911
      %v5018 = vadd.f32 %v4618, %v4914
      %v5019 = vadd.f32 %v4623, %v4919
      %v5020 = vadd.f32 %v4626, %v4922
      %v5021 = vadd.f32 %v4631, %v4927
      %v5022 = vadd.f32 %v4634, %v4930
      %v5023 = vadd.f32 %v4639, %v4935
      %v5024 = vadd.f32 %v4642, %v4938
      %v5025 = vadd.f32 %v4647, %v4943
      %v5026 = vadd.f32 %v4650, %v4946
      %v5027 = vadd.f32 %v4655, %v4951
      %v5028 = vadd.f32 %v4658, %v4954
      %v5029 = vadd.f32 %v4663, %v4959
      %v5030 = vadd.f32 %v4666, %v4962
      %v5031 = vadd.f32 %v4671, %v4967
      %v5032 = vadd.f32 %v4674, %v4970
      %v5033 = vadd.f32 %v4679, %v4975
      %v5034 = vadd.f32 %v4682, %v4978
      %v5035 = vadd.f32 %v4687, %v4983
      %v5036 = vadd.f32 %v4690, %v4986
      %v5037 = vadd.f32 %v4695, %v4991
      %v5038 = vadd.f32 %v4698, %v4994
      %v5039 = vadd.f32 %v4703, %v4999
      %v5040 = vadd.f32 %v4706, %v5002
      %v5041 = vpack.c.bf16 %v4077, %v4076
      %v5042 = vpack.c.bf16 %v4078, %v4078
      %s5043 = scalar_lea.vmem %s5, 24
      %v5044 = vld [vmem:[%s5043] sm:$0xf]
      %v5045 = vld [vmem:[%s5043 + $0x4] sm:$0xf]
      %v5048 = vrot.slane %v5041, 1
      %v5049 = vsel %vm1041, %v4764, %v5048
      %v5050 = vrot.slane %v5042, 1
      %v5051 = vsel %vm1041, %v5048, %v5050
      %v5054 = vunpack.c.l.b16 %v5044
      %v5055 = vunpack.c.l.b16 %v5045
      %v5056 = vpack.c.b16 %v5055, %v5054
      %v5059 = vsel %vm3446, %v5049, 0
      %v5062 = vsel %vm3446, %v5051, 0
      %5064 = vmatprep.subr.bf16.mxu0 0
      %5065 = vmatpush1.bf16.msra.mxu0 %v5056
      %5066 = vmatprep.subr.bf16.mxu0 0
      %5067 = vmatpush1.bf16.msra.mxu0 0
      %5068 = vmatprep.subr.bf16.mxu0 0
      %5069 = vmatpush1.bf16.msra.mxu0 0
      %5070 = vmatprep.subr.bf16.mxu0 0
      %5071 = vmatpush1.bf16.msra.mxu0 0
      %5072 = vmatprep.subr.bf16.mxu0 0
      %5073 = vmatpush1.bf16.msra.mxu0 0
      %5074 = vmatprep.subr.bf16.mxu0 0
      %5075 = vmatpush1.bf16.msra.mxu0 0
      %5076 = vmatprep.subr.bf16.mxu0 0
      %5077 = vmatpush1.bf16.msra.mxu0 0
      %5078 = vmatprep.subr.bf16.mxu0 0
      %5079 = vmatpush1.bf16.msra.mxu0 0
      %5080 = vmatprep.subr.bf16.mxu0 0
      %5081 = vmatpush1.bf16.msra.mxu0 0
      %5082 = vmatprep.subr.bf16.mxu0 0
      %5083 = vmatpush1.bf16.msra.mxu0 0
      %5084 = vmatprep.subr.bf16.mxu0 0
      %5085 = vmatpush1.bf16.msra.mxu0 0
      %5086 = vmatprep.subr.bf16.mxu0 0
      %5087 = vmatpush1.bf16.msra.mxu0 0
      %5088 = vmatprep.subr.bf16.mxu0 0
      %5089 = vmatpush1.bf16.msra.mxu0 0
      %5090 = vmatprep.subr.bf16.mxu0 0
      %5091 = vmatpush1.bf16.msra.mxu0 0
      %5092 = vmatprep.subr.bf16.mxu0 0
      %5093 = vmatpush1.bf16.msra.mxu0 0
      %5094 = vmatprep.subr.bf16.mxu0 0
      %5095 = vmatpush1.bf16.msra.mxu0 0
      %5096 = vmatprep.mubr.bf16.mxu0 0
      %5097 = vmatmul.mubr.bf16.gmra.mrb[0].mxu0 %v4778
      %v5098 = vpop.f32.mrb[0].mxu0
      %v5099 = vadd.f32 0.0, %v5098
      %v5100 = vpop.f32.mrb[0].mxu0
      %v5101 = vpop.f32.mrb[0].mxu0
      %v5102 = vadd.f32 0.0, %v5101
      %v5103 = vpop.f32.mrb[0].mxu0
      %5104 = vmatprep.mubr.bf16.mxu0 0
      %5105 = vmatmul.mubr.bf16.gmra.mrb[0].mxu0 %v4781
      %v5106 = vpop.f32.mrb[0].mxu0
      %v5107 = vadd.f32 0.0, %v5106
      %v5108 = vpop.f32.mrb[0].mxu0
      %v5109 = vpop.f32.mrb[0].mxu0
      %v5110 = vadd.f32 0.0, %v5109
      %v5111 = vpop.f32.mrb[0].mxu0
      %5112 = vmatprep.mubr.bf16.mxu0 0
      %5113 = vmatmul.mubr.bf16.gmra.mrb[0].mxu0 %v4784
      %v5114 = vpop.f32.mrb[0].mxu0
      %v5115 = vadd.f32 0.0, %v5114
      %v5116 = vpop.f32.mrb[0].mxu0
      %v5117 = vpop.f32.mrb[0].mxu0
      %v5118 = vadd.f32 0.0, %v5117
      %v5119 = vpop.f32.mrb[0].mxu0
      %5120 = vmatprep.mubr.bf16.mxu0 0
      %5121 = vmatmul.mubr.bf16.gmra.mrb[0].mxu0 %v4787
      %v5122 = vpop.f32.mrb[0].mxu0
      %v5123 = vadd.f32 0.0, %v5122
      %v5124 = vpop.f32.mrb[0].mxu0
      %v5125 = vpop.f32.mrb[0].mxu0
      %v5126 = vadd.f32 0.0, %v5125
      %v5127 = vpop.f32.mrb[0].mxu0
      %5128 = vmatprep.mubr.bf16.mxu0 0
      %5129 = vmatmul.mubr.bf16.gmra.mrb[0].mxu0 %v4790
      %v5130 = vpop.f32.mrb[0].mxu0
      %v5131 = vadd.f32 0.0, %v5130
      %v5132 = vpop.f32.mrb[0].mxu0
      %v5133 = vpop.f32.mrb[0].mxu0
      %v5134 = vadd.f32 0.0, %v5133
      %v5135 = vpop.f32.mrb[0].mxu0
      %5136 = vmatprep.mubr.bf16.mxu0 0
      %5137 = vmatmul.mubr.bf16.gmra.mrb[0].mxu0 %v4793
      %v5138 = vpop.f32.mrb[0].mxu0
      %v5139 = vadd.f32 0.0, %v5138
      %v5140 = vpop.f32.mrb[0].mxu0
      %v5141 = vpop.f32.mrb[0].mxu0
      %v5142 = vadd.f32 0.0, %v5141
      %v5143 = vpop.f32.mrb[0].mxu0
      %5144 = vmatprep.mubr.bf16.mxu0 0
      %5145 = vmatmul.mubr.bf16.gmra.mrb[0].mxu0 %v4796
      %v5146 = vpop.f32.mrb[0].mxu0
      %v5147 = vadd.f32 0.0, %v5146
      %v5148 = vpop.f32.mrb[0].mxu0
      %v5149 = vpop.f32.mrb[0].mxu0
      %v5150 = vadd.f32 0.0, %v5149
      %v5151 = vpop.f32.mrb[0].mxu0
      %5152 = vmatprep.mubr.bf16.mxu0 0
      %5153 = vmatmul.mubr.bf16.gmra.mrb[0].mxu0 %v4799
      %v5154 = vpop.f32.mrb[0].mxu0
      %v5155 = vadd.f32 0.0, %v5154
      %v5156 = vpop.f32.mrb[0].mxu0
      %v5157 = vpop.f32.mrb[0].mxu0
      %v5158 = vadd.f32 0.0, %v5157
      %v5159 = vpop.f32.mrb[0].mxu0
      %5160 = vmatprep.mubr.bf16.mxu0 0
      %5161 = vmatmul.mubr.bf16.gmra.mrb[0].mxu0 %v4802
      %v5162 = vpop.f32.mrb[0].mxu0
      %v5163 = vadd.f32 0.0, %v5162
      %v5164 = vpop.f32.mrb[0].mxu0
      %v5165 = vpop.f32.mrb[0].mxu0
      %v5166 = vadd.f32 0.0, %v5165
      %v5167 = vpop.f32.mrb[0].mxu0
      %5168 = vmatprep.mubr.bf16.mxu0 0
      %5169 = vmatmul.mubr.bf16.gmra.mrb[0].mxu0 %v4805
      %v5170 = vpop.f32.mrb[0].mxu0
      %v5171 = vadd.f32 0.0, %v5170
      %v5172 = vpop.f32.mrb[0].mxu0
      %v5173 = vpop.f32.mrb[0].mxu0
      %v5174 = vadd.f32 0.0, %v5173
      %v5175 = vpop.f32.mrb[0].mxu0
      %5176 = vmatprep.mubr.bf16.mxu0 0
      %5177 = vmatmul.mubr.bf16.gmra.mrb[0].mxu0 %v4808
      %v5178 = vpop.f32.mrb[0].mxu0
      %v5179 = vadd.f32 0.0, %v5178
      %v5180 = vpop.f32.mrb[0].mxu0
      %v5181 = vpop.f32.mrb[0].mxu0
      %v5182 = vadd.f32 0.0, %v5181
      %v5183 = vpop.f32.mrb[0].mxu0
      %5184 = vmatprep.mubr.bf16.mxu0 0
      %5185 = vmatmul.mubr.bf16.gmra.mrb[0].mxu0 %v4811
      %v5186 = vpop.f32.mrb[0].mxu0
      %v5187 = vadd.f32 0.0, %v5186
      %v5188 = vpop.f32.mrb[0].mxu0
      %v5189 = vpop.f32.mrb[0].mxu0
      %v5190 = vadd.f32 0.0, %v5189
      %v5191 = vpop.f32.mrb[0].mxu0
      %5192 = vmatprep.mubr.bf16.mxu0 0
      %5193 = vmatmul.mubr.bf16.gmra.mrb[0].mxu0 %v4814
      %v5194 = vpop.f32.mrb[0].mxu0
      %v5195 = vadd.f32 0.0, %v5194
      %v5196 = vpop.f32.mrb[0].mxu0
      %v5197 = vpop.f32.mrb[0].mxu0
      %v5198 = vadd.f32 0.0, %v5197
      %v5199 = vpop.f32.mrb[0].mxu0
      %5200 = vmatprep.mubr.bf16.mxu0 0
      %5201 = vmatmul.mubr.bf16.gmra.mrb[0].mxu0 %v4817
      %v5202 = vpop.f32.mrb[0].mxu0
      %v5203 = vadd.f32 0.0, %v5202
      %v5204 = vpop.f32.mrb[0].mxu0
      %v5205 = vpop.f32.mrb[0].mxu0
      %v5206 = vadd.f32 0.0, %v5205
      %v5207 = vpop.f32.mrb[0].mxu0
      %5208 = vmatprep.mubr.bf16.mxu0 0
      %5209 = vmatmul.mubr.bf16.gmra.mrb[0].mxu0 %v4820
      %v5210 = vpop.f32.mrb[0].mxu0
      %v5211 = vadd.f32 0.0, %v5210
      %v5212 = vpop.f32.mrb[0].mxu0
      %v5213 = vpop.f32.mrb[0].mxu0
      %v5214 = vadd.f32 0.0, %v5213
      %v5215 = vpop.f32.mrb[0].mxu0
      %5216 = vmatprep.mubr.bf16.mxu0 0
      %5217 = vmatmul.mubr.bf16.gmra.mrb[0].mxu0 %v4823
      %v5218 = vpop.f32.mrb[0].mxu0
      %v5219 = vadd.f32 0.0, %v5218
      %v5220 = vpop.f32.mrb[0].mxu0
      %v5221 = vpop.f32.mrb[0].mxu0
      %v5222 = vadd.f32 0.0, %v5221
      %v5223 = vpop.f32.mrb[0].mxu0
      %5224 = vmatprep.mubr.bf16.mxu0 0
      %5225 = vmatmul.mubr.bf16.gmra.mrb[0].mxu0 %v5059
      %v5226 = vpop.f32.mrb[0].mxu0
      %v5227 = vadd.f32 0.0, %v5226
      %v5228 = vpop.f32.mrb[0].mxu0
      %v5229 = vpop.f32.mrb[0].mxu0
      %v5230 = vadd.f32 0.0, %v5229
      %v5231 = vpop.f32.mrb[0].mxu0
      %5232 = vmatprep.mubr.bf16.mxu0 0
      %5233 = vmatmul.mubr.bf16.gmra.mrb[0].mxu0 %v5062
      %v5234 = vpop.f32.mrb[0].mxu0
      %v5235 = vadd.f32 0.0, %v5234
      %v5236 = vpop.f32.mrb[0].mxu0
      %v5237 = vpop.f32.mrb[0].mxu0
      %v5238 = vadd.f32 0.0, %v5237
      %v5239 = vpop.f32.mrb[0].mxu0
      %5240 = vdwg.mxu0
      %v5241 = vadd.f32 %v5005, %v5099
      %v5242 = vadd.f32 %v5006, %v5102
      %v5243 = vadd.f32 %v5007, %v5107
      %v5244 = vadd.f32 %v5008, %v5110
      %v5245 = vadd.f32 %v5009, %v5115
      %v5246 = vadd.f32 %v5010, %v5118
      %v5247 = vadd.f32 %v5011, %v5123
      %v5248 = vadd.f32 %v5012, %v5126
      %v5249 = vadd.f32 %v5013, %v5131
      %v5250 = vadd.f32 %v5014, %v5134
      %v5251 = vadd.f32 %v5015, %v5139
      %v5252 = vadd.f32 %v5016, %v5142
      %v5253 = vadd.f32 %v5017, %v5147
      %v5254 = vadd.f32 %v5018, %v5150
      %v5255 = vadd.f32 %v5019, %v5155
      %v5256 = vadd.f32 %v5020, %v5158
      %v5257 = vadd.f32 %v5021, %v5163
      %v5258 = vadd.f32 %v5022, %v5166
      %v5259 = vadd.f32 %v5023, %v5171
      %v5260 = vadd.f32 %v5024, %v5174
      %v5261 = vadd.f32 %v5025, %v5179
      %v5262 = vadd.f32 %v5026, %v5182
      %v5263 = vadd.f32 %v5027, %v5187
      %v5264 = vadd.f32 %v5028, %v5190
      %v5265 = vadd.f32 %v5029, %v5195
      %v5266 = vadd.f32 %v5030, %v5198
      %v5267 = vadd.f32 %v5031, %v5203
      %v5268 = vadd.f32 %v5032, %v5206
      %v5269 = vadd.f32 %v5033, %v5211
      %v5270 = vadd.f32 %v5034, %v5214
      %v5271 = vadd.f32 %v5035, %v5219
      %v5272 = vadd.f32 %v5036, %v5222
      %v5273 = vadd.f32 %v5037, %v5227
      %v5274 = vadd.f32 %v5038, %v5230
      %v5275 = vadd.f32 %v5039, %v5235
      %v5276 = vadd.f32 %v5040, %v5238
      %s5277 = scalar_lea.vmem %s5, 32
      %v5278 = vld [vmem:[%s5277] sm:$0xf]
      %v5279 = vld [vmem:[%s5277 + $0x4] sm:$0xf]
      %v5280 = vrot.slane %v4117, 1
      %v5281 = vrot.slane %v4113, 2
      %v5282 = vor.u32 %v5280, %v5281
      %v5283 = vrot.slane %v4125, 1
      %v5284 = vrot.slane %v4121, 2
      %v5285 = vor.u32 %v5283, %v5284
      %v5286 = vsel %vm1607, %v5282, %v5285
      %v5287 = vrot.slane %v4133, 1
      %v5288 = vrot.slane %v4129, 2
      %v5289 = vor.u32 %v5287, %v5288
      %v5290 = vsel %vm1607, %v5285, %v5289
      %v5291 = vrot.slane %v4141, 1
      %v5292 = vrot.slane %v4137, 2
      %v5293 = vor.u32 %v5291, %v5292
      %v5294 = vsel %vm1607, %v5289, %v5293
      %v5295 = vrot.slane %v4149, 1
      %v5296 = vrot.slane %v4145, 2
      %v5297 = vor.u32 %v5295, %v5296
      %v5298 = vsel %vm1607, %v5293, %v5297
      %v5299 = vrot.slane %v4157, 1
      %v5300 = vrot.slane %v4153, 2
      %v5301 = vor.u32 %v5299, %v5300
      %v5302 = vsel %vm1607, %v5297, %v5301
      %v5303 = vrot.slane %v4165, 1
      %v5304 = vrot.slane %v4161, 2
      %v5305 = vor.u32 %v5303, %v5304
      %v5306 = vsel %vm1607, %v5301, %v5305
      %v5307 = vrot.slane %v4173, 1
      %v5308 = vrot.slane %v4169, 2
      %v5309 = vor.u32 %v5307, %v5308
      %v5310 = vsel %vm1607, %v5305, %v5309
      %v5311 = vrot.slane %v4181, 1
      %v5312 = vrot.slane %v4177, 2
      %v5313 = vor.u32 %v5311, %v5312
      %v5314 = vsel %vm1607, %v5309, %v5313
      %v5315 = vrot.slane %v4189, 1
      %v5316 = vrot.slane %v4185, 2
      %v5317 = vor.u32 %v5315, %v5316
      %v5318 = vsel %vm1607, %v5313, %v5317
      %v5319 = vrot.slane %v4197, 1
      %v5320 = vrot.slane %v4193, 2
      %v5321 = vor.u32 %v5319, %v5320
      %v5322 = vsel %vm1607, %v5317, %v5321
      %v5323 = vrot.slane %v4205, 1
      %v5324 = vrot.slane %v4201, 2
      %v5325 = vor.u32 %v5323, %v5324
      %v5326 = vsel %vm1607, %v5321, %v5325
      %v5327 = vrot.slane %v4213, 1
      %v5328 = vrot.slane %v4209, 2
      %v5329 = vor.u32 %v5327, %v5328
      %v5330 = vsel %vm1607, %v5325, %v5329
      %v5331 = vrot.slane %v4221, 1
      %v5332 = vrot.slane %v4217, 2
      %v5333 = vor.u32 %v5331, %v5332
      %v5334 = vsel %vm1607, %v5329, %v5333
      %v5335 = vrot.slane %v4229, 1
      %v5336 = vrot.slane %v4225, 2
      %v5337 = vor.u32 %v5335, %v5336
      %v5338 = vsel %vm1607, %v5333, %v5337
      %v5339 = vrot.slane %v4237, 1
      %v5340 = vrot.slane %v4233, 2
      %v5341 = vor.u32 %v5339, %v5340
      %v5342 = vsel %vm1607, %v5337, %v5341
      %v5343 = vrot.slane %v4245, 1
      %v5344 = vrot.slane %v4241, 2
      %v5345 = vor.u32 %v5343, %v5344
      %v5346 = vsel %vm1607, %v5341, %v5345
      %v5348 = vshrl.u32 %v5041, 16
      %v5350 = vrot.slane %v5348, 1
      %v5351 = vshll.u32 %v5041, 16
      %v5353 = vrot.slane %v5351, 2
      %v5354 = vor.u32 %v5350, %v5353
      %v5355 = vsel %vm1607, %v5345, %v5354
      %v5357 = vshrl.u32 %v5042, 16
      %v5359 = vrot.slane %v5357, 1
      %v5360 = vshll.u32 %v5042, 16
      %v5362 = vrot.slane %v5360, 2
      %v5363 = vor.u32 %v5359, %v5362
      %v5364 = vsel %vm1607, %v5354, %v5363
      %v5367 = vunpack.c.l.b16 %v5278
      %v5368 = vunpack.c.l.b16 %v5279
      %v5369 = vpack.c.b16 %v5368, %v5367
      %v5372 = vsel %vm3446, %v5286, 0
      %v5375 = vsel %vm3446, %v5290, 0
      %v5378 = vsel %vm3446, %v5294, 0
      %v5381 = vsel %vm3446, %v5298, 0
      %v5384 = vsel %vm3446, %v5302, 0
      %v5387 = vsel %vm3446, %v5306, 0
      %v5390 = vsel %vm3446, %v5310, 0
      %v5393 = vsel %vm3446, %v5314, 0
      %v5396 = vsel %vm3446, %v5318, 0
      %v5399 = vsel %vm3446, %v5322, 0
      %v5402 = vsel %vm3446, %v5326, 0
      %v5405 = vsel %vm3446, %v5330, 0
      %v5408 = vsel %vm3446, %v5334, 0
      %v5411 = vsel %vm3446, %v5338, 0
      %v5414 = vsel %vm3446, %v5342, 0
      %v5417 = vsel %vm3446, %v5346, 0
      %v5420 = vsel %vm3446, %v5355, 0
      %v5423 = vsel %vm3446, %v5364, 0
      %5425 = vmatprep.subr.bf16.mxu0 0
      %5426 = vmatpush1.bf16.msra.mxu0 %v5369
      %5427 = vmatprep.subr.bf16.mxu0 0
      %5428 = vmatpush1.bf16.msra.mxu0 0
      %5429 = vmatprep.subr.bf16.mxu0 0
      %5430 = vmatpush1.bf16.msra.mxu0 0
      %5431 = vmatprep.subr.bf16.mxu0 0
      %5432 = vmatpush1.bf16.msra.mxu0 0
      %5433 = vmatprep.subr.bf16.mxu0 0
      %5434 = vmatpush1.bf16.msra.mxu0 0
      %5435 = vmatprep.subr.bf16.mxu0 0
      %5436 = vmatpush1.bf16.msra.mxu0 0
      %5437 = vmatprep.subr.bf16.mxu0 0
      %5438 = vmatpush1.bf16.msra.mxu0 0
      %5439 = vmatprep.subr.bf16.mxu0 0
      %5440 = vmatpush1.bf16.msra.mxu0 0
      %5441 = vmatprep.subr.bf16.mxu0 0
      %5442 = vmatpush1.bf16.msra.mxu0 0
      %5443 = vmatprep.subr.bf16.mxu0 0
      %5444 = vmatpush1.bf16.msra.mxu0 0
      %5445 = vmatprep.subr.bf16.mxu0 0
      %5446 = vmatpush1.bf16.msra.mxu0 0
      %5447 = vmatprep.subr.bf16.mxu0 0
      %5448 = vmatpush1.bf16.msra.mxu0 0
      %5449 = vmatprep.subr.bf16.mxu0 0
      %5450 = vmatpush1.bf16.msra.mxu0 0
      %5451 = vmatprep.subr.bf16.mxu0 0
      %5452 = vmatpush1.bf16.msra.mxu0 0
      %5453 = vmatprep.subr.bf16.mxu0 0
      %5454 = vmatpush1.bf16.msra.mxu0 0
      %5455 = vmatprep.subr.bf16.mxu0 0
      %5456 = vmatpush1.bf16.msra.mxu0 0
      %5457 = vmatprep.mubr.bf16.mxu0 0
      %5458 = vmatmul.mubr.bf16.gmra.mrb[0].mxu0 %v5372
      %v5459 = vpop.f32.mrb[0].mxu0
      %v5460 = vadd.f32 0.0, %v5459
      %v5461 = vpop.f32.mrb[0].mxu0
      %v5462 = vpop.f32.mrb[0].mxu0
      %v5463 = vadd.f32 0.0, %v5462
      %v5464 = vpop.f32.mrb[0].mxu0
      %5465 = vmatprep.mubr.bf16.mxu0 0
      %5466 = vmatmul.mubr.bf16.gmra.mrb[0].mxu0 %v5375
      %v5467 = vpop.f32.mrb[0].mxu0
      %v5468 = vadd.f32 0.0, %v5467
      %v5469 = vpop.f32.mrb[0].mxu0
      %v5470 = vpop.f32.mrb[0].mxu0
      %v5471 = vadd.f32 0.0, %v5470
      %v5472 = vpop.f32.mrb[0].mxu0
      %5473 = vmatprep.mubr.bf16.mxu0 0
      %5474 = vmatmul.mubr.bf16.gmra.mrb[0].mxu0 %v5378
      %v5475 = vpop.f32.mrb[0].mxu0
      %v5476 = vadd.f32 0.0, %v5475
      %v5477 = vpop.f32.mrb[0].mxu0
      %v5478 = vpop.f32.mrb[0].mxu0
      %v5479 = vadd.f32 0.0, %v5478
      %v5480 = vpop.f32.mrb[0].mxu0
      %5481 = vmatprep.mubr.bf16.mxu0 0
      %5482 = vmatmul.mubr.bf16.gmra.mrb[0].mxu0 %v5381
      %v5483 = vpop.f32.mrb[0].mxu0
      %v5484 = vadd.f32 0.0, %v5483
      %v5485 = vpop.f32.mrb[0].mxu0
      %v5486 = vpop.f32.mrb[0].mxu0
      %v5487 = vadd.f32 0.0, %v5486
      %v5488 = vpop.f32.mrb[0].mxu0
      %5489 = vmatprep.mubr.bf16.mxu0 0
      %5490 = vmatmul.mubr.bf16.gmra.mrb[0].mxu0 %v5384
      %v5491 = vpop.f32.mrb[0].mxu0
      %v5492 = vadd.f32 0.0, %v5491
      %v5493 = vpop.f32.mrb[0].mxu0
      %v5494 = vpop.f32.mrb[0].mxu0
      %v5495 = vadd.f32 0.0, %v5494
      %v5496 = vpop.f32.mrb[0].mxu0
      %5497 = vmatprep.mubr.bf16.mxu0 0
      %5498 = vmatmul.mubr.bf16.gmra.mrb[0].mxu0 %v5387
      %v5499 = vpop.f32.mrb[0].mxu0
      %v5500 = vadd.f32 0.0, %v5499
      %v5501 = vpop.f32.mrb[0].mxu0
      %v5502 = vpop.f32.mrb[0].mxu0
      %v5503 = vadd.f32 0.0, %v5502
      %v5504 = vpop.f32.mrb[0].mxu0
      %5505 = vmatprep.mubr.bf16.mxu0 0
      %5506 = vmatmul.mubr.bf16.gmra.mrb[0].mxu0 %v5390
      %v5507 = vpop.f32.mrb[0].mxu0
      %v5508 = vadd.f32 0.0, %v5507
      %v5509 = vpop.f32.mrb[0].mxu0
      %v5510 = vpop.f32.mrb[0].mxu0
      %v5511 = vadd.f32 0.0, %v5510
      %v5512 = vpop.f32.mrb[0].mxu0
      %5513 = vmatprep.mubr.bf16.mxu0 0
      %5514 = vmatmul.mubr.bf16.gmra.mrb[0].mxu0 %v5393
      %v5515 = vpop.f32.mrb[0].mxu0
      %v5516 = vadd.f32 0.0, %v5515
      %v5517 = vpop.f32.mrb[0].mxu0
      %v5518 = vpop.f32.mrb[0].mxu0
      %v5519 = vadd.f32 0.0, %v5518
      %v5520 = vpop.f32.mrb[0].mxu0
      %5521 = vmatprep.mubr.bf16.mxu0 0
      %5522 = vmatmul.mubr.bf16.gmra.mrb[0].mxu0 %v5396
      %v5523 = vpop.f32.mrb[0].mxu0
      %v5524 = vadd.f32 0.0, %v5523
      %v5525 = vpop.f32.mrb[0].mxu0
      %v5526 = vpop.f32.mrb[0].mxu0
      %v5527 = vadd.f32 0.0, %v5526
      %v5528 = vpop.f32.mrb[0].mxu0
      %5529 = vmatprep.mubr.bf16.mxu0 0
      %5530 = vmatmul.mubr.bf16.gmra.mrb[0].mxu0 %v5399
      %v5531 = vpop.f32.mrb[0].mxu0
      %v5532 = vadd.f32 0.0, %v5531
      %v5533 = vpop.f32.mrb[0].mxu0
      %v5534 = vpop.f32.mrb[0].mxu0
      %v5535 = vadd.f32 0.0, %v5534
      %v5536 = vpop.f32.mrb[0].mxu0
      %5537 = vmatprep.mubr.bf16.mxu0 0
      %5538 = vmatmul.mubr.bf16.gmra.mrb[0].mxu0 %v5402
      %v5539 = vpop.f32.mrb[0].mxu0
      %v5540 = vadd.f32 0.0, %v5539
      %v5541 = vpop.f32.mrb[0].mxu0
      %v5542 = vpop.f32.mrb[0].mxu0
      %v5543 = vadd.f32 0.0, %v5542
      %v5544 = vpop.f32.mrb[0].mxu0
      %5545 = vmatprep.mubr.bf16.mxu0 0
      %5546 = vmatmul.mubr.bf16.gmra.mrb[0].mxu0 %v5405
      %v5547 = vpop.f32.mrb[0].mxu0
      %v5548 = vadd.f32 0.0, %v5547
      %v5549 = vpop.f32.mrb[0].mxu0
      %v5550 = vpop.f32.mrb[0].mxu0
      %v5551 = vadd.f32 0.0, %v5550
      %v5552 = vpop.f32.mrb[0].mxu0
      %5553 = vmatprep.mubr.bf16.mxu0 0
      %5554 = vmatmul.mubr.bf16.gmra.mrb[0].mxu0 %v5408
      %v5555 = vpop.f32.mrb[0].mxu0
      %v5556 = vadd.f32 0.0, %v5555
      %v5557 = vpop.f32.mrb[0].mxu0
      %v5558 = vpop.f32.mrb[0].mxu0
      %v5559 = vadd.f32 0.0, %v5558
      %v5560 = vpop.f32.mrb[0].mxu0
      %5561 = vmatprep.mubr.bf16.mxu0 0
      %5562 = vmatmul.mubr.bf16.gmra.mrb[0].mxu0 %v5411
      %v5563 = vpop.f32.mrb[0].mxu0
      %v5564 = vadd.f32 0.0, %v5563
      %v5565 = vpop.f32.mrb[0].mxu0
      %v5566 = vpop.f32.mrb[0].mxu0
      %v5567 = vadd.f32 0.0, %v5566
      %v5568 = vpop.f32.mrb[0].mxu0
      %5569 = vmatprep.mubr.bf16.mxu0 0
      %5570 = vmatmul.mubr.bf16.gmra.mrb[0].mxu0 %v5414
      %v5571 = vpop.f32.mrb[0].mxu0
      %v5572 = vadd.f32 0.0, %v5571
      %v5573 = vpop.f32.mrb[0].mxu0
      %v5574 = vpop.f32.mrb[0].mxu0
      %v5575 = vadd.f32 0.0, %v5574
      %v5576 = vpop.f32.mrb[0].mxu0
      %5577 = vmatprep.mubr.bf16.mxu0 0
      %5578 = vmatmul.mubr.bf16.gmra.mrb[0].mxu0 %v5417
      %v5579 = vpop.f32.mrb[0].mxu0
      %v5580 = vadd.f32 0.0, %v5579
      %v5581 = vpop.f32.mrb[0].mxu0
      %v5582 = vpop.f32.mrb[0].mxu0
      %v5583 = vadd.f32 0.0, %v5582
      %v5584 = vpop.f32.mrb[0].mxu0
      %5585 = vmatprep.mubr.bf16.mxu0 0
      %5586 = vmatmul.mubr.bf16.gmra.mrb[0].mxu0 %v5420
      %v5587 = vpop.f32.mrb[0].mxu0
      %v5588 = vadd.f32 0.0, %v5587
      %v5589 = vpop.f32.mrb[0].mxu0
      %v5590 = vpop.f32.mrb[0].mxu0
      %v5591 = vadd.f32 0.0, %v5590
      %v5592 = vpop.f32.mrb[0].mxu0
      %5593 = vmatprep.mubr.bf16.mxu0 0
      %5594 = vmatmul.mubr.bf16.gmra.mrb[0].mxu0 %v5423
      %v5595 = vpop.f32.mrb[0].mxu0
      %v5596 = vadd.f32 0.0, %v5595
      %v5597 = vpop.f32.mrb[0].mxu0
      %v5598 = vpop.f32.mrb[0].mxu0
      %v5599 = vadd.f32 0.0, %v5598
      %v5600 = vpop.f32.mrb[0].mxu0
      %5601 = vdwg.mxu0
      %v5602 = vadd.f32 %v5241, %v5460
      %v5603 = vadd.f32 %v5242, %v5463
      %v5604 = vadd.f32 %v5243, %v5468
      %v5605 = vadd.f32 %v5244, %v5471
      %v5606 = vadd.f32 %v5245, %v5476
      %v5607 = vadd.f32 %v5246, %v5479
      %v5608 = vadd.f32 %v5247, %v5484
      %v5609 = vadd.f32 %v5248, %v5487
      %v5610 = vadd.f32 %v5249, %v5492
      %v5611 = vadd.f32 %v5250, %v5495
      %v5612 = vadd.f32 %v5251, %v5500
      %v5613 = vadd.f32 %v5252, %v5503
      %v5614 = vadd.f32 %v5253, %v5508
      %v5615 = vadd.f32 %v5254, %v5511
      %v5616 = vadd.f32 %v5255, %v5516
      %v5617 = vadd.f32 %v5256, %v5519
      %v5618 = vadd.f32 %v5257, %v5524
      %v5619 = vadd.f32 %v5258, %v5527
      %v5620 = vadd.f32 %v5259, %v5532
      %v5621 = vadd.f32 %v5260, %v5535
      %v5622 = vadd.f32 %v5261, %v5540
      %v5623 = vadd.f32 %v5262, %v5543
      %v5624 = vadd.f32 %v5263, %v5548
      %v5625 = vadd.f32 %v5264, %v5551
      %v5626 = vadd.f32 %v5265, %v5556
      %v5627 = vadd.f32 %v5266, %v5559
      %v5628 = vadd.f32 %v5267, %v5564
      %v5629 = vadd.f32 %v5268, %v5567
      %v5630 = vadd.f32 %v5269, %v5572
      %v5631 = vadd.f32 %v5270, %v5575
      %v5632 = vadd.f32 %v5271, %v5580
      %v5633 = vadd.f32 %v5272, %v5583
      %v5634 = vadd.f32 %v5273, %v5588
      %v5635 = vadd.f32 %v5274, %v5591
      %v5636 = vadd.f32 %v5275, %v5596
      %v5637 = vadd.f32 %v5276, %v5599
      %s5638 = scalar_lea.vmem %s5, 40
      %v5639 = vld [vmem:[%s5638] sm:$0xf]
      %v5640 = vld [vmem:[%s5638 + $0x4] sm:$0xf]
      %v5641 = vrot.slane %v4082, 2
      %v5642 = vrot.slane %v4083, 2
      %v5643 = vsel %vm1977, %v5641, %v5642
      %v5644 = vrot.slane %v4084, 2
      %v5645 = vsel %vm1977, %v5642, %v5644
      %v5646 = vrot.slane %v4085, 2
      %v5647 = vsel %vm1977, %v5644, %v5646
      %v5648 = vrot.slane %v4086, 2
      %v5649 = vsel %vm1977, %v5646, %v5648
      %v5650 = vrot.slane %v4087, 2
      %v5651 = vsel %vm1977, %v5648, %v5650
      %v5652 = vrot.slane %v4088, 2
      %v5653 = vsel %vm1977, %v5650, %v5652
      %v5654 = vrot.slane %v4089, 2
      %v5655 = vsel %vm1977, %v5652, %v5654
      %v5656 = vrot.slane %v4090, 2
      %v5657 = vsel %vm1977, %v5654, %v5656
      %v5658 = vrot.slane %v4091, 2
      %v5659 = vsel %vm1977, %v5656, %v5658
      %v5660 = vrot.slane %v4092, 2
      %v5661 = vsel %vm1977, %v5658, %v5660
      %v5662 = vrot.slane %v4093, 2
      %v5663 = vsel %vm1977, %v5660, %v5662
      %v5664 = vrot.slane %v4094, 2
      %v5665 = vsel %vm1977, %v5662, %v5664
      %v5666 = vrot.slane %v4095, 2
      %v5667 = vsel %vm1977, %v5664, %v5666
      %v5668 = vrot.slane %v4096, 2
      %v5669 = vsel %vm1977, %v5666, %v5668
      %v5670 = vrot.slane %v4097, 2
      %v5671 = vsel %vm1977, %v5668, %v5670
      %v5672 = vrot.slane %v4098, 2
      %v5673 = vsel %vm1977, %v5670, %v5672
      %v5674 = vrot.slane %v5041, 2
      %v5675 = vsel %vm1977, %v5672, %v5674
      %v5676 = vrot.slane %v5042, 2
      %v5677 = vsel %vm1977, %v5674, %v5676
      %v5680 = vunpack.c.l.b16 %v5639
      %v5681 = vunpack.c.l.b16 %v5640
      %v5682 = vpack.c.b16 %v5681, %v5680
      %v5685 = vsel %vm3446, %v5643, 0
      %v5688 = vsel %vm3446, %v5645, 0
      %v5691 = vsel %vm3446, %v5647, 0
      %v5694 = vsel %vm3446, %v5649, 0
      %v5697 = vsel %vm3446, %v5651, 0
      %v5700 = vsel %vm3446, %v5653, 0
      %v5703 = vsel %vm3446, %v5655, 0
      %v5706 = vsel %vm3446, %v5657, 0
      %v5709 = vsel %vm3446, %v5659, 0
      %v5712 = vsel %vm3446, %v5661, 0
      %v5715 = vsel %vm3446, %v5663, 0
      %v5718 = vsel %vm3446, %v5665, 0
      %v5721 = vsel %vm3446, %v5667, 0
      %v5724 = vsel %vm3446, %v5669, 0
      %v5727 = vsel %vm3446, %v5671, 0
      %v5730 = vsel %vm3446, %v5673, 0
      %v5733 = vsel %vm3446, %v5675, 0
      %v5736 = vsel %vm3446, %v5677, 0
      %5738 = vmatprep.subr.bf16.mxu0 0
      %5739 = vmatpush1.bf16.msra.mxu0 %v5682
      %5740 = vmatprep.subr.bf16.mxu0 0
      %5741 = vmatpush1.bf16.msra.mxu0 0
      %5742 = vmatprep.subr.bf16.mxu0 0
      %5743 = vmatpush1.bf16.msra.mxu0 0
      %5744 = vmatprep.subr.bf16.mxu0 0
      %5745 = vmatpush1.bf16.msra.mxu0 0
      %5746 = vmatprep.subr.bf16.mxu0 0
      %5747 = vmatpush1.bf16.msra.mxu0 0
      %5748 = vmatprep.subr.bf16.mxu0 0
      %5749 = vmatpush1.bf16.msra.mxu0 0
      %5750 = vmatprep.subr.bf16.mxu0 0
      %5751 = vmatpush1.bf16.msra.mxu0 0
      %5752 = vmatprep.subr.bf16.mxu0 0
      %5753 = vmatpush1.bf16.msra.mxu0 0
      %5754 = vmatprep.subr.bf16.mxu0 0
      %5755 = vmatpush1.bf16.msra.mxu0 0
      %5756 = vmatprep.subr.bf16.mxu0 0
      %5757 = vmatpush1.bf16.msra.mxu0 0
      %5758 = vmatprep.subr.bf16.mxu0 0
      %5759 = vmatpush1.bf16.msra.mxu0 0
      %5760 = vmatprep.subr.bf16.mxu0 0
      %5761 = vmatpush1.bf16.msra.mxu0 0
      %5762 = vmatprep.subr.bf16.mxu0 0
      %5763 = vmatpush1.bf16.msra.mxu0 0
      %5764 = vmatprep.subr.bf16.mxu0 0
      %5765 = vmatpush1.bf16.msra.mxu0 0
      %5766 = vmatprep.subr.bf16.mxu0 0
      %5767 = vmatpush1.bf16.msra.mxu0 0
      %5768 = vmatprep.subr.bf16.mxu0 0
      %5769 = vmatpush1.bf16.msra.mxu0 0
      %5770 = vmatprep.mubr.bf16.mxu0 0
      %5771 = vmatmul.mubr.bf16.gmra.mrb[0].mxu0 %v5685
      %v5772 = vpop.f32.mrb[0].mxu0
      %v5773 = vadd.f32 0.0, %v5772
      %v5774 = vpop.f32.mrb[0].mxu0
      %v5775 = vpop.f32.mrb[0].mxu0
      %v5776 = vadd.f32 0.0, %v5775
      %v5777 = vpop.f32.mrb[0].mxu0
      %5778 = vmatprep.mubr.bf16.mxu0 0
      %5779 = vmatmul.mubr.bf16.gmra.mrb[0].mxu0 %v5688
      %v5780 = vpop.f32.mrb[0].mxu0
      %v5781 = vadd.f32 0.0, %v5780
      %v5782 = vpop.f32.mrb[0].mxu0
      %v5783 = vpop.f32.mrb[0].mxu0
      %v5784 = vadd.f32 0.0, %v5783
      %v5785 = vpop.f32.mrb[0].mxu0
      %5786 = vmatprep.mubr.bf16.mxu0 0
      %5787 = vmatmul.mubr.bf16.gmra.mrb[0].mxu0 %v5691
      %v5788 = vpop.f32.mrb[0].mxu0
      %v5789 = vadd.f32 0.0, %v5788
      %v5790 = vpop.f32.mrb[0].mxu0
      %v5791 = vpop.f32.mrb[0].mxu0
      %v5792 = vadd.f32 0.0, %v5791
      %v5793 = vpop.f32.mrb[0].mxu0
      %5794 = vmatprep.mubr.bf16.mxu0 0
      %5795 = vmatmul.mubr.bf16.gmra.mrb[0].mxu0 %v5694
      %v5796 = vpop.f32.mrb[0].mxu0
      %v5797 = vadd.f32 0.0, %v5796
      %v5798 = vpop.f32.mrb[0].mxu0
      %v5799 = vpop.f32.mrb[0].mxu0
      %v5800 = vadd.f32 0.0, %v5799
      %v5801 = vpop.f32.mrb[0].mxu0
      %5802 = vmatprep.mubr.bf16.mxu0 0
      %5803 = vmatmul.mubr.bf16.gmra.mrb[0].mxu0 %v5697
      %v5804 = vpop.f32.mrb[0].mxu0
      %v5805 = vadd.f32 0.0, %v5804
      %v5806 = vpop.f32.mrb[0].mxu0
      %v5807 = vpop.f32.mrb[0].mxu0
      %v5808 = vadd.f32 0.0, %v5807
      %v5809 = vpop.f32.mrb[0].mxu0
      %5810 = vmatprep.mubr.bf16.mxu0 0
      %5811 = vmatmul.mubr.bf16.gmra.mrb[0].mxu0 %v5700
      %v5812 = vpop.f32.mrb[0].mxu0
      %v5813 = vadd.f32 0.0, %v5812
      %v5814 = vpop.f32.mrb[0].mxu0
      %v5815 = vpop.f32.mrb[0].mxu0
      %v5816 = vadd.f32 0.0, %v5815
      %v5817 = vpop.f32.mrb[0].mxu0
      %5818 = vmatprep.mubr.bf16.mxu0 0
      %5819 = vmatmul.mubr.bf16.gmra.mrb[0].mxu0 %v5703
      %v5820 = vpop.f32.mrb[0].mxu0
      %v5821 = vadd.f32 0.0, %v5820
      %v5822 = vpop.f32.mrb[0].mxu0
      %v5823 = vpop.f32.mrb[0].mxu0
      %v5824 = vadd.f32 0.0, %v5823
      %v5825 = vpop.f32.mrb[0].mxu0
      %5826 = vmatprep.mubr.bf16.mxu0 0
      %5827 = vmatmul.mubr.bf16.gmra.mrb[0].mxu0 %v5706
      %v5828 = vpop.f32.mrb[0].mxu0
      %v5829 = vadd.f32 0.0, %v5828
      %v5830 = vpop.f32.mrb[0].mxu0
      %v5831 = vpop.f32.mrb[0].mxu0
      %v5832 = vadd.f32 0.0, %v5831
      %v5833 = vpop.f32.mrb[0].mxu0
      %5834 = vmatprep.mubr.bf16.mxu0 0
      %5835 = vmatmul.mubr.bf16.gmra.mrb[0].mxu0 %v5709
      %v5836 = vpop.f32.mrb[0].mxu0
      %v5837 = vadd.f32 0.0, %v5836
      %v5838 = vpop.f32.mrb[0].mxu0
      %v5839 = vpop.f32.mrb[0].mxu0
      %v5840 = vadd.f32 0.0, %v5839
      %v5841 = vpop.f32.mrb[0].mxu0
      %5842 = vmatprep.mubr.bf16.mxu0 0
      %5843 = vmatmul.mubr.bf16.gmra.mrb[0].mxu0 %v5712
      %v5844 = vpop.f32.mrb[0].mxu0
      %v5845 = vadd.f32 0.0, %v5844
      %v5846 = vpop.f32.mrb[0].mxu0
      %v5847 = vpop.f32.mrb[0].mxu0
      %v5848 = vadd.f32 0.0, %v5847
      %v5849 = vpop.f32.mrb[0].mxu0
      %5850 = vmatprep.mubr.bf16.mxu0 0
      %5851 = vmatmul.mubr.bf16.gmra.mrb[0].mxu0 %v5715
      %v5852 = vpop.f32.mrb[0].mxu0
      %v5853 = vadd.f32 0.0, %v5852
      %v5854 = vpop.f32.mrb[0].mxu0
      %v5855 = vpop.f32.mrb[0].mxu0
      %v5856 = vadd.f32 0.0, %v5855
      %v5857 = vpop.f32.mrb[0].mxu0
      %5858 = vmatprep.mubr.bf16.mxu0 0
      %5859 = vmatmul.mubr.bf16.gmra.mrb[0].mxu0 %v5718
      %v5860 = vpop.f32.mrb[0].mxu0
      %v5861 = vadd.f32 0.0, %v5860
      %v5862 = vpop.f32.mrb[0].mxu0
      %v5863 = vpop.f32.mrb[0].mxu0
      %v5864 = vadd.f32 0.0, %v5863
      %v5865 = vpop.f32.mrb[0].mxu0
      %5866 = vmatprep.mubr.bf16.mxu0 0
      %5867 = vmatmul.mubr.bf16.gmra.mrb[0].mxu0 %v5721
      %v5868 = vpop.f32.mrb[0].mxu0
      %v5869 = vadd.f32 0.0, %v5868
      %v5870 = vpop.f32.mrb[0].mxu0
      %v5871 = vpop.f32.mrb[0].mxu0
      %v5872 = vadd.f32 0.0, %v5871
      %v5873 = vpop.f32.mrb[0].mxu0
      %5874 = vmatprep.mubr.bf16.mxu0 0
      %5875 = vmatmul.mubr.bf16.gmra.mrb[0].mxu0 %v5724
      %v5876 = vpop.f32.mrb[0].mxu0
      %v5877 = vadd.f32 0.0, %v5876
      %v5878 = vpop.f32.mrb[0].mxu0
      %v5879 = vpop.f32.mrb[0].mxu0
      %v5880 = vadd.f32 0.0, %v5879
      %v5881 = vpop.f32.mrb[0].mxu0
      %5882 = vmatprep.mubr.bf16.mxu0 0
      %5883 = vmatmul.mubr.bf16.gmra.mrb[0].mxu0 %v5727
      %v5884 = vpop.f32.mrb[0].mxu0
      %v5885 = vadd.f32 0.0, %v5884
      %v5886 = vpop.f32.mrb[0].mxu0
      %v5887 = vpop.f32.mrb[0].mxu0
      %v5888 = vadd.f32 0.0, %v5887
      %v5889 = vpop.f32.mrb[0].mxu0
      %5890 = vmatprep.mubr.bf16.mxu0 0
      %5891 = vmatmul.mubr.bf16.gmra.mrb[0].mxu0 %v5730
      %v5892 = vpop.f32.mrb[0].mxu0
      %v5893 = vadd.f32 0.0, %v5892
      %v5894 = vpop.f32.mrb[0].mxu0
      %v5895 = vpop.f32.mrb[0].mxu0
      %v5896 = vadd.f32 0.0, %v5895
      %v5897 = vpop.f32.mrb[0].mxu0
      %5898 = vmatprep.mubr.bf16.mxu0 0
      %5899 = vmatmul.mubr.bf16.gmra.mrb[0].mxu0 %v5733
      %v5900 = vpop.f32.mrb[0].mxu0
      %v5901 = vadd.f32 0.0, %v5900
      %v5902 = vpop.f32.mrb[0].mxu0
      %v5903 = vpop.f32.mrb[0].mxu0
      %v5904 = vadd.f32 0.0, %v5903
      %v5905 = vpop.f32.mrb[0].mxu0
      %5906 = vmatprep.mubr.bf16.mxu0 0
      %5907 = vmatmul.mubr.bf16.gmra.mrb[0].mxu0 %v5736
      %v5908 = vpop.f32.mrb[0].mxu0
      %v5909 = vadd.f32 0.0, %v5908
      %v5910 = vpop.f32.mrb[0].mxu0
      %v5911 = vpop.f32.mrb[0].mxu0
      %v5912 = vadd.f32 0.0, %v5911
      %v5913 = vpop.f32.mrb[0].mxu0
      %5914 = vdwg.mxu0
      %v5915 = vadd.f32 %v5602, %v5773
      %v5916 = vadd.f32 %v5603, %v5776
      %v5917 = vadd.f32 %v5604, %v5781
      %v5918 = vadd.f32 %v5605, %v5784
      %v5919 = vadd.f32 %v5606, %v5789
      %v5920 = vadd.f32 %v5607, %v5792
      %v5921 = vadd.f32 %v5608, %v5797
      %v5922 = vadd.f32 %v5609, %v5800
      %v5923 = vadd.f32 %v5610, %v5805
      %v5924 = vadd.f32 %v5611, %v5808
      %v5925 = vadd.f32 %v5612, %v5813
      %v5926 = vadd.f32 %v5613, %v5816
      %v5927 = vadd.f32 %v5614, %v5821
      %v5928 = vadd.f32 %v5615, %v5824
      %v5929 = vadd.f32 %v5616, %v5829
      %v5930 = vadd.f32 %v5617, %v5832
      %v5931 = vadd.f32 %v5618, %v5837
      %v5932 = vadd.f32 %v5619, %v5840
      %v5933 = vadd.f32 %v5620, %v5845
      %v5934 = vadd.f32 %v5621, %v5848
      %v5935 = vadd.f32 %v5622, %v5853
      %v5936 = vadd.f32 %v5623, %v5856
      %v5937 = vadd.f32 %v5624, %v5861
      %v5938 = vadd.f32 %v5625, %v5864
      %v5939 = vadd.f32 %v5626, %v5869
      %v5940 = vadd.f32 %v5627, %v5872
      %v5941 = vadd.f32 %v5628, %v5877
      %v5942 = vadd.f32 %v5629, %v5880
      %v5943 = vadd.f32 %v5630, %v5885
      %v5944 = vadd.f32 %v5631, %v5888
      %v5945 = vadd.f32 %v5632, %v5893
      %v5946 = vadd.f32 %v5633, %v5896
      %v5947 = vadd.f32 %v5634, %v5901
      %v5948 = vadd.f32 %v5635, %v5904
      %v5949 = vadd.f32 %v5636, %v5909
      %v5950 = vadd.f32 %v5637, %v5912
      %v5951 = vpack.c.bf16 %v4079, %v4078
      %v5952 = vpack.c.bf16 %v4080, %v4080
      %s5953 = scalar_lea.vmem %s5, 48
      %v5954 = vld [vmem:[%s5953] sm:$0xf]
      %v5955 = vld [vmem:[%s5953 + $0x4] sm:$0xf]
      %v5958 = vrot.slane %v5951, 2
      %v5959 = vsel %vm1977, %v5674, %v5958
      %v5960 = vrot.slane %v5952, 2
      %v5961 = vsel %vm1977, %v5958, %v5960
      %v5964 = vunpack.c.l.b16 %v5954
      %v5965 = vunpack.c.l.b16 %v5955
      %v5966 = vpack.c.b16 %v5965, %v5964
      %v5969 = vsel %vm3446, %v5959, 0
      %v5972 = vsel %vm3446, %v5961, 0
      %5974 = vmatprep.subr.bf16.mxu0 0
      %5975 = vmatpush1.bf16.msra.mxu0 %v5966
      %5976 = vmatprep.subr.bf16.mxu0 0
      %5977 = vmatpush1.bf16.msra.mxu0 0
      %5978 = vmatprep.subr.bf16.mxu0 0
      %5979 = vmatpush1.bf16.msra.mxu0 0
      %5980 = vmatprep.subr.bf16.mxu0 0
      %5981 = vmatpush1.bf16.msra.mxu0 0
      %5982 = vmatprep.subr.bf16.mxu0 0
      %5983 = vmatpush1.bf16.msra.mxu0 0
      %5984 = vmatprep.subr.bf16.mxu0 0
      %5985 = vmatpush1.bf16.msra.mxu0 0
      %5986 = vmatprep.subr.bf16.mxu0 0
      %5987 = vmatpush1.bf16.msra.mxu0 0
      %5988 = vmatprep.subr.bf16.mxu0 0
      %5989 = vmatpush1.bf16.msra.mxu0 0
      %5990 = vmatprep.subr.bf16.mxu0 0
      %5991 = vmatpush1.bf16.msra.mxu0 0
      %5992 = vmatprep.subr.bf16.mxu0 0
      %5993 = vmatpush1.bf16.msra.mxu0 0
      %5994 = vmatprep.subr.bf16.mxu0 0
      %5995 = vmatpush1.bf16.msra.mxu0 0
      %5996 = vmatprep.subr.bf16.mxu0 0
      %5997 = vmatpush1.bf16.msra.mxu0 0
      %5998 = vmatprep.subr.bf16.mxu0 0
      %5999 = vmatpush1.bf16.msra.mxu0 0
      %6000 = vmatprep.subr.bf16.mxu0 0
      %6001 = vmatpush1.bf16.msra.mxu0 0
      %6002 = vmatprep.subr.bf16.mxu0 0
      %6003 = vmatpush1.bf16.msra.mxu0 0
      %6004 = vmatprep.subr.bf16.mxu0 0
      %6005 = vmatpush1.bf16.msra.mxu0 0
      %6006 = vmatprep.mubr.bf16.mxu0 0
      %6007 = vmatmul.mubr.bf16.gmra.mrb[0].mxu0 %v5688
      %v6008 = vpop.f32.mrb[0].mxu0
      %v6009 = vadd.f32 0.0, %v6008
      %v6010 = vpop.f32.mrb[0].mxu0
      %v6011 = vpop.f32.mrb[0].mxu0
      %v6012 = vadd.f32 0.0, %v6011
      %v6013 = vpop.f32.mrb[0].mxu0
      %6014 = vmatprep.mubr.bf16.mxu0 0
      %6015 = vmatmul.mubr.bf16.gmra.mrb[0].mxu0 %v5691
      %v6016 = vpop.f32.mrb[0].mxu0
      %v6017 = vadd.f32 0.0, %v6016
      %v6018 = vpop.f32.mrb[0].mxu0
      %v6019 = vpop.f32.mrb[0].mxu0
      %v6020 = vadd.f32 0.0, %v6019
      %v6021 = vpop.f32.mrb[0].mxu0
      %6022 = vmatprep.mubr.bf16.mxu0 0
      %6023 = vmatmul.mubr.bf16.gmra.mrb[0].mxu0 %v5694
      %v6024 = vpop.f32.mrb[0].mxu0
      %v6025 = vadd.f32 0.0, %v6024
      %v6026 = vpop.f32.mrb[0].mxu0
      %v6027 = vpop.f32.mrb[0].mxu0
      %v6028 = vadd.f32 0.0, %v6027
      %v6029 = vpop.f32.mrb[0].mxu0
      %6030 = vmatprep.mubr.bf16.mxu0 0
      %6031 = vmatmul.mubr.bf16.gmra.mrb[0].mxu0 %v5697
      %v6032 = vpop.f32.mrb[0].mxu0
      %v6033 = vadd.f32 0.0, %v6032
      %v6034 = vpop.f32.mrb[0].mxu0
      %v6035 = vpop.f32.mrb[0].mxu0
      %v6036 = vadd.f32 0.0, %v6035
      %v6037 = vpop.f32.mrb[0].mxu0
      %6038 = vmatprep.mubr.bf16.mxu0 0
      %6039 = vmatmul.mubr.bf16.gmra.mrb[0].mxu0 %v5700
      %v6040 = vpop.f32.mrb[0].mxu0
      %v6041 = vadd.f32 0.0, %v6040
      %v6042 = vpop.f32.mrb[0].mxu0
      %v6043 = vpop.f32.mrb[0].mxu0
      %v6044 = vadd.f32 0.0, %v6043
      %v6045 = vpop.f32.mrb[0].mxu0
      %6046 = vmatprep.mubr.bf16.mxu0 0
      %6047 = vmatmul.mubr.bf16.gmra.mrb[0].mxu0 %v5703
      %v6048 = vpop.f32.mrb[0].mxu0
      %v6049 = vadd.f32 0.0, %v6048
      %v6050 = vpop.f32.mrb[0].mxu0
      %v6051 = vpop.f32.mrb[0].mxu0
      %v6052 = vadd.f32 0.0, %v6051
      %v6053 = vpop.f32.mrb[0].mxu0
      %6054 = vmatprep.mubr.bf16.mxu0 0
      %6055 = vmatmul.mubr.bf16.gmra.mrb[0].mxu0 %v5706
      %v6056 = vpop.f32.mrb[0].mxu0
      %v6057 = vadd.f32 0.0, %v6056
      %v6058 = vpop.f32.mrb[0].mxu0
      %v6059 = vpop.f32.mrb[0].mxu0
      %v6060 = vadd.f32 0.0, %v6059
      %v6061 = vpop.f32.mrb[0].mxu0
      %6062 = vmatprep.mubr.bf16.mxu0 0
      %6063 = vmatmul.mubr.bf16.gmra.mrb[0].mxu0 %v5709
      %v6064 = vpop.f32.mrb[0].mxu0
      %v6065 = vadd.f32 0.0, %v6064
      %v6066 = vpop.f32.mrb[0].mxu0
      %v6067 = vpop.f32.mrb[0].mxu0
      %v6068 = vadd.f32 0.0, %v6067
      %v6069 = vpop.f32.mrb[0].mxu0
      %6070 = vmatprep.mubr.bf16.mxu0 0
      %6071 = vmatmul.mubr.bf16.gmra.mrb[0].mxu0 %v5712
      %v6072 = vpop.f32.mrb[0].mxu0
      %v6073 = vadd.f32 0.0, %v6072
      %v6074 = vpop.f32.mrb[0].mxu0
      %v6075 = vpop.f32.mrb[0].mxu0
      %v6076 = vadd.f32 0.0, %v6075
      %v6077 = vpop.f32.mrb[0].mxu0
      %6078 = vmatprep.mubr.bf16.mxu0 0
      %6079 = vmatmul.mubr.bf16.gmra.mrb[0].mxu0 %v5715
      %v6080 = vpop.f32.mrb[0].mxu0
      %v6081 = vadd.f32 0.0, %v6080
      %v6082 = vpop.f32.mrb[0].mxu0
      %v6083 = vpop.f32.mrb[0].mxu0
      %v6084 = vadd.f32 0.0, %v6083
      %v6085 = vpop.f32.mrb[0].mxu0
      %6086 = vmatprep.mubr.bf16.mxu0 0
      %6087 = vmatmul.mubr.bf16.gmra.mrb[0].mxu0 %v5718
      %v6088 = vpop.f32.mrb[0].mxu0
      %v6089 = vadd.f32 0.0, %v6088
      %v6090 = vpop.f32.mrb[0].mxu0
      %v6091 = vpop.f32.mrb[0].mxu0
      %v6092 = vadd.f32 0.0, %v6091
      %v6093 = vpop.f32.mrb[0].mxu0
      %6094 = vmatprep.mubr.bf16.mxu0 0
      %6095 = vmatmul.mubr.bf16.gmra.mrb[0].mxu0 %v5721
      %v6096 = vpop.f32.mrb[0].mxu0
      %v6097 = vadd.f32 0.0, %v6096
      %v6098 = vpop.f32.mrb[0].mxu0
      %v6099 = vpop.f32.mrb[0].mxu0
      %v6100 = vadd.f32 0.0, %v6099
      %v6101 = vpop.f32.mrb[0].mxu0
      %6102 = vmatprep.mubr.bf16.mxu0 0
      %6103 = vmatmul.mubr.bf16.gmra.mrb[0].mxu0 %v5724
      %v6104 = vpop.f32.mrb[0].mxu0
      %v6105 = vadd.f32 0.0, %v6104
      %v6106 = vpop.f32.mrb[0].mxu0
      %v6107 = vpop.f32.mrb[0].mxu0
      %v6108 = vadd.f32 0.0, %v6107
      %v6109 = vpop.f32.mrb[0].mxu0
      %6110 = vmatprep.mubr.bf16.mxu0 0
      %6111 = vmatmul.mubr.bf16.gmra.mrb[0].mxu0 %v5727
      %v6112 = vpop.f32.mrb[0].mxu0
      %v6113 = vadd.f32 0.0, %v6112
      %v6114 = vpop.f32.mrb[0].mxu0
      %v6115 = vpop.f32.mrb[0].mxu0
      %v6116 = vadd.f32 0.0, %v6115
      %v6117 = vpop.f32.mrb[0].mxu0
      %6118 = vmatprep.mubr.bf16.mxu0 0
      %6119 = vmatmul.mubr.bf16.gmra.mrb[0].mxu0 %v5730
      %v6120 = vpop.f32.mrb[0].mxu0
      %v6121 = vadd.f32 0.0, %v6120
      %v6122 = vpop.f32.mrb[0].mxu0
      %v6123 = vpop.f32.mrb[0].mxu0
      %v6124 = vadd.f32 0.0, %v6123
      %v6125 = vpop.f32.mrb[0].mxu0
      %6126 = vmatprep.mubr.bf16.mxu0 0
      %6127 = vmatmul.mubr.bf16.gmra.mrb[0].mxu0 %v5733
      %v6128 = vpop.f32.mrb[0].mxu0
      %v6129 = vadd.f32 0.0, %v6128
      %v6130 = vpop.f32.mrb[0].mxu0
      %v6131 = vpop.f32.mrb[0].mxu0
      %v6132 = vadd.f32 0.0, %v6131
      %v6133 = vpop.f32.mrb[0].mxu0
      %6134 = vmatprep.mubr.bf16.mxu0 0
      %6135 = vmatmul.mubr.bf16.gmra.mrb[0].mxu0 %v5969
      %v6136 = vpop.f32.mrb[0].mxu0
      %v6137 = vadd.f32 0.0, %v6136
      %v6138 = vpop.f32.mrb[0].mxu0
      %v6139 = vpop.f32.mrb[0].mxu0
      %v6140 = vadd.f32 0.0, %v6139
      %v6141 = vpop.f32.mrb[0].mxu0
      %6142 = vmatprep.mubr.bf16.mxu0 0
      %6143 = vmatmul.mubr.bf16.gmra.mrb[0].mxu0 %v5972
      %v6144 = vpop.f32.mrb[0].mxu0
      %v6145 = vadd.f32 0.0, %v6144
      %v6146 = vpop.f32.mrb[0].mxu0
      %v6147 = vpop.f32.mrb[0].mxu0
      %v6148 = vadd.f32 0.0, %v6147
      %v6149 = vpop.f32.mrb[0].mxu0
      %6150 = vdwg.mxu0
      %v6151 = vadd.f32 %v5915, %v6009
      %v6152 = vadd.f32 %v5916, %v6012
      %v6153 = vadd.f32 %v5917, %v6017
      %v6154 = vadd.f32 %v5918, %v6020
      %v6155 = vadd.f32 %v5919, %v6025
      %v6156 = vadd.f32 %v5920, %v6028
      %v6157 = vadd.f32 %v5921, %v6033
      %v6158 = vadd.f32 %v5922, %v6036
      %v6159 = vadd.f32 %v5923, %v6041
      %v6160 = vadd.f32 %v5924, %v6044
      %v6161 = vadd.f32 %v5925, %v6049
      %v6162 = vadd.f32 %v5926, %v6052
      %v6163 = vadd.f32 %v5927, %v6057
      %v6164 = vadd.f32 %v5928, %v6060
      %v6165 = vadd.f32 %v5929, %v6065
      %v6166 = vadd.f32 %v5930, %v6068
      %v6167 = vadd.f32 %v5931, %v6073
      %v6168 = vadd.f32 %v5932, %v6076
      %v6169 = vadd.f32 %v5933, %v6081
      %v6170 = vadd.f32 %v5934, %v6084
      %v6171 = vadd.f32 %v5935, %v6089
      %v6172 = vadd.f32 %v5936, %v6092
      %v6173 = vadd.f32 %v5937, %v6097
      %v6174 = vadd.f32 %v5938, %v6100
      %v6175 = vadd.f32 %v5939, %v6105
      %v6176 = vadd.f32 %v5940, %v6108
      %v6177 = vadd.f32 %v5941, %v6113
      %v6178 = vadd.f32 %v5942, %v6116
      %v6179 = vadd.f32 %v5943, %v6121
      %v6180 = vadd.f32 %v5944, %v6124
      %v6181 = vadd.f32 %v5945, %v6129
      %v6182 = vadd.f32 %v5946, %v6132
      %v6183 = vadd.f32 %v5947, %v6137
      %v6184 = vadd.f32 %v5948, %v6140
      %v6185 = vadd.f32 %v5949, %v6145
      %v6186 = vadd.f32 %v5950, %v6148
      %s6187 = scalar_lea.vmem %s5, 56
      %v6188 = vld [vmem:[%s6187] sm:$0xf]
      %v6189 = vld [vmem:[%s6187 + $0x4] sm:$0xf]
      %v6190 = vrot.slane %v4125, 2
      %v6191 = vrot.slane %v4121, 3
      %v6192 = vor.u32 %v6190, %v6191
      %v6193 = vrot.slane %v4133, 2
      %v6194 = vrot.slane %v4129, 3
      %v6195 = vor.u32 %v6193, %v6194
      %v6196 = vsel %vm2543, %v6192, %v6195
      %v6197 = vrot.slane %v4141, 2
      %v6198 = vrot.slane %v4137, 3
      %v6199 = vor.u32 %v6197, %v6198
      %v6200 = vsel %vm2543, %v6195, %v6199
      %v6201 = vrot.slane %v4149, 2
      %v6202 = vrot.slane %v4145, 3
      %v6203 = vor.u32 %v6201, %v6202
      %v6204 = vsel %vm2543, %v6199, %v6203
      %v6205 = vrot.slane %v4157, 2
      %v6206 = vrot.slane %v4153, 3
      %v6207 = vor.u32 %v6205, %v6206
      %v6208 = vsel %vm2543, %v6203, %v6207
      %v6209 = vrot.slane %v4165, 2
      %v6210 = vrot.slane %v4161, 3
      %v6211 = vor.u32 %v6209, %v6210
      %v6212 = vsel %vm2543, %v6207, %v6211
      %v6213 = vrot.slane %v4173, 2
      %v6214 = vrot.slane %v4169, 3
      %v6215 = vor.u32 %v6213, %v6214
      %v6216 = vsel %vm2543, %v6211, %v6215
      %v6217 = vrot.slane %v4181, 2
      %v6218 = vrot.slane %v4177, 3
      %v6219 = vor.u32 %v6217, %v6218
      %v6220 = vsel %vm2543, %v6215, %v6219
      %v6221 = vrot.slane %v4189, 2
      %v6222 = vrot.slane %v4185, 3
      %v6223 = vor.u32 %v6221, %v6222
      %v6224 = vsel %vm2543, %v6219, %v6223
      %v6225 = vrot.slane %v4197, 2
      %v6226 = vrot.slane %v4193, 3
      %v6227 = vor.u32 %v6225, %v6226
      %v6228 = vsel %vm2543, %v6223, %v6227
      %v6229 = vrot.slane %v4205, 2
      %v6230 = vrot.slane %v4201, 3
      %v6231 = vor.u32 %v6229, %v6230
      %v6232 = vsel %vm2543, %v6227, %v6231
      %v6233 = vrot.slane %v4213, 2
      %v6234 = vrot.slane %v4209, 3
      %v6235 = vor.u32 %v6233, %v6234
      %v6236 = vsel %vm2543, %v6231, %v6235
      %v6237 = vrot.slane %v4221, 2
      %v6238 = vrot.slane %v4217, 3
      %v6239 = vor.u32 %v6237, %v6238
      %v6240 = vsel %vm2543, %v6235, %v6239
      %v6241 = vrot.slane %v4229, 2
      %v6242 = vrot.slane %v4225, 3
      %v6243 = vor.u32 %v6241, %v6242
      %v6244 = vsel %vm2543, %v6239, %v6243
      %v6245 = vrot.slane %v4237, 2
      %v6246 = vrot.slane %v4233, 3
      %v6247 = vor.u32 %v6245, %v6246
      %v6248 = vsel %vm2543, %v6243, %v6247
      %v6249 = vrot.slane %v4245, 2
      %v6250 = vrot.slane %v4241, 3
      %v6251 = vor.u32 %v6249, %v6250
      %v6252 = vsel %vm2543, %v6247, %v6251
      %v6253 = vrot.slane %v5348, 2
      %v6254 = vrot.slane %v5351, 3
      %v6255 = vor.u32 %v6253, %v6254
      %v6256 = vsel %vm2543, %v6251, %v6255
      %v6258 = vshrl.u32 %v5951, 16
      %v6260 = vrot.slane %v6258, 2
      %v6261 = vshll.u32 %v5951, 16
      %v6263 = vrot.slane %v6261, 3
      %v6264 = vor.u32 %v6260, %v6263
      %v6265 = vsel %vm2543, %v6255, %v6264
      %v6267 = vshrl.u32 %v5952, 16
      %v6269 = vrot.slane %v6267, 2
      %v6270 = vshll.u32 %v5952, 16
      %v6272 = vrot.slane %v6270, 3
      %v6273 = vor.u32 %v6269, %v6272
      %v6274 = vsel %vm2543, %v6264, %v6273
      %v6277 = vunpack.c.l.b16 %v6188
      %v6278 = vunpack.c.l.b16 %v6189
      %v6279 = vpack.c.b16 %v6278, %v6277
      %v6282 = vsel %vm3446, %v6196, 0
      %v6285 = vsel %vm3446, %v6200, 0
      %v6288 = vsel %vm3446, %v6204, 0
      %v6291 = vsel %vm3446, %v6208, 0
      %v6294 = vsel %vm3446, %v6212, 0
      %v6297 = vsel %vm3446, %v6216, 0
      %v6300 = vsel %vm3446, %v6220, 0
      %v6303 = vsel %vm3446, %v6224, 0
      %v6306 = vsel %vm3446, %v6228, 0
      %v6309 = vsel %vm3446, %v6232, 0
      %v6312 = vsel %vm3446, %v6236, 0
      %v6315 = vsel %vm3446, %v6240, 0
      %v6318 = vsel %vm3446, %v6244, 0
      %v6321 = vsel %vm3446, %v6248, 0
      %v6324 = vsel %vm3446, %v6252, 0
      %v6327 = vsel %vm3446, %v6256, 0
      %v6330 = vsel %vm3446, %v6265, 0
      %v6333 = vsel %vm3446, %v6274, 0
      %6335 = vmatprep.subr.bf16.mxu0 0
      %6336 = vmatpush1.bf16.msra.mxu0 %v6279
      %6337 = vmatprep.subr.bf16.mxu0 0
      %6338 = vmatpush1.bf16.msra.mxu0 0
      %6339 = vmatprep.subr.bf16.mxu0 0
      %6340 = vmatpush1.bf16.msra.mxu0 0
      %6341 = vmatprep.subr.bf16.mxu0 0
      %6342 = vmatpush1.bf16.msra.mxu0 0
      %6343 = vmatprep.subr.bf16.mxu0 0
      %6344 = vmatpush1.bf16.msra.mxu0 0
      %6345 = vmatprep.subr.bf16.mxu0 0
      %6346 = vmatpush1.bf16.msra.mxu0 0
      %6347 = vmatprep.subr.bf16.mxu0 0
      %6348 = vmatpush1.bf16.msra.mxu0 0
      %6349 = vmatprep.subr.bf16.mxu0 0
      %6350 = vmatpush1.bf16.msra.mxu0 0
      %6351 = vmatprep.subr.bf16.mxu0 0
      %6352 = vmatpush1.bf16.msra.mxu0 0
      %6353 = vmatprep.subr.bf16.mxu0 0
      %6354 = vmatpush1.bf16.msra.mxu0 0
      %6355 = vmatprep.subr.bf16.mxu0 0
      %6356 = vmatpush1.bf16.msra.mxu0 0
      %6357 = vmatprep.subr.bf16.mxu0 0
      %6358 = vmatpush1.bf16.msra.mxu0 0
      %6359 = vmatprep.subr.bf16.mxu0 0
      %6360 = vmatpush1.bf16.msra.mxu0 0
      %6361 = vmatprep.subr.bf16.mxu0 0
      %6362 = vmatpush1.bf16.msra.mxu0 0
      %6363 = vmatprep.subr.bf16.mxu0 0
      %6364 = vmatpush1.bf16.msra.mxu0 0
      %6365 = vmatprep.subr.bf16.mxu0 0
      %6366 = vmatpush1.bf16.msra.mxu0 0
      %6367 = vmatprep.mubr.bf16.mxu0 0
      %6368 = vmatmul.mubr.bf16.gmra.mrb[0].mxu0 %v6282
      %v6369 = vpop.f32.mrb[0].mxu0
      %v6370 = vadd.f32 0.0, %v6369
      %v6371 = vpop.f32.mrb[0].mxu0
      %v6372 = vpop.f32.mrb[0].mxu0
      %v6373 = vadd.f32 0.0, %v6372
      %v6374 = vpop.f32.mrb[0].mxu0
      %6375 = vmatprep.mubr.bf16.mxu0 0
      %6376 = vmatmul.mubr.bf16.gmra.mrb[0].mxu0 %v6285
      %v6377 = vpop.f32.mrb[0].mxu0
      %v6378 = vadd.f32 0.0, %v6377
      %v6379 = vpop.f32.mrb[0].mxu0
      %v6380 = vpop.f32.mrb[0].mxu0
      %v6381 = vadd.f32 0.0, %v6380
      %v6382 = vpop.f32.mrb[0].mxu0
      %6383 = vmatprep.mubr.bf16.mxu0 0
      %6384 = vmatmul.mubr.bf16.gmra.mrb[0].mxu0 %v6288
      %v6385 = vpop.f32.mrb[0].mxu0
      %v6386 = vadd.f32 0.0, %v6385
      %v6387 = vpop.f32.mrb[0].mxu0
      %v6388 = vpop.f32.mrb[0].mxu0
      %v6389 = vadd.f32 0.0, %v6388
      %v6390 = vpop.f32.mrb[0].mxu0
      %6391 = vmatprep.mubr.bf16.mxu0 0
      %6392 = vmatmul.mubr.bf16.gmra.mrb[0].mxu0 %v6291
      %v6393 = vpop.f32.mrb[0].mxu0
      %v6394 = vadd.f32 0.0, %v6393
      %v6395 = vpop.f32.mrb[0].mxu0
      %v6396 = vpop.f32.mrb[0].mxu0
      %v6397 = vadd.f32 0.0, %v6396
      %v6398 = vpop.f32.mrb[0].mxu0
      %6399 = vmatprep.mubr.bf16.mxu0 0
      %6400 = vmatmul.mubr.bf16.gmra.mrb[0].mxu0 %v6294
      %v6401 = vpop.f32.mrb[0].mxu0
      %v6402 = vadd.f32 0.0, %v6401
      %v6403 = vpop.f32.mrb[0].mxu0
      %v6404 = vpop.f32.mrb[0].mxu0
      %v6405 = vadd.f32 0.0, %v6404
      %v6406 = vpop.f32.mrb[0].mxu0
      %6407 = vmatprep.mubr.bf16.mxu0 0
      %6408 = vmatmul.mubr.bf16.gmra.mrb[0].mxu0 %v6297
      %v6409 = vpop.f32.mrb[0].mxu0
      %v6410 = vadd.f32 0.0, %v6409
      %v6411 = vpop.f32.mrb[0].mxu0
      %v6412 = vpop.f32.mrb[0].mxu0
      %v6413 = vadd.f32 0.0, %v6412
      %v6414 = vpop.f32.mrb[0].mxu0
      %6415 = vmatprep.mubr.bf16.mxu0 0
      %6416 = vmatmul.mubr.bf16.gmra.mrb[0].mxu0 %v6300
      %v6417 = vpop.f32.mrb[0].mxu0
      %v6418 = vadd.f32 0.0, %v6417
      %v6419 = vpop.f32.mrb[0].mxu0
      %v6420 = vpop.f32.mrb[0].mxu0
      %v6421 = vadd.f32 0.0, %v6420
      %v6422 = vpop.f32.mrb[0].mxu0
      %6423 = vmatprep.mubr.bf16.mxu0 0
      %6424 = vmatmul.mubr.bf16.gmra.mrb[0].mxu0 %v6303
      %v6425 = vpop.f32.mrb[0].mxu0
      %v6426 = vadd.f32 0.0, %v6425
      %v6427 = vpop.f32.mrb[0].mxu0
      %v6428 = vpop.f32.mrb[0].mxu0
      %v6429 = vadd.f32 0.0, %v6428
      %v6430 = vpop.f32.mrb[0].mxu0
      %6431 = vmatprep.mubr.bf16.mxu0 0
      %6432 = vmatmul.mubr.bf16.gmra.mrb[0].mxu0 %v6306
      %v6433 = vpop.f32.mrb[0].mxu0
      %v6434 = vadd.f32 0.0, %v6433
      %v6435 = vpop.f32.mrb[0].mxu0
      %v6436 = vpop.f32.mrb[0].mxu0
      %v6437 = vadd.f32 0.0, %v6436
      %v6438 = vpop.f32.mrb[0].mxu0
      %6439 = vmatprep.mubr.bf16.mxu0 0
      %6440 = vmatmul.mubr.bf16.gmra.mrb[0].mxu0 %v6309
      %v6441 = vpop.f32.mrb[0].mxu0
      %v6442 = vadd.f32 0.0, %v6441
      %v6443 = vpop.f32.mrb[0].mxu0
      %v6444 = vpop.f32.mrb[0].mxu0
      %v6445 = vadd.f32 0.0, %v6444
      %v6446 = vpop.f32.mrb[0].mxu0
      %6447 = vmatprep.mubr.bf16.mxu0 0
      %6448 = vmatmul.mubr.bf16.gmra.mrb[0].mxu0 %v6312
      %v6449 = vpop.f32.mrb[0].mxu0
      %v6450 = vadd.f32 0.0, %v6449
      %v6451 = vpop.f32.mrb[0].mxu0
      %v6452 = vpop.f32.mrb[0].mxu0
      %v6453 = vadd.f32 0.0, %v6452
      %v6454 = vpop.f32.mrb[0].mxu0
      %6455 = vmatprep.mubr.bf16.mxu0 0
      %6456 = vmatmul.mubr.bf16.gmra.mrb[0].mxu0 %v6315
      %v6457 = vpop.f32.mrb[0].mxu0
      %v6458 = vadd.f32 0.0, %v6457
      %v6459 = vpop.f32.mrb[0].mxu0
      %v6460 = vpop.f32.mrb[0].mxu0
      %v6461 = vadd.f32 0.0, %v6460
      %v6462 = vpop.f32.mrb[0].mxu0
      %6463 = vmatprep.mubr.bf16.mxu0 0
      %6464 = vmatmul.mubr.bf16.gmra.mrb[0].mxu0 %v6318
      %v6465 = vpop.f32.mrb[0].mxu0
      %v6466 = vadd.f32 0.0, %v6465
      %v6467 = vpop.f32.mrb[0].mxu0
      %v6468 = vpop.f32.mrb[0].mxu0
      %v6469 = vadd.f32 0.0, %v6468
      %v6470 = vpop.f32.mrb[0].mxu0
      %6471 = vmatprep.mubr.bf16.mxu0 0
      %6472 = vmatmul.mubr.bf16.gmra.mrb[0].mxu0 %v6321
      %v6473 = vpop.f32.mrb[0].mxu0
      %v6474 = vadd.f32 0.0, %v6473
      %v6475 = vpop.f32.mrb[0].mxu0
      %v6476 = vpop.f32.mrb[0].mxu0
      %v6477 = vadd.f32 0.0, %v6476
      %v6478 = vpop.f32.mrb[0].mxu0
      %6479 = vmatprep.mubr.bf16.mxu0 0
      %6480 = vmatmul.mubr.bf16.gmra.mrb[0].mxu0 %v6324
      %v6481 = vpop.f32.mrb[0].mxu0
      %v6482 = vadd.f32 0.0, %v6481
      %v6483 = vpop.f32.mrb[0].mxu0
      %v6484 = vpop.f32.mrb[0].mxu0
      %v6485 = vadd.f32 0.0, %v6484
      %v6486 = vpop.f32.mrb[0].mxu0
      %6487 = vmatprep.mubr.bf16.mxu0 0
      %6488 = vmatmul.mubr.bf16.gmra.mrb[0].mxu0 %v6327
      %v6489 = vpop.f32.mrb[0].mxu0
      %v6490 = vadd.f32 0.0, %v6489
      %v6491 = vpop.f32.mrb[0].mxu0
      %v6492 = vpop.f32.mrb[0].mxu0
      %v6493 = vadd.f32 0.0, %v6492
      %v6494 = vpop.f32.mrb[0].mxu0
      %6495 = vmatprep.mubr.bf16.mxu0 0
      %6496 = vmatmul.mubr.bf16.gmra.mrb[0].mxu0 %v6330
      %v6497 = vpop.f32.mrb[0].mxu0
      %v6498 = vadd.f32 0.0, %v6497
      %v6499 = vpop.f32.mrb[0].mxu0
      %v6500 = vpop.f32.mrb[0].mxu0
      %v6501 = vadd.f32 0.0, %v6500
      %v6502 = vpop.f32.mrb[0].mxu0
      %6503 = vmatprep.mubr.bf16.mxu0 0
      %6504 = vmatmul.mubr.bf16.gmra.mrb[0].mxu0 %v6333
      %v6505 = vpop.f32.mrb[0].mxu0
      %v6506 = vadd.f32 0.0, %v6505
      %v6507 = vpop.f32.mrb[0].mxu0
      %v6508 = vpop.f32.mrb[0].mxu0
      %v6509 = vadd.f32 0.0, %v6508
      %v6510 = vpop.f32.mrb[0].mxu0
      %6511 = vdwg.mxu0
      %v6512 = vadd.f32 %v6151, %v6370
      %v6513 = vadd.f32 %v6152, %v6373
      %v6514 = vadd.f32 %v6153, %v6378
      %v6515 = vadd.f32 %v6154, %v6381
      %v6516 = vadd.f32 %v6155, %v6386
      %v6517 = vadd.f32 %v6156, %v6389
      %v6518 = vadd.f32 %v6157, %v6394
      %v6519 = vadd.f32 %v6158, %v6397
      %v6520 = vadd.f32 %v6159, %v6402
      %v6521 = vadd.f32 %v6160, %v6405
      %v6522 = vadd.f32 %v6161, %v6410
      %v6523 = vadd.f32 %v6162, %v6413
      %v6524 = vadd.f32 %v6163, %v6418
      %v6525 = vadd.f32 %v6164, %v6421
      %v6526 = vadd.f32 %v6165, %v6426
      %v6527 = vadd.f32 %v6166, %v6429
      %v6528 = vadd.f32 %v6167, %v6434
      %v6529 = vadd.f32 %v6168, %v6437
      %v6530 = vadd.f32 %v6169, %v6442
      %v6531 = vadd.f32 %v6170, %v6445
      %v6532 = vadd.f32 %v6171, %v6450
      %v6533 = vadd.f32 %v6172, %v6453
      %v6534 = vadd.f32 %v6173, %v6458
      %v6535 = vadd.f32 %v6174, %v6461
      %v6536 = vadd.f32 %v6175, %v6466
      %v6537 = vadd.f32 %v6176, %v6469
      %v6538 = vadd.f32 %v6177, %v6474
      %v6539 = vadd.f32 %v6178, %v6477
      %v6540 = vadd.f32 %v6179, %v6482
      %v6541 = vadd.f32 %v6180, %v6485
      %v6542 = vadd.f32 %v6181, %v6490
      %v6543 = vadd.f32 %v6182, %v6493
      %v6544 = vadd.f32 %v6183, %v6498
      %v6545 = vadd.f32 %v6184, %v6501
      %v6546 = vadd.f32 %v6185, %v6506
      %v6547 = vadd.f32 %v6186, %v6509
      %s6548 = scalar_lea.vmem %s5, 64
      %v6549 = vld [vmem:[%s6548] sm:$0xf]
      %v6550 = vld [vmem:[%s6548 + $0x4] sm:$0xf]
      %v6551 = vrot.slane %v4083, 3
      %v6552 = vrot.slane %v4084, 3
      %v6553 = vsel %vm2913, %v6551, %v6552
      %v6554 = vrot.slane %v4085, 3
      %v6555 = vsel %vm2913, %v6552, %v6554
      %v6556 = vrot.slane %v4086, 3
      %v6557 = vsel %vm2913, %v6554, %v6556
      %v6558 = vrot.slane %v4087, 3
      %v6559 = vsel %vm2913, %v6556, %v6558
      %v6560 = vrot.slane %v4088, 3
      %v6561 = vsel %vm2913, %v6558, %v6560
      %v6562 = vrot.slane %v4089, 3
      %v6563 = vsel %vm2913, %v6560, %v6562
      %v6564 = vrot.slane %v4090, 3
      %v6565 = vsel %vm2913, %v6562, %v6564
      %v6566 = vrot.slane %v4091, 3
      %v6567 = vsel %vm2913, %v6564, %v6566
      %v6568 = vrot.slane %v4092, 3
      %v6569 = vsel %vm2913, %v6566, %v6568
      %v6570 = vrot.slane %v4093, 3
      %v6571 = vsel %vm2913, %v6568, %v6570
      %v6572 = vrot.slane %v4094, 3
      %v6573 = vsel %vm2913, %v6570, %v6572
      %v6574 = vrot.slane %v4095, 3
      %v6575 = vsel %vm2913, %v6572, %v6574
      %v6576 = vrot.slane %v4096, 3
      %v6577 = vsel %vm2913, %v6574, %v6576
      %v6578 = vrot.slane %v4097, 3
      %v6579 = vsel %vm2913, %v6576, %v6578
      %v6580 = vrot.slane %v4098, 3
      %v6581 = vsel %vm2913, %v6578, %v6580
      %v6582 = vrot.slane %v5041, 3
      %v6583 = vsel %vm2913, %v6580, %v6582
      %v6584 = vrot.slane %v5951, 3
      %v6585 = vsel %vm2913, %v6582, %v6584
      %v6586 = vrot.slane %v5952, 3
      %v6587 = vsel %vm2913, %v6584, %v6586
      %v6590 = vunpack.c.l.b16 %v6549
      %v6591 = vunpack.c.l.b16 %v6550
      %v6592 = vpack.c.b16 %v6591, %v6590
      %v6595 = vsel %vm3446, %v6553, 0
      %v6598 = vsel %vm3446, %v6555, 0
      %v6601 = vsel %vm3446, %v6557, 0
      %v6604 = vsel %vm3446, %v6559, 0
      %v6607 = vsel %vm3446, %v6561, 0
      %v6610 = vsel %vm3446, %v6563, 0
      %v6613 = vsel %vm3446, %v6565, 0
      %v6616 = vsel %vm3446, %v6567, 0
      %v6619 = vsel %vm3446, %v6569, 0
      %v6622 = vsel %vm3446, %v6571, 0
      %v6625 = vsel %vm3446, %v6573, 0
      %v6628 = vsel %vm3446, %v6575, 0
      %v6631 = vsel %vm3446, %v6577, 0
      %v6634 = vsel %vm3446, %v6579, 0
      %v6637 = vsel %vm3446, %v6581, 0
      %v6640 = vsel %vm3446, %v6583, 0
      %v6643 = vsel %vm3446, %v6585, 0
      %v6646 = vsel %vm3446, %v6587, 0
      %6648 = vmatprep.subr.bf16.mxu0 0
      %6649 = vmatpush1.bf16.msra.mxu0 %v6592
      %6650 = vmatprep.subr.bf16.mxu0 0
      %6651 = vmatpush1.bf16.msra.mxu0 0
      %6652 = vmatprep.subr.bf16.mxu0 0
      %6653 = vmatpush1.bf16.msra.mxu0 0
      %6654 = vmatprep.subr.bf16.mxu0 0
      %6655 = vmatpush1.bf16.msra.mxu0 0
      %6656 = vmatprep.subr.bf16.mxu0 0
      %6657 = vmatpush1.bf16.msra.mxu0 0
      %6658 = vmatprep.subr.bf16.mxu0 0
      %6659 = vmatpush1.bf16.msra.mxu0 0
      %6660 = vmatprep.subr.bf16.mxu0 0
      %6661 = vmatpush1.bf16.msra.mxu0 0
      %6662 = vmatprep.subr.bf16.mxu0 0
      %6663 = vmatpush1.bf16.msra.mxu0 0
      %6664 = vmatprep.subr.bf16.mxu0 0
      %6665 = vmatpush1.bf16.msra.mxu0 0
      %6666 = vmatprep.subr.bf16.mxu0 0
      %6667 = vmatpush1.bf16.msra.mxu0 0
      %6668 = vmatprep.subr.bf16.mxu0 0
      %6669 = vmatpush1.bf16.msra.mxu0 0
      %6670 = vmatprep.subr.bf16.mxu0 0
      %6671 = vmatpush1.bf16.msra.mxu0 0
      %6672 = vmatprep.subr.bf16.mxu0 0
      %6673 = vmatpush1.bf16.msra.mxu0 0
      %6674 = vmatprep.subr.bf16.mxu0 0
      %6675 = vmatpush1.bf16.msra.mxu0 0
      %6676 = vmatprep.subr.bf16.mxu0 0
      %6677 = vmatpush1.bf16.msra.mxu0 0
      %6678 = vmatprep.subr.bf16.mxu0 0
      %6679 = vmatpush1.bf16.msra.mxu0 0
      %6680 = vmatprep.mubr.bf16.mxu0 0
      %6681 = vmatmul.mubr.bf16.gmra.mrb[0].mxu0 %v6595
      %v6682 = vpop.f32.mrb[0].mxu0
      %v6683 = vadd.f32 0.0, %v6682
      %v6684 = vpop.f32.mrb[0].mxu0
      %v6685 = vpop.f32.mrb[0].mxu0
      %v6686 = vadd.f32 0.0, %v6685
      %v6687 = vpop.f32.mrb[0].mxu0
      %6688 = vmatprep.mubr.bf16.mxu0 0
      %6689 = vmatmul.mubr.bf16.gmra.mrb[0].mxu0 %v6598
      %v6690 = vpop.f32.mrb[0].mxu0
      %v6691 = vadd.f32 0.0, %v6690
      %v6692 = vpop.f32.mrb[0].mxu0
      %v6693 = vpop.f32.mrb[0].mxu0
      %v6694 = vadd.f32 0.0, %v6693
      %v6695 = vpop.f32.mrb[0].mxu0
      %6696 = vmatprep.mubr.bf16.mxu0 0
      %6697 = vmatmul.mubr.bf16.gmra.mrb[0].mxu0 %v6601
      %v6698 = vpop.f32.mrb[0].mxu0
      %v6699 = vadd.f32 0.0, %v6698
      %v6700 = vpop.f32.mrb[0].mxu0
      %v6701 = vpop.f32.mrb[0].mxu0
      %v6702 = vadd.f32 0.0, %v6701
      %v6703 = vpop.f32.mrb[0].mxu0
      %6704 = vmatprep.mubr.bf16.mxu0 0
      %6705 = vmatmul.mubr.bf16.gmra.mrb[0].mxu0 %v6604
      %v6706 = vpop.f32.mrb[0].mxu0
      %v6707 = vadd.f32 0.0, %v6706
      %v6708 = vpop.f32.mrb[0].mxu0
      %v6709 = vpop.f32.mrb[0].mxu0
      %v6710 = vadd.f32 0.0, %v6709
      %v6711 = vpop.f32.mrb[0].mxu0
      %6712 = vmatprep.mubr.bf16.mxu0 0
      %6713 = vmatmul.mubr.bf16.gmra.mrb[0].mxu0 %v6607
      %v6714 = vpop.f32.mrb[0].mxu0
      %v6715 = vadd.f32 0.0, %v6714
      %v6716 = vpop.f32.mrb[0].mxu0
      %v6717 = vpop.f32.mrb[0].mxu0
      %v6718 = vadd.f32 0.0, %v6717
      %v6719 = vpop.f32.mrb[0].mxu0
      %6720 = vmatprep.mubr.bf16.mxu0 0
      %6721 = vmatmul.mubr.bf16.gmra.mrb[0].mxu0 %v6610
      %v6722 = vpop.f32.mrb[0].mxu0
      %v6723 = vadd.f32 0.0, %v6722
      %v6724 = vpop.f32.mrb[0].mxu0
      %v6725 = vpop.f32.mrb[0].mxu0
      %v6726 = vadd.f32 0.0, %v6725
      %v6727 = vpop.f32.mrb[0].mxu0
      %6728 = vmatprep.mubr.bf16.mxu0 0
      %6729 = vmatmul.mubr.bf16.gmra.mrb[0].mxu0 %v6613
      %v6730 = vpop.f32.mrb[0].mxu0
      %v6731 = vadd.f32 0.0, %v6730
      %v6732 = vpop.f32.mrb[0].mxu0
      %v6733 = vpop.f32.mrb[0].mxu0
      %v6734 = vadd.f32 0.0, %v6733
      %v6735 = vpop.f32.mrb[0].mxu0
      %6736 = vmatprep.mubr.bf16.mxu0 0
      %6737 = vmatmul.mubr.bf16.gmra.mrb[0].mxu0 %v6616
      %v6738 = vpop.f32.mrb[0].mxu0
      %v6739 = vadd.f32 0.0, %v6738
      %v6740 = vpop.f32.mrb[0].mxu0
      %v6741 = vpop.f32.mrb[0].mxu0
      %v6742 = vadd.f32 0.0, %v6741
      %v6743 = vpop.f32.mrb[0].mxu0
      %6744 = vmatprep.mubr.bf16.mxu0 0
      %6745 = vmatmul.mubr.bf16.gmra.mrb[0].mxu0 %v6619
      %v6746 = vpop.f32.mrb[0].mxu0
      %v6747 = vadd.f32 0.0, %v6746
      %v6748 = vpop.f32.mrb[0].mxu0
      %v6749 = vpop.f32.mrb[0].mxu0
      %v6750 = vadd.f32 0.0, %v6749
      %v6751 = vpop.f32.mrb[0].mxu0
      %6752 = vmatprep.mubr.bf16.mxu0 0
      %6753 = vmatmul.mubr.bf16.gmra.mrb[0].mxu0 %v6622
      %v6754 = vpop.f32.mrb[0].mxu0
      %v6755 = vadd.f32 0.0, %v6754
      %v6756 = vpop.f32.mrb[0].mxu0
      %v6757 = vpop.f32.mrb[0].mxu0
      %v6758 = vadd.f32 0.0, %v6757
      %v6759 = vpop.f32.mrb[0].mxu0
      %6760 = vmatprep.mubr.bf16.mxu0 0
      %6761 = vmatmul.mubr.bf16.gmra.mrb[0].mxu0 %v6625
      %v6762 = vpop.f32.mrb[0].mxu0
      %v6763 = vadd.f32 0.0, %v6762
      %v6764 = vpop.f32.mrb[0].mxu0
      %v6765 = vpop.f32.mrb[0].mxu0
      %v6766 = vadd.f32 0.0, %v6765
      %v6767 = vpop.f32.mrb[0].mxu0
      %6768 = vmatprep.mubr.bf16.mxu0 0
      %6769 = vmatmul.mubr.bf16.gmra.mrb[0].mxu0 %v6628
      %v6770 = vpop.f32.mrb[0].mxu0
      %v6771 = vadd.f32 0.0, %v6770
      %v6772 = vpop.f32.mrb[0].mxu0
      %v6773 = vpop.f32.mrb[0].mxu0
      %v6774 = vadd.f32 0.0, %v6773
      %v6775 = vpop.f32.mrb[0].mxu0
      %6776 = vmatprep.mubr.bf16.mxu0 0
      %6777 = vmatmul.mubr.bf16.gmra.mrb[0].mxu0 %v6631
      %v6778 = vpop.f32.mrb[0].mxu0
      %v6779 = vadd.f32 0.0, %v6778
      %v6780 = vpop.f32.mrb[0].mxu0
      %v6781 = vpop.f32.mrb[0].mxu0
      %v6782 = vadd.f32 0.0, %v6781
      %v6783 = vpop.f32.mrb[0].mxu0
      %6784 = vmatprep.mubr.bf16.mxu0 0
      %6785 = vmatmul.mubr.bf16.gmra.mrb[0].mxu0 %v6634
      %v6786 = vpop.f32.mrb[0].mxu0
      %v6787 = vadd.f32 0.0, %v6786
      %v6788 = vpop.f32.mrb[0].mxu0
      %v6789 = vpop.f32.mrb[0].mxu0
      %v6790 = vadd.f32 0.0, %v6789
      %v6791 = vpop.f32.mrb[0].mxu0
      %6792 = vmatprep.mubr.bf16.mxu0 0
      %6793 = vmatmul.mubr.bf16.gmra.mrb[0].mxu0 %v6637
      %v6794 = vpop.f32.mrb[0].mxu0
      %v6795 = vadd.f32 0.0, %v6794
      %v6796 = vpop.f32.mrb[0].mxu0
      %v6797 = vpop.f32.mrb[0].mxu0
      %v6798 = vadd.f32 0.0, %v6797
      %v6799 = vpop.f32.mrb[0].mxu0
      %6800 = vmatprep.mubr.bf16.mxu0 0
      %6801 = vmatmul.mubr.bf16.gmra.mrb[0].mxu0 %v6640
      %v6802 = vpop.f32.mrb[0].mxu0
      %v6803 = vadd.f32 0.0, %v6802
      %v6804 = vpop.f32.mrb[0].mxu0
      %v6805 = vpop.f32.mrb[0].mxu0
      %v6806 = vadd.f32 0.0, %v6805
      %v6807 = vpop.f32.mrb[0].mxu0
      %6808 = vmatprep.mubr.bf16.mxu0 0
      %6809 = vmatmul.mubr.bf16.gmra.mrb[0].mxu0 %v6643
      %v6810 = vpop.f32.mrb[0].mxu0
      %v6811 = vadd.f32 0.0, %v6810
      %v6812 = vpop.f32.mrb[0].mxu0
      %v6813 = vpop.f32.mrb[0].mxu0
      %v6814 = vadd.f32 0.0, %v6813
      %v6815 = vpop.f32.mrb[0].mxu0
      %6816 = vmatprep.mubr.bf16.mxu0 0
      %6817 = vmatmul.mubr.bf16.gmra.mrb[0].mxu0 %v6646
      %v6818 = vpop.f32.mrb[0].mxu0
      %v6819 = vadd.f32 0.0, %v6818
      %v6820 = vpop.f32.mrb[0].mxu0
      %v6821 = vpop.f32.mrb[0].mxu0
      %v6822 = vadd.f32 0.0, %v6821
      %v6823 = vpop.f32.mrb[0].mxu0
      %6824 = vdwg.mxu0
      %v6825 = vadd.f32 %v6512, %v6683
      %v6826 = vadd.f32 %v6513, %v6686
      %v6827 = vadd.f32 %v6514, %v6691
      %v6828 = vadd.f32 %v6515, %v6694
      %v6829 = vadd.f32 %v6516, %v6699
      %v6830 = vadd.f32 %v6517, %v6702
      %v6831 = vadd.f32 %v6518, %v6707
      %v6832 = vadd.f32 %v6519, %v6710
      %v6833 = vadd.f32 %v6520, %v6715
      %v6834 = vadd.f32 %v6521, %v6718
      %v6835 = vadd.f32 %v6522, %v6723
      %v6836 = vadd.f32 %v6523, %v6726
      %v6837 = vadd.f32 %v6524, %v6731
      %v6838 = vadd.f32 %v6525, %v6734
      %v6839 = vadd.f32 %v6526, %v6739
      %v6840 = vadd.f32 %v6527, %v6742
      %v6841 = vadd.f32 %v6528, %v6747
      %v6842 = vadd.f32 %v6529, %v6750
      %v6843 = vadd.f32 %v6530, %v6755
      %v6844 = vadd.f32 %v6531, %v6758
      %v6845 = vadd.f32 %v6532, %v6763
      %v6846 = vadd.f32 %v6533, %v6766
      %v6847 = vadd.f32 %v6534, %v6771
      %v6848 = vadd.f32 %v6535, %v6774
      %v6849 = vadd.f32 %v6536, %v6779
      %v6850 = vadd.f32 %v6537, %v6782
      %v6851 = vadd.f32 %v6538, %v6787
      %v6852 = vadd.f32 %v6539, %v6790
      %v6853 = vadd.f32 %v6540, %v6795
      %v6854 = vadd.f32 %v6541, %v6798
      %v6855 = vadd.f32 %v6542, %v6803
      %v6856 = vadd.f32 %v6543, %v6806
      %v6857 = vadd.f32 %v6544, %v6811
      %v6858 = vadd.f32 %v6545, %v6814
      %v6859 = vadd.f32 %v6546, %v6819
      %v6860 = vadd.f32 %v6547, %v6822
      %vm6861 = vcmp.ge.f32.partialorder %v6825, 0.0
      %vm6862 = vcmp.ge.f32.partialorder %v6826, 0.0
      %vm6863 = vcmp.ge.f32.partialorder %v6827, 0.0
      %vm6864 = vcmp.ge.f32.partialorder %v6828, 0.0
      %vm6865 = vcmp.ge.f32.partialorder %v6829, 0.0
      %vm6866 = vcmp.ge.f32.partialorder %v6830, 0.0
      %vm6867 = vcmp.ge.f32.partialorder %v6831, 0.0
      %vm6868 = vcmp.ge.f32.partialorder %v6832, 0.0
      %vm6869 = vcmp.ge.f32.partialorder %v6833, 0.0
      %vm6870 = vcmp.ge.f32.partialorder %v6834, 0.0
      %vm6871 = vcmp.ge.f32.partialorder %v6835, 0.0
      %vm6872 = vcmp.ge.f32.partialorder %v6836, 0.0
      %vm6873 = vcmp.ge.f32.partialorder %v6837, 0.0
      %vm6874 = vcmp.ge.f32.partialorder %v6838, 0.0
      %vm6875 = vcmp.ge.f32.partialorder %v6839, 0.0
      %vm6876 = vcmp.ge.f32.partialorder %v6840, 0.0
      %vm6877 = vcmp.ge.f32.partialorder %v6841, 0.0
      %vm6878 = vcmp.ge.f32.partialorder %v6842, 0.0
      %vm6879 = vcmp.ge.f32.partialorder %v6843, 0.0
      %vm6880 = vcmp.ge.f32.partialorder %v6844, 0.0
      %vm6881 = vcmp.ge.f32.partialorder %v6845, 0.0
      %vm6882 = vcmp.ge.f32.partialorder %v6846, 0.0
      %vm6883 = vcmp.ge.f32.partialorder %v6847, 0.0
      %vm6884 = vcmp.ge.f32.partialorder %v6848, 0.0
      %vm6885 = vcmp.ge.f32.partialorder %v6849, 0.0
      %vm6886 = vcmp.ge.f32.partialorder %v6850, 0.0
      %vm6887 = vcmp.ge.f32.partialorder %v6851, 0.0
      %vm6888 = vcmp.ge.f32.partialorder %v6852, 0.0
      %vm6889 = vcmp.ge.f32.partialorder %v6853, 0.0
      %vm6890 = vcmp.ge.f32.partialorder %v6854, 0.0
      %vm6891 = vcmp.ge.f32.partialorder %v6855, 0.0
      %vm6892 = vcmp.ge.f32.partialorder %v6856, 0.0
      %vm6893 = vcmp.ge.f32.partialorder %v6857, 0.0
      %vm6894 = vcmp.ge.f32.partialorder %v6858, 0.0
      %vm6895 = vcmp.ge.f32.partialorder %v6859, 0.0
      %vm6896 = vcmp.ge.f32.partialorder %v6860, 0.0
      %v6897 = vmul.f32 %v6825, 0.01
      %v6898 = vmul.f32 %v6826, 0.01
      %v6899 = vmul.f32 %v6827, 0.01
      %v6900 = vmul.f32 %v6828, 0.01
      %v6901 = vmul.f32 %v6829, 0.01
      %v6902 = vmul.f32 %v6830, 0.01
      %v6903 = vmul.f32 %v6831, 0.01
      %v6904 = vmul.f32 %v6832, 0.01
      %v6905 = vmul.f32 %v6833, 0.01
      %v6906 = vmul.f32 %v6834, 0.01
      %v6907 = vmul.f32 %v6835, 0.01
      %v6908 = vmul.f32 %v6836, 0.01
      %v6909 = vmul.f32 %v6837, 0.01
      %v6910 = vmul.f32 %v6838, 0.01
      %v6911 = vmul.f32 %v6839, 0.01
      %v6912 = vmul.f32 %v6840, 0.01
      %v6913 = vmul.f32 %v6841, 0.01
      %v6914 = vmul.f32 %v6842, 0.01
      %v6915 = vmul.f32 %v6843, 0.01
      %v6916 = vmul.f32 %v6844, 0.01
      %v6917 = vmul.f32 %v6845, 0.01
      %v6918 = vmul.f32 %v6846, 0.01
      %v6919 = vmul.f32 %v6847, 0.01
      %v6920 = vmul.f32 %v6848, 0.01
      %v6921 = vmul.f32 %v6849, 0.01
      %v6922 = vmul.f32 %v6850, 0.01
      %v6923 = vmul.f32 %v6851, 0.01
      %v6924 = vmul.f32 %v6852, 0.01
      %v6925 = vmul.f32 %v6853, 0.01
      %v6926 = vmul.f32 %v6854, 0.01
      %v6927 = vmul.f32 %v6855, 0.01
      %v6928 = vmul.f32 %v6856, 0.01
      %v6929 = vmul.f32 %v6857, 0.01
      %v6930 = vmul.f32 %v6858, 0.01
      %v6931 = vmul.f32 %v6859, 0.01
      %v6932 = vmul.f32 %v6860, 0.01
      %v6933 = vsel %vm6861, %v6825, %v6897
      %v6934 = vsel %vm6862, %v6826, %v6898
      %v6935 = vsel %vm6863, %v6827, %v6899
      %v6936 = vsel %vm6864, %v6828, %v6900
      %v6937 = vsel %vm6865, %v6829, %v6901
      %v6938 = vsel %vm6866, %v6830, %v6902
      %v6939 = vsel %vm6867, %v6831, %v6903
      %v6940 = vsel %vm6868, %v6832, %v6904
      %v6941 = vsel %vm6869, %v6833, %v6905
      %v6942 = vsel %vm6870, %v6834, %v6906
      %v6943 = vsel %vm6871, %v6835, %v6907
      %v6944 = vsel %vm6872, %v6836, %v6908
      %v6945 = vsel %vm6873, %v6837, %v6909
      %v6946 = vsel %vm6874, %v6838, %v6910
      %v6947 = vsel %vm6875, %v6839, %v6911
      %v6948 = vsel %vm6876, %v6840, %v6912
      %v6949 = vsel %vm6877, %v6841, %v6913
      %v6950 = vsel %vm6878, %v6842, %v6914
      %v6951 = vsel %vm6879, %v6843, %v6915
      %v6952 = vsel %vm6880, %v6844, %v6916
      %v6953 = vsel %vm6881, %v6845, %v6917
      %v6954 = vsel %vm6882, %v6846, %v6918
      %v6955 = vsel %vm6883, %v6847, %v6919
      %v6956 = vsel %vm6884, %v6848, %v6920
      %v6957 = vsel %vm6885, %v6849, %v6921
      %v6958 = vsel %vm6886, %v6850, %v6922
      %v6959 = vsel %vm6887, %v6851, %v6923
      %v6960 = vsel %vm6888, %v6852, %v6924
      %v6961 = vsel %vm6889, %v6853, %v6925
      %v6962 = vsel %vm6890, %v6854, %v6926
      %v6963 = vsel %vm6891, %v6855, %v6927
      %v6964 = vsel %vm6892, %v6856, %v6928
      %v6965 = vsel %vm6893, %v6857, %v6929
      %v6966 = vsel %vm6894, %v6858, %v6930
      %v6967 = vsel %vm6895, %v6859, %v6931
      %v6968 = vsel %vm6896, %v6860, %v6932
      %6969 = vst [vmem:[%s251] sm:$0xff] %v6933
      %6970 = vst [vmem:[%s251 + $0x8] sm:$0xff] %v6934
      %6971 = vst [vmem:[%s251 + $0x10] sm:$0xff] %v6935
      %6972 = vst [vmem:[%s251 + $0x18] sm:$0xff] %v6936
      %6973 = vst [vmem:[%s251 + $0x20] sm:$0xff] %v6937
      %6974 = vst [vmem:[%s251 + $0x28] sm:$0xff] %v6938
      %6975 = vst [vmem:[%s251 + $0x30] sm:$0xff] %v6939
      %6976 = vst [vmem:[%s251 + $0x38] sm:$0xff] %v6940
      %6977 = vst [vmem:[%s251 + $0x40] sm:$0xff] %v6941
      %6978 = vst [vmem:[%s251 + $0x48] sm:$0xff] %v6942
      %6979 = vst [vmem:[%s251 + $0x50] sm:$0xff] %v6943
      %6980 = vst [vmem:[%s251 + $0x58] sm:$0xff] %v6944
      %6981 = vst [vmem:[%s251 + $0x60] sm:$0xff] %v6945
      %6982 = vst [vmem:[%s251 + $0x68] sm:$0xff] %v6946
      %6983 = vst [vmem:[%s251 + $0x70] sm:$0xff] %v6947
      %6984 = vst [vmem:[%s251 + $0x78] sm:$0xff] %v6948
      %6985 = vst [vmem:[%s251 + $0x80] sm:$0xff] %v6949
      %6986 = vst [vmem:[%s251 + $0x88] sm:$0xff] %v6950
      %6987 = vst [vmem:[%s251 + $0x90] sm:$0xff] %v6951
      %6988 = vst [vmem:[%s251 + $0x98] sm:$0xff] %v6952
      %6989 = vst [vmem:[%s251 + $0xa0] sm:$0xff] %v6953
      %6990 = vst [vmem:[%s251 + $0xa8] sm:$0xff] %v6954
      %6991 = vst [vmem:[%s251 + $0xb0] sm:$0xff] %v6955
      %6992 = vst [vmem:[%s251 + $0xb8] sm:$0xff] %v6956
      %6993 = vst [vmem:[%s251 + $0xc0] sm:$0xff] %v6957
      %6994 = vst [vmem:[%s251 + $0xc8] sm:$0xff] %v6958
      %6995 = vst [vmem:[%s251 + $0xd0] sm:$0xff] %v6959
      %6996 = vst [vmem:[%s251 + $0xd8] sm:$0xff] %v6960
      %6997 = vst [vmem:[%s251 + $0xe0] sm:$0xff] %v6961
      %6998 = vst [vmem:[%s251 + $0xe8] sm:$0xff] %v6962
      %6999 = vst [vmem:[%s251 + $0xf0] sm:$0xff] %v6963
      %7000 = vst [vmem:[%s251 + $0xf8] sm:$0xff] %v6964
      %7001 = vst [vmem:[%s251 + $0x100] sm:$0xff] %v6965
      %7002 = vst [vmem:[%s251 + $0x108] sm:$0xff] %v6966
      %7003 = vst [vmem:[%s251 + $0x110] sm:$0xff] %v6967
      %7004 = vst [vmem:[%s251 + $0x118] sm:$0xff] %v6968
      %p7005 = scmp.lt.s32.totalorder %s17, 1
      %s7006 = scalar_select %p7005, %s17, 1
      %s7007 = smul.addr %s7006, 36
      %s7008 = smul.addr %s7007, 8
      %s7009 = scalar_lea.vmem %s6, %s7008
      // Predicated region
      $region45: #{up_forward.3} parent=43 // pred_check
        %p7010 = pneg %p166
      $region46: #{up_forward.3} parent=43 // pred_check_branch
        %7012 = sbr.rel (%p7010) target = $region48
      $region47: #{up_forward.3} parent=43 // pred_region
        _
      $region48: #{up_forward.3} parent=43 // pred_fallthru
        _
    $region44: #{up_forward.3} parent=5 // pred_fallthru
      _
    %p7013 = scmp.le.s32.totalorder 2, %s12
    // Predicated region
    $region49: #{up_forward.3} parent=5 // pred_check
      %p7014 = pneg %p7013
    $region50: #{up_forward.3} parent=5 // pred_check_branch
      %7016 = sbr.rel (%p7014) target = $region52
    $region51: #{up_forward.3} parent=5 // pred_region
      %s7017 = ssub.s32 %s12, 2
      // Predicated region
      $region53: #{up_forward.3} parent=51 // pred_check
        %p7018 = pneg %p172
      $region54: #{up_forward.3} parent=51 // pred_check_branch
        %7020 = sbr.rel (%p7018) target = $region56
      $region55: #{up_forward.3} parent=51 // pred_region
        %p7021 = scmp.lt.s32.totalorder %s18, 1
        %s7022 = scalar_select %p7021, %s18, 1
        %s7023 = smul.addr %s7022, 36
        %s7024 = smul.addr %s7023, 8
        %s7025 = scalar_lea.vmem %s6, %s7024
      $region56: #{up_forward.3} parent=51 // pred_fallthru
        _
    $region52: #{up_forward.3} parent=5 // pred_fallthru
      _
  $region6: #{up_forward.3} parent=0 // loop_footer
    %s16 = sadd.s32 1, %s12
  $region7: #{up_forward.3} parent=0 // loop_footer_branch
    %11 = sbr.rel target = $region3
  $region8: #{up_forward.3} parent=0 // loop_exit
    _

</llo_original>
